<compile_context>
chip_gen: v7x
topology: tpu7x:2x2x1
jax: 0.10.0
libtpu: 0.0.40
codegen_flags: <defaults>
</compile_context>

<pallas_src>
import jax
import jax.numpy as jnp
from jax.experimental import pallas as pl
from jax.experimental.pallas import tpu as pltpu


# ---------------------------------------------------------------------------
# Kernels
# ---------------------------------------------------------------------------
def _zero_read_kernel(x_ref, o_ref):
    # Multiply by a dtype-matched zero: faithful to torch `x * 0.0`
    # (NaN/Inf -> NaN) and no accidental dtype promotion for bf16/int inputs.
    o_ref[...] = x_ref[...] * jnp.zeros((), dtype=x_ref.dtype)


def _zero_write_kernel(o_ref):
    # Write-only fast path: no input read, halves HBM traffic.
    o_ref[...] = jnp.zeros_like(o_ref)


# ---------------------------------------------------------------------------
# Tiling configuration
# ---------------------------------------------------------------------------
_LANE_CANDIDATES = (2048, 1024, 512, 256, 128)   # preferred lane widths
_TARGET_BLOCK_BYTES = 8 * 1024 * 1024            # ~8 MiB blocks
_VMEM_LIMIT_BYTES = 48 * 1024 * 1024             # 4 x 8 MiB bufs + headroom;
                                                 # fits v7x 64 MiB physical and
                                                 # v5e/v6e 128 MiB physical.
_MIN_PALLAS_BYTES = 1 << 20                      # below ~1 MiB, fused XLA wins.


def _sublane_multiple(dtype):
    """Native sublane packing: (8,128) f32, (16,128) bf16, (32,128) int8."""
    itemsize = jnp.dtype(dtype).itemsize
    if itemsize >= 4:
        return 8
    if itemsize == 2:
        return 16
    return 32


def _lane_dense_view(x):
    """Lane-dense 2D view (free: the op is purely elementwise).

    Returns None when the element count is not a multiple of 128 — those cases
    fall back to plain XLA (padding would add extra HBM passes; sub-128 lane
    widths force masked vst.msk stores).
    """
    total = x.size
    for lane in _LANE_CANDIDATES:
        if total % lane == 0:
            return x.reshape(total // lane, lane)
    return None


def _tiled_zero_2d(x2d, read_input):
    rows, lanes = x2d.shape
    itemsize = jnp.dtype(x2d.dtype).itemsize
    sub = _sublane_multiple(x2d.dtype)

    # Row block: dtype-aware sublane multiple, sized to ~_TARGET_BLOCK_BYTES.
    tr = _TARGET_BLOCK_BYTES // (lanes * itemsize)
    tr = max(sub, (tr // sub) * sub)
    if tr >= rows:
        if rows >= 2 * sub:
            # Split into >= 2 programs so v7x's second TensorCore gets work.
            half = pl.cdiv(rows, 2)
            tr = ((half + sub - 1) // sub) * sub
        else:
            tr = rows            # full second-to-last dim: always a legal block

    grid = (pl.cdiv(rows, tr),)
    nbytes = x2d.size * itemsize

    compiler_params = pltpu.CompilerParams(
        dimension_semantics=("parallel",),        # megacore sharding on v7x
        vmem_limit_bytes=_VMEM_LIMIT_BYTES,
    )
    out_spec = pl.BlockSpec((tr, lanes), lambda i: (i, 0))
    out_shape = jax.ShapeDtypeStruct(x2d.shape, x2d.dtype)

    if read_input:
        return pl.pallas_call(
            _zero_read_kernel,
            out_shape=out_shape,
            grid=grid,
            in_specs=[pl.BlockSpec((tr, lanes), lambda i: (i, 0))],
            out_specs=out_spec,
            compiler_params=compiler_params,
            cost_estimate=pl.CostEstimate(
                flops=x2d.size, transcendentals=0, bytes_accessed=2 * nbytes),
        )(x2d)

    # Write-only variant: no input operand at all.
    return pl.pallas_call(
        _zero_write_kernel,
        out_shape=out_shape,
        grid=grid,
        out_specs=out_spec,
        compiler_params=compiler_params,
        cost_estimate=pl.CostEstimate(
            flops=0, transcendentals=0, bytes_accessed=nbytes),
    )()


# ---------------------------------------------------------------------------
# Forward
# ---------------------------------------------------------------------------
def zero_forward(x, stride: int, C_out: int, *, read_input: bool = True):
    """Forward pass of the Zero op (NCHW).

    stride == 1: returns x * 0.0
    stride  > 1: returns x[:, :, ::stride, ::stride] * 0.0

    read_input=False is an opt-in fast path (write-only, ~2x less HBM traffic)
    that does NOT propagate NaN/Inf like torch's `x * 0.0`.
    """
    N, C, H, W = x.shape
    if C != C_out:
        raise ValueError('invalid channel in zero layer')

    if stride != 1:
        # Spatial subsampling: indexing glue kept in plain JAX (output is only
        # 1/stride^2 of the data, so this path's HBM cost is already small).
        # TODO(synk): fold the H-stride into the BlockSpec index_map and the
        # W-stride into an in-kernel pl.ds(start, size, stride=...) read to
        # drop this extra XLA slice pass entirely.
        x = x[:, :, ::stride, ::stride]

    out_shape = x.shape
    nbytes = x.size * jnp.dtype(x.dtype).itemsize

    if not read_input:
        if nbytes < _MIN_PALLAS_BYTES or _lane_dense_view(x) is None:
            return jnp.zeros(out_shape, dtype=x.dtype)
        return _tiled_zero_2d(_lane_dense_view(x), read_input=False).reshape(out_shape)

    # Torch-faithful default path.
    x2d = _lane_dense_view(x)
    if x2d is None or nbytes < _MIN_PALLAS_BYTES:
        # Tiny or non-128-divisible tensors: launch overhead / masked partial
        # stores make Pallas strictly worse — plain fused XLA elementwise.
        return x * jnp.zeros((), dtype=x.dtype)
    return _tiled_zero_2d(x2d, read_input=True).reshape(out_shape)


class ZeroPallas:
    """Mirror of the PyTorch Zero module (no parameters)."""

    def __init__(self, C_in, C_out, stride, *args, read_input=True, **kwargs):
        if C_in != C_out:
            raise ValueError('invalid channel in zero layer')
        self.stride = stride
        self.C_out = C_out
        self.read_input = read_input

    def __call__(self, x):
        return zero_forward(x, self.stride, self.C_out, read_input=self.read_input)


# ---------------------------------------------------------------------------
# Tests
# ---------------------------------------------------------------------------
if __name__ == "__main__":
    key = jax.random.PRNGKey(0)

    # --- stride = 1, f32, small shape (XLA small-input path) ---------------
    N, C, H, W = 2, 4, 16, 16
    x = jax.random.normal(key, (N, C, H, W), dtype=jnp.float32)
    op1 = ZeroPallas(C, C, stride=1)
    y1 = jax.block_until_ready(op1(x))
    assert y1.shape == (N, C, H, W)
    assert y1.dtype == x.dtype
    assert bool(jnp.all(y1 == 0.0))

    # --- NaN propagation on the small path ---------------------------------
    x_nan = x.at[0, 0, 0, 0].set(jnp.nan)
    y_nan = jax.block_until_ready(op1(x_nan))
    assert bool(jnp.isnan(y_nan[0, 0, 0, 0]))
    assert bool(jnp.all(y_nan[0, 0, 0, 1:] == 0.0))

    # --- stride = 2 ---------------------------------------------------------
    op2 = ZeroPallas(C, C, stride=2)
    y2 = jax.block_until_ready(op2(x))
    assert y2.shape == (N, C, H // 2, W // 2)
    assert y2.dtype == x.dtype
    assert bool(jnp.all(y2 == 0.0))

    # --- odd spatial size (non-128-divisible -> XLA fallback) --------------
    x_odd = jax.random.normal(key, (2, 4, 15, 15), dtype=jnp.float32)
    op3 = ZeroPallas(4, 4, stride=3)
    y3 = jax.block_until_ready(op3(x_odd))
    assert y3.shape == (2, 4, 5, 5)
    assert bool(jnp.all(y3 == 0.0))

    # --- larger f32 shape: exercises the Pallas path + multi-block grid ----
    x_big = jax.random.normal(key, (8, 32, 128, 128), dtype=jnp.float32)  # 16 MiB
    op4 = ZeroPallas(32, 32, stride=1)
    y4 = jax.block_until_ready(op4(x_big))
    assert y4.shape == x_big.shape
    assert y4.dtype == x_big.dtype
    assert bool(jnp.all(y4 == 0.0))

    # --- NaN propagation through the Pallas kernel itself -------------------
    x_big_nan = x_big.at[0, 0, 0, 0].set(jnp.nan)
    y_big_nan = jax.block_until_ready(op4(x_big_nan))
    assert bool(jnp.isnan(y_big_nan[0, 0, 0, 0]))
    assert bool(jnp.all(y_big_nan[0, 0, 0, 1:] == 0.0))

    # --- bf16 on the Pallas path (dtype preserved, 16-row sublane mult) ----
    x_bf = jax.random.normal(key, (8, 32, 64, 64), dtype=jnp.float32).astype(jnp.bfloat16)
    y_bf = jax.block_until_ready(op4(x_bf))
    assert y_bf.dtype == jnp.bfloat16
    assert bool(jnp.all(y_bf == 0))

    # --- opt-in write-only fast path ----------------------------------------
    op_fast = ZeroPallas(32, 32, stride=1, read_input=False)
    y_fast = jax.block_until_ready(op_fast(x_big))
    assert y_fast.shape == x_big.shape
    assert y_fast.dtype == x_big.dtype
    assert bool(jnp.all(y_fast == 0.0))

    print("KERNEL_OK")
</pallas_src>

<mosaic_0001>
module attributes {stable_mosaic.version = 11 : i64} {
  func.func @_zero_read_kernel(%arg0: i32, %arg1: memref<1024x2048xf32, #tpu.memory_space<vmem>>, %arg2: memref<1024x2048xf32, #tpu.memory_space<vmem>>) attributes {dimension_semantics = [#tpu.dimension_semantics<parallel>], iteration_bounds = array<i64: 2>, scalar_prefetch = 0 : i64, scratch_operands = 0 : i64, tpu.core_type = #tpu.core_type<tc>, window_params = [{transform_indices = @transform_0, window_bounds = array<i64: 1024, 2048>}, {transform_indices = @transform_1, window_bounds = array<i64: 1024, 2048>}]} {
    %c0 = arith.constant 0 : index
    %c0_0 = arith.constant 0 : index
    %0 = vector.load %arg1[%c0, %c0_0] : memref<1024x2048xf32, #tpu.memory_space<vmem>>, vector<1024x2048xf32>
    %cst = arith.constant 0.000000e+00 : f32
    %1 = vector.broadcast %cst : f32 to vector<1024x2048xf32>
    %2 = arith.mulf %0, %1 : vector<1024x2048xf32>
    %c0_1 = arith.constant 0 : index
    %c0_2 = arith.constant 0 : index
    %3 = vector.load %arg2[%c0_1, %c0_2] : memref<1024x2048xf32, #tpu.memory_space<vmem>>, vector<1024x2048xf32>
    tpu.vector_store %arg2[%c0_1, %c0_2], %2 {strides = array<i32>} : memref<1024x2048xf32, #tpu.memory_space<vmem>>, vector<1024x2048xf32>,
    return
  }
  func.func @transform_0(%arg0: i32) -> (i32, i32) {
    %c0_i32 = arith.constant 0 : i32
    %c0_i32_0 = arith.constant 0 : i32
    return %arg0, %c0_i32 : i32, i32
  }
  func.func @transform_1(%arg0: i32) -> (i32, i32) {
    %c0_i32 = arith.constant 0 : i32
    %c0_i32_0 = arith.constant 0 : i32
    return %arg0, %c0_i32 : i32, i32
  }
}

</mosaic_0001>

<llo_original>
// kernel: tpu_custom_call.1
$region0: #{tpu_custom_call.1}
  #allocation0 [shape = 'u32[]', space=smem, size = 0x4, offset = 0x4, fixed_abs, tag = 'smem constant byte address 0x4 - core index']
  #allocation1 [shape = 'u32[144,128]{1,0:T(1,128)}', space=vmem, size = 0x12000, scoped, tag = 'internal scratch']
  %s0 = inlined_call_operand.hbm [shape: f32[2048,2048], index: 0, kind: input, shape index: {}]
  %s1 = inlined_call_operand.hbm [shape: f32[2048,2048], index: 1, kind: output, shape index: {}]
  %s2 = sld [smem:[#allocation0]]
  $region41: #{tpu_custom_call.1} parent=0
    _
  %s4 = ssub.s32 1, %s2
  %s5 = scalar_select 0, %s4, %s2
  $region1: #{tpu_custom_call.1} parent=0
    #allocation2 [shape = 'u8[16777216]{0}', space=vmem, size = 0x1000000, scoped, tag = 'input window, operand 0']
    #allocation3 [shape = 's32[2]{0}', space=sflag, size = 0x8, scoped, tag = 'scoped memory for tpu_custom_call.1']
    #allocation4 [shape = 's32[2]{0}', space=sflag, size = 0x8, scoped, tag = 'scoped memory for tpu_custom_call.1']
    #allocation5 [shape = 'u8[16777216]{0}', space=vmem, size = 0x1000000, scoped, tag = 'output window, operand 0']
    %6 = vsyncpa [#allocation3], 0
    %s7 = scalar_lea.sflag [#allocation3], 1
    %8 = vsyncpa %s7, 0
    %9 = vsyncpa [#allocation4], 0
    %s10 = scalar_lea.sflag [#allocation4], 1
    %11 = vsyncpa %s10, 0
    loop: start=0, step=1, limit=4
    $region2: #{tpu_custom_call.1} parent=1 // loop_pre_header
      _
    $region3: #{tpu_custom_call.1} parent=1 // loop_header
      %s13 = sphi 0, %s17
      %p14 = scmp.ge.s32.totalorder %s13, 4
      %s23 = sphi 0, %s25
      %s26 = sphi 0, %s23
      %s27 = sphi 0, %s26
      %s43 = sphi 0, %s27
      %s49 = sphi 0, %s51
      %s52 = sphi 0, %s49
      %s53 = sphi 0, %s52
      %s69 = sphi 0, %s53
    $region4: #{tpu_custom_call.1} parent=1 // loop_header_branch
      %16 = sbr.rel (%p14) target = $region8
    $region5: #{tpu_custom_call.1} parent=1 // loop_body
      %s18 = ssub.s32 %s13, 1
      %s19 = ssub.s32 %s13, 2
      %s20 = sadd.s32 %s13, 1
      %s21 = ssub.s32 %s13, %s20
      %p22 = scmp.eq.s32.totalorder %s21, 0
      %s24 = sadd.s32 %s23, 1
      %s25 = scalar_select %p22, %s23, %s24
      %p28 = pneg %p22
      %p29 = scmp.eq.s32.totalorder %s13, 1
      %p30 = por %p28, %p29
      %p31 = scmp.ne.s32.totalorder %s23, %s26
      %p32 = scmp.eq.s32.totalorder %s13, 0
      %p33 = por %p31, %p32
      %p34 = scmp.ne.s32.totalorder %s23, %s26
      %p35 = scmp.eq.s32.totalorder %s18, 1
      %p36 = por %p34, %p35
      %p37 = scmp.ne.s32.totalorder %s26, %s27
      %p38 = scmp.eq.s32.totalorder %s18, 0
      %p39 = por %p37, %p38
      %p40 = scmp.ne.s32.totalorder %s26, %s27
      %p41 = scmp.eq.s32.totalorder %s19, 1
      %p42 = por %p40, %p41
      %p44 = scmp.ne.s32.totalorder %s27, %s43
      %p45 = scmp.eq.s32.totalorder %s19, 0
      %p46 = por %p44, %p45
      %s47 = ssub.s32 %s13, %s20
      %p48 = scmp.eq.s32.totalorder %s47, 0
      %s50 = sadd.s32 %s49, 1
      %s51 = scalar_select %p48, %s49, %s50
      %p54 = pneg %p48
      %p55 = scmp.eq.s32.totalorder %s13, 1
      %p56 = por %p54, %p55
      %p57 = scmp.ne.s32.totalorder %s49, %s52
      %p58 = scmp.eq.s32.totalorder %s13, 0
      %p59 = por %p57, %p58
      %p60 = scmp.ne.s32.totalorder %s49, %s52
      %p61 = scmp.eq.s32.totalorder %s18, 1
      %p62 = por %p60, %p61
      %p63 = scmp.ne.s32.totalorder %s52, %s53
      %p64 = scmp.eq.s32.totalorder %s18, 0
      %p65 = por %p63, %p64
      %p66 = scmp.ne.s32.totalorder %s52, %s53
      %p67 = scmp.eq.s32.totalorder %s19, 1
      %p68 = por %p66, %p67
      %p70 = scmp.ne.s32.totalorder %s53, %s69
      %p71 = scmp.eq.s32.totalorder %s19, 0
      %p72 = por %p70, %p71
      %p73 = scmp.le.s32.totalorder 1, %s13
      %p74 = scmp.lt.s32.totalorder %s13, 3
      %p75 = pnand %p73, %p74
      %p76 = pneg %p75
      // Predicated region
      $region9: #{tpu_custom_call.1} parent=5 // pred_check
        _
      $region10: #{tpu_custom_call.1} parent=5 // pred_check_branch
        %78 = sbr.rel (%p75) target = $region12
      $region11: #{tpu_custom_call.1} parent=5 // pred_region
        %s79 = ssub.s32 %s13, 1
      $region12: #{tpu_custom_call.1} parent=5 // pred_fallthru
        _
      %p80 = scmp.lt.s32.totalorder %s13, 2
      // Predicated region
      $region13: #{tpu_custom_call.1} parent=5 // pred_check
        %p81 = pneg %p80
      $region14: #{tpu_custom_call.1} parent=5 // pred_check_branch
        %83 = sbr.rel (%p81) target = $region16
      $region15: #{tpu_custom_call.1} parent=5 // pred_region
        // Predicated region
        $region17: #{tpu_custom_call.1} parent=15 // pred_check
          %p84 = pneg %p33
        $region18: #{tpu_custom_call.1} parent=15 // pred_check_branch
          %86 = sbr.rel (%p84) target = $region20
        $region19: #{tpu_custom_call.1} parent=15 // pred_region
          %s87 = sand.u32 %s23, 1
          %s88 = scalar_lea.sflag [#allocation3], %s87
          %s89 = sand.u32 %s23, 1
          %s90 = smul.addr %s89, 16384
          %s91 = scalar_lea.vmem [#allocation2], %s90
          %s92 = smul.u32 128, %s13
          %s94 = ssub.s32 262144, 262144
          %95 = vsyncadd %s88, %s94
          %s96 = smul.addr %s92, 16
          %s97 = smul.addr %s96, 128
          %s98 = scalar_lea.hbm %s0, %s97
          %s99 = sshll.u32 %s91, 4
          %s100 = int_to_ptr.vmem [resolvable:$true] %s99
          %105 = dma.hbm_to_vmem [thread:$0]  %s98, 262144, %s100, %s88, 2048, 2048, 128
        $region20: #{tpu_custom_call.1} parent=15 // pred_fallthru
          _
      $region16: #{tpu_custom_call.1} parent=5 // pred_fallthru
        _
      %p106 = scmp.le.s32.totalorder 1, %s13
      %p107 = scmp.lt.s32.totalorder %s13, 3
      %p108 = pnand %p106, %p107
      %p109 = pneg %p108
      // Predicated region
      $region21: #{tpu_custom_call.1} parent=5 // pred_check
        _
      $region22: #{tpu_custom_call.1} parent=5 // pred_check_branch
        %111 = sbr.rel (%p108) target = $region24
      $region23: #{tpu_custom_call.1} parent=5 // pred_region
        %s112 = ssub.s32 %s13, 1
        %s113 = sand.u32 %s26, 1
        %s114 = scalar_lea.sflag [#allocation3], %s113
        %s115 = sand.u32 %s26, 1
        %s116 = smul.addr %s115, 16384
        %s117 = scalar_lea.vmem [#allocation2], %s116
        // Predicated region
        $region25: #{tpu_custom_call.1} parent=23 // pred_check
          %p118 = pneg %p39
        $region26: #{tpu_custom_call.1} parent=23 // pred_check_branch
          %120 = sbr.rel (%p118) target = $region28
        $region27: #{tpu_custom_call.1} parent=23 // pred_region
          %121 = dma.done %s114, 262144
        $region28: #{tpu_custom_call.1} parent=23 // pred_fallthru
          _
        %s122 = sand.u32 %s26, 1
        %s123 = scalar_lea.sflag [#allocation3], %s122
        %s124 = sand.u32 %s26, 1
        %s125 = smul.addr %s124, 16384
        %s126 = scalar_lea.vmem [#allocation2], %s125
        %p127 = pneg %p39
        %p128 = pneg %p36
        %p129 = pneg %p65
        %p130 = pneg %p62
        %s131 = sand.u32 %s52, 1
        %s132 = scalar_lea.sflag [#allocation4], %s131
        %s133 = sand.u32 %s52, 1
        %s134 = smul.addr %s133, 16384
        %s135 = scalar_lea.vmem [#allocation5], %s134
        %s136 = smul.u32 128, %s18
        %s137 = smul.u32 128, %s18
        %v138 = vld [vmem:[%s117] sm:$0xff]
        %v139 = vld [vmem:[%s117 + $0x8] sm:$0xff]
        %v140 = vld [vmem:[%s117 + $0x10] sm:$0xff]
        %v141 = vld [vmem:[%s117 + $0x18] sm:$0xff]
        %v142 = vld [vmem:[%s117 + $0x20] sm:$0xff]
        %v143 = vld [vmem:[%s117 + $0x28] sm:$0xff]
        %v144 = vld [vmem:[%s117 + $0x30] sm:$0xff]
        %v145 = vld [vmem:[%s117 + $0x38] sm:$0xff]
        %v146 = vld [vmem:[%s117 + $0x40] sm:$0xff]
        %v147 = vld [vmem:[%s117 + $0x48] sm:$0xff]
        %v148 = vld [vmem:[%s117 + $0x50] sm:$0xff]
        %v149 = vld [vmem:[%s117 + $0x58] sm:$0xff]
        %v150 = vld [vmem:[%s117 + $0x60] sm:$0xff]
        %v151 = vld [vmem:[%s117 + $0x68] sm:$0xff]
        %v152 = vld [vmem:[%s117 + $0x70] sm:$0xff]
        %v153 = vld [vmem:[%s117 + $0x78] sm:$0xff]
        %v154 = vld [vmem:[%s117 + $0x80] sm:$0xff]
        %v155 = vld [vmem:[%s117 + $0x88] sm:$0xff]
        %v156 = vld [vmem:[%s117 + $0x90] sm:$0xff]
        %v157 = vld [vmem:[%s117 + $0x98] sm:$0xff]
        %v158 = vld [vmem:[%s117 + $0xa0] sm:$0xff]
        %v159 = vld [vmem:[%s117 + $0xa8] sm:$0xff]
        %v160 = vld [vmem:[%s117 + $0xb0] sm:$0xff]
        %v161 = vld [vmem:[%s117 + $0xb8] sm:$0xff]
        %v162 = vld [vmem:[%s117 + $0xc0] sm:$0xff]
        %v163 = vld [vmem:[%s117 + $0xc8] sm:$0xff]
        %v164 = vld [vmem:[%s117 + $0xd0] sm:$0xff]
        %v165 = vld [vmem:[%s117 + $0xd8] sm:$0xff]
        %v166 = vld [vmem:[%s117 + $0xe0] sm:$0xff]
        %v167 = vld [vmem:[%s117 + $0xe8] sm:$0xff]
        %v168 = vld [vmem:[%s117 + $0xf0] sm:$0xff]
        %v169 = vld [vmem:[%s117 + $0xf8] sm:$0xff]
        %v170 = vld [vmem:[%s117 + $0x100] sm:$0xff]
        %v171 = vld [vmem:[%s117 + $0x108] sm:$0xff]
        %v172 = vld [vmem:[%s117 + $0x110] sm:$0xff]
        %v173 = vld [vmem:[%s117 + $0x118] sm:$0xff]
        %v174 = vld [vmem:[%s117 + $0x120] sm:$0xff]
        %v175 = vld [vmem:[%s117 + $0x128] sm:$0xff]
        %v176 = vld [vmem:[%s117 + $0x130] sm:$0xff]
        %v177 = vld [vmem:[%s117 + $0x138] sm:$0xff]
        %v178 = vld [vmem:[%s117 + $0x140] sm:$0xff]
        %v179 = vld [vmem:[%s117 + $0x148] sm:$0xff]
        %v180 = vld [vmem:[%s117 + $0x150] sm:$0xff]
        %v181 = vld [vmem:[%s117 + $0x158] sm:$0xff]
        %v182 = vld [vmem:[%s117 + $0x160] sm:$0xff]
        %v183 = vld [vmem:[%s117 + $0x168] sm:$0xff]
        %v184 = vld [vmem:[%s117 + $0x170] sm:$0xff]
        %v185 = vld [vmem:[%s117 + $0x178] sm:$0xff]
        %v186 = vld [vmem:[%s117 + $0x180] sm:$0xff]
        %v187 = vld [vmem:[%s117 + $0x188] sm:$0xff]
        %v188 = vld [vmem:[%s117 + $0x190] sm:$0xff]
        %v189 = vld [vmem:[%s117 + $0x198] sm:$0xff]
        %v190 = vld [vmem:[%s117 + $0x1a0] sm:$0xff]
        %v191 = vld [vmem:[%s117 + $0x1a8] sm:$0xff]
        %v192 = vld [vmem:[%s117 + $0x1b0] sm:$0xff]
        %v193 = vld [vmem:[%s117 + $0x1b8] sm:$0xff]
        %v194 = vld [vmem:[%s117 + $0x1c0] sm:$0xff]
        %v195 = vld [vmem:[%s117 + $0x1c8] sm:$0xff]
        %v196 = vld [vmem:[%s117 + $0x1d0] sm:$0xff]
        %v197 = vld [vmem:[%s117 + $0x1d8] sm:$0xff]
        %v198 = vld [vmem:[%s117 + $0x1e0] sm:$0xff]
        %v199 = vld [vmem:[%s117 + $0x1e8] sm:$0xff]
        %v200 = vld [vmem:[%s117 + $0x1f0] sm:$0xff]
        %v201 = vld [vmem:[%s117 + $0x1f8] sm:$0xff]
        %v202 = vld [vmem:[%s117 + $0x200] sm:$0xff]
        %v203 = vld [vmem:[%s117 + $0x208] sm:$0xff]
        %v204 = vld [vmem:[%s117 + $0x210] sm:$0xff]
        %v205 = vld [vmem:[%s117 + $0x218] sm:$0xff]
        %v206 = vld [vmem:[%s117 + $0x220] sm:$0xff]
        %v207 = vld [vmem:[%s117 + $0x228] sm:$0xff]
        %v208 = vld [vmem:[%s117 + $0x230] sm:$0xff]
        %v209 = vld [vmem:[%s117 + $0x238] sm:$0xff]
        %v210 = vld [vmem:[%s117 + $0x240] sm:$0xff]
        %v211 = vld [vmem:[%s117 + $0x248] sm:$0xff]
        %v212 = vld [vmem:[%s117 + $0x250] sm:$0xff]
        %v213 = vld [vmem:[%s117 + $0x258] sm:$0xff]
        %v214 = vld [vmem:[%s117 + $0x260] sm:$0xff]
        %v215 = vld [vmem:[%s117 + $0x268] sm:$0xff]
        %v216 = vld [vmem:[%s117 + $0x270] sm:$0xff]
        %v217 = vld [vmem:[%s117 + $0x278] sm:$0xff]
        %v218 = vld [vmem:[%s117 + $0x280] sm:$0xff]
        %v219 = vld [vmem:[%s117 + $0x288] sm:$0xff]
        %v220 = vld [vmem:[%s117 + $0x290] sm:$0xff]
        %v221 = vld [vmem:[%s117 + $0x298] sm:$0xff]
        %v222 = vld [vmem:[%s117 + $0x2a0] sm:$0xff]
        %v223 = vld [vmem:[%s117 + $0x2a8] sm:$0xff]
        %v224 = vld [vmem:[%s117 + $0x2b0] sm:$0xff]
        %v225 = vld [vmem:[%s117 + $0x2b8] sm:$0xff]
        %v226 = vld [vmem:[%s117 + $0x2c0] sm:$0xff]
        %v227 = vld [vmem:[%s117 + $0x2c8] sm:$0xff]
        %v228 = vld [vmem:[%s117 + $0x2d0] sm:$0xff]
        %v229 = vld [vmem:[%s117 + $0x2d8] sm:$0xff]
        %v230 = vld [vmem:[%s117 + $0x2e0] sm:$0xff]
        %v231 = vld [vmem:[%s117 + $0x2e8] sm:$0xff]
        %v232 = vld [vmem:[%s117 + $0x2f0] sm:$0xff]
        %v233 = vld [vmem:[%s117 + $0x2f8] sm:$0xff]
        %v234 = vld [vmem:[%s117 + $0x300] sm:$0xff]
        %v235 = vld [vmem:[%s117 + $0x308] sm:$0xff]
        %v236 = vld [vmem:[%s117 + $0x310] sm:$0xff]
        %v237 = vld [vmem:[%s117 + $0x318] sm:$0xff]
        %v238 = vld [vmem:[%s117 + $0x320] sm:$0xff]
        %v239 = vld [vmem:[%s117 + $0x328] sm:$0xff]
        %v240 = vld [vmem:[%s117 + $0x330] sm:$0xff]
        %v241 = vld [vmem:[%s117 + $0x338] sm:$0xff]
        %v242 = vld [vmem:[%s117 + $0x340] sm:$0xff]
        %v243 = vld [vmem:[%s117 + $0x348] sm:$0xff]
        %v244 = vld [vmem:[%s117 + $0x350] sm:$0xff]
        %v245 = vld [vmem:[%s117 + $0x358] sm:$0xff]
        %v246 = vld [vmem:[%s117 + $0x360] sm:$0xff]
        %v247 = vld [vmem:[%s117 + $0x368] sm:$0xff]
        %v248 = vld [vmem:[%s117 + $0x370] sm:$0xff]
        %v249 = vld [vmem:[%s117 + $0x378] sm:$0xff]
        %v250 = vld [vmem:[%s117 + $0x380] sm:$0xff]
        %v251 = vld [vmem:[%s117 + $0x388] sm:$0xff]
        %v252 = vld [vmem:[%s117 + $0x390] sm:$0xff]
        %v253 = vld [vmem:[%s117 + $0x398] sm:$0xff]
        %v254 = vld [vmem:[%s117 + $0x3a0] sm:$0xff]
        %v255 = vld [vmem:[%s117 + $0x3a8] sm:$0xff]
        %v256 = vld [vmem:[%s117 + $0x3b0] sm:$0xff]
        %v257 = vld [vmem:[%s117 + $0x3b8] sm:$0xff]
        %v258 = vld [vmem:[%s117 + $0x3c0] sm:$0xff]
        %v259 = vld [vmem:[%s117 + $0x3c8] sm:$0xff]
        %v260 = vld [vmem:[%s117 + $0x3d0] sm:$0xff]
        %v261 = vld [vmem:[%s117 + $0x3d8] sm:$0xff]
        %v262 = vld [vmem:[%s117 + $0x3e0] sm:$0xff]
        %v263 = vld [vmem:[%s117 + $0x3e8] sm:$0xff]
        %v264 = vld [vmem:[%s117 + $0x3f0] sm:$0xff]
        %v265 = vld [vmem:[%s117 + $0x3f8] sm:$0xff]
        %v266 = vld [vmem:[%s117 + $0x400] sm:$0xff]
        %v267 = vld [vmem:[%s117 + $0x408] sm:$0xff]
        %v268 = vld [vmem:[%s117 + $0x410] sm:$0xff]
        %v269 = vld [vmem:[%s117 + $0x418] sm:$0xff]
        %v270 = vld [vmem:[%s117 + $0x420] sm:$0xff]
        %v271 = vld [vmem:[%s117 + $0x428] sm:$0xff]
        %v272 = vld [vmem:[%s117 + $0x430] sm:$0xff]
        %v273 = vld [vmem:[%s117 + $0x438] sm:$0xff]
        %v274 = vld [vmem:[%s117 + $0x440] sm:$0xff]
        %v275 = vld [vmem:[%s117 + $0x448] sm:$0xff]
        %v276 = vld [vmem:[%s117 + $0x450] sm:$0xff]
        %v277 = vld [vmem:[%s117 + $0x458] sm:$0xff]
        %v278 = vld [vmem:[%s117 + $0x460] sm:$0xff]
        %v279 = vld [vmem:[%s117 + $0x468] sm:$0xff]
        %v280 = vld [vmem:[%s117 + $0x470] sm:$0xff]
        %v281 = vld [vmem:[%s117 + $0x478] sm:$0xff]
        %v282 = vld [vmem:[%s117 + $0x480] sm:$0xff]
        %v283 = vld [vmem:[%s117 + $0x488] sm:$0xff]
        %v284 = vld [vmem:[%s117 + $0x490] sm:$0xff]
        %v285 = vld [vmem:[%s117 + $0x498] sm:$0xff]
        %v286 = vld [vmem:[%s117 + $0x4a0] sm:$0xff]
        %v287 = vld [vmem:[%s117 + $0x4a8] sm:$0xff]
        %v288 = vld [vmem:[%s117 + $0x4b0] sm:$0xff]
        %v289 = vld [vmem:[%s117 + $0x4b8] sm:$0xff]
        %v290 = vld [vmem:[%s117 + $0x4c0] sm:$0xff]
        %v291 = vld [vmem:[%s117 + $0x4c8] sm:$0xff]
        %v292 = vld [vmem:[%s117 + $0x4d0] sm:$0xff]
        %v293 = vld [vmem:[%s117 + $0x4d8] sm:$0xff]
        %v294 = vld [vmem:[%s117 + $0x4e0] sm:$0xff]
        %v295 = vld [vmem:[%s117 + $0x4e8] sm:$0xff]
        %v296 = vld [vmem:[%s117 + $0x4f0] sm:$0xff]
        %v297 = vld [vmem:[%s117 + $0x4f8] sm:$0xff]
        %v298 = vld [vmem:[%s117 + $0x500] sm:$0xff]
        %v299 = vld [vmem:[%s117 + $0x508] sm:$0xff]
        %v300 = vld [vmem:[%s117 + $0x510] sm:$0xff]
        %v301 = vld [vmem:[%s117 + $0x518] sm:$0xff]
        %v302 = vld [vmem:[%s117 + $0x520] sm:$0xff]
        %v303 = vld [vmem:[%s117 + $0x528] sm:$0xff]
        %v304 = vld [vmem:[%s117 + $0x530] sm:$0xff]
        %v305 = vld [vmem:[%s117 + $0x538] sm:$0xff]
        %v306 = vld [vmem:[%s117 + $0x540] sm:$0xff]
        %v307 = vld [vmem:[%s117 + $0x548] sm:$0xff]
        %v308 = vld [vmem:[%s117 + $0x550] sm:$0xff]
        %v309 = vld [vmem:[%s117 + $0x558] sm:$0xff]
        %v310 = vld [vmem:[%s117 + $0x560] sm:$0xff]
        %v311 = vld [vmem:[%s117 + $0x568] sm:$0xff]
        %v312 = vld [vmem:[%s117 + $0x570] sm:$0xff]
        %v313 = vld [vmem:[%s117 + $0x578] sm:$0xff]
        %v314 = vld [vmem:[%s117 + $0x580] sm:$0xff]
        %v315 = vld [vmem:[%s117 + $0x588] sm:$0xff]
        %v316 = vld [vmem:[%s117 + $0x590] sm:$0xff]
        %v317 = vld [vmem:[%s117 + $0x598] sm:$0xff]
        %v318 = vld [vmem:[%s117 + $0x5a0] sm:$0xff]
        %v319 = vld [vmem:[%s117 + $0x5a8] sm:$0xff]
        %v320 = vld [vmem:[%s117 + $0x5b0] sm:$0xff]
        %v321 = vld [vmem:[%s117 + $0x5b8] sm:$0xff]
        %v322 = vld [vmem:[%s117 + $0x5c0] sm:$0xff]
        %v323 = vld [vmem:[%s117 + $0x5c8] sm:$0xff]
        %v324 = vld [vmem:[%s117 + $0x5d0] sm:$0xff]
        %v325 = vld [vmem:[%s117 + $0x5d8] sm:$0xff]
        %v326 = vld [vmem:[%s117 + $0x5e0] sm:$0xff]
        %v327 = vld [vmem:[%s117 + $0x5e8] sm:$0xff]
        %v328 = vld [vmem:[%s117 + $0x5f0] sm:$0xff]
        %v329 = vld [vmem:[%s117 + $0x5f8] sm:$0xff]
        %v330 = vld [vmem:[%s117 + $0x600] sm:$0xff]
        %v331 = vld [vmem:[%s117 + $0x608] sm:$0xff]
        %v332 = vld [vmem:[%s117 + $0x610] sm:$0xff]
        %v333 = vld [vmem:[%s117 + $0x618] sm:$0xff]
        %v334 = vld [vmem:[%s117 + $0x620] sm:$0xff]
        %v335 = vld [vmem:[%s117 + $0x628] sm:$0xff]
        %v336 = vld [vmem:[%s117 + $0x630] sm:$0xff]
        %v337 = vld [vmem:[%s117 + $0x638] sm:$0xff]
        %v338 = vld [vmem:[%s117 + $0x640] sm:$0xff]
        %v339 = vld [vmem:[%s117 + $0x648] sm:$0xff]
        %v340 = vld [vmem:[%s117 + $0x650] sm:$0xff]
        %v341 = vld [vmem:[%s117 + $0x658] sm:$0xff]
        %v342 = vld [vmem:[%s117 + $0x660] sm:$0xff]
        %v343 = vld [vmem:[%s117 + $0x668] sm:$0xff]
        %v344 = vld [vmem:[%s117 + $0x670] sm:$0xff]
        %v345 = vld [vmem:[%s117 + $0x678] sm:$0xff]
        %v346 = vld [vmem:[%s117 + $0x680] sm:$0xff]
        %v347 = vld [vmem:[%s117 + $0x688] sm:$0xff]
        %v348 = vld [vmem:[%s117 + $0x690] sm:$0xff]
        %v349 = vld [vmem:[%s117 + $0x698] sm:$0xff]
        %v350 = vld [vmem:[%s117 + $0x6a0] sm:$0xff]
        %v351 = vld [vmem:[%s117 + $0x6a8] sm:$0xff]
        %v352 = vld [vmem:[%s117 + $0x6b0] sm:$0xff]
        %v353 = vld [vmem:[%s117 + $0x6b8] sm:$0xff]
        %v354 = vld [vmem:[%s117 + $0x6c0] sm:$0xff]
        %v355 = vld [vmem:[%s117 + $0x6c8] sm:$0xff]
        %v356 = vld [vmem:[%s117 + $0x6d0] sm:$0xff]
        %v357 = vld [vmem:[%s117 + $0x6d8] sm:$0xff]
        %v358 = vld [vmem:[%s117 + $0x6e0] sm:$0xff]
        %v359 = vld [vmem:[%s117 + $0x6e8] sm:$0xff]
        %v360 = vld [vmem:[%s117 + $0x6f0] sm:$0xff]
        %v361 = vld [vmem:[%s117 + $0x6f8] sm:$0xff]
        %v362 = vld [vmem:[%s117 + $0x700] sm:$0xff]
        %v363 = vld [vmem:[%s117 + $0x708] sm:$0xff]
        %v364 = vld [vmem:[%s117 + $0x710] sm:$0xff]
        %v365 = vld [vmem:[%s117 + $0x718] sm:$0xff]
        %v366 = vld [vmem:[%s117 + $0x720] sm:$0xff]
        %v367 = vld [vmem:[%s117 + $0x728] sm:$0xff]
        %v368 = vld [vmem:[%s117 + $0x730] sm:$0xff]
        %v369 = vld [vmem:[%s117 + $0x738] sm:$0xff]
        %v370 = vld [vmem:[%s117 + $0x740] sm:$0xff]
        %v371 = vld [vmem:[%s117 + $0x748] sm:$0xff]
        %v372 = vld [vmem:[%s117 + $0x750] sm:$0xff]
        %v373 = vld [vmem:[%s117 + $0x758] sm:$0xff]
        %v374 = vld [vmem:[%s117 + $0x760] sm:$0xff]
        %v375 = vld [vmem:[%s117 + $0x768] sm:$0xff]
        %v376 = vld [vmem:[%s117 + $0x770] sm:$0xff]
        %v377 = vld [vmem:[%s117 + $0x778] sm:$0xff]
        %v378 = vld [vmem:[%s117 + $0x780] sm:$0xff]
        %v379 = vld [vmem:[%s117 + $0x788] sm:$0xff]
        %v380 = vld [vmem:[%s117 + $0x790] sm:$0xff]
        %v381 = vld [vmem:[%s117 + $0x798] sm:$0xff]
        %v382 = vld [vmem:[%s117 + $0x7a0] sm:$0xff]
        %v383 = vld [vmem:[%s117 + $0x7a8] sm:$0xff]
        %v384 = vld [vmem:[%s117 + $0x7b0] sm:$0xff]
        %v385 = vld [vmem:[%s117 + $0x7b8] sm:$0xff]
        %v386 = vld [vmem:[%s117 + $0x7c0] sm:$0xff]
        %v387 = vld [vmem:[%s117 + $0x7c8] sm:$0xff]
        %v388 = vld [vmem:[%s117 + $0x7d0] sm:$0xff]
        %v389 = vld [vmem:[%s117 + $0x7d8] sm:$0xff]
        %v390 = vld [vmem:[%s117 + $0x7e0] sm:$0xff]
        %v391 = vld [vmem:[%s117 + $0x7e8] sm:$0xff]
        %v392 = vld [vmem:[%s117 + $0x7f0] sm:$0xff]
        %v393 = vld [vmem:[%s117 + $0x7f8] sm:$0xff]
        %v394 = vld [vmem:[%s117 + $0x800] sm:$0xff]
        %v395 = vld [vmem:[%s117 + $0x808] sm:$0xff]
        %v396 = vld [vmem:[%s117 + $0x810] sm:$0xff]
        %v397 = vld [vmem:[%s117 + $0x818] sm:$0xff]
        %v398 = vld [vmem:[%s117 + $0x820] sm:$0xff]
        %v399 = vld [vmem:[%s117 + $0x828] sm:$0xff]
        %v400 = vld [vmem:[%s117 + $0x830] sm:$0xff]
        %v401 = vld [vmem:[%s117 + $0x838] sm:$0xff]
        %v402 = vld [vmem:[%s117 + $0x840] sm:$0xff]
        %v403 = vld [vmem:[%s117 + $0x848] sm:$0xff]
        %v404 = vld [vmem:[%s117 + $0x850] sm:$0xff]
        %v405 = vld [vmem:[%s117 + $0x858] sm:$0xff]
        %v406 = vld [vmem:[%s117 + $0x860] sm:$0xff]
        %v407 = vld [vmem:[%s117 + $0x868] sm:$0xff]
        %v408 = vld [vmem:[%s117 + $0x870] sm:$0xff]
        %v409 = vld [vmem:[%s117 + $0x878] sm:$0xff]
        %v410 = vld [vmem:[%s117 + $0x880] sm:$0xff]
        %v411 = vld [vmem:[%s117 + $0x888] sm:$0xff]
        %v412 = vld [vmem:[%s117 + $0x890] sm:$0xff]
        %v413 = vld [vmem:[%s117 + $0x898] sm:$0xff]
        %v414 = vld [vmem:[%s117 + $0x8a0] sm:$0xff]
        %v415 = vld [vmem:[%s117 + $0x8a8] sm:$0xff]
        %v416 = vld [vmem:[%s117 + $0x8b0] sm:$0xff]
        %v417 = vld [vmem:[%s117 + $0x8b8] sm:$0xff]
        %v418 = vld [vmem:[%s117 + $0x8c0] sm:$0xff]
        %v419 = vld [vmem:[%s117 + $0x8c8] sm:$0xff]
        %v420 = vld [vmem:[%s117 + $0x8d0] sm:$0xff]
        %v421 = vld [vmem:[%s117 + $0x8d8] sm:$0xff]
        %v422 = vld [vmem:[%s117 + $0x8e0] sm:$0xff]
        %v423 = vld [vmem:[%s117 + $0x8e8] sm:$0xff]
        %v424 = vld [vmem:[%s117 + $0x8f0] sm:$0xff]
        %v425 = vld [vmem:[%s117 + $0x8f8] sm:$0xff]
        %v426 = vld [vmem:[%s117 + $0x900] sm:$0xff]
        %v427 = vld [vmem:[%s117 + $0x908] sm:$0xff]
        %v428 = vld [vmem:[%s117 + $0x910] sm:$0xff]
        %v429 = vld [vmem:[%s117 + $0x918] sm:$0xff]
        %v430 = vld [vmem:[%s117 + $0x920] sm:$0xff]
        %v431 = vld [vmem:[%s117 + $0x928] sm:$0xff]
        %v432 = vld [vmem:[%s117 + $0x930] sm:$0xff]
        %v433 = vld [vmem:[%s117 + $0x938] sm:$0xff]
        %v434 = vld [vmem:[%s117 + $0x940] sm:$0xff]
        %v435 = vld [vmem:[%s117 + $0x948] sm:$0xff]
        %v436 = vld [vmem:[%s117 + $0x950] sm:$0xff]
        %v437 = vld [vmem:[%s117 + $0x958] sm:$0xff]
        %v438 = vld [vmem:[%s117 + $0x960] sm:$0xff]
        %v439 = vld [vmem:[%s117 + $0x968] sm:$0xff]
        %v440 = vld [vmem:[%s117 + $0x970] sm:$0xff]
        %v441 = vld [vmem:[%s117 + $0x978] sm:$0xff]
        %v442 = vld [vmem:[%s117 + $0x980] sm:$0xff]
        %v443 = vld [vmem:[%s117 + $0x988] sm:$0xff]
        %v444 = vld [vmem:[%s117 + $0x990] sm:$0xff]
        %v445 = vld [vmem:[%s117 + $0x998] sm:$0xff]
        %v446 = vld [vmem:[%s117 + $0x9a0] sm:$0xff]
        %v447 = vld [vmem:[%s117 + $0x9a8] sm:$0xff]
        %v448 = vld [vmem:[%s117 + $0x9b0] sm:$0xff]
        %v449 = vld [vmem:[%s117 + $0x9b8] sm:$0xff]
        %v450 = vld [vmem:[%s117 + $0x9c0] sm:$0xff]
        %v451 = vld [vmem:[%s117 + $0x9c8] sm:$0xff]
        %v452 = vld [vmem:[%s117 + $0x9d0] sm:$0xff]
        %v453 = vld [vmem:[%s117 + $0x9d8] sm:$0xff]
        %v454 = vld [vmem:[%s117 + $0x9e0] sm:$0xff]
        %v455 = vld [vmem:[%s117 + $0x9e8] sm:$0xff]
        %v456 = vld [vmem:[%s117 + $0x9f0] sm:$0xff]
        %v457 = vld [vmem:[%s117 + $0x9f8] sm:$0xff]
        %v458 = vld [vmem:[%s117 + $0xa00] sm:$0xff]
        %v459 = vld [vmem:[%s117 + $0xa08] sm:$0xff]
        %v460 = vld [vmem:[%s117 + $0xa10] sm:$0xff]
        %v461 = vld [vmem:[%s117 + $0xa18] sm:$0xff]
        %v462 = vld [vmem:[%s117 + $0xa20] sm:$0xff]
        %v463 = vld [vmem:[%s117 + $0xa28] sm:$0xff]
        %v464 = vld [vmem:[%s117 + $0xa30] sm:$0xff]
        %v465 = vld [vmem:[%s117 + $0xa38] sm:$0xff]
        %v466 = vld [vmem:[%s117 + $0xa40] sm:$0xff]
        %v467 = vld [vmem:[%s117 + $0xa48] sm:$0xff]
        %v468 = vld [vmem:[%s117 + $0xa50] sm:$0xff]
        %v469 = vld [vmem:[%s117 + $0xa58] sm:$0xff]
        %v470 = vld [vmem:[%s117 + $0xa60] sm:$0xff]
        %v471 = vld [vmem:[%s117 + $0xa68] sm:$0xff]
        %v472 = vld [vmem:[%s117 + $0xa70] sm:$0xff]
        %v473 = vld [vmem:[%s117 + $0xa78] sm:$0xff]
        %v474 = vld [vmem:[%s117 + $0xa80] sm:$0xff]
        %v475 = vld [vmem:[%s117 + $0xa88] sm:$0xff]
        %v476 = vld [vmem:[%s117 + $0xa90] sm:$0xff]
        %v477 = vld [vmem:[%s117 + $0xa98] sm:$0xff]
        %v478 = vld [vmem:[%s117 + $0xaa0] sm:$0xff]
        %v479 = vld [vmem:[%s117 + $0xaa8] sm:$0xff]
        %v480 = vld [vmem:[%s117 + $0xab0] sm:$0xff]
        %v481 = vld [vmem:[%s117 + $0xab8] sm:$0xff]
        %v482 = vld [vmem:[%s117 + $0xac0] sm:$0xff]
        %v483 = vld [vmem:[%s117 + $0xac8] sm:$0xff]
        %v484 = vld [vmem:[%s117 + $0xad0] sm:$0xff]
        %v485 = vld [vmem:[%s117 + $0xad8] sm:$0xff]
        %v486 = vld [vmem:[%s117 + $0xae0] sm:$0xff]
        %v487 = vld [vmem:[%s117 + $0xae8] sm:$0xff]
        %v488 = vld [vmem:[%s117 + $0xaf0] sm:$0xff]
        %v489 = vld [vmem:[%s117 + $0xaf8] sm:$0xff]
        %v490 = vld [vmem:[%s117 + $0xb00] sm:$0xff]
        %v491 = vld [vmem:[%s117 + $0xb08] sm:$0xff]
        %v492 = vld [vmem:[%s117 + $0xb10] sm:$0xff]
        %v493 = vld [vmem:[%s117 + $0xb18] sm:$0xff]
        %v494 = vld [vmem:[%s117 + $0xb20] sm:$0xff]
        %v495 = vld [vmem:[%s117 + $0xb28] sm:$0xff]
        %v496 = vld [vmem:[%s117 + $0xb30] sm:$0xff]
        %v497 = vld [vmem:[%s117 + $0xb38] sm:$0xff]
        %v498 = vld [vmem:[%s117 + $0xb40] sm:$0xff]
        %v499 = vld [vmem:[%s117 + $0xb48] sm:$0xff]
        %v500 = vld [vmem:[%s117 + $0xb50] sm:$0xff]
        %v501 = vld [vmem:[%s117 + $0xb58] sm:$0xff]
        %v502 = vld [vmem:[%s117 + $0xb60] sm:$0xff]
        %v503 = vld [vmem:[%s117 + $0xb68] sm:$0xff]
        %v504 = vld [vmem:[%s117 + $0xb70] sm:$0xff]
        %v505 = vld [vmem:[%s117 + $0xb78] sm:$0xff]
        %v506 = vld [vmem:[%s117 + $0xb80] sm:$0xff]
        %v507 = vld [vmem:[%s117 + $0xb88] sm:$0xff]
        %v508 = vld [vmem:[%s117 + $0xb90] sm:$0xff]
        %v509 = vld [vmem:[%s117 + $0xb98] sm:$0xff]
        %v510 = vld [vmem:[%s117 + $0xba0] sm:$0xff]
        %v511 = vld [vmem:[%s117 + $0xba8] sm:$0xff]
        %v512 = vld [vmem:[%s117 + $0xbb0] sm:$0xff]
        %v513 = vld [vmem:[%s117 + $0xbb8] sm:$0xff]
        %v514 = vld [vmem:[%s117 + $0xbc0] sm:$0xff]
        %v515 = vld [vmem:[%s117 + $0xbc8] sm:$0xff]
        %v516 = vld [vmem:[%s117 + $0xbd0] sm:$0xff]
        %v517 = vld [vmem:[%s117 + $0xbd8] sm:$0xff]
        %v518 = vld [vmem:[%s117 + $0xbe0] sm:$0xff]
        %v519 = vld [vmem:[%s117 + $0xbe8] sm:$0xff]
        %v520 = vld [vmem:[%s117 + $0xbf0] sm:$0xff]
        %v521 = vld [vmem:[%s117 + $0xbf8] sm:$0xff]
        %v522 = vld [vmem:[%s117 + $0xc00] sm:$0xff]
        %v523 = vld [vmem:[%s117 + $0xc08] sm:$0xff]
        %v524 = vld [vmem:[%s117 + $0xc10] sm:$0xff]
        %v525 = vld [vmem:[%s117 + $0xc18] sm:$0xff]
        %v526 = vld [vmem:[%s117 + $0xc20] sm:$0xff]
        %v527 = vld [vmem:[%s117 + $0xc28] sm:$0xff]
        %v528 = vld [vmem:[%s117 + $0xc30] sm:$0xff]
        %v529 = vld [vmem:[%s117 + $0xc38] sm:$0xff]
        %v530 = vld [vmem:[%s117 + $0xc40] sm:$0xff]
        %v531 = vld [vmem:[%s117 + $0xc48] sm:$0xff]
        %v532 = vld [vmem:[%s117 + $0xc50] sm:$0xff]
        %v533 = vld [vmem:[%s117 + $0xc58] sm:$0xff]
        %v534 = vld [vmem:[%s117 + $0xc60] sm:$0xff]
        %v535 = vld [vmem:[%s117 + $0xc68] sm:$0xff]
        %v536 = vld [vmem:[%s117 + $0xc70] sm:$0xff]
        %v537 = vld [vmem:[%s117 + $0xc78] sm:$0xff]
        %v538 = vld [vmem:[%s117 + $0xc80] sm:$0xff]
        %v539 = vld [vmem:[%s117 + $0xc88] sm:$0xff]
        %v540 = vld [vmem:[%s117 + $0xc90] sm:$0xff]
        %v541 = vld [vmem:[%s117 + $0xc98] sm:$0xff]
        %v542 = vld [vmem:[%s117 + $0xca0] sm:$0xff]
        %v543 = vld [vmem:[%s117 + $0xca8] sm:$0xff]
        %v544 = vld [vmem:[%s117 + $0xcb0] sm:$0xff]
        %v545 = vld [vmem:[%s117 + $0xcb8] sm:$0xff]
        %v546 = vld [vmem:[%s117 + $0xcc0] sm:$0xff]
        %v547 = vld [vmem:[%s117 + $0xcc8] sm:$0xff]
        %v548 = vld [vmem:[%s117 + $0xcd0] sm:$0xff]
        %v549 = vld [vmem:[%s117 + $0xcd8] sm:$0xff]
        %v550 = vld [vmem:[%s117 + $0xce0] sm:$0xff]
        %v551 = vld [vmem:[%s117 + $0xce8] sm:$0xff]
        %v552 = vld [vmem:[%s117 + $0xcf0] sm:$0xff]
        %v553 = vld [vmem:[%s117 + $0xcf8] sm:$0xff]
        %v554 = vld [vmem:[%s117 + $0xd00] sm:$0xff]
        %v555 = vld [vmem:[%s117 + $0xd08] sm:$0xff]
        %v556 = vld [vmem:[%s117 + $0xd10] sm:$0xff]
        %v557 = vld [vmem:[%s117 + $0xd18] sm:$0xff]
        %v558 = vld [vmem:[%s117 + $0xd20] sm:$0xff]
        %v559 = vld [vmem:[%s117 + $0xd28] sm:$0xff]
        %v560 = vld [vmem:[%s117 + $0xd30] sm:$0xff]
        %v561 = vld [vmem:[%s117 + $0xd38] sm:$0xff]
        %v562 = vld [vmem:[%s117 + $0xd40] sm:$0xff]
        %v563 = vld [vmem:[%s117 + $0xd48] sm:$0xff]
        %v564 = vld [vmem:[%s117 + $0xd50] sm:$0xff]
        %v565 = vld [vmem:[%s117 + $0xd58] sm:$0xff]
        %v566 = vld [vmem:[%s117 + $0xd60] sm:$0xff]
        %v567 = vld [vmem:[%s117 + $0xd68] sm:$0xff]
        %v568 = vld [vmem:[%s117 + $0xd70] sm:$0xff]
        %v569 = vld [vmem:[%s117 + $0xd78] sm:$0xff]
        %v570 = vld [vmem:[%s117 + $0xd80] sm:$0xff]
        %v571 = vld [vmem:[%s117 + $0xd88] sm:$0xff]
        %v572 = vld [vmem:[%s117 + $0xd90] sm:$0xff]
        %v573 = vld [vmem:[%s117 + $0xd98] sm:$0xff]
        %v574 = vld [vmem:[%s117 + $0xda0] sm:$0xff]
        %v575 = vld [vmem:[%s117 + $0xda8] sm:$0xff]
        %v576 = vld [vmem:[%s117 + $0xdb0] sm:$0xff]
        %v577 = vld [vmem:[%s117 + $0xdb8] sm:$0xff]
        %v578 = vld [vmem:[%s117 + $0xdc0] sm:$0xff]
        %v579 = vld [vmem:[%s117 + $0xdc8] sm:$0xff]
        %v580 = vld [vmem:[%s117 + $0xdd0] sm:$0xff]
        %v581 = vld [vmem:[%s117 + $0xdd8] sm:$0xff]
        %v582 = vld [vmem:[%s117 + $0xde0] sm:$0xff]
        %v583 = vld [vmem:[%s117 + $0xde8] sm:$0xff]
        %v584 = vld [vmem:[%s117 + $0xdf0] sm:$0xff]
        %v585 = vld [vmem:[%s117 + $0xdf8] sm:$0xff]
        %v586 = vld [vmem:[%s117 + $0xe00] sm:$0xff]
        %v587 = vld [vmem:[%s117 + $0xe08] sm:$0xff]
        %v588 = vld [vmem:[%s117 + $0xe10] sm:$0xff]
        %v589 = vld [vmem:[%s117 + $0xe18] sm:$0xff]
        %v590 = vld [vmem:[%s117 + $0xe20] sm:$0xff]
        %v591 = vld [vmem:[%s117 + $0xe28] sm:$0xff]
        %v592 = vld [vmem:[%s117 + $0xe30] sm:$0xff]
        %v593 = vld [vmem:[%s117 + $0xe38] sm:$0xff]
        %v594 = vld [vmem:[%s117 + $0xe40] sm:$0xff]
        %v595 = vld [vmem:[%s117 + $0xe48] sm:$0xff]
        %v596 = vld [vmem:[%s117 + $0xe50] sm:$0xff]
        %v597 = vld [vmem:[%s117 + $0xe58] sm:$0xff]
        %v598 = vld [vmem:[%s117 + $0xe60] sm:$0xff]
        %v599 = vld [vmem:[%s117 + $0xe68] sm:$0xff]
        %v600 = vld [vmem:[%s117 + $0xe70] sm:$0xff]
        %v601 = vld [vmem:[%s117 + $0xe78] sm:$0xff]
        %v602 = vld [vmem:[%s117 + $0xe80] sm:$0xff]
        %v603 = vld [vmem:[%s117 + $0xe88] sm:$0xff]
        %v604 = vld [vmem:[%s117 + $0xe90] sm:$0xff]
        %v605 = vld [vmem:[%s117 + $0xe98] sm:$0xff]
        %v606 = vld [vmem:[%s117 + $0xea0] sm:$0xff]
        %v607 = vld [vmem:[%s117 + $0xea8] sm:$0xff]
        %v608 = vld [vmem:[%s117 + $0xeb0] sm:$0xff]
        %v609 = vld [vmem:[%s117 + $0xeb8] sm:$0xff]
        %v610 = vld [vmem:[%s117 + $0xec0] sm:$0xff]
        %v611 = vld [vmem:[%s117 + $0xec8] sm:$0xff]
        %v612 = vld [vmem:[%s117 + $0xed0] sm:$0xff]
        %v613 = vld [vmem:[%s117 + $0xed8] sm:$0xff]
        %v614 = vld [vmem:[%s117 + $0xee0] sm:$0xff]
        %v615 = vld [vmem:[%s117 + $0xee8] sm:$0xff]
        %v616 = vld [vmem:[%s117 + $0xef0] sm:$0xff]
        %v617 = vld [vmem:[%s117 + $0xef8] sm:$0xff]
        %v618 = vld [vmem:[%s117 + $0xf00] sm:$0xff]
        %v619 = vld [vmem:[%s117 + $0xf08] sm:$0xff]
        %v620 = vld [vmem:[%s117 + $0xf10] sm:$0xff]
        %v621 = vld [vmem:[%s117 + $0xf18] sm:$0xff]
        %v622 = vld [vmem:[%s117 + $0xf20] sm:$0xff]
        %v623 = vld [vmem:[%s117 + $0xf28] sm:$0xff]
        %v624 = vld [vmem:[%s117 + $0xf30] sm:$0xff]
        %v625 = vld [vmem:[%s117 + $0xf38] sm:$0xff]
        %v626 = vld [vmem:[%s117 + $0xf40] sm:$0xff]
        %v627 = vld [vmem:[%s117 + $0xf48] sm:$0xff]
        %v628 = vld [vmem:[%s117 + $0xf50] sm:$0xff]
        %v629 = vld [vmem:[%s117 + $0xf58] sm:$0xff]
        %v630 = vld [vmem:[%s117 + $0xf60] sm:$0xff]
        %v631 = vld [vmem:[%s117 + $0xf68] sm:$0xff]
        %v632 = vld [vmem:[%s117 + $0xf70] sm:$0xff]
        %v633 = vld [vmem:[%s117 + $0xf78] sm:$0xff]
        %v634 = vld [vmem:[%s117 + $0xf80] sm:$0xff]
        %v635 = vld [vmem:[%s117 + $0xf88] sm:$0xff]
        %v636 = vld [vmem:[%s117 + $0xf90] sm:$0xff]
        %v637 = vld [vmem:[%s117 + $0xf98] sm:$0xff]
        %v638 = vld [vmem:[%s117 + $0xfa0] sm:$0xff]
        %v639 = vld [vmem:[%s117 + $0xfa8] sm:$0xff]
        %v640 = vld [vmem:[%s117 + $0xfb0] sm:$0xff]
        %v641 = vld [vmem:[%s117 + $0xfb8] sm:$0xff]
        %v642 = vld [vmem:[%s117 + $0xfc0] sm:$0xff]
        %v643 = vld [vmem:[%s117 + $0xfc8] sm:$0xff]
        %v644 = vld [vmem:[%s117 + $0xfd0] sm:$0xff]
        %v645 = vld [vmem:[%s117 + $0xfd8] sm:$0xff]
        %v646 = vld [vmem:[%s117 + $0xfe0] sm:$0xff]
        %v647 = vld [vmem:[%s117 + $0xfe8] sm:$0xff]
        %v648 = vld [vmem:[%s117 + $0xff0] sm:$0xff]
        %v649 = vld [vmem:[%s117 + $0xff8] sm:$0xff]
        %v650 = vld [vmem:[%s117 + $0x1000] sm:$0xff]
        %v651 = vld [vmem:[%s117 + $0x1008] sm:$0xff]
        %v652 = vld [vmem:[%s117 + $0x1010] sm:$0xff]
        %v653 = vld [vmem:[%s117 + $0x1018] sm:$0xff]
        %v654 = vld [vmem:[%s117 + $0x1020] sm:$0xff]
        %v655 = vld [vmem:[%s117 + $0x1028] sm:$0xff]
        %v656 = vld [vmem:[%s117 + $0x1030] sm:$0xff]
        %v657 = vld [vmem:[%s117 + $0x1038] sm:$0xff]
        %v658 = vld [vmem:[%s117 + $0x1040] sm:$0xff]
        %v659 = vld [vmem:[%s117 + $0x1048] sm:$0xff]
        %v660 = vld [vmem:[%s117 + $0x1050] sm:$0xff]
        %v661 = vld [vmem:[%s117 + $0x1058] sm:$0xff]
        %v662 = vld [vmem:[%s117 + $0x1060] sm:$0xff]
        %v663 = vld [vmem:[%s117 + $0x1068] sm:$0xff]
        %v664 = vld [vmem:[%s117 + $0x1070] sm:$0xff]
        %v665 = vld [vmem:[%s117 + $0x1078] sm:$0xff]
        %v666 = vld [vmem:[%s117 + $0x1080] sm:$0xff]
        %v667 = vld [vmem:[%s117 + $0x1088] sm:$0xff]
        %v668 = vld [vmem:[%s117 + $0x1090] sm:$0xff]
        %v669 = vld [vmem:[%s117 + $0x1098] sm:$0xff]
        %v670 = vld [vmem:[%s117 + $0x10a0] sm:$0xff]
        %v671 = vld [vmem:[%s117 + $0x10a8] sm:$0xff]
        %v672 = vld [vmem:[%s117 + $0x10b0] sm:$0xff]
        %v673 = vld [vmem:[%s117 + $0x10b8] sm:$0xff]
        %v674 = vld [vmem:[%s117 + $0x10c0] sm:$0xff]
        %v675 = vld [vmem:[%s117 + $0x10c8] sm:$0xff]
        %v676 = vld [vmem:[%s117 + $0x10d0] sm:$0xff]
        %v677 = vld [vmem:[%s117 + $0x10d8] sm:$0xff]
        %v678 = vld [vmem:[%s117 + $0x10e0] sm:$0xff]
        %v679 = vld [vmem:[%s117 + $0x10e8] sm:$0xff]
        %v680 = vld [vmem:[%s117 + $0x10f0] sm:$0xff]
        %v681 = vld [vmem:[%s117 + $0x10f8] sm:$0xff]
        %v682 = vld [vmem:[%s117 + $0x1100] sm:$0xff]
        %v683 = vld [vmem:[%s117 + $0x1108] sm:$0xff]
        %v684 = vld [vmem:[%s117 + $0x1110] sm:$0xff]
        %v685 = vld [vmem:[%s117 + $0x1118] sm:$0xff]
        %v686 = vld [vmem:[%s117 + $0x1120] sm:$0xff]
        %v687 = vld [vmem:[%s117 + $0x1128] sm:$0xff]
        %v688 = vld [vmem:[%s117 + $0x1130] sm:$0xff]
        %v689 = vld [vmem:[%s117 + $0x1138] sm:$0xff]
        %v690 = vld [vmem:[%s117 + $0x1140] sm:$0xff]
        %v691 = vld [vmem:[%s117 + $0x1148] sm:$0xff]
        %v692 = vld [vmem:[%s117 + $0x1150] sm:$0xff]
        %v693 = vld [vmem:[%s117 + $0x1158] sm:$0xff]
        %v694 = vld [vmem:[%s117 + $0x1160] sm:$0xff]
        %v695 = vld [vmem:[%s117 + $0x1168] sm:$0xff]
        %v696 = vld [vmem:[%s117 + $0x1170] sm:$0xff]
        %v697 = vld [vmem:[%s117 + $0x1178] sm:$0xff]
        %v698 = vld [vmem:[%s117 + $0x1180] sm:$0xff]
        %v699 = vld [vmem:[%s117 + $0x1188] sm:$0xff]
        %v700 = vld [vmem:[%s117 + $0x1190] sm:$0xff]
        %v701 = vld [vmem:[%s117 + $0x1198] sm:$0xff]
        %v702 = vld [vmem:[%s117 + $0x11a0] sm:$0xff]
        %v703 = vld [vmem:[%s117 + $0x11a8] sm:$0xff]
        %v704 = vld [vmem:[%s117 + $0x11b0] sm:$0xff]
        %v705 = vld [vmem:[%s117 + $0x11b8] sm:$0xff]
        %v706 = vld [vmem:[%s117 + $0x11c0] sm:$0xff]
        %v707 = vld [vmem:[%s117 + $0x11c8] sm:$0xff]
        %v708 = vld [vmem:[%s117 + $0x11d0] sm:$0xff]
        %v709 = vld [vmem:[%s117 + $0x11d8] sm:$0xff]
        %v710 = vld [vmem:[%s117 + $0x11e0] sm:$0xff]
        %v711 = vld [vmem:[%s117 + $0x11e8] sm:$0xff]
        %v712 = vld [vmem:[%s117 + $0x11f0] sm:$0xff]
        %v713 = vld [vmem:[%s117 + $0x11f8] sm:$0xff]
        %v714 = vld [vmem:[%s117 + $0x1200] sm:$0xff]
        %v715 = vld [vmem:[%s117 + $0x1208] sm:$0xff]
        %v716 = vld [vmem:[%s117 + $0x1210] sm:$0xff]
        %v717 = vld [vmem:[%s117 + $0x1218] sm:$0xff]
        %v718 = vld [vmem:[%s117 + $0x1220] sm:$0xff]
        %v719 = vld [vmem:[%s117 + $0x1228] sm:$0xff]
        %v720 = vld [vmem:[%s117 + $0x1230] sm:$0xff]
        %v721 = vld [vmem:[%s117 + $0x1238] sm:$0xff]
        %v722 = vld [vmem:[%s117 + $0x1240] sm:$0xff]
        %v723 = vld [vmem:[%s117 + $0x1248] sm:$0xff]
        %v724 = vld [vmem:[%s117 + $0x1250] sm:$0xff]
        %v725 = vld [vmem:[%s117 + $0x1258] sm:$0xff]
        %v726 = vld [vmem:[%s117 + $0x1260] sm:$0xff]
        %v727 = vld [vmem:[%s117 + $0x1268] sm:$0xff]
        %v728 = vld [vmem:[%s117 + $0x1270] sm:$0xff]
        %v729 = vld [vmem:[%s117 + $0x1278] sm:$0xff]
        %v730 = vld [vmem:[%s117 + $0x1280] sm:$0xff]
        %v731 = vld [vmem:[%s117 + $0x1288] sm:$0xff]
        %v732 = vld [vmem:[%s117 + $0x1290] sm:$0xff]
        %v733 = vld [vmem:[%s117 + $0x1298] sm:$0xff]
        %v734 = vld [vmem:[%s117 + $0x12a0] sm:$0xff]
        %v735 = vld [vmem:[%s117 + $0x12a8] sm:$0xff]
        %v736 = vld [vmem:[%s117 + $0x12b0] sm:$0xff]
        %v737 = vld [vmem:[%s117 + $0x12b8] sm:$0xff]
        %v738 = vld [vmem:[%s117 + $0x12c0] sm:$0xff]
        %v739 = vld [vmem:[%s117 + $0x12c8] sm:$0xff]
        %v740 = vld [vmem:[%s117 + $0x12d0] sm:$0xff]
        %v741 = vld [vmem:[%s117 + $0x12d8] sm:$0xff]
        %v742 = vld [vmem:[%s117 + $0x12e0] sm:$0xff]
        %v743 = vld [vmem:[%s117 + $0x12e8] sm:$0xff]
        %v744 = vld [vmem:[%s117 + $0x12f0] sm:$0xff]
        %v745 = vld [vmem:[%s117 + $0x12f8] sm:$0xff]
        %v746 = vld [vmem:[%s117 + $0x1300] sm:$0xff]
        %v747 = vld [vmem:[%s117 + $0x1308] sm:$0xff]
        %v748 = vld [vmem:[%s117 + $0x1310] sm:$0xff]
        %v749 = vld [vmem:[%s117 + $0x1318] sm:$0xff]
        %v750 = vld [vmem:[%s117 + $0x1320] sm:$0xff]
        %v751 = vld [vmem:[%s117 + $0x1328] sm:$0xff]
        %v752 = vld [vmem:[%s117 + $0x1330] sm:$0xff]
        %v753 = vld [vmem:[%s117 + $0x1338] sm:$0xff]
        %v754 = vld [vmem:[%s117 + $0x1340] sm:$0xff]
        %v755 = vld [vmem:[%s117 + $0x1348] sm:$0xff]
        %v756 = vld [vmem:[%s117 + $0x1350] sm:$0xff]
        %v757 = vld [vmem:[%s117 + $0x1358] sm:$0xff]
        %v758 = vld [vmem:[%s117 + $0x1360] sm:$0xff]
        %v759 = vld [vmem:[%s117 + $0x1368] sm:$0xff]
        %v760 = vld [vmem:[%s117 + $0x1370] sm:$0xff]
        %v761 = vld [vmem:[%s117 + $0x1378] sm:$0xff]
        %v762 = vld [vmem:[%s117 + $0x1380] sm:$0xff]
        %v763 = vld [vmem:[%s117 + $0x1388] sm:$0xff]
        %v764 = vld [vmem:[%s117 + $0x1390] sm:$0xff]
        %v765 = vld [vmem:[%s117 + $0x1398] sm:$0xff]
        %v766 = vld [vmem:[%s117 + $0x13a0] sm:$0xff]
        %v767 = vld [vmem:[%s117 + $0x13a8] sm:$0xff]
        %v768 = vld [vmem:[%s117 + $0x13b0] sm:$0xff]
        %v769 = vld [vmem:[%s117 + $0x13b8] sm:$0xff]
        %v770 = vld [vmem:[%s117 + $0x13c0] sm:$0xff]
        %v771 = vld [vmem:[%s117 + $0x13c8] sm:$0xff]
        %v772 = vld [vmem:[%s117 + $0x13d0] sm:$0xff]
        %v773 = vld [vmem:[%s117 + $0x13d8] sm:$0xff]
        %v774 = vld [vmem:[%s117 + $0x13e0] sm:$0xff]
        %v775 = vld [vmem:[%s117 + $0x13e8] sm:$0xff]
        %v776 = vld [vmem:[%s117 + $0x13f0] sm:$0xff]
        %v777 = vld [vmem:[%s117 + $0x13f8] sm:$0xff]
        %v778 = vld [vmem:[%s117 + $0x1400] sm:$0xff]
        %v779 = vld [vmem:[%s117 + $0x1408] sm:$0xff]
        %v780 = vld [vmem:[%s117 + $0x1410] sm:$0xff]
        %v781 = vld [vmem:[%s117 + $0x1418] sm:$0xff]
        %v782 = vld [vmem:[%s117 + $0x1420] sm:$0xff]
        %v783 = vld [vmem:[%s117 + $0x1428] sm:$0xff]
        %v784 = vld [vmem:[%s117 + $0x1430] sm:$0xff]
        %v785 = vld [vmem:[%s117 + $0x1438] sm:$0xff]
        %v786 = vld [vmem:[%s117 + $0x1440] sm:$0xff]
        %v787 = vld [vmem:[%s117 + $0x1448] sm:$0xff]
        %v788 = vld [vmem:[%s117 + $0x1450] sm:$0xff]
        %v789 = vld [vmem:[%s117 + $0x1458] sm:$0xff]
        %v790 = vld [vmem:[%s117 + $0x1460] sm:$0xff]
        %v791 = vld [vmem:[%s117 + $0x1468] sm:$0xff]
        %v792 = vld [vmem:[%s117 + $0x1470] sm:$0xff]
        %v793 = vld [vmem:[%s117 + $0x1478] sm:$0xff]
        %v794 = vld [vmem:[%s117 + $0x1480] sm:$0xff]
        %v795 = vld [vmem:[%s117 + $0x1488] sm:$0xff]
        %v796 = vld [vmem:[%s117 + $0x1490] sm:$0xff]
        %v797 = vld [vmem:[%s117 + $0x1498] sm:$0xff]
        %v798 = vld [vmem:[%s117 + $0x14a0] sm:$0xff]
        %v799 = vld [vmem:[%s117 + $0x14a8] sm:$0xff]
        %v800 = vld [vmem:[%s117 + $0x14b0] sm:$0xff]
        %v801 = vld [vmem:[%s117 + $0x14b8] sm:$0xff]
        %v802 = vld [vmem:[%s117 + $0x14c0] sm:$0xff]
        %v803 = vld [vmem:[%s117 + $0x14c8] sm:$0xff]
        %v804 = vld [vmem:[%s117 + $0x14d0] sm:$0xff]
        %v805 = vld [vmem:[%s117 + $0x14d8] sm:$0xff]
        %v806 = vld [vmem:[%s117 + $0x14e0] sm:$0xff]
        %v807 = vld [vmem:[%s117 + $0x14e8] sm:$0xff]
        %v808 = vld [vmem:[%s117 + $0x14f0] sm:$0xff]
        %v809 = vld [vmem:[%s117 + $0x14f8] sm:$0xff]
        %v810 = vld [vmem:[%s117 + $0x1500] sm:$0xff]
        %v811 = vld [vmem:[%s117 + $0x1508] sm:$0xff]
        %v812 = vld [vmem:[%s117 + $0x1510] sm:$0xff]
        %v813 = vld [vmem:[%s117 + $0x1518] sm:$0xff]
        %v814 = vld [vmem:[%s117 + $0x1520] sm:$0xff]
        %v815 = vld [vmem:[%s117 + $0x1528] sm:$0xff]
        %v816 = vld [vmem:[%s117 + $0x1530] sm:$0xff]
        %v817 = vld [vmem:[%s117 + $0x1538] sm:$0xff]
        %v818 = vld [vmem:[%s117 + $0x1540] sm:$0xff]
        %v819 = vld [vmem:[%s117 + $0x1548] sm:$0xff]
        %v820 = vld [vmem:[%s117 + $0x1550] sm:$0xff]
        %v821 = vld [vmem:[%s117 + $0x1558] sm:$0xff]
        %v822 = vld [vmem:[%s117 + $0x1560] sm:$0xff]
        %v823 = vld [vmem:[%s117 + $0x1568] sm:$0xff]
        %v824 = vld [vmem:[%s117 + $0x1570] sm:$0xff]
        %v825 = vld [vmem:[%s117 + $0x1578] sm:$0xff]
        %v826 = vld [vmem:[%s117 + $0x1580] sm:$0xff]
        %v827 = vld [vmem:[%s117 + $0x1588] sm:$0xff]
        %v828 = vld [vmem:[%s117 + $0x1590] sm:$0xff]
        %v829 = vld [vmem:[%s117 + $0x1598] sm:$0xff]
        %v830 = vld [vmem:[%s117 + $0x15a0] sm:$0xff]
        %v831 = vld [vmem:[%s117 + $0x15a8] sm:$0xff]
        %v832 = vld [vmem:[%s117 + $0x15b0] sm:$0xff]
        %v833 = vld [vmem:[%s117 + $0x15b8] sm:$0xff]
        %v834 = vld [vmem:[%s117 + $0x15c0] sm:$0xff]
        %v835 = vld [vmem:[%s117 + $0x15c8] sm:$0xff]
        %v836 = vld [vmem:[%s117 + $0x15d0] sm:$0xff]
        %v837 = vld [vmem:[%s117 + $0x15d8] sm:$0xff]
        %v838 = vld [vmem:[%s117 + $0x15e0] sm:$0xff]
        %v839 = vld [vmem:[%s117 + $0x15e8] sm:$0xff]
        %v840 = vld [vmem:[%s117 + $0x15f0] sm:$0xff]
        %v841 = vld [vmem:[%s117 + $0x15f8] sm:$0xff]
        %v842 = vld [vmem:[%s117 + $0x1600] sm:$0xff]
        %v843 = vld [vmem:[%s117 + $0x1608] sm:$0xff]
        %v844 = vld [vmem:[%s117 + $0x1610] sm:$0xff]
        %v845 = vld [vmem:[%s117 + $0x1618] sm:$0xff]
        %v846 = vld [vmem:[%s117 + $0x1620] sm:$0xff]
        %v847 = vld [vmem:[%s117 + $0x1628] sm:$0xff]
        %v848 = vld [vmem:[%s117 + $0x1630] sm:$0xff]
        %v849 = vld [vmem:[%s117 + $0x1638] sm:$0xff]
        %v850 = vld [vmem:[%s117 + $0x1640] sm:$0xff]
        %v851 = vld [vmem:[%s117 + $0x1648] sm:$0xff]
        %v852 = vld [vmem:[%s117 + $0x1650] sm:$0xff]
        %v853 = vld [vmem:[%s117 + $0x1658] sm:$0xff]
        %v854 = vld [vmem:[%s117 + $0x1660] sm:$0xff]
        %v855 = vld [vmem:[%s117 + $0x1668] sm:$0xff]
        %v856 = vld [vmem:[%s117 + $0x1670] sm:$0xff]
        %v857 = vld [vmem:[%s117 + $0x1678] sm:$0xff]
        %v858 = vld [vmem:[%s117 + $0x1680] sm:$0xff]
        %v859 = vld [vmem:[%s117 + $0x1688] sm:$0xff]
        %v860 = vld [vmem:[%s117 + $0x1690] sm:$0xff]
        %v861 = vld [vmem:[%s117 + $0x1698] sm:$0xff]
        %v862 = vld [vmem:[%s117 + $0x16a0] sm:$0xff]
        %v863 = vld [vmem:[%s117 + $0x16a8] sm:$0xff]
        %v864 = vld [vmem:[%s117 + $0x16b0] sm:$0xff]
        %v865 = vld [vmem:[%s117 + $0x16b8] sm:$0xff]
        %v866 = vld [vmem:[%s117 + $0x16c0] sm:$0xff]
        %v867 = vld [vmem:[%s117 + $0x16c8] sm:$0xff]
        %v868 = vld [vmem:[%s117 + $0x16d0] sm:$0xff]
        %v869 = vld [vmem:[%s117 + $0x16d8] sm:$0xff]
        %v870 = vld [vmem:[%s117 + $0x16e0] sm:$0xff]
        %v871 = vld [vmem:[%s117 + $0x16e8] sm:$0xff]
        %v872 = vld [vmem:[%s117 + $0x16f0] sm:$0xff]
        %v873 = vld [vmem:[%s117 + $0x16f8] sm:$0xff]
        %v874 = vld [vmem:[%s117 + $0x1700] sm:$0xff]
        %v875 = vld [vmem:[%s117 + $0x1708] sm:$0xff]
        %v876 = vld [vmem:[%s117 + $0x1710] sm:$0xff]
        %v877 = vld [vmem:[%s117 + $0x1718] sm:$0xff]
        %v878 = vld [vmem:[%s117 + $0x1720] sm:$0xff]
        %v879 = vld [vmem:[%s117 + $0x1728] sm:$0xff]
        %v880 = vld [vmem:[%s117 + $0x1730] sm:$0xff]
        %v881 = vld [vmem:[%s117 + $0x1738] sm:$0xff]
        %v882 = vld [vmem:[%s117 + $0x1740] sm:$0xff]
        %v883 = vld [vmem:[%s117 + $0x1748] sm:$0xff]
        %v884 = vld [vmem:[%s117 + $0x1750] sm:$0xff]
        %v885 = vld [vmem:[%s117 + $0x1758] sm:$0xff]
        %v886 = vld [vmem:[%s117 + $0x1760] sm:$0xff]
        %v887 = vld [vmem:[%s117 + $0x1768] sm:$0xff]
        %v888 = vld [vmem:[%s117 + $0x1770] sm:$0xff]
        %v889 = vld [vmem:[%s117 + $0x1778] sm:$0xff]
        %v890 = vld [vmem:[%s117 + $0x1780] sm:$0xff]
        %v891 = vld [vmem:[%s117 + $0x1788] sm:$0xff]
        %v892 = vld [vmem:[%s117 + $0x1790] sm:$0xff]
        %v893 = vld [vmem:[%s117 + $0x1798] sm:$0xff]
        %v894 = vld [vmem:[%s117 + $0x17a0] sm:$0xff]
        %v895 = vld [vmem:[%s117 + $0x17a8] sm:$0xff]
        %v896 = vld [vmem:[%s117 + $0x17b0] sm:$0xff]
        %v897 = vld [vmem:[%s117 + $0x17b8] sm:$0xff]
        %v898 = vld [vmem:[%s117 + $0x17c0] sm:$0xff]
        %v899 = vld [vmem:[%s117 + $0x17c8] sm:$0xff]
        %v900 = vld [vmem:[%s117 + $0x17d0] sm:$0xff]
        %v901 = vld [vmem:[%s117 + $0x17d8] sm:$0xff]
        %v902 = vld [vmem:[%s117 + $0x17e0] sm:$0xff]
        %v903 = vld [vmem:[%s117 + $0x17e8] sm:$0xff]
        %v904 = vld [vmem:[%s117 + $0x17f0] sm:$0xff]
        %v905 = vld [vmem:[%s117 + $0x17f8] sm:$0xff]
        %v906 = vld [vmem:[%s117 + $0x1800] sm:$0xff]
        %v907 = vld [vmem:[%s117 + $0x1808] sm:$0xff]
        %v908 = vld [vmem:[%s117 + $0x1810] sm:$0xff]
        %v909 = vld [vmem:[%s117 + $0x1818] sm:$0xff]
        %v910 = vld [vmem:[%s117 + $0x1820] sm:$0xff]
        %v911 = vld [vmem:[%s117 + $0x1828] sm:$0xff]
        %v912 = vld [vmem:[%s117 + $0x1830] sm:$0xff]
        %v913 = vld [vmem:[%s117 + $0x1838] sm:$0xff]
        %v914 = vld [vmem:[%s117 + $0x1840] sm:$0xff]
        %v915 = vld [vmem:[%s117 + $0x1848] sm:$0xff]
        %v916 = vld [vmem:[%s117 + $0x1850] sm:$0xff]
        %v917 = vld [vmem:[%s117 + $0x1858] sm:$0xff]
        %v918 = vld [vmem:[%s117 + $0x1860] sm:$0xff]
        %v919 = vld [vmem:[%s117 + $0x1868] sm:$0xff]
        %v920 = vld [vmem:[%s117 + $0x1870] sm:$0xff]
        %v921 = vld [vmem:[%s117 + $0x1878] sm:$0xff]
        %v922 = vld [vmem:[%s117 + $0x1880] sm:$0xff]
        %v923 = vld [vmem:[%s117 + $0x1888] sm:$0xff]
        %v924 = vld [vmem:[%s117 + $0x1890] sm:$0xff]
        %v925 = vld [vmem:[%s117 + $0x1898] sm:$0xff]
        %v926 = vld [vmem:[%s117 + $0x18a0] sm:$0xff]
        %v927 = vld [vmem:[%s117 + $0x18a8] sm:$0xff]
        %v928 = vld [vmem:[%s117 + $0x18b0] sm:$0xff]
        %v929 = vld [vmem:[%s117 + $0x18b8] sm:$0xff]
        %v930 = vld [vmem:[%s117 + $0x18c0] sm:$0xff]
        %v931 = vld [vmem:[%s117 + $0x18c8] sm:$0xff]
        %v932 = vld [vmem:[%s117 + $0x18d0] sm:$0xff]
        %v933 = vld [vmem:[%s117 + $0x18d8] sm:$0xff]
        %v934 = vld [vmem:[%s117 + $0x18e0] sm:$0xff]
        %v935 = vld [vmem:[%s117 + $0x18e8] sm:$0xff]
        %v936 = vld [vmem:[%s117 + $0x18f0] sm:$0xff]
        %v937 = vld [vmem:[%s117 + $0x18f8] sm:$0xff]
        %v938 = vld [vmem:[%s117 + $0x1900] sm:$0xff]
        %v939 = vld [vmem:[%s117 + $0x1908] sm:$0xff]
        %v940 = vld [vmem:[%s117 + $0x1910] sm:$0xff]
        %v941 = vld [vmem:[%s117 + $0x1918] sm:$0xff]
        %v942 = vld [vmem:[%s117 + $0x1920] sm:$0xff]
        %v943 = vld [vmem:[%s117 + $0x1928] sm:$0xff]
        %v944 = vld [vmem:[%s117 + $0x1930] sm:$0xff]
        %v945 = vld [vmem:[%s117 + $0x1938] sm:$0xff]
        %v946 = vld [vmem:[%s117 + $0x1940] sm:$0xff]
        %v947 = vld [vmem:[%s117 + $0x1948] sm:$0xff]
        %v948 = vld [vmem:[%s117 + $0x1950] sm:$0xff]
        %v949 = vld [vmem:[%s117 + $0x1958] sm:$0xff]
        %v950 = vld [vmem:[%s117 + $0x1960] sm:$0xff]
        %v951 = vld [vmem:[%s117 + $0x1968] sm:$0xff]
        %v952 = vld [vmem:[%s117 + $0x1970] sm:$0xff]
        %v953 = vld [vmem:[%s117 + $0x1978] sm:$0xff]
        %v954 = vld [vmem:[%s117 + $0x1980] sm:$0xff]
        %v955 = vld [vmem:[%s117 + $0x1988] sm:$0xff]
        %v956 = vld [vmem:[%s117 + $0x1990] sm:$0xff]
        %v957 = vld [vmem:[%s117 + $0x1998] sm:$0xff]
        %v958 = vld [vmem:[%s117 + $0x19a0] sm:$0xff]
        %v959 = vld [vmem:[%s117 + $0x19a8] sm:$0xff]
        %v960 = vld [vmem:[%s117 + $0x19b0] sm:$0xff]
        %v961 = vld [vmem:[%s117 + $0x19b8] sm:$0xff]
        %v962 = vld [vmem:[%s117 + $0x19c0] sm:$0xff]
        %v963 = vld [vmem:[%s117 + $0x19c8] sm:$0xff]
        %v964 = vld [vmem:[%s117 + $0x19d0] sm:$0xff]
        %v965 = vld [vmem:[%s117 + $0x19d8] sm:$0xff]
        %v966 = vld [vmem:[%s117 + $0x19e0] sm:$0xff]
        %v967 = vld [vmem:[%s117 + $0x19e8] sm:$0xff]
        %v968 = vld [vmem:[%s117 + $0x19f0] sm:$0xff]
        %v969 = vld [vmem:[%s117 + $0x19f8] sm:$0xff]
        %v970 = vld [vmem:[%s117 + $0x1a00] sm:$0xff]
        %v971 = vld [vmem:[%s117 + $0x1a08] sm:$0xff]
        %v972 = vld [vmem:[%s117 + $0x1a10] sm:$0xff]
        %v973 = vld [vmem:[%s117 + $0x1a18] sm:$0xff]
        %v974 = vld [vmem:[%s117 + $0x1a20] sm:$0xff]
        %v975 = vld [vmem:[%s117 + $0x1a28] sm:$0xff]
        %v976 = vld [vmem:[%s117 + $0x1a30] sm:$0xff]
        %v977 = vld [vmem:[%s117 + $0x1a38] sm:$0xff]
        %v978 = vld [vmem:[%s117 + $0x1a40] sm:$0xff]
        %v979 = vld [vmem:[%s117 + $0x1a48] sm:$0xff]
        %v980 = vld [vmem:[%s117 + $0x1a50] sm:$0xff]
        %v981 = vld [vmem:[%s117 + $0x1a58] sm:$0xff]
        %v982 = vld [vmem:[%s117 + $0x1a60] sm:$0xff]
        %v983 = vld [vmem:[%s117 + $0x1a68] sm:$0xff]
        %v984 = vld [vmem:[%s117 + $0x1a70] sm:$0xff]
        %v985 = vld [vmem:[%s117 + $0x1a78] sm:$0xff]
        %v986 = vld [vmem:[%s117 + $0x1a80] sm:$0xff]
        %v987 = vld [vmem:[%s117 + $0x1a88] sm:$0xff]
        %v988 = vld [vmem:[%s117 + $0x1a90] sm:$0xff]
        %v989 = vld [vmem:[%s117 + $0x1a98] sm:$0xff]
        %v990 = vld [vmem:[%s117 + $0x1aa0] sm:$0xff]
        %v991 = vld [vmem:[%s117 + $0x1aa8] sm:$0xff]
        %v992 = vld [vmem:[%s117 + $0x1ab0] sm:$0xff]
        %v993 = vld [vmem:[%s117 + $0x1ab8] sm:$0xff]
        %v994 = vld [vmem:[%s117 + $0x1ac0] sm:$0xff]
        %v995 = vld [vmem:[%s117 + $0x1ac8] sm:$0xff]
        %v996 = vld [vmem:[%s117 + $0x1ad0] sm:$0xff]
        %v997 = vld [vmem:[%s117 + $0x1ad8] sm:$0xff]
        %v998 = vld [vmem:[%s117 + $0x1ae0] sm:$0xff]
        %v999 = vld [vmem:[%s117 + $0x1ae8] sm:$0xff]
        %v1000 = vld [vmem:[%s117 + $0x1af0] sm:$0xff]
        %v1001 = vld [vmem:[%s117 + $0x1af8] sm:$0xff]
        %v1002 = vld [vmem:[%s117 + $0x1b00] sm:$0xff]
        %v1003 = vld [vmem:[%s117 + $0x1b08] sm:$0xff]
        %v1004 = vld [vmem:[%s117 + $0x1b10] sm:$0xff]
        %v1005 = vld [vmem:[%s117 + $0x1b18] sm:$0xff]
        %v1006 = vld [vmem:[%s117 + $0x1b20] sm:$0xff]
        %v1007 = vld [vmem:[%s117 + $0x1b28] sm:$0xff]
        %v1008 = vld [vmem:[%s117 + $0x1b30] sm:$0xff]
        %v1009 = vld [vmem:[%s117 + $0x1b38] sm:$0xff]
        %v1010 = vld [vmem:[%s117 + $0x1b40] sm:$0xff]
        %v1011 = vld [vmem:[%s117 + $0x1b48] sm:$0xff]
        %v1012 = vld [vmem:[%s117 + $0x1b50] sm:$0xff]
        %v1013 = vld [vmem:[%s117 + $0x1b58] sm:$0xff]
        %v1014 = vld [vmem:[%s117 + $0x1b60] sm:$0xff]
        %v1015 = vld [vmem:[%s117 + $0x1b68] sm:$0xff]
        %v1016 = vld [vmem:[%s117 + $0x1b70] sm:$0xff]
        %v1017 = vld [vmem:[%s117 + $0x1b78] sm:$0xff]
        %v1018 = vld [vmem:[%s117 + $0x1b80] sm:$0xff]
        %v1019 = vld [vmem:[%s117 + $0x1b88] sm:$0xff]
        %v1020 = vld [vmem:[%s117 + $0x1b90] sm:$0xff]
        %v1021 = vld [vmem:[%s117 + $0x1b98] sm:$0xff]
        %v1022 = vld [vmem:[%s117 + $0x1ba0] sm:$0xff]
        %v1023 = vld [vmem:[%s117 + $0x1ba8] sm:$0xff]
        %v1024 = vld [vmem:[%s117 + $0x1bb0] sm:$0xff]
        %v1025 = vld [vmem:[%s117 + $0x1bb8] sm:$0xff]
        %v1026 = vld [vmem:[%s117 + $0x1bc0] sm:$0xff]
        %v1027 = vld [vmem:[%s117 + $0x1bc8] sm:$0xff]
        %v1028 = vld [vmem:[%s117 + $0x1bd0] sm:$0xff]
        %v1029 = vld [vmem:[%s117 + $0x1bd8] sm:$0xff]
        %v1030 = vld [vmem:[%s117 + $0x1be0] sm:$0xff]
        %v1031 = vld [vmem:[%s117 + $0x1be8] sm:$0xff]
        %v1032 = vld [vmem:[%s117 + $0x1bf0] sm:$0xff]
        %v1033 = vld [vmem:[%s117 + $0x1bf8] sm:$0xff]
        %v1034 = vld [vmem:[%s117 + $0x1c00] sm:$0xff]
        %v1035 = vld [vmem:[%s117 + $0x1c08] sm:$0xff]
        %v1036 = vld [vmem:[%s117 + $0x1c10] sm:$0xff]
        %v1037 = vld [vmem:[%s117 + $0x1c18] sm:$0xff]
        %v1038 = vld [vmem:[%s117 + $0x1c20] sm:$0xff]
        %v1039 = vld [vmem:[%s117 + $0x1c28] sm:$0xff]
        %v1040 = vld [vmem:[%s117 + $0x1c30] sm:$0xff]
        %v1041 = vld [vmem:[%s117 + $0x1c38] sm:$0xff]
        %v1042 = vld [vmem:[%s117 + $0x1c40] sm:$0xff]
        %v1043 = vld [vmem:[%s117 + $0x1c48] sm:$0xff]
        %v1044 = vld [vmem:[%s117 + $0x1c50] sm:$0xff]
        %v1045 = vld [vmem:[%s117 + $0x1c58] sm:$0xff]
        %v1046 = vld [vmem:[%s117 + $0x1c60] sm:$0xff]
        %v1047 = vld [vmem:[%s117 + $0x1c68] sm:$0xff]
        %v1048 = vld [vmem:[%s117 + $0x1c70] sm:$0xff]
        %v1049 = vld [vmem:[%s117 + $0x1c78] sm:$0xff]
        %v1050 = vld [vmem:[%s117 + $0x1c80] sm:$0xff]
        %v1051 = vld [vmem:[%s117 + $0x1c88] sm:$0xff]
        %v1052 = vld [vmem:[%s117 + $0x1c90] sm:$0xff]
        %v1053 = vld [vmem:[%s117 + $0x1c98] sm:$0xff]
        %v1054 = vld [vmem:[%s117 + $0x1ca0] sm:$0xff]
        %v1055 = vld [vmem:[%s117 + $0x1ca8] sm:$0xff]
        %v1056 = vld [vmem:[%s117 + $0x1cb0] sm:$0xff]
        %v1057 = vld [vmem:[%s117 + $0x1cb8] sm:$0xff]
        %v1058 = vld [vmem:[%s117 + $0x1cc0] sm:$0xff]
        %v1059 = vld [vmem:[%s117 + $0x1cc8] sm:$0xff]
        %v1060 = vld [vmem:[%s117 + $0x1cd0] sm:$0xff]
        %v1061 = vld [vmem:[%s117 + $0x1cd8] sm:$0xff]
        %v1062 = vld [vmem:[%s117 + $0x1ce0] sm:$0xff]
        %v1063 = vld [vmem:[%s117 + $0x1ce8] sm:$0xff]
        %v1064 = vld [vmem:[%s117 + $0x1cf0] sm:$0xff]
        %v1065 = vld [vmem:[%s117 + $0x1cf8] sm:$0xff]
        %v1066 = vld [vmem:[%s117 + $0x1d00] sm:$0xff]
        %v1067 = vld [vmem:[%s117 + $0x1d08] sm:$0xff]
        %v1068 = vld [vmem:[%s117 + $0x1d10] sm:$0xff]
        %v1069 = vld [vmem:[%s117 + $0x1d18] sm:$0xff]
        %v1070 = vld [vmem:[%s117 + $0x1d20] sm:$0xff]
        %v1071 = vld [vmem:[%s117 + $0x1d28] sm:$0xff]
        %v1072 = vld [vmem:[%s117 + $0x1d30] sm:$0xff]
        %v1073 = vld [vmem:[%s117 + $0x1d38] sm:$0xff]
        %v1074 = vld [vmem:[%s117 + $0x1d40] sm:$0xff]
        %v1075 = vld [vmem:[%s117 + $0x1d48] sm:$0xff]
        %v1076 = vld [vmem:[%s117 + $0x1d50] sm:$0xff]
        %v1077 = vld [vmem:[%s117 + $0x1d58] sm:$0xff]
        %v1078 = vld [vmem:[%s117 + $0x1d60] sm:$0xff]
        %v1079 = vld [vmem:[%s117 + $0x1d68] sm:$0xff]
        %v1080 = vld [vmem:[%s117 + $0x1d70] sm:$0xff]
        %v1081 = vld [vmem:[%s117 + $0x1d78] sm:$0xff]
        %v1082 = vld [vmem:[%s117 + $0x1d80] sm:$0xff]
        %v1083 = vld [vmem:[%s117 + $0x1d88] sm:$0xff]
        %v1084 = vld [vmem:[%s117 + $0x1d90] sm:$0xff]
        %v1085 = vld [vmem:[%s117 + $0x1d98] sm:$0xff]
        %v1086 = vld [vmem:[%s117 + $0x1da0] sm:$0xff]
        %v1087 = vld [vmem:[%s117 + $0x1da8] sm:$0xff]
        %v1088 = vld [vmem:[%s117 + $0x1db0] sm:$0xff]
        %v1089 = vld [vmem:[%s117 + $0x1db8] sm:$0xff]
        %v1090 = vld [vmem:[%s117 + $0x1dc0] sm:$0xff]
        %v1091 = vld [vmem:[%s117 + $0x1dc8] sm:$0xff]
        %v1092 = vld [vmem:[%s117 + $0x1dd0] sm:$0xff]
        %v1093 = vld [vmem:[%s117 + $0x1dd8] sm:$0xff]
        %v1094 = vld [vmem:[%s117 + $0x1de0] sm:$0xff]
        %v1095 = vld [vmem:[%s117 + $0x1de8] sm:$0xff]
        %v1096 = vld [vmem:[%s117 + $0x1df0] sm:$0xff]
        %v1097 = vld [vmem:[%s117 + $0x1df8] sm:$0xff]
        %v1098 = vld [vmem:[%s117 + $0x1e00] sm:$0xff]
        %v1099 = vld [vmem:[%s117 + $0x1e08] sm:$0xff]
        %v1100 = vld [vmem:[%s117 + $0x1e10] sm:$0xff]
        %v1101 = vld [vmem:[%s117 + $0x1e18] sm:$0xff]
        %v1102 = vld [vmem:[%s117 + $0x1e20] sm:$0xff]
        %v1103 = vld [vmem:[%s117 + $0x1e28] sm:$0xff]
        %v1104 = vld [vmem:[%s117 + $0x1e30] sm:$0xff]
        %v1105 = vld [vmem:[%s117 + $0x1e38] sm:$0xff]
        %v1106 = vld [vmem:[%s117 + $0x1e40] sm:$0xff]
        %v1107 = vld [vmem:[%s117 + $0x1e48] sm:$0xff]
        %v1108 = vld [vmem:[%s117 + $0x1e50] sm:$0xff]
        %v1109 = vld [vmem:[%s117 + $0x1e58] sm:$0xff]
        %v1110 = vld [vmem:[%s117 + $0x1e60] sm:$0xff]
        %v1111 = vld [vmem:[%s117 + $0x1e68] sm:$0xff]
        %v1112 = vld [vmem:[%s117 + $0x1e70] sm:$0xff]
        %v1113 = vld [vmem:[%s117 + $0x1e78] sm:$0xff]
        %v1114 = vld [vmem:[%s117 + $0x1e80] sm:$0xff]
        %v1115 = vld [vmem:[%s117 + $0x1e88] sm:$0xff]
        %v1116 = vld [vmem:[%s117 + $0x1e90] sm:$0xff]
        %v1117 = vld [vmem:[%s117 + $0x1e98] sm:$0xff]
        %v1118 = vld [vmem:[%s117 + $0x1ea0] sm:$0xff]
        %v1119 = vld [vmem:[%s117 + $0x1ea8] sm:$0xff]
        %v1120 = vld [vmem:[%s117 + $0x1eb0] sm:$0xff]
        %v1121 = vld [vmem:[%s117 + $0x1eb8] sm:$0xff]
        %v1122 = vld [vmem:[%s117 + $0x1ec0] sm:$0xff]
        %v1123 = vld [vmem:[%s117 + $0x1ec8] sm:$0xff]
        %v1124 = vld [vmem:[%s117 + $0x1ed0] sm:$0xff]
        %v1125 = vld [vmem:[%s117 + $0x1ed8] sm:$0xff]
        %v1126 = vld [vmem:[%s117 + $0x1ee0] sm:$0xff]
        %v1127 = vld [vmem:[%s117 + $0x1ee8] sm:$0xff]
        %v1128 = vld [vmem:[%s117 + $0x1ef0] sm:$0xff]
        %v1129 = vld [vmem:[%s117 + $0x1ef8] sm:$0xff]
        %v1130 = vld [vmem:[%s117 + $0x1f00] sm:$0xff]
        %v1131 = vld [vmem:[%s117 + $0x1f08] sm:$0xff]
        %v1132 = vld [vmem:[%s117 + $0x1f10] sm:$0xff]
        %v1133 = vld [vmem:[%s117 + $0x1f18] sm:$0xff]
        %v1134 = vld [vmem:[%s117 + $0x1f20] sm:$0xff]
        %v1135 = vld [vmem:[%s117 + $0x1f28] sm:$0xff]
        %v1136 = vld [vmem:[%s117 + $0x1f30] sm:$0xff]
        %v1137 = vld [vmem:[%s117 + $0x1f38] sm:$0xff]
        %v1138 = vld [vmem:[%s117 + $0x1f40] sm:$0xff]
        %v1139 = vld [vmem:[%s117 + $0x1f48] sm:$0xff]
        %v1140 = vld [vmem:[%s117 + $0x1f50] sm:$0xff]
        %v1141 = vld [vmem:[%s117 + $0x1f58] sm:$0xff]
        %v1142 = vld [vmem:[%s117 + $0x1f60] sm:$0xff]
        %v1143 = vld [vmem:[%s117 + $0x1f68] sm:$0xff]
        %v1144 = vld [vmem:[%s117 + $0x1f70] sm:$0xff]
        %v1145 = vld [vmem:[%s117 + $0x1f78] sm:$0xff]
        %v1146 = vld [vmem:[%s117 + $0x1f80] sm:$0xff]
        %v1147 = vld [vmem:[%s117 + $0x1f88] sm:$0xff]
        %v1148 = vld [vmem:[%s117 + $0x1f90] sm:$0xff]
        %v1149 = vld [vmem:[%s117 + $0x1f98] sm:$0xff]
        %v1150 = vld [vmem:[%s117 + $0x1fa0] sm:$0xff]
        %v1151 = vld [vmem:[%s117 + $0x1fa8] sm:$0xff]
        %v1152 = vld [vmem:[%s117 + $0x1fb0] sm:$0xff]
        %v1153 = vld [vmem:[%s117 + $0x1fb8] sm:$0xff]
        %v1154 = vld [vmem:[%s117 + $0x1fc0] sm:$0xff]
        %v1155 = vld [vmem:[%s117 + $0x1fc8] sm:$0xff]
        %v1156 = vld [vmem:[%s117 + $0x1fd0] sm:$0xff]
        %v1157 = vld [vmem:[%s117 + $0x1fd8] sm:$0xff]
        %v1158 = vld [vmem:[%s117 + $0x1fe0] sm:$0xff]
        %v1159 = vld [vmem:[%s117 + $0x1fe8] sm:$0xff]
        %v1160 = vld [vmem:[%s117 + $0x1ff0] sm:$0xff]
        %v1161 = vld [vmem:[%s117 + $0x1ff8] sm:$0xff]
        %v1162 = vld [vmem:[%s117 + $0x2000] sm:$0xff]
        %v1163 = vld [vmem:[%s117 + $0x2008] sm:$0xff]
        %v1164 = vld [vmem:[%s117 + $0x2010] sm:$0xff]
        %v1165 = vld [vmem:[%s117 + $0x2018] sm:$0xff]
        %v1166 = vld [vmem:[%s117 + $0x2020] sm:$0xff]
        %v1167 = vld [vmem:[%s117 + $0x2028] sm:$0xff]
        %v1168 = vld [vmem:[%s117 + $0x2030] sm:$0xff]
        %v1169 = vld [vmem:[%s117 + $0x2038] sm:$0xff]
        %v1170 = vld [vmem:[%s117 + $0x2040] sm:$0xff]
        %v1171 = vld [vmem:[%s117 + $0x2048] sm:$0xff]
        %v1172 = vld [vmem:[%s117 + $0x2050] sm:$0xff]
        %v1173 = vld [vmem:[%s117 + $0x2058] sm:$0xff]
        %v1174 = vld [vmem:[%s117 + $0x2060] sm:$0xff]
        %v1175 = vld [vmem:[%s117 + $0x2068] sm:$0xff]
        %v1176 = vld [vmem:[%s117 + $0x2070] sm:$0xff]
        %v1177 = vld [vmem:[%s117 + $0x2078] sm:$0xff]
        %v1178 = vld [vmem:[%s117 + $0x2080] sm:$0xff]
        %v1179 = vld [vmem:[%s117 + $0x2088] sm:$0xff]
        %v1180 = vld [vmem:[%s117 + $0x2090] sm:$0xff]
        %v1181 = vld [vmem:[%s117 + $0x2098] sm:$0xff]
        %v1182 = vld [vmem:[%s117 + $0x20a0] sm:$0xff]
        %v1183 = vld [vmem:[%s117 + $0x20a8] sm:$0xff]
        %v1184 = vld [vmem:[%s117 + $0x20b0] sm:$0xff]
        %v1185 = vld [vmem:[%s117 + $0x20b8] sm:$0xff]
        %v1186 = vld [vmem:[%s117 + $0x20c0] sm:$0xff]
        %v1187 = vld [vmem:[%s117 + $0x20c8] sm:$0xff]
        %v1188 = vld [vmem:[%s117 + $0x20d0] sm:$0xff]
        %v1189 = vld [vmem:[%s117 + $0x20d8] sm:$0xff]
        %v1190 = vld [vmem:[%s117 + $0x20e0] sm:$0xff]
        %v1191 = vld [vmem:[%s117 + $0x20e8] sm:$0xff]
        %v1192 = vld [vmem:[%s117 + $0x20f0] sm:$0xff]
        %v1193 = vld [vmem:[%s117 + $0x20f8] sm:$0xff]
        %v1194 = vld [vmem:[%s117 + $0x2100] sm:$0xff]
        %v1195 = vld [vmem:[%s117 + $0x2108] sm:$0xff]
        %v1196 = vld [vmem:[%s117 + $0x2110] sm:$0xff]
        %v1197 = vld [vmem:[%s117 + $0x2118] sm:$0xff]
        %v1198 = vld [vmem:[%s117 + $0x2120] sm:$0xff]
        %v1199 = vld [vmem:[%s117 + $0x2128] sm:$0xff]
        %v1200 = vld [vmem:[%s117 + $0x2130] sm:$0xff]
        %v1201 = vld [vmem:[%s117 + $0x2138] sm:$0xff]
        %v1202 = vld [vmem:[%s117 + $0x2140] sm:$0xff]
        %v1203 = vld [vmem:[%s117 + $0x2148] sm:$0xff]
        %v1204 = vld [vmem:[%s117 + $0x2150] sm:$0xff]
        %v1205 = vld [vmem:[%s117 + $0x2158] sm:$0xff]
        %v1206 = vld [vmem:[%s117 + $0x2160] sm:$0xff]
        %v1207 = vld [vmem:[%s117 + $0x2168] sm:$0xff]
        %v1208 = vld [vmem:[%s117 + $0x2170] sm:$0xff]
        %v1209 = vld [vmem:[%s117 + $0x2178] sm:$0xff]
        %v1210 = vld [vmem:[%s117 + $0x2180] sm:$0xff]
        %v1211 = vld [vmem:[%s117 + $0x2188] sm:$0xff]
        %v1212 = vld [vmem:[%s117 + $0x2190] sm:$0xff]
        %v1213 = vld [vmem:[%s117 + $0x2198] sm:$0xff]
        %v1214 = vld [vmem:[%s117 + $0x21a0] sm:$0xff]
        %v1215 = vld [vmem:[%s117 + $0x21a8] sm:$0xff]
        %v1216 = vld [vmem:[%s117 + $0x21b0] sm:$0xff]
        %v1217 = vld [vmem:[%s117 + $0x21b8] sm:$0xff]
        %v1218 = vld [vmem:[%s117 + $0x21c0] sm:$0xff]
        %v1219 = vld [vmem:[%s117 + $0x21c8] sm:$0xff]
        %v1220 = vld [vmem:[%s117 + $0x21d0] sm:$0xff]
        %v1221 = vld [vmem:[%s117 + $0x21d8] sm:$0xff]
        %v1222 = vld [vmem:[%s117 + $0x21e0] sm:$0xff]
        %v1223 = vld [vmem:[%s117 + $0x21e8] sm:$0xff]
        %v1224 = vld [vmem:[%s117 + $0x21f0] sm:$0xff]
        %v1225 = vld [vmem:[%s117 + $0x21f8] sm:$0xff]
        %v1226 = vld [vmem:[%s117 + $0x2200] sm:$0xff]
        %v1227 = vld [vmem:[%s117 + $0x2208] sm:$0xff]
        %v1228 = vld [vmem:[%s117 + $0x2210] sm:$0xff]
        %v1229 = vld [vmem:[%s117 + $0x2218] sm:$0xff]
        %v1230 = vld [vmem:[%s117 + $0x2220] sm:$0xff]
        %v1231 = vld [vmem:[%s117 + $0x2228] sm:$0xff]
        %v1232 = vld [vmem:[%s117 + $0x2230] sm:$0xff]
        %v1233 = vld [vmem:[%s117 + $0x2238] sm:$0xff]
        %v1234 = vld [vmem:[%s117 + $0x2240] sm:$0xff]
        %v1235 = vld [vmem:[%s117 + $0x2248] sm:$0xff]
        %v1236 = vld [vmem:[%s117 + $0x2250] sm:$0xff]
        %v1237 = vld [vmem:[%s117 + $0x2258] sm:$0xff]
        %v1238 = vld [vmem:[%s117 + $0x2260] sm:$0xff]
        %v1239 = vld [vmem:[%s117 + $0x2268] sm:$0xff]
        %v1240 = vld [vmem:[%s117 + $0x2270] sm:$0xff]
        %v1241 = vld [vmem:[%s117 + $0x2278] sm:$0xff]
        %v1242 = vld [vmem:[%s117 + $0x2280] sm:$0xff]
        %v1243 = vld [vmem:[%s117 + $0x2288] sm:$0xff]
        %v1244 = vld [vmem:[%s117 + $0x2290] sm:$0xff]
        %v1245 = vld [vmem:[%s117 + $0x2298] sm:$0xff]
        %v1246 = vld [vmem:[%s117 + $0x22a0] sm:$0xff]
        %v1247 = vld [vmem:[%s117 + $0x22a8] sm:$0xff]
        %v1248 = vld [vmem:[%s117 + $0x22b0] sm:$0xff]
        %v1249 = vld [vmem:[%s117 + $0x22b8] sm:$0xff]
        %v1250 = vld [vmem:[%s117 + $0x22c0] sm:$0xff]
        %v1251 = vld [vmem:[%s117 + $0x22c8] sm:$0xff]
        %v1252 = vld [vmem:[%s117 + $0x22d0] sm:$0xff]
        %v1253 = vld [vmem:[%s117 + $0x22d8] sm:$0xff]
        %v1254 = vld [vmem:[%s117 + $0x22e0] sm:$0xff]
        %v1255 = vld [vmem:[%s117 + $0x22e8] sm:$0xff]
        %v1256 = vld [vmem:[%s117 + $0x22f0] sm:$0xff]
        %v1257 = vld [vmem:[%s117 + $0x22f8] sm:$0xff]
        %v1258 = vld [vmem:[%s117 + $0x2300] sm:$0xff]
        %v1259 = vld [vmem:[%s117 + $0x2308] sm:$0xff]
        %v1260 = vld [vmem:[%s117 + $0x2310] sm:$0xff]
        %v1261 = vld [vmem:[%s117 + $0x2318] sm:$0xff]
        %v1262 = vld [vmem:[%s117 + $0x2320] sm:$0xff]
        %v1263 = vld [vmem:[%s117 + $0x2328] sm:$0xff]
        %v1264 = vld [vmem:[%s117 + $0x2330] sm:$0xff]
        %v1265 = vld [vmem:[%s117 + $0x2338] sm:$0xff]
        %v1266 = vld [vmem:[%s117 + $0x2340] sm:$0xff]
        %v1267 = vld [vmem:[%s117 + $0x2348] sm:$0xff]
        %v1268 = vld [vmem:[%s117 + $0x2350] sm:$0xff]
        %v1269 = vld [vmem:[%s117 + $0x2358] sm:$0xff]
        %v1270 = vld [vmem:[%s117 + $0x2360] sm:$0xff]
        %v1271 = vld [vmem:[%s117 + $0x2368] sm:$0xff]
        %v1272 = vld [vmem:[%s117 + $0x2370] sm:$0xff]
        %v1273 = vld [vmem:[%s117 + $0x2378] sm:$0xff]
        %v1274 = vld [vmem:[%s117 + $0x2380] sm:$0xff]
        %v1275 = vld [vmem:[%s117 + $0x2388] sm:$0xff]
        %v1276 = vld [vmem:[%s117 + $0x2390] sm:$0xff]
        %v1277 = vld [vmem:[%s117 + $0x2398] sm:$0xff]
        %v1278 = vld [vmem:[%s117 + $0x23a0] sm:$0xff]
        %v1279 = vld [vmem:[%s117 + $0x23a8] sm:$0xff]
        %v1280 = vld [vmem:[%s117 + $0x23b0] sm:$0xff]
        %v1281 = vld [vmem:[%s117 + $0x23b8] sm:$0xff]
        %v1282 = vld [vmem:[%s117 + $0x23c0] sm:$0xff]
        %v1283 = vld [vmem:[%s117 + $0x23c8] sm:$0xff]
        %v1284 = vld [vmem:[%s117 + $0x23d0] sm:$0xff]
        %v1285 = vld [vmem:[%s117 + $0x23d8] sm:$0xff]
        %v1286 = vld [vmem:[%s117 + $0x23e0] sm:$0xff]
        %v1287 = vld [vmem:[%s117 + $0x23e8] sm:$0xff]
        %v1288 = vld [vmem:[%s117 + $0x23f0] sm:$0xff]
        %v1289 = vld [vmem:[%s117 + $0x23f8] sm:$0xff]
        %v1290 = vld [vmem:[%s117 + $0x2400] sm:$0xff]
        %v1291 = vld [vmem:[%s117 + $0x2408] sm:$0xff]
        %v1292 = vld [vmem:[%s117 + $0x2410] sm:$0xff]
        %v1293 = vld [vmem:[%s117 + $0x2418] sm:$0xff]
        %v1294 = vld [vmem:[%s117 + $0x2420] sm:$0xff]
        %v1295 = vld [vmem:[%s117 + $0x2428] sm:$0xff]
        %v1296 = vld [vmem:[%s117 + $0x2430] sm:$0xff]
        %v1297 = vld [vmem:[%s117 + $0x2438] sm:$0xff]
        %v1298 = vld [vmem:[%s117 + $0x2440] sm:$0xff]
        %v1299 = vld [vmem:[%s117 + $0x2448] sm:$0xff]
        %v1300 = vld [vmem:[%s117 + $0x2450] sm:$0xff]
        %v1301 = vld [vmem:[%s117 + $0x2458] sm:$0xff]
        %v1302 = vld [vmem:[%s117 + $0x2460] sm:$0xff]
        %v1303 = vld [vmem:[%s117 + $0x2468] sm:$0xff]
        %v1304 = vld [vmem:[%s117 + $0x2470] sm:$0xff]
        %v1305 = vld [vmem:[%s117 + $0x2478] sm:$0xff]
        %v1306 = vld [vmem:[%s117 + $0x2480] sm:$0xff]
        %v1307 = vld [vmem:[%s117 + $0x2488] sm:$0xff]
        %v1308 = vld [vmem:[%s117 + $0x2490] sm:$0xff]
        %v1309 = vld [vmem:[%s117 + $0x2498] sm:$0xff]
        %v1310 = vld [vmem:[%s117 + $0x24a0] sm:$0xff]
        %v1311 = vld [vmem:[%s117 + $0x24a8] sm:$0xff]
        %v1312 = vld [vmem:[%s117 + $0x24b0] sm:$0xff]
        %v1313 = vld [vmem:[%s117 + $0x24b8] sm:$0xff]
        %v1314 = vld [vmem:[%s117 + $0x24c0] sm:$0xff]
        %v1315 = vld [vmem:[%s117 + $0x24c8] sm:$0xff]
        %v1316 = vld [vmem:[%s117 + $0x24d0] sm:$0xff]
        %v1317 = vld [vmem:[%s117 + $0x24d8] sm:$0xff]
        %v1318 = vld [vmem:[%s117 + $0x24e0] sm:$0xff]
        %v1319 = vld [vmem:[%s117 + $0x24e8] sm:$0xff]
        %v1320 = vld [vmem:[%s117 + $0x24f0] sm:$0xff]
        %v1321 = vld [vmem:[%s117 + $0x24f8] sm:$0xff]
        %v1322 = vld [vmem:[%s117 + $0x2500] sm:$0xff]
        %v1323 = vld [vmem:[%s117 + $0x2508] sm:$0xff]
        %v1324 = vld [vmem:[%s117 + $0x2510] sm:$0xff]
        %v1325 = vld [vmem:[%s117 + $0x2518] sm:$0xff]
        %v1326 = vld [vmem:[%s117 + $0x2520] sm:$0xff]
        %v1327 = vld [vmem:[%s117 + $0x2528] sm:$0xff]
        %v1328 = vld [vmem:[%s117 + $0x2530] sm:$0xff]
        %v1329 = vld [vmem:[%s117 + $0x2538] sm:$0xff]
        %v1330 = vld [vmem:[%s117 + $0x2540] sm:$0xff]
        %v1331 = vld [vmem:[%s117 + $0x2548] sm:$0xff]
        %v1332 = vld [vmem:[%s117 + $0x2550] sm:$0xff]
        %v1333 = vld [vmem:[%s117 + $0x2558] sm:$0xff]
        %v1334 = vld [vmem:[%s117 + $0x2560] sm:$0xff]
        %v1335 = vld [vmem:[%s117 + $0x2568] sm:$0xff]
        %v1336 = vld [vmem:[%s117 + $0x2570] sm:$0xff]
        %v1337 = vld [vmem:[%s117 + $0x2578] sm:$0xff]
        %v1338 = vld [vmem:[%s117 + $0x2580] sm:$0xff]
        %v1339 = vld [vmem:[%s117 + $0x2588] sm:$0xff]
        %v1340 = vld [vmem:[%s117 + $0x2590] sm:$0xff]
        %v1341 = vld [vmem:[%s117 + $0x2598] sm:$0xff]
        %v1342 = vld [vmem:[%s117 + $0x25a0] sm:$0xff]
        %v1343 = vld [vmem:[%s117 + $0x25a8] sm:$0xff]
        %v1344 = vld [vmem:[%s117 + $0x25b0] sm:$0xff]
        %v1345 = vld [vmem:[%s117 + $0x25b8] sm:$0xff]
        %v1346 = vld [vmem:[%s117 + $0x25c0] sm:$0xff]
        %v1347 = vld [vmem:[%s117 + $0x25c8] sm:$0xff]
        %v1348 = vld [vmem:[%s117 + $0x25d0] sm:$0xff]
        %v1349 = vld [vmem:[%s117 + $0x25d8] sm:$0xff]
        %v1350 = vld [vmem:[%s117 + $0x25e0] sm:$0xff]
        %v1351 = vld [vmem:[%s117 + $0x25e8] sm:$0xff]
        %v1352 = vld [vmem:[%s117 + $0x25f0] sm:$0xff]
        %v1353 = vld [vmem:[%s117 + $0x25f8] sm:$0xff]
        %v1354 = vld [vmem:[%s117 + $0x2600] sm:$0xff]
        %v1355 = vld [vmem:[%s117 + $0x2608] sm:$0xff]
        %v1356 = vld [vmem:[%s117 + $0x2610] sm:$0xff]
        %v1357 = vld [vmem:[%s117 + $0x2618] sm:$0xff]
        %v1358 = vld [vmem:[%s117 + $0x2620] sm:$0xff]
        %v1359 = vld [vmem:[%s117 + $0x2628] sm:$0xff]
        %v1360 = vld [vmem:[%s117 + $0x2630] sm:$0xff]
        %v1361 = vld [vmem:[%s117 + $0x2638] sm:$0xff]
        %v1362 = vld [vmem:[%s117 + $0x2640] sm:$0xff]
        %v1363 = vld [vmem:[%s117 + $0x2648] sm:$0xff]
        %v1364 = vld [vmem:[%s117 + $0x2650] sm:$0xff]
        %v1365 = vld [vmem:[%s117 + $0x2658] sm:$0xff]
        %v1366 = vld [vmem:[%s117 + $0x2660] sm:$0xff]
        %v1367 = vld [vmem:[%s117 + $0x2668] sm:$0xff]
        %v1368 = vld [vmem:[%s117 + $0x2670] sm:$0xff]
        %v1369 = vld [vmem:[%s117 + $0x2678] sm:$0xff]
        %v1370 = vld [vmem:[%s117 + $0x2680] sm:$0xff]
        %v1371 = vld [vmem:[%s117 + $0x2688] sm:$0xff]
        %v1372 = vld [vmem:[%s117 + $0x2690] sm:$0xff]
        %v1373 = vld [vmem:[%s117 + $0x2698] sm:$0xff]
        %v1374 = vld [vmem:[%s117 + $0x26a0] sm:$0xff]
        %v1375 = vld [vmem:[%s117 + $0x26a8] sm:$0xff]
        %v1376 = vld [vmem:[%s117 + $0x26b0] sm:$0xff]
        %v1377 = vld [vmem:[%s117 + $0x26b8] sm:$0xff]
        %v1378 = vld [vmem:[%s117 + $0x26c0] sm:$0xff]
        %v1379 = vld [vmem:[%s117 + $0x26c8] sm:$0xff]
        %v1380 = vld [vmem:[%s117 + $0x26d0] sm:$0xff]
        %v1381 = vld [vmem:[%s117 + $0x26d8] sm:$0xff]
        %v1382 = vld [vmem:[%s117 + $0x26e0] sm:$0xff]
        %v1383 = vld [vmem:[%s117 + $0x26e8] sm:$0xff]
        %v1384 = vld [vmem:[%s117 + $0x26f0] sm:$0xff]
        %v1385 = vld [vmem:[%s117 + $0x26f8] sm:$0xff]
        %v1386 = vld [vmem:[%s117 + $0x2700] sm:$0xff]
        %v1387 = vld [vmem:[%s117 + $0x2708] sm:$0xff]
        %v1388 = vld [vmem:[%s117 + $0x2710] sm:$0xff]
        %v1389 = vld [vmem:[%s117 + $0x2718] sm:$0xff]
        %v1390 = vld [vmem:[%s117 + $0x2720] sm:$0xff]
        %v1391 = vld [vmem:[%s117 + $0x2728] sm:$0xff]
        %v1392 = vld [vmem:[%s117 + $0x2730] sm:$0xff]
        %v1393 = vld [vmem:[%s117 + $0x2738] sm:$0xff]
        %v1394 = vld [vmem:[%s117 + $0x2740] sm:$0xff]
        %v1395 = vld [vmem:[%s117 + $0x2748] sm:$0xff]
        %v1396 = vld [vmem:[%s117 + $0x2750] sm:$0xff]
        %v1397 = vld [vmem:[%s117 + $0x2758] sm:$0xff]
        %v1398 = vld [vmem:[%s117 + $0x2760] sm:$0xff]
        %v1399 = vld [vmem:[%s117 + $0x2768] sm:$0xff]
        %v1400 = vld [vmem:[%s117 + $0x2770] sm:$0xff]
        %v1401 = vld [vmem:[%s117 + $0x2778] sm:$0xff]
        %v1402 = vld [vmem:[%s117 + $0x2780] sm:$0xff]
        %v1403 = vld [vmem:[%s117 + $0x2788] sm:$0xff]
        %v1404 = vld [vmem:[%s117 + $0x2790] sm:$0xff]
        %v1405 = vld [vmem:[%s117 + $0x2798] sm:$0xff]
        %v1406 = vld [vmem:[%s117 + $0x27a0] sm:$0xff]
        %v1407 = vld [vmem:[%s117 + $0x27a8] sm:$0xff]
        %v1408 = vld [vmem:[%s117 + $0x27b0] sm:$0xff]
        %v1409 = vld [vmem:[%s117 + $0x27b8] sm:$0xff]
        %v1410 = vld [vmem:[%s117 + $0x27c0] sm:$0xff]
        %v1411 = vld [vmem:[%s117 + $0x27c8] sm:$0xff]
        %v1412 = vld [vmem:[%s117 + $0x27d0] sm:$0xff]
        %v1413 = vld [vmem:[%s117 + $0x27d8] sm:$0xff]
        %v1414 = vld [vmem:[%s117 + $0x27e0] sm:$0xff]
        %v1415 = vld [vmem:[%s117 + $0x27e8] sm:$0xff]
        %v1416 = vld [vmem:[%s117 + $0x27f0] sm:$0xff]
        %v1417 = vld [vmem:[%s117 + $0x27f8] sm:$0xff]
        %v1418 = vld [vmem:[%s117 + $0x2800] sm:$0xff]
        %v1419 = vld [vmem:[%s117 + $0x2808] sm:$0xff]
        %v1420 = vld [vmem:[%s117 + $0x2810] sm:$0xff]
        %v1421 = vld [vmem:[%s117 + $0x2818] sm:$0xff]
        %v1422 = vld [vmem:[%s117 + $0x2820] sm:$0xff]
        %v1423 = vld [vmem:[%s117 + $0x2828] sm:$0xff]
        %v1424 = vld [vmem:[%s117 + $0x2830] sm:$0xff]
        %v1425 = vld [vmem:[%s117 + $0x2838] sm:$0xff]
        %v1426 = vld [vmem:[%s117 + $0x2840] sm:$0xff]
        %v1427 = vld [vmem:[%s117 + $0x2848] sm:$0xff]
        %v1428 = vld [vmem:[%s117 + $0x2850] sm:$0xff]
        %v1429 = vld [vmem:[%s117 + $0x2858] sm:$0xff]
        %v1430 = vld [vmem:[%s117 + $0x2860] sm:$0xff]
        %v1431 = vld [vmem:[%s117 + $0x2868] sm:$0xff]
        %v1432 = vld [vmem:[%s117 + $0x2870] sm:$0xff]
        %v1433 = vld [vmem:[%s117 + $0x2878] sm:$0xff]
        %v1434 = vld [vmem:[%s117 + $0x2880] sm:$0xff]
        %v1435 = vld [vmem:[%s117 + $0x2888] sm:$0xff]
        %v1436 = vld [vmem:[%s117 + $0x2890] sm:$0xff]
        %v1437 = vld [vmem:[%s117 + $0x2898] sm:$0xff]
        %v1438 = vld [vmem:[%s117 + $0x28a0] sm:$0xff]
        %v1439 = vld [vmem:[%s117 + $0x28a8] sm:$0xff]
        %v1440 = vld [vmem:[%s117 + $0x28b0] sm:$0xff]
        %v1441 = vld [vmem:[%s117 + $0x28b8] sm:$0xff]
        %v1442 = vld [vmem:[%s117 + $0x28c0] sm:$0xff]
        %v1443 = vld [vmem:[%s117 + $0x28c8] sm:$0xff]
        %v1444 = vld [vmem:[%s117 + $0x28d0] sm:$0xff]
        %v1445 = vld [vmem:[%s117 + $0x28d8] sm:$0xff]
        %v1446 = vld [vmem:[%s117 + $0x28e0] sm:$0xff]
        %v1447 = vld [vmem:[%s117 + $0x28e8] sm:$0xff]
        %v1448 = vld [vmem:[%s117 + $0x28f0] sm:$0xff]
        %v1449 = vld [vmem:[%s117 + $0x28f8] sm:$0xff]
        %v1450 = vld [vmem:[%s117 + $0x2900] sm:$0xff]
        %v1451 = vld [vmem:[%s117 + $0x2908] sm:$0xff]
        %v1452 = vld [vmem:[%s117 + $0x2910] sm:$0xff]
        %v1453 = vld [vmem:[%s117 + $0x2918] sm:$0xff]
        %v1454 = vld [vmem:[%s117 + $0x2920] sm:$0xff]
        %v1455 = vld [vmem:[%s117 + $0x2928] sm:$0xff]
        %v1456 = vld [vmem:[%s117 + $0x2930] sm:$0xff]
        %v1457 = vld [vmem:[%s117 + $0x2938] sm:$0xff]
        %v1458 = vld [vmem:[%s117 + $0x2940] sm:$0xff]
        %v1459 = vld [vmem:[%s117 + $0x2948] sm:$0xff]
        %v1460 = vld [vmem:[%s117 + $0x2950] sm:$0xff]
        %v1461 = vld [vmem:[%s117 + $0x2958] sm:$0xff]
        %v1462 = vld [vmem:[%s117 + $0x2960] sm:$0xff]
        %v1463 = vld [vmem:[%s117 + $0x2968] sm:$0xff]
        %v1464 = vld [vmem:[%s117 + $0x2970] sm:$0xff]
        %v1465 = vld [vmem:[%s117 + $0x2978] sm:$0xff]
        %v1466 = vld [vmem:[%s117 + $0x2980] sm:$0xff]
        %v1467 = vld [vmem:[%s117 + $0x2988] sm:$0xff]
        %v1468 = vld [vmem:[%s117 + $0x2990] sm:$0xff]
        %v1469 = vld [vmem:[%s117 + $0x2998] sm:$0xff]
        %v1470 = vld [vmem:[%s117 + $0x29a0] sm:$0xff]
        %v1471 = vld [vmem:[%s117 + $0x29a8] sm:$0xff]
        %v1472 = vld [vmem:[%s117 + $0x29b0] sm:$0xff]
        %v1473 = vld [vmem:[%s117 + $0x29b8] sm:$0xff]
        %v1474 = vld [vmem:[%s117 + $0x29c0] sm:$0xff]
        %v1475 = vld [vmem:[%s117 + $0x29c8] sm:$0xff]
        %v1476 = vld [vmem:[%s117 + $0x29d0] sm:$0xff]
        %v1477 = vld [vmem:[%s117 + $0x29d8] sm:$0xff]
        %v1478 = vld [vmem:[%s117 + $0x29e0] sm:$0xff]
        %v1479 = vld [vmem:[%s117 + $0x29e8] sm:$0xff]
        %v1480 = vld [vmem:[%s117 + $0x29f0] sm:$0xff]
        %v1481 = vld [vmem:[%s117 + $0x29f8] sm:$0xff]
        %v1482 = vld [vmem:[%s117 + $0x2a00] sm:$0xff]
        %v1483 = vld [vmem:[%s117 + $0x2a08] sm:$0xff]
        %v1484 = vld [vmem:[%s117 + $0x2a10] sm:$0xff]
        %v1485 = vld [vmem:[%s117 + $0x2a18] sm:$0xff]
        %v1486 = vld [vmem:[%s117 + $0x2a20] sm:$0xff]
        %v1487 = vld [vmem:[%s117 + $0x2a28] sm:$0xff]
        %v1488 = vld [vmem:[%s117 + $0x2a30] sm:$0xff]
        %v1489 = vld [vmem:[%s117 + $0x2a38] sm:$0xff]
        %v1490 = vld [vmem:[%s117 + $0x2a40] sm:$0xff]
        %v1491 = vld [vmem:[%s117 + $0x2a48] sm:$0xff]
        %v1492 = vld [vmem:[%s117 + $0x2a50] sm:$0xff]
        %v1493 = vld [vmem:[%s117 + $0x2a58] sm:$0xff]
        %v1494 = vld [vmem:[%s117 + $0x2a60] sm:$0xff]
        %v1495 = vld [vmem:[%s117 + $0x2a68] sm:$0xff]
        %v1496 = vld [vmem:[%s117 + $0x2a70] sm:$0xff]
        %v1497 = vld [vmem:[%s117 + $0x2a78] sm:$0xff]
        %v1498 = vld [vmem:[%s117 + $0x2a80] sm:$0xff]
        %v1499 = vld [vmem:[%s117 + $0x2a88] sm:$0xff]
        %v1500 = vld [vmem:[%s117 + $0x2a90] sm:$0xff]
        %v1501 = vld [vmem:[%s117 + $0x2a98] sm:$0xff]
        %v1502 = vld [vmem:[%s117 + $0x2aa0] sm:$0xff]
        %v1503 = vld [vmem:[%s117 + $0x2aa8] sm:$0xff]
        %v1504 = vld [vmem:[%s117 + $0x2ab0] sm:$0xff]
        %v1505 = vld [vmem:[%s117 + $0x2ab8] sm:$0xff]
        %v1506 = vld [vmem:[%s117 + $0x2ac0] sm:$0xff]
        %v1507 = vld [vmem:[%s117 + $0x2ac8] sm:$0xff]
        %v1508 = vld [vmem:[%s117 + $0x2ad0] sm:$0xff]
        %v1509 = vld [vmem:[%s117 + $0x2ad8] sm:$0xff]
        %v1510 = vld [vmem:[%s117 + $0x2ae0] sm:$0xff]
        %v1511 = vld [vmem:[%s117 + $0x2ae8] sm:$0xff]
        %v1512 = vld [vmem:[%s117 + $0x2af0] sm:$0xff]
        %v1513 = vld [vmem:[%s117 + $0x2af8] sm:$0xff]
        %v1514 = vld [vmem:[%s117 + $0x2b00] sm:$0xff]
        %v1515 = vld [vmem:[%s117 + $0x2b08] sm:$0xff]
        %v1516 = vld [vmem:[%s117 + $0x2b10] sm:$0xff]
        %v1517 = vld [vmem:[%s117 + $0x2b18] sm:$0xff]
        %v1518 = vld [vmem:[%s117 + $0x2b20] sm:$0xff]
        %v1519 = vld [vmem:[%s117 + $0x2b28] sm:$0xff]
        %v1520 = vld [vmem:[%s117 + $0x2b30] sm:$0xff]
        %v1521 = vld [vmem:[%s117 + $0x2b38] sm:$0xff]
        %v1522 = vld [vmem:[%s117 + $0x2b40] sm:$0xff]
        %v1523 = vld [vmem:[%s117 + $0x2b48] sm:$0xff]
        %v1524 = vld [vmem:[%s117 + $0x2b50] sm:$0xff]
        %v1525 = vld [vmem:[%s117 + $0x2b58] sm:$0xff]
        %v1526 = vld [vmem:[%s117 + $0x2b60] sm:$0xff]
        %v1527 = vld [vmem:[%s117 + $0x2b68] sm:$0xff]
        %v1528 = vld [vmem:[%s117 + $0x2b70] sm:$0xff]
        %v1529 = vld [vmem:[%s117 + $0x2b78] sm:$0xff]
        %v1530 = vld [vmem:[%s117 + $0x2b80] sm:$0xff]
        %v1531 = vld [vmem:[%s117 + $0x2b88] sm:$0xff]
        %v1532 = vld [vmem:[%s117 + $0x2b90] sm:$0xff]
        %v1533 = vld [vmem:[%s117 + $0x2b98] sm:$0xff]
        %v1534 = vld [vmem:[%s117 + $0x2ba0] sm:$0xff]
        %v1535 = vld [vmem:[%s117 + $0x2ba8] sm:$0xff]
        %v1536 = vld [vmem:[%s117 + $0x2bb0] sm:$0xff]
        %v1537 = vld [vmem:[%s117 + $0x2bb8] sm:$0xff]
        %v1538 = vld [vmem:[%s117 + $0x2bc0] sm:$0xff]
        %v1539 = vld [vmem:[%s117 + $0x2bc8] sm:$0xff]
        %v1540 = vld [vmem:[%s117 + $0x2bd0] sm:$0xff]
        %v1541 = vld [vmem:[%s117 + $0x2bd8] sm:$0xff]
        %v1542 = vld [vmem:[%s117 + $0x2be0] sm:$0xff]
        %v1543 = vld [vmem:[%s117 + $0x2be8] sm:$0xff]
        %v1544 = vld [vmem:[%s117 + $0x2bf0] sm:$0xff]
        %v1545 = vld [vmem:[%s117 + $0x2bf8] sm:$0xff]
        %v1546 = vld [vmem:[%s117 + $0x2c00] sm:$0xff]
        %v1547 = vld [vmem:[%s117 + $0x2c08] sm:$0xff]
        %v1548 = vld [vmem:[%s117 + $0x2c10] sm:$0xff]
        %v1549 = vld [vmem:[%s117 + $0x2c18] sm:$0xff]
        %v1550 = vld [vmem:[%s117 + $0x2c20] sm:$0xff]
        %v1551 = vld [vmem:[%s117 + $0x2c28] sm:$0xff]
        %v1552 = vld [vmem:[%s117 + $0x2c30] sm:$0xff]
        %v1553 = vld [vmem:[%s117 + $0x2c38] sm:$0xff]
        %v1554 = vld [vmem:[%s117 + $0x2c40] sm:$0xff]
        %v1555 = vld [vmem:[%s117 + $0x2c48] sm:$0xff]
        %v1556 = vld [vmem:[%s117 + $0x2c50] sm:$0xff]
        %v1557 = vld [vmem:[%s117 + $0x2c58] sm:$0xff]
        %v1558 = vld [vmem:[%s117 + $0x2c60] sm:$0xff]
        %v1559 = vld [vmem:[%s117 + $0x2c68] sm:$0xff]
        %v1560 = vld [vmem:[%s117 + $0x2c70] sm:$0xff]
        %v1561 = vld [vmem:[%s117 + $0x2c78] sm:$0xff]
        %v1562 = vld [vmem:[%s117 + $0x2c80] sm:$0xff]
        %v1563 = vld [vmem:[%s117 + $0x2c88] sm:$0xff]
        %v1564 = vld [vmem:[%s117 + $0x2c90] sm:$0xff]
        %v1565 = vld [vmem:[%s117 + $0x2c98] sm:$0xff]
        %v1566 = vld [vmem:[%s117 + $0x2ca0] sm:$0xff]
        %v1567 = vld [vmem:[%s117 + $0x2ca8] sm:$0xff]
        %v1568 = vld [vmem:[%s117 + $0x2cb0] sm:$0xff]
        %v1569 = vld [vmem:[%s117 + $0x2cb8] sm:$0xff]
        %v1570 = vld [vmem:[%s117 + $0x2cc0] sm:$0xff]
        %v1571 = vld [vmem:[%s117 + $0x2cc8] sm:$0xff]
        %v1572 = vld [vmem:[%s117 + $0x2cd0] sm:$0xff]
        %v1573 = vld [vmem:[%s117 + $0x2cd8] sm:$0xff]
        %v1574 = vld [vmem:[%s117 + $0x2ce0] sm:$0xff]
        %v1575 = vld [vmem:[%s117 + $0x2ce8] sm:$0xff]
        %v1576 = vld [vmem:[%s117 + $0x2cf0] sm:$0xff]
        %v1577 = vld [vmem:[%s117 + $0x2cf8] sm:$0xff]
        %v1578 = vld [vmem:[%s117 + $0x2d00] sm:$0xff]
        %v1579 = vld [vmem:[%s117 + $0x2d08] sm:$0xff]
        %v1580 = vld [vmem:[%s117 + $0x2d10] sm:$0xff]
        %v1581 = vld [vmem:[%s117 + $0x2d18] sm:$0xff]
        %v1582 = vld [vmem:[%s117 + $0x2d20] sm:$0xff]
        %v1583 = vld [vmem:[%s117 + $0x2d28] sm:$0xff]
        %v1584 = vld [vmem:[%s117 + $0x2d30] sm:$0xff]
        %v1585 = vld [vmem:[%s117 + $0x2d38] sm:$0xff]
        %v1586 = vld [vmem:[%s117 + $0x2d40] sm:$0xff]
        %v1587 = vld [vmem:[%s117 + $0x2d48] sm:$0xff]
        %v1588 = vld [vmem:[%s117 + $0x2d50] sm:$0xff]
        %v1589 = vld [vmem:[%s117 + $0x2d58] sm:$0xff]
        %v1590 = vld [vmem:[%s117 + $0x2d60] sm:$0xff]
        %v1591 = vld [vmem:[%s117 + $0x2d68] sm:$0xff]
        %v1592 = vld [vmem:[%s117 + $0x2d70] sm:$0xff]
        %v1593 = vld [vmem:[%s117 + $0x2d78] sm:$0xff]
        %v1594 = vld [vmem:[%s117 + $0x2d80] sm:$0xff]
        %v1595 = vld [vmem:[%s117 + $0x2d88] sm:$0xff]
        %v1596 = vld [vmem:[%s117 + $0x2d90] sm:$0xff]
        %v1597 = vld [vmem:[%s117 + $0x2d98] sm:$0xff]
        %v1598 = vld [vmem:[%s117 + $0x2da0] sm:$0xff]
        %v1599 = vld [vmem:[%s117 + $0x2da8] sm:$0xff]
        %v1600 = vld [vmem:[%s117 + $0x2db0] sm:$0xff]
        %v1601 = vld [vmem:[%s117 + $0x2db8] sm:$0xff]
        %v1602 = vld [vmem:[%s117 + $0x2dc0] sm:$0xff]
        %v1603 = vld [vmem:[%s117 + $0x2dc8] sm:$0xff]
        %v1604 = vld [vmem:[%s117 + $0x2dd0] sm:$0xff]
        %v1605 = vld [vmem:[%s117 + $0x2dd8] sm:$0xff]
        %v1606 = vld [vmem:[%s117 + $0x2de0] sm:$0xff]
        %v1607 = vld [vmem:[%s117 + $0x2de8] sm:$0xff]
        %v1608 = vld [vmem:[%s117 + $0x2df0] sm:$0xff]
        %v1609 = vld [vmem:[%s117 + $0x2df8] sm:$0xff]
        %v1610 = vld [vmem:[%s117 + $0x2e00] sm:$0xff]
        %v1611 = vld [vmem:[%s117 + $0x2e08] sm:$0xff]
        %v1612 = vld [vmem:[%s117 + $0x2e10] sm:$0xff]
        %v1613 = vld [vmem:[%s117 + $0x2e18] sm:$0xff]
        %v1614 = vld [vmem:[%s117 + $0x2e20] sm:$0xff]
        %v1615 = vld [vmem:[%s117 + $0x2e28] sm:$0xff]
        %v1616 = vld [vmem:[%s117 + $0x2e30] sm:$0xff]
        %v1617 = vld [vmem:[%s117 + $0x2e38] sm:$0xff]
        %v1618 = vld [vmem:[%s117 + $0x2e40] sm:$0xff]
        %v1619 = vld [vmem:[%s117 + $0x2e48] sm:$0xff]
        %v1620 = vld [vmem:[%s117 + $0x2e50] sm:$0xff]
        %v1621 = vld [vmem:[%s117 + $0x2e58] sm:$0xff]
        %v1622 = vld [vmem:[%s117 + $0x2e60] sm:$0xff]
        %v1623 = vld [vmem:[%s117 + $0x2e68] sm:$0xff]
        %v1624 = vld [vmem:[%s117 + $0x2e70] sm:$0xff]
        %v1625 = vld [vmem:[%s117 + $0x2e78] sm:$0xff]
        %v1626 = vld [vmem:[%s117 + $0x2e80] sm:$0xff]
        %v1627 = vld [vmem:[%s117 + $0x2e88] sm:$0xff]
        %v1628 = vld [vmem:[%s117 + $0x2e90] sm:$0xff]
        %v1629 = vld [vmem:[%s117 + $0x2e98] sm:$0xff]
        %v1630 = vld [vmem:[%s117 + $0x2ea0] sm:$0xff]
        %v1631 = vld [vmem:[%s117 + $0x2ea8] sm:$0xff]
        %v1632 = vld [vmem:[%s117 + $0x2eb0] sm:$0xff]
        %v1633 = vld [vmem:[%s117 + $0x2eb8] sm:$0xff]
        %v1634 = vld [vmem:[%s117 + $0x2ec0] sm:$0xff]
        %v1635 = vld [vmem:[%s117 + $0x2ec8] sm:$0xff]
        %v1636 = vld [vmem:[%s117 + $0x2ed0] sm:$0xff]
        %v1637 = vld [vmem:[%s117 + $0x2ed8] sm:$0xff]
        %v1638 = vld [vmem:[%s117 + $0x2ee0] sm:$0xff]
        %v1639 = vld [vmem:[%s117 + $0x2ee8] sm:$0xff]
        %v1640 = vld [vmem:[%s117 + $0x2ef0] sm:$0xff]
        %v1641 = vld [vmem:[%s117 + $0x2ef8] sm:$0xff]
        %v1642 = vld [vmem:[%s117 + $0x2f00] sm:$0xff]
        %v1643 = vld [vmem:[%s117 + $0x2f08] sm:$0xff]
        %v1644 = vld [vmem:[%s117 + $0x2f10] sm:$0xff]
        %v1645 = vld [vmem:[%s117 + $0x2f18] sm:$0xff]
        %v1646 = vld [vmem:[%s117 + $0x2f20] sm:$0xff]
        %v1647 = vld [vmem:[%s117 + $0x2f28] sm:$0xff]
        %v1648 = vld [vmem:[%s117 + $0x2f30] sm:$0xff]
        %v1649 = vld [vmem:[%s117 + $0x2f38] sm:$0xff]
        %v1650 = vld [vmem:[%s117 + $0x2f40] sm:$0xff]
        %v1651 = vld [vmem:[%s117 + $0x2f48] sm:$0xff]
        %v1652 = vld [vmem:[%s117 + $0x2f50] sm:$0xff]
        %v1653 = vld [vmem:[%s117 + $0x2f58] sm:$0xff]
        %v1654 = vld [vmem:[%s117 + $0x2f60] sm:$0xff]
        %v1655 = vld [vmem:[%s117 + $0x2f68] sm:$0xff]
        %v1656 = vld [vmem:[%s117 + $0x2f70] sm:$0xff]
        %v1657 = vld [vmem:[%s117 + $0x2f78] sm:$0xff]
        %v1658 = vld [vmem:[%s117 + $0x2f80] sm:$0xff]
        %v1659 = vld [vmem:[%s117 + $0x2f88] sm:$0xff]
        %v1660 = vld [vmem:[%s117 + $0x2f90] sm:$0xff]
        %v1661 = vld [vmem:[%s117 + $0x2f98] sm:$0xff]
        %v1662 = vld [vmem:[%s117 + $0x2fa0] sm:$0xff]
        %v1663 = vld [vmem:[%s117 + $0x2fa8] sm:$0xff]
        %v1664 = vld [vmem:[%s117 + $0x2fb0] sm:$0xff]
        %v1665 = vld [vmem:[%s117 + $0x2fb8] sm:$0xff]
        %v1666 = vld [vmem:[%s117 + $0x2fc0] sm:$0xff]
        %v1667 = vld [vmem:[%s117 + $0x2fc8] sm:$0xff]
        %v1668 = vld [vmem:[%s117 + $0x2fd0] sm:$0xff]
        %v1669 = vld [vmem:[%s117 + $0x2fd8] sm:$0xff]
        %v1670 = vld [vmem:[%s117 + $0x2fe0] sm:$0xff]
        %v1671 = vld [vmem:[%s117 + $0x2fe8] sm:$0xff]
        %v1672 = vld [vmem:[%s117 + $0x2ff0] sm:$0xff]
        %v1673 = vld [vmem:[%s117 + $0x2ff8] sm:$0xff]
        %v1674 = vld [vmem:[%s117 + $0x3000] sm:$0xff]
        %v1675 = vld [vmem:[%s117 + $0x3008] sm:$0xff]
        %v1676 = vld [vmem:[%s117 + $0x3010] sm:$0xff]
        %v1677 = vld [vmem:[%s117 + $0x3018] sm:$0xff]
        %v1678 = vld [vmem:[%s117 + $0x3020] sm:$0xff]
        %v1679 = vld [vmem:[%s117 + $0x3028] sm:$0xff]
        %v1680 = vld [vmem:[%s117 + $0x3030] sm:$0xff]
        %v1681 = vld [vmem:[%s117 + $0x3038] sm:$0xff]
        %v1682 = vld [vmem:[%s117 + $0x3040] sm:$0xff]
        %v1683 = vld [vmem:[%s117 + $0x3048] sm:$0xff]
        %v1684 = vld [vmem:[%s117 + $0x3050] sm:$0xff]
        %v1685 = vld [vmem:[%s117 + $0x3058] sm:$0xff]
        %v1686 = vld [vmem:[%s117 + $0x3060] sm:$0xff]
        %v1687 = vld [vmem:[%s117 + $0x3068] sm:$0xff]
        %v1688 = vld [vmem:[%s117 + $0x3070] sm:$0xff]
        %v1689 = vld [vmem:[%s117 + $0x3078] sm:$0xff]
        %v1690 = vld [vmem:[%s117 + $0x3080] sm:$0xff]
        %v1691 = vld [vmem:[%s117 + $0x3088] sm:$0xff]
        %v1692 = vld [vmem:[%s117 + $0x3090] sm:$0xff]
        %v1693 = vld [vmem:[%s117 + $0x3098] sm:$0xff]
        %v1694 = vld [vmem:[%s117 + $0x30a0] sm:$0xff]
        %v1695 = vld [vmem:[%s117 + $0x30a8] sm:$0xff]
        %v1696 = vld [vmem:[%s117 + $0x30b0] sm:$0xff]
        %v1697 = vld [vmem:[%s117 + $0x30b8] sm:$0xff]
        %v1698 = vld [vmem:[%s117 + $0x30c0] sm:$0xff]
        %v1699 = vld [vmem:[%s117 + $0x30c8] sm:$0xff]
        %v1700 = vld [vmem:[%s117 + $0x30d0] sm:$0xff]
        %v1701 = vld [vmem:[%s117 + $0x30d8] sm:$0xff]
        %v1702 = vld [vmem:[%s117 + $0x30e0] sm:$0xff]
        %v1703 = vld [vmem:[%s117 + $0x30e8] sm:$0xff]
        %v1704 = vld [vmem:[%s117 + $0x30f0] sm:$0xff]
        %v1705 = vld [vmem:[%s117 + $0x30f8] sm:$0xff]
        %v1706 = vld [vmem:[%s117 + $0x3100] sm:$0xff]
        %v1707 = vld [vmem:[%s117 + $0x3108] sm:$0xff]
        %v1708 = vld [vmem:[%s117 + $0x3110] sm:$0xff]
        %v1709 = vld [vmem:[%s117 + $0x3118] sm:$0xff]
        %v1710 = vld [vmem:[%s117 + $0x3120] sm:$0xff]
        %v1711 = vld [vmem:[%s117 + $0x3128] sm:$0xff]
        %v1712 = vld [vmem:[%s117 + $0x3130] sm:$0xff]
        %v1713 = vld [vmem:[%s117 + $0x3138] sm:$0xff]
        %v1714 = vld [vmem:[%s117 + $0x3140] sm:$0xff]
        %v1715 = vld [vmem:[%s117 + $0x3148] sm:$0xff]
        %v1716 = vld [vmem:[%s117 + $0x3150] sm:$0xff]
        %v1717 = vld [vmem:[%s117 + $0x3158] sm:$0xff]
        %v1718 = vld [vmem:[%s117 + $0x3160] sm:$0xff]
        %v1719 = vld [vmem:[%s117 + $0x3168] sm:$0xff]
        %v1720 = vld [vmem:[%s117 + $0x3170] sm:$0xff]
        %v1721 = vld [vmem:[%s117 + $0x3178] sm:$0xff]
        %v1722 = vld [vmem:[%s117 + $0x3180] sm:$0xff]
        %v1723 = vld [vmem:[%s117 + $0x3188] sm:$0xff]
        %v1724 = vld [vmem:[%s117 + $0x3190] sm:$0xff]
        %v1725 = vld [vmem:[%s117 + $0x3198] sm:$0xff]
        %v1726 = vld [vmem:[%s117 + $0x31a0] sm:$0xff]
        %v1727 = vld [vmem:[%s117 + $0x31a8] sm:$0xff]
        %v1728 = vld [vmem:[%s117 + $0x31b0] sm:$0xff]
        %v1729 = vld [vmem:[%s117 + $0x31b8] sm:$0xff]
        %v1730 = vld [vmem:[%s117 + $0x31c0] sm:$0xff]
        %v1731 = vld [vmem:[%s117 + $0x31c8] sm:$0xff]
        %v1732 = vld [vmem:[%s117 + $0x31d0] sm:$0xff]
        %v1733 = vld [vmem:[%s117 + $0x31d8] sm:$0xff]
        %v1734 = vld [vmem:[%s117 + $0x31e0] sm:$0xff]
        %v1735 = vld [vmem:[%s117 + $0x31e8] sm:$0xff]
        %v1736 = vld [vmem:[%s117 + $0x31f0] sm:$0xff]
        %v1737 = vld [vmem:[%s117 + $0x31f8] sm:$0xff]
        %v1738 = vld [vmem:[%s117 + $0x3200] sm:$0xff]
        %v1739 = vld [vmem:[%s117 + $0x3208] sm:$0xff]
        %v1740 = vld [vmem:[%s117 + $0x3210] sm:$0xff]
        %v1741 = vld [vmem:[%s117 + $0x3218] sm:$0xff]
        %v1742 = vld [vmem:[%s117 + $0x3220] sm:$0xff]
        %v1743 = vld [vmem:[%s117 + $0x3228] sm:$0xff]
        %v1744 = vld [vmem:[%s117 + $0x3230] sm:$0xff]
        %v1745 = vld [vmem:[%s117 + $0x3238] sm:$0xff]
        %v1746 = vld [vmem:[%s117 + $0x3240] sm:$0xff]
        %v1747 = vld [vmem:[%s117 + $0x3248] sm:$0xff]
        %v1748 = vld [vmem:[%s117 + $0x3250] sm:$0xff]
        %v1749 = vld [vmem:[%s117 + $0x3258] sm:$0xff]
        %v1750 = vld [vmem:[%s117 + $0x3260] sm:$0xff]
        %v1751 = vld [vmem:[%s117 + $0x3268] sm:$0xff]
        %v1752 = vld [vmem:[%s117 + $0x3270] sm:$0xff]
        %v1753 = vld [vmem:[%s117 + $0x3278] sm:$0xff]
        %v1754 = vld [vmem:[%s117 + $0x3280] sm:$0xff]
        %v1755 = vld [vmem:[%s117 + $0x3288] sm:$0xff]
        %v1756 = vld [vmem:[%s117 + $0x3290] sm:$0xff]
        %v1757 = vld [vmem:[%s117 + $0x3298] sm:$0xff]
        %v1758 = vld [vmem:[%s117 + $0x32a0] sm:$0xff]
        %v1759 = vld [vmem:[%s117 + $0x32a8] sm:$0xff]
        %v1760 = vld [vmem:[%s117 + $0x32b0] sm:$0xff]
        %v1761 = vld [vmem:[%s117 + $0x32b8] sm:$0xff]
        %v1762 = vld [vmem:[%s117 + $0x32c0] sm:$0xff]
        %v1763 = vld [vmem:[%s117 + $0x32c8] sm:$0xff]
        %v1764 = vld [vmem:[%s117 + $0x32d0] sm:$0xff]
        %v1765 = vld [vmem:[%s117 + $0x32d8] sm:$0xff]
        %v1766 = vld [vmem:[%s117 + $0x32e0] sm:$0xff]
        %v1767 = vld [vmem:[%s117 + $0x32e8] sm:$0xff]
        %v1768 = vld [vmem:[%s117 + $0x32f0] sm:$0xff]
        %v1769 = vld [vmem:[%s117 + $0x32f8] sm:$0xff]
        %v1770 = vld [vmem:[%s117 + $0x3300] sm:$0xff]
        %v1771 = vld [vmem:[%s117 + $0x3308] sm:$0xff]
        %v1772 = vld [vmem:[%s117 + $0x3310] sm:$0xff]
        %v1773 = vld [vmem:[%s117 + $0x3318] sm:$0xff]
        %v1774 = vld [vmem:[%s117 + $0x3320] sm:$0xff]
        %v1775 = vld [vmem:[%s117 + $0x3328] sm:$0xff]
        %v1776 = vld [vmem:[%s117 + $0x3330] sm:$0xff]
        %v1777 = vld [vmem:[%s117 + $0x3338] sm:$0xff]
        %v1778 = vld [vmem:[%s117 + $0x3340] sm:$0xff]
        %v1779 = vld [vmem:[%s117 + $0x3348] sm:$0xff]
        %v1780 = vld [vmem:[%s117 + $0x3350] sm:$0xff]
        %v1781 = vld [vmem:[%s117 + $0x3358] sm:$0xff]
        %v1782 = vld [vmem:[%s117 + $0x3360] sm:$0xff]
        %v1783 = vld [vmem:[%s117 + $0x3368] sm:$0xff]
        %v1784 = vld [vmem:[%s117 + $0x3370] sm:$0xff]
        %v1785 = vld [vmem:[%s117 + $0x3378] sm:$0xff]
        %v1786 = vld [vmem:[%s117 + $0x3380] sm:$0xff]
        %v1787 = vld [vmem:[%s117 + $0x3388] sm:$0xff]
        %v1788 = vld [vmem:[%s117 + $0x3390] sm:$0xff]
        %v1789 = vld [vmem:[%s117 + $0x3398] sm:$0xff]
        %v1790 = vld [vmem:[%s117 + $0x33a0] sm:$0xff]
        %v1791 = vld [vmem:[%s117 + $0x33a8] sm:$0xff]
        %v1792 = vld [vmem:[%s117 + $0x33b0] sm:$0xff]
        %v1793 = vld [vmem:[%s117 + $0x33b8] sm:$0xff]
        %v1794 = vld [vmem:[%s117 + $0x33c0] sm:$0xff]
        %v1795 = vld [vmem:[%s117 + $0x33c8] sm:$0xff]
        %v1796 = vld [vmem:[%s117 + $0x33d0] sm:$0xff]
        %v1797 = vld [vmem:[%s117 + $0x33d8] sm:$0xff]
        %v1798 = vld [vmem:[%s117 + $0x33e0] sm:$0xff]
        %v1799 = vld [vmem:[%s117 + $0x33e8] sm:$0xff]
        %v1800 = vld [vmem:[%s117 + $0x33f0] sm:$0xff]
        %v1801 = vld [vmem:[%s117 + $0x33f8] sm:$0xff]
        %v1802 = vld [vmem:[%s117 + $0x3400] sm:$0xff]
        %v1803 = vld [vmem:[%s117 + $0x3408] sm:$0xff]
        %v1804 = vld [vmem:[%s117 + $0x3410] sm:$0xff]
        %v1805 = vld [vmem:[%s117 + $0x3418] sm:$0xff]
        %v1806 = vld [vmem:[%s117 + $0x3420] sm:$0xff]
        %v1807 = vld [vmem:[%s117 + $0x3428] sm:$0xff]
        %v1808 = vld [vmem:[%s117 + $0x3430] sm:$0xff]
        %v1809 = vld [vmem:[%s117 + $0x3438] sm:$0xff]
        %v1810 = vld [vmem:[%s117 + $0x3440] sm:$0xff]
        %v1811 = vld [vmem:[%s117 + $0x3448] sm:$0xff]
        %v1812 = vld [vmem:[%s117 + $0x3450] sm:$0xff]
        %v1813 = vld [vmem:[%s117 + $0x3458] sm:$0xff]
        %v1814 = vld [vmem:[%s117 + $0x3460] sm:$0xff]
        %v1815 = vld [vmem:[%s117 + $0x3468] sm:$0xff]
        %v1816 = vld [vmem:[%s117 + $0x3470] sm:$0xff]
        %v1817 = vld [vmem:[%s117 + $0x3478] sm:$0xff]
        %v1818 = vld [vmem:[%s117 + $0x3480] sm:$0xff]
        %v1819 = vld [vmem:[%s117 + $0x3488] sm:$0xff]
        %v1820 = vld [vmem:[%s117 + $0x3490] sm:$0xff]
        %v1821 = vld [vmem:[%s117 + $0x3498] sm:$0xff]
        %v1822 = vld [vmem:[%s117 + $0x34a0] sm:$0xff]
        %v1823 = vld [vmem:[%s117 + $0x34a8] sm:$0xff]
        %v1824 = vld [vmem:[%s117 + $0x34b0] sm:$0xff]
        %v1825 = vld [vmem:[%s117 + $0x34b8] sm:$0xff]
        %v1826 = vld [vmem:[%s117 + $0x34c0] sm:$0xff]
        %v1827 = vld [vmem:[%s117 + $0x34c8] sm:$0xff]
        %v1828 = vld [vmem:[%s117 + $0x34d0] sm:$0xff]
        %v1829 = vld [vmem:[%s117 + $0x34d8] sm:$0xff]
        %v1830 = vld [vmem:[%s117 + $0x34e0] sm:$0xff]
        %v1831 = vld [vmem:[%s117 + $0x34e8] sm:$0xff]
        %v1832 = vld [vmem:[%s117 + $0x34f0] sm:$0xff]
        %v1833 = vld [vmem:[%s117 + $0x34f8] sm:$0xff]
        %v1834 = vld [vmem:[%s117 + $0x3500] sm:$0xff]
        %v1835 = vld [vmem:[%s117 + $0x3508] sm:$0xff]
        %v1836 = vld [vmem:[%s117 + $0x3510] sm:$0xff]
        %v1837 = vld [vmem:[%s117 + $0x3518] sm:$0xff]
        %v1838 = vld [vmem:[%s117 + $0x3520] sm:$0xff]
        %v1839 = vld [vmem:[%s117 + $0x3528] sm:$0xff]
        %v1840 = vld [vmem:[%s117 + $0x3530] sm:$0xff]
        %v1841 = vld [vmem:[%s117 + $0x3538] sm:$0xff]
        %v1842 = vld [vmem:[%s117 + $0x3540] sm:$0xff]
        %v1843 = vld [vmem:[%s117 + $0x3548] sm:$0xff]
        %v1844 = vld [vmem:[%s117 + $0x3550] sm:$0xff]
        %v1845 = vld [vmem:[%s117 + $0x3558] sm:$0xff]
        %v1846 = vld [vmem:[%s117 + $0x3560] sm:$0xff]
        %v1847 = vld [vmem:[%s117 + $0x3568] sm:$0xff]
        %v1848 = vld [vmem:[%s117 + $0x3570] sm:$0xff]
        %v1849 = vld [vmem:[%s117 + $0x3578] sm:$0xff]
        %v1850 = vld [vmem:[%s117 + $0x3580] sm:$0xff]
        %v1851 = vld [vmem:[%s117 + $0x3588] sm:$0xff]
        %v1852 = vld [vmem:[%s117 + $0x3590] sm:$0xff]
        %v1853 = vld [vmem:[%s117 + $0x3598] sm:$0xff]
        %v1854 = vld [vmem:[%s117 + $0x35a0] sm:$0xff]
        %v1855 = vld [vmem:[%s117 + $0x35a8] sm:$0xff]
        %v1856 = vld [vmem:[%s117 + $0x35b0] sm:$0xff]
        %v1857 = vld [vmem:[%s117 + $0x35b8] sm:$0xff]
        %v1858 = vld [vmem:[%s117 + $0x35c0] sm:$0xff]
        %v1859 = vld [vmem:[%s117 + $0x35c8] sm:$0xff]
        %v1860 = vld [vmem:[%s117 + $0x35d0] sm:$0xff]
        %v1861 = vld [vmem:[%s117 + $0x35d8] sm:$0xff]
        %v1862 = vld [vmem:[%s117 + $0x35e0] sm:$0xff]
        %v1863 = vld [vmem:[%s117 + $0x35e8] sm:$0xff]
        %v1864 = vld [vmem:[%s117 + $0x35f0] sm:$0xff]
        %v1865 = vld [vmem:[%s117 + $0x35f8] sm:$0xff]
        %v1866 = vld [vmem:[%s117 + $0x3600] sm:$0xff]
        %v1867 = vld [vmem:[%s117 + $0x3608] sm:$0xff]
        %v1868 = vld [vmem:[%s117 + $0x3610] sm:$0xff]
        %v1869 = vld [vmem:[%s117 + $0x3618] sm:$0xff]
        %v1870 = vld [vmem:[%s117 + $0x3620] sm:$0xff]
        %v1871 = vld [vmem:[%s117 + $0x3628] sm:$0xff]
        %v1872 = vld [vmem:[%s117 + $0x3630] sm:$0xff]
        %v1873 = vld [vmem:[%s117 + $0x3638] sm:$0xff]
        %v1874 = vld [vmem:[%s117 + $0x3640] sm:$0xff]
        %v1875 = vld [vmem:[%s117 + $0x3648] sm:$0xff]
        %v1876 = vld [vmem:[%s117 + $0x3650] sm:$0xff]
        %v1877 = vld [vmem:[%s117 + $0x3658] sm:$0xff]
        %v1878 = vld [vmem:[%s117 + $0x3660] sm:$0xff]
        %v1879 = vld [vmem:[%s117 + $0x3668] sm:$0xff]
        %v1880 = vld [vmem:[%s117 + $0x3670] sm:$0xff]
        %v1881 = vld [vmem:[%s117 + $0x3678] sm:$0xff]
        %v1882 = vld [vmem:[%s117 + $0x3680] sm:$0xff]
        %v1883 = vld [vmem:[%s117 + $0x3688] sm:$0xff]
        %v1884 = vld [vmem:[%s117 + $0x3690] sm:$0xff]
        %v1885 = vld [vmem:[%s117 + $0x3698] sm:$0xff]
        %v1886 = vld [vmem:[%s117 + $0x36a0] sm:$0xff]
        %v1887 = vld [vmem:[%s117 + $0x36a8] sm:$0xff]
        %v1888 = vld [vmem:[%s117 + $0x36b0] sm:$0xff]
        %v1889 = vld [vmem:[%s117 + $0x36b8] sm:$0xff]
        %v1890 = vld [vmem:[%s117 + $0x36c0] sm:$0xff]
        %v1891 = vld [vmem:[%s117 + $0x36c8] sm:$0xff]
        %v1892 = vld [vmem:[%s117 + $0x36d0] sm:$0xff]
        %v1893 = vld [vmem:[%s117 + $0x36d8] sm:$0xff]
        %v1894 = vld [vmem:[%s117 + $0x36e0] sm:$0xff]
        %v1895 = vld [vmem:[%s117 + $0x36e8] sm:$0xff]
        %v1896 = vld [vmem:[%s117 + $0x36f0] sm:$0xff]
        %v1897 = vld [vmem:[%s117 + $0x36f8] sm:$0xff]
        %v1898 = vld [vmem:[%s117 + $0x3700] sm:$0xff]
        %v1899 = vld [vmem:[%s117 + $0x3708] sm:$0xff]
        %v1900 = vld [vmem:[%s117 + $0x3710] sm:$0xff]
        %v1901 = vld [vmem:[%s117 + $0x3718] sm:$0xff]
        %v1902 = vld [vmem:[%s117 + $0x3720] sm:$0xff]
        %v1903 = vld [vmem:[%s117 + $0x3728] sm:$0xff]
        %v1904 = vld [vmem:[%s117 + $0x3730] sm:$0xff]
        %v1905 = vld [vmem:[%s117 + $0x3738] sm:$0xff]
        %v1906 = vld [vmem:[%s117 + $0x3740] sm:$0xff]
        %v1907 = vld [vmem:[%s117 + $0x3748] sm:$0xff]
        %v1908 = vld [vmem:[%s117 + $0x3750] sm:$0xff]
        %v1909 = vld [vmem:[%s117 + $0x3758] sm:$0xff]
        %v1910 = vld [vmem:[%s117 + $0x3760] sm:$0xff]
        %v1911 = vld [vmem:[%s117 + $0x3768] sm:$0xff]
        %v1912 = vld [vmem:[%s117 + $0x3770] sm:$0xff]
        %v1913 = vld [vmem:[%s117 + $0x3778] sm:$0xff]
        %v1914 = vld [vmem:[%s117 + $0x3780] sm:$0xff]
        %v1915 = vld [vmem:[%s117 + $0x3788] sm:$0xff]
        %v1916 = vld [vmem:[%s117 + $0x3790] sm:$0xff]
        %v1917 = vld [vmem:[%s117 + $0x3798] sm:$0xff]
        %v1918 = vld [vmem:[%s117 + $0x37a0] sm:$0xff]
        %v1919 = vld [vmem:[%s117 + $0x37a8] sm:$0xff]
        %v1920 = vld [vmem:[%s117 + $0x37b0] sm:$0xff]
        %v1921 = vld [vmem:[%s117 + $0x37b8] sm:$0xff]
        %v1922 = vld [vmem:[%s117 + $0x37c0] sm:$0xff]
        %v1923 = vld [vmem:[%s117 + $0x37c8] sm:$0xff]
        %v1924 = vld [vmem:[%s117 + $0x37d0] sm:$0xff]
        %v1925 = vld [vmem:[%s117 + $0x37d8] sm:$0xff]
        %v1926 = vld [vmem:[%s117 + $0x37e0] sm:$0xff]
        %v1927 = vld [vmem:[%s117 + $0x37e8] sm:$0xff]
        %v1928 = vld [vmem:[%s117 + $0x37f0] sm:$0xff]
        %v1929 = vld [vmem:[%s117 + $0x37f8] sm:$0xff]
        %v1930 = vld [vmem:[%s117 + $0x3800] sm:$0xff]
        %v1931 = vld [vmem:[%s117 + $0x3808] sm:$0xff]
        %v1932 = vld [vmem:[%s117 + $0x3810] sm:$0xff]
        %v1933 = vld [vmem:[%s117 + $0x3818] sm:$0xff]
        %v1934 = vld [vmem:[%s117 + $0x3820] sm:$0xff]
        %v1935 = vld [vmem:[%s117 + $0x3828] sm:$0xff]
        %v1936 = vld [vmem:[%s117 + $0x3830] sm:$0xff]
        %v1937 = vld [vmem:[%s117 + $0x3838] sm:$0xff]
        %v1938 = vld [vmem:[%s117 + $0x3840] sm:$0xff]
        %v1939 = vld [vmem:[%s117 + $0x3848] sm:$0xff]
        %v1940 = vld [vmem:[%s117 + $0x3850] sm:$0xff]
        %v1941 = vld [vmem:[%s117 + $0x3858] sm:$0xff]
        %v1942 = vld [vmem:[%s117 + $0x3860] sm:$0xff]
        %v1943 = vld [vmem:[%s117 + $0x3868] sm:$0xff]
        %v1944 = vld [vmem:[%s117 + $0x3870] sm:$0xff]
        %v1945 = vld [vmem:[%s117 + $0x3878] sm:$0xff]
        %v1946 = vld [vmem:[%s117 + $0x3880] sm:$0xff]
        %v1947 = vld [vmem:[%s117 + $0x3888] sm:$0xff]
        %v1948 = vld [vmem:[%s117 + $0x3890] sm:$0xff]
        %v1949 = vld [vmem:[%s117 + $0x3898] sm:$0xff]
        %v1950 = vld [vmem:[%s117 + $0x38a0] sm:$0xff]
        %v1951 = vld [vmem:[%s117 + $0x38a8] sm:$0xff]
        %v1952 = vld [vmem:[%s117 + $0x38b0] sm:$0xff]
        %v1953 = vld [vmem:[%s117 + $0x38b8] sm:$0xff]
        %v1954 = vld [vmem:[%s117 + $0x38c0] sm:$0xff]
        %v1955 = vld [vmem:[%s117 + $0x38c8] sm:$0xff]
        %v1956 = vld [vmem:[%s117 + $0x38d0] sm:$0xff]
        %v1957 = vld [vmem:[%s117 + $0x38d8] sm:$0xff]
        %v1958 = vld [vmem:[%s117 + $0x38e0] sm:$0xff]
        %v1959 = vld [vmem:[%s117 + $0x38e8] sm:$0xff]
        %v1960 = vld [vmem:[%s117 + $0x38f0] sm:$0xff]
        %v1961 = vld [vmem:[%s117 + $0x38f8] sm:$0xff]
        %v1962 = vld [vmem:[%s117 + $0x3900] sm:$0xff]
        %v1963 = vld [vmem:[%s117 + $0x3908] sm:$0xff]
        %v1964 = vld [vmem:[%s117 + $0x3910] sm:$0xff]
        %v1965 = vld [vmem:[%s117 + $0x3918] sm:$0xff]
        %v1966 = vld [vmem:[%s117 + $0x3920] sm:$0xff]
        %v1967 = vld [vmem:[%s117 + $0x3928] sm:$0xff]
        %v1968 = vld [vmem:[%s117 + $0x3930] sm:$0xff]
        %v1969 = vld [vmem:[%s117 + $0x3938] sm:$0xff]
        %v1970 = vld [vmem:[%s117 + $0x3940] sm:$0xff]
        %v1971 = vld [vmem:[%s117 + $0x3948] sm:$0xff]
        %v1972 = vld [vmem:[%s117 + $0x3950] sm:$0xff]
        %v1973 = vld [vmem:[%s117 + $0x3958] sm:$0xff]
        %v1974 = vld [vmem:[%s117 + $0x3960] sm:$0xff]
        %v1975 = vld [vmem:[%s117 + $0x3968] sm:$0xff]
        %v1976 = vld [vmem:[%s117 + $0x3970] sm:$0xff]
        %v1977 = vld [vmem:[%s117 + $0x3978] sm:$0xff]
        %v1978 = vld [vmem:[%s117 + $0x3980] sm:$0xff]
        %v1979 = vld [vmem:[%s117 + $0x3988] sm:$0xff]
        %v1980 = vld [vmem:[%s117 + $0x3990] sm:$0xff]
        %v1981 = vld [vmem:[%s117 + $0x3998] sm:$0xff]
        %v1982 = vld [vmem:[%s117 + $0x39a0] sm:$0xff]
        %v1983 = vld [vmem:[%s117 + $0x39a8] sm:$0xff]
        %v1984 = vld [vmem:[%s117 + $0x39b0] sm:$0xff]
        %v1985 = vld [vmem:[%s117 + $0x39b8] sm:$0xff]
        %v1986 = vld [vmem:[%s117 + $0x39c0] sm:$0xff]
        %v1987 = vld [vmem:[%s117 + $0x39c8] sm:$0xff]
        %v1988 = vld [vmem:[%s117 + $0x39d0] sm:$0xff]
        %v1989 = vld [vmem:[%s117 + $0x39d8] sm:$0xff]
        %v1990 = vld [vmem:[%s117 + $0x39e0] sm:$0xff]
        %v1991 = vld [vmem:[%s117 + $0x39e8] sm:$0xff]
        %v1992 = vld [vmem:[%s117 + $0x39f0] sm:$0xff]
        %v1993 = vld [vmem:[%s117 + $0x39f8] sm:$0xff]
        %v1994 = vld [vmem:[%s117 + $0x3a00] sm:$0xff]
        %v1995 = vld [vmem:[%s117 + $0x3a08] sm:$0xff]
        %v1996 = vld [vmem:[%s117 + $0x3a10] sm:$0xff]
        %v1997 = vld [vmem:[%s117 + $0x3a18] sm:$0xff]
        %v1998 = vld [vmem:[%s117 + $0x3a20] sm:$0xff]
        %v1999 = vld [vmem:[%s117 + $0x3a28] sm:$0xff]
        %v2000 = vld [vmem:[%s117 + $0x3a30] sm:$0xff]
        %v2001 = vld [vmem:[%s117 + $0x3a38] sm:$0xff]
        %v2002 = vld [vmem:[%s117 + $0x3a40] sm:$0xff]
        %v2003 = vld [vmem:[%s117 + $0x3a48] sm:$0xff]
        %v2004 = vld [vmem:[%s117 + $0x3a50] sm:$0xff]
        %v2005 = vld [vmem:[%s117 + $0x3a58] sm:$0xff]
        %v2006 = vld [vmem:[%s117 + $0x3a60] sm:$0xff]
        %v2007 = vld [vmem:[%s117 + $0x3a68] sm:$0xff]
        %v2008 = vld [vmem:[%s117 + $0x3a70] sm:$0xff]
        %v2009 = vld [vmem:[%s117 + $0x3a78] sm:$0xff]
        %v2010 = vld [vmem:[%s117 + $0x3a80] sm:$0xff]
        %v2011 = vld [vmem:[%s117 + $0x3a88] sm:$0xff]
        %v2012 = vld [vmem:[%s117 + $0x3a90] sm:$0xff]
        %v2013 = vld [vmem:[%s117 + $0x3a98] sm:$0xff]
        %v2014 = vld [vmem:[%s117 + $0x3aa0] sm:$0xff]
        %v2015 = vld [vmem:[%s117 + $0x3aa8] sm:$0xff]
        %v2016 = vld [vmem:[%s117 + $0x3ab0] sm:$0xff]
        %v2017 = vld [vmem:[%s117 + $0x3ab8] sm:$0xff]
        %v2018 = vld [vmem:[%s117 + $0x3ac0] sm:$0xff]
        %v2019 = vld [vmem:[%s117 + $0x3ac8] sm:$0xff]
        %v2020 = vld [vmem:[%s117 + $0x3ad0] sm:$0xff]
        %v2021 = vld [vmem:[%s117 + $0x3ad8] sm:$0xff]
        %v2022 = vld [vmem:[%s117 + $0x3ae0] sm:$0xff]
        %v2023 = vld [vmem:[%s117 + $0x3ae8] sm:$0xff]
        %v2024 = vld [vmem:[%s117 + $0x3af0] sm:$0xff]
        %v2025 = vld [vmem:[%s117 + $0x3af8] sm:$0xff]
        %v2026 = vld [vmem:[%s117 + $0x3b00] sm:$0xff]
        %v2027 = vld [vmem:[%s117 + $0x3b08] sm:$0xff]
        %v2028 = vld [vmem:[%s117 + $0x3b10] sm:$0xff]
        %v2029 = vld [vmem:[%s117 + $0x3b18] sm:$0xff]
        %v2030 = vld [vmem:[%s117 + $0x3b20] sm:$0xff]
        %v2031 = vld [vmem:[%s117 + $0x3b28] sm:$0xff]
        %v2032 = vld [vmem:[%s117 + $0x3b30] sm:$0xff]
        %v2033 = vld [vmem:[%s117 + $0x3b38] sm:$0xff]
        %v2034 = vld [vmem:[%s117 + $0x3b40] sm:$0xff]
        %v2035 = vld [vmem:[%s117 + $0x3b48] sm:$0xff]
        %v2036 = vld [vmem:[%s117 + $0x3b50] sm:$0xff]
        %v2037 = vld [vmem:[%s117 + $0x3b58] sm:$0xff]
        %v2038 = vld [vmem:[%s117 + $0x3b60] sm:$0xff]
        %v2039 = vld [vmem:[%s117 + $0x3b68] sm:$0xff]
        %v2040 = vld [vmem:[%s117 + $0x3b70] sm:$0xff]
        %v2041 = vld [vmem:[%s117 + $0x3b78] sm:$0xff]
        %v2042 = vld [vmem:[%s117 + $0x3b80] sm:$0xff]
        %v2043 = vld [vmem:[%s117 + $0x3b88] sm:$0xff]
        %v2044 = vld [vmem:[%s117 + $0x3b90] sm:$0xff]
        %v2045 = vld [vmem:[%s117 + $0x3b98] sm:$0xff]
        %v2046 = vld [vmem:[%s117 + $0x3ba0] sm:$0xff]
        %v2047 = vld [vmem:[%s117 + $0x3ba8] sm:$0xff]
        %v2048 = vld [vmem:[%s117 + $0x3bb0] sm:$0xff]
        %v2049 = vld [vmem:[%s117 + $0x3bb8] sm:$0xff]
        %v2050 = vld [vmem:[%s117 + $0x3bc0] sm:$0xff]
        %v2051 = vld [vmem:[%s117 + $0x3bc8] sm:$0xff]
        %v2052 = vld [vmem:[%s117 + $0x3bd0] sm:$0xff]
        %v2053 = vld [vmem:[%s117 + $0x3bd8] sm:$0xff]
        %v2054 = vld [vmem:[%s117 + $0x3be0] sm:$0xff]
        %v2055 = vld [vmem:[%s117 + $0x3be8] sm:$0xff]
        %v2056 = vld [vmem:[%s117 + $0x3bf0] sm:$0xff]
        %v2057 = vld [vmem:[%s117 + $0x3bf8] sm:$0xff]
        %v2058 = vld [vmem:[%s117 + $0x3c00] sm:$0xff]
        %v2059 = vld [vmem:[%s117 + $0x3c08] sm:$0xff]
        %v2060 = vld [vmem:[%s117 + $0x3c10] sm:$0xff]
        %v2061 = vld [vmem:[%s117 + $0x3c18] sm:$0xff]
        %v2062 = vld [vmem:[%s117 + $0x3c20] sm:$0xff]
        %v2063 = vld [vmem:[%s117 + $0x3c28] sm:$0xff]
        %v2064 = vld [vmem:[%s117 + $0x3c30] sm:$0xff]
        %v2065 = vld [vmem:[%s117 + $0x3c38] sm:$0xff]
        %v2066 = vld [vmem:[%s117 + $0x3c40] sm:$0xff]
        %v2067 = vld [vmem:[%s117 + $0x3c48] sm:$0xff]
        %v2068 = vld [vmem:[%s117 + $0x3c50] sm:$0xff]
        %v2069 = vld [vmem:[%s117 + $0x3c58] sm:$0xff]
        %v2070 = vld [vmem:[%s117 + $0x3c60] sm:$0xff]
        %v2071 = vld [vmem:[%s117 + $0x3c68] sm:$0xff]
        %v2072 = vld [vmem:[%s117 + $0x3c70] sm:$0xff]
        %v2073 = vld [vmem:[%s117 + $0x3c78] sm:$0xff]
        %v2074 = vld [vmem:[%s117 + $0x3c80] sm:$0xff]
        %v2075 = vld [vmem:[%s117 + $0x3c88] sm:$0xff]
        %v2076 = vld [vmem:[%s117 + $0x3c90] sm:$0xff]
        %v2077 = vld [vmem:[%s117 + $0x3c98] sm:$0xff]
        %v2078 = vld [vmem:[%s117 + $0x3ca0] sm:$0xff]
        %v2079 = vld [vmem:[%s117 + $0x3ca8] sm:$0xff]
        %v2080 = vld [vmem:[%s117 + $0x3cb0] sm:$0xff]
        %v2081 = vld [vmem:[%s117 + $0x3cb8] sm:$0xff]
        %v2082 = vld [vmem:[%s117 + $0x3cc0] sm:$0xff]
        %v2083 = vld [vmem:[%s117 + $0x3cc8] sm:$0xff]
        %v2084 = vld [vmem:[%s117 + $0x3cd0] sm:$0xff]
        %v2085 = vld [vmem:[%s117 + $0x3cd8] sm:$0xff]
        %v2086 = vld [vmem:[%s117 + $0x3ce0] sm:$0xff]
        %v2087 = vld [vmem:[%s117 + $0x3ce8] sm:$0xff]
        %v2088 = vld [vmem:[%s117 + $0x3cf0] sm:$0xff]
        %v2089 = vld [vmem:[%s117 + $0x3cf8] sm:$0xff]
        %v2090 = vld [vmem:[%s117 + $0x3d00] sm:$0xff]
        %v2091 = vld [vmem:[%s117 + $0x3d08] sm:$0xff]
        %v2092 = vld [vmem:[%s117 + $0x3d10] sm:$0xff]
        %v2093 = vld [vmem:[%s117 + $0x3d18] sm:$0xff]
        %v2094 = vld [vmem:[%s117 + $0x3d20] sm:$0xff]
        %v2095 = vld [vmem:[%s117 + $0x3d28] sm:$0xff]
        %v2096 = vld [vmem:[%s117 + $0x3d30] sm:$0xff]
        %v2097 = vld [vmem:[%s117 + $0x3d38] sm:$0xff]
        %v2098 = vld [vmem:[%s117 + $0x3d40] sm:$0xff]
        %v2099 = vld [vmem:[%s117 + $0x3d48] sm:$0xff]
        %v2100 = vld [vmem:[%s117 + $0x3d50] sm:$0xff]
        %v2101 = vld [vmem:[%s117 + $0x3d58] sm:$0xff]
        %v2102 = vld [vmem:[%s117 + $0x3d60] sm:$0xff]
        %v2103 = vld [vmem:[%s117 + $0x3d68] sm:$0xff]
        %v2104 = vld [vmem:[%s117 + $0x3d70] sm:$0xff]
        %v2105 = vld [vmem:[%s117 + $0x3d78] sm:$0xff]
        %v2106 = vld [vmem:[%s117 + $0x3d80] sm:$0xff]
        %v2107 = vld [vmem:[%s117 + $0x3d88] sm:$0xff]
        %v2108 = vld [vmem:[%s117 + $0x3d90] sm:$0xff]
        %v2109 = vld [vmem:[%s117 + $0x3d98] sm:$0xff]
        %v2110 = vld [vmem:[%s117 + $0x3da0] sm:$0xff]
        %v2111 = vld [vmem:[%s117 + $0x3da8] sm:$0xff]
        %v2112 = vld [vmem:[%s117 + $0x3db0] sm:$0xff]
        %v2113 = vld [vmem:[%s117 + $0x3db8] sm:$0xff]
        %v2114 = vld [vmem:[%s117 + $0x3dc0] sm:$0xff]
        %v2115 = vld [vmem:[%s117 + $0x3dc8] sm:$0xff]
        %v2116 = vld [vmem:[%s117 + $0x3dd0] sm:$0xff]
        %v2117 = vld [vmem:[%s117 + $0x3dd8] sm:$0xff]
        %v2118 = vld [vmem:[%s117 + $0x3de0] sm:$0xff]
        %v2119 = vld [vmem:[%s117 + $0x3de8] sm:$0xff]
        %v2120 = vld [vmem:[%s117 + $0x3df0] sm:$0xff]
        %v2121 = vld [vmem:[%s117 + $0x3df8] sm:$0xff]
        %v2122 = vld [vmem:[%s117 + $0x3e00] sm:$0xff]
        %v2123 = vld [vmem:[%s117 + $0x3e08] sm:$0xff]
        %v2124 = vld [vmem:[%s117 + $0x3e10] sm:$0xff]
        %v2125 = vld [vmem:[%s117 + $0x3e18] sm:$0xff]
        %v2126 = vld [vmem:[%s117 + $0x3e20] sm:$0xff]
        %v2127 = vld [vmem:[%s117 + $0x3e28] sm:$0xff]
        %v2128 = vld [vmem:[%s117 + $0x3e30] sm:$0xff]
        %v2129 = vld [vmem:[%s117 + $0x3e38] sm:$0xff]
        %v2130 = vld [vmem:[%s117 + $0x3e40] sm:$0xff]
        %v2131 = vld [vmem:[%s117 + $0x3e48] sm:$0xff]
        %v2132 = vld [vmem:[%s117 + $0x3e50] sm:$0xff]
        %v2133 = vld [vmem:[%s117 + $0x3e58] sm:$0xff]
        %v2134 = vld [vmem:[%s117 + $0x3e60] sm:$0xff]
        %v2135 = vld [vmem:[%s117 + $0x3e68] sm:$0xff]
        %v2136 = vld [vmem:[%s117 + $0x3e70] sm:$0xff]
        %v2137 = vld [vmem:[%s117 + $0x3e78] sm:$0xff]
        %v2138 = vld [vmem:[%s117 + $0x3e80] sm:$0xff]
        %v2139 = vld [vmem:[%s117 + $0x3e88] sm:$0xff]
        %v2140 = vld [vmem:[%s117 + $0x3e90] sm:$0xff]
        %v2141 = vld [vmem:[%s117 + $0x3e98] sm:$0xff]
        %v2142 = vld [vmem:[%s117 + $0x3ea0] sm:$0xff]
        %v2143 = vld [vmem:[%s117 + $0x3ea8] sm:$0xff]
        %v2144 = vld [vmem:[%s117 + $0x3eb0] sm:$0xff]
        %v2145 = vld [vmem:[%s117 + $0x3eb8] sm:$0xff]
        %v2146 = vld [vmem:[%s117 + $0x3ec0] sm:$0xff]
        %v2147 = vld [vmem:[%s117 + $0x3ec8] sm:$0xff]
        %v2148 = vld [vmem:[%s117 + $0x3ed0] sm:$0xff]
        %v2149 = vld [vmem:[%s117 + $0x3ed8] sm:$0xff]
        %v2150 = vld [vmem:[%s117 + $0x3ee0] sm:$0xff]
        %v2151 = vld [vmem:[%s117 + $0x3ee8] sm:$0xff]
        %v2152 = vld [vmem:[%s117 + $0x3ef0] sm:$0xff]
        %v2153 = vld [vmem:[%s117 + $0x3ef8] sm:$0xff]
        %v2154 = vld [vmem:[%s117 + $0x3f00] sm:$0xff]
        %v2155 = vld [vmem:[%s117 + $0x3f08] sm:$0xff]
        %v2156 = vld [vmem:[%s117 + $0x3f10] sm:$0xff]
        %v2157 = vld [vmem:[%s117 + $0x3f18] sm:$0xff]
        %v2158 = vld [vmem:[%s117 + $0x3f20] sm:$0xff]
        %v2159 = vld [vmem:[%s117 + $0x3f28] sm:$0xff]
        %v2160 = vld [vmem:[%s117 + $0x3f30] sm:$0xff]
        %v2161 = vld [vmem:[%s117 + $0x3f38] sm:$0xff]
        %v2162 = vld [vmem:[%s117 + $0x3f40] sm:$0xff]
        %v2163 = vld [vmem:[%s117 + $0x3f48] sm:$0xff]
        %v2164 = vld [vmem:[%s117 + $0x3f50] sm:$0xff]
        %v2165 = vld [vmem:[%s117 + $0x3f58] sm:$0xff]
        %v2166 = vld [vmem:[%s117 + $0x3f60] sm:$0xff]
        %v2167 = vld [vmem:[%s117 + $0x3f68] sm:$0xff]
        %v2168 = vld [vmem:[%s117 + $0x3f70] sm:$0xff]
        %v2169 = vld [vmem:[%s117 + $0x3f78] sm:$0xff]
        %v2170 = vld [vmem:[%s117 + $0x3f80] sm:$0xff]
        %v2171 = vld [vmem:[%s117 + $0x3f88] sm:$0xff]
        %v2172 = vld [vmem:[%s117 + $0x3f90] sm:$0xff]
        %v2173 = vld [vmem:[%s117 + $0x3f98] sm:$0xff]
        %v2174 = vld [vmem:[%s117 + $0x3fa0] sm:$0xff]
        %v2175 = vld [vmem:[%s117 + $0x3fa8] sm:$0xff]
        %v2176 = vld [vmem:[%s117 + $0x3fb0] sm:$0xff]
        %v2177 = vld [vmem:[%s117 + $0x3fb8] sm:$0xff]
        %v2178 = vld [vmem:[%s117 + $0x3fc0] sm:$0xff]
        %v2179 = vld [vmem:[%s117 + $0x3fc8] sm:$0xff]
        %v2180 = vld [vmem:[%s117 + $0x3fd0] sm:$0xff]
        %v2181 = vld [vmem:[%s117 + $0x3fd8] sm:$0xff]
        %v2182 = vld [vmem:[%s117 + $0x3fe0] sm:$0xff]
        %v2183 = vld [vmem:[%s117 + $0x3fe8] sm:$0xff]
        %v2184 = vld [vmem:[%s117 + $0x3ff0] sm:$0xff]
        %v2185 = vld [vmem:[%s117 + $0x3ff8] sm:$0xff]
        %v2186 = vmul.f32 %v138, 0.0
        %v2187 = vmul.f32 %v139, 0.0
        %v2188 = vmul.f32 %v140, 0.0
        %v2189 = vmul.f32 %v141, 0.0
        %v2190 = vmul.f32 %v142, 0.0
        %v2191 = vmul.f32 %v143, 0.0
        %v2192 = vmul.f32 %v144, 0.0
        %v2193 = vmul.f32 %v145, 0.0
        %v2194 = vmul.f32 %v146, 0.0
        %v2195 = vmul.f32 %v147, 0.0
        %v2196 = vmul.f32 %v148, 0.0
        %v2197 = vmul.f32 %v149, 0.0
        %v2198 = vmul.f32 %v150, 0.0
        %v2199 = vmul.f32 %v151, 0.0
        %v2200 = vmul.f32 %v152, 0.0
        %v2201 = vmul.f32 %v153, 0.0
        %v2202 = vmul.f32 %v154, 0.0
        %v2203 = vmul.f32 %v155, 0.0
        %v2204 = vmul.f32 %v156, 0.0
        %v2205 = vmul.f32 %v157, 0.0
        %v2206 = vmul.f32 %v158, 0.0
        %v2207 = vmul.f32 %v159, 0.0
        %v2208 = vmul.f32 %v160, 0.0
        %v2209 = vmul.f32 %v161, 0.0
        %v2210 = vmul.f32 %v162, 0.0
        %v2211 = vmul.f32 %v163, 0.0
        %v2212 = vmul.f32 %v164, 0.0
        %v2213 = vmul.f32 %v165, 0.0
        %v2214 = vmul.f32 %v166, 0.0
        %v2215 = vmul.f32 %v167, 0.0
        %v2216 = vmul.f32 %v168, 0.0
        %v2217 = vmul.f32 %v169, 0.0
        %v2218 = vmul.f32 %v170, 0.0
        %v2219 = vmul.f32 %v171, 0.0
        %v2220 = vmul.f32 %v172, 0.0
        %v2221 = vmul.f32 %v173, 0.0
        %v2222 = vmul.f32 %v174, 0.0
        %v2223 = vmul.f32 %v175, 0.0
        %v2224 = vmul.f32 %v176, 0.0
        %v2225 = vmul.f32 %v177, 0.0
        %v2226 = vmul.f32 %v178, 0.0
        %v2227 = vmul.f32 %v179, 0.0
        %v2228 = vmul.f32 %v180, 0.0
        %v2229 = vmul.f32 %v181, 0.0
        %v2230 = vmul.f32 %v182, 0.0
        %v2231 = vmul.f32 %v183, 0.0
        %v2232 = vmul.f32 %v184, 0.0
        %v2233 = vmul.f32 %v185, 0.0
        %v2234 = vmul.f32 %v186, 0.0
        %v2235 = vmul.f32 %v187, 0.0
        %v2236 = vmul.f32 %v188, 0.0
        %v2237 = vmul.f32 %v189, 0.0
        %v2238 = vmul.f32 %v190, 0.0
        %v2239 = vmul.f32 %v191, 0.0
        %v2240 = vmul.f32 %v192, 0.0
        %v2241 = vmul.f32 %v193, 0.0
        %v2242 = vmul.f32 %v194, 0.0
        %v2243 = vmul.f32 %v195, 0.0
        %v2244 = vmul.f32 %v196, 0.0
        %v2245 = vmul.f32 %v197, 0.0
        %v2246 = vmul.f32 %v198, 0.0
        %v2247 = vmul.f32 %v199, 0.0
        %v2248 = vmul.f32 %v200, 0.0
        %v2249 = vmul.f32 %v201, 0.0
        %v2250 = vmul.f32 %v202, 0.0
        %v2251 = vmul.f32 %v203, 0.0
        %v2252 = vmul.f32 %v204, 0.0
        %v2253 = vmul.f32 %v205, 0.0
        %v2254 = vmul.f32 %v206, 0.0
        %v2255 = vmul.f32 %v207, 0.0
        %v2256 = vmul.f32 %v208, 0.0
        %v2257 = vmul.f32 %v209, 0.0
        %v2258 = vmul.f32 %v210, 0.0
        %v2259 = vmul.f32 %v211, 0.0
        %v2260 = vmul.f32 %v212, 0.0
        %v2261 = vmul.f32 %v213, 0.0
        %v2262 = vmul.f32 %v214, 0.0
        %v2263 = vmul.f32 %v215, 0.0
        %v2264 = vmul.f32 %v216, 0.0
        %v2265 = vmul.f32 %v217, 0.0
        %v2266 = vmul.f32 %v218, 0.0
        %v2267 = vmul.f32 %v219, 0.0
        %v2268 = vmul.f32 %v220, 0.0
        %v2269 = vmul.f32 %v221, 0.0
        %v2270 = vmul.f32 %v222, 0.0
        %v2271 = vmul.f32 %v223, 0.0
        %v2272 = vmul.f32 %v224, 0.0
        %v2273 = vmul.f32 %v225, 0.0
        %v2274 = vmul.f32 %v226, 0.0
        %v2275 = vmul.f32 %v227, 0.0
        %v2276 = vmul.f32 %v228, 0.0
        %v2277 = vmul.f32 %v229, 0.0
        %v2278 = vmul.f32 %v230, 0.0
        %v2279 = vmul.f32 %v231, 0.0
        %v2280 = vmul.f32 %v232, 0.0
        %v2281 = vmul.f32 %v233, 0.0
        %v2282 = vmul.f32 %v234, 0.0
        %v2283 = vmul.f32 %v235, 0.0
        %v2284 = vmul.f32 %v236, 0.0
        %v2285 = vmul.f32 %v237, 0.0
        %v2286 = vmul.f32 %v238, 0.0
        %v2287 = vmul.f32 %v239, 0.0
        %v2288 = vmul.f32 %v240, 0.0
        %v2289 = vmul.f32 %v241, 0.0
        %v2290 = vmul.f32 %v242, 0.0
        %v2291 = vmul.f32 %v243, 0.0
        %v2292 = vmul.f32 %v244, 0.0
        %v2293 = vmul.f32 %v245, 0.0
        %v2294 = vmul.f32 %v246, 0.0
        %v2295 = vmul.f32 %v247, 0.0
        %v2296 = vmul.f32 %v248, 0.0
        %v2297 = vmul.f32 %v249, 0.0
        %v2298 = vmul.f32 %v250, 0.0
        %v2299 = vmul.f32 %v251, 0.0
        %v2300 = vmul.f32 %v252, 0.0
        %v2301 = vmul.f32 %v253, 0.0
        %v2302 = vmul.f32 %v254, 0.0
        %v2303 = vmul.f32 %v255, 0.0
        %v2304 = vmul.f32 %v256, 0.0
        %v2305 = vmul.f32 %v257, 0.0
        %v2306 = vmul.f32 %v258, 0.0
        %v2307 = vmul.f32 %v259, 0.0
        %v2308 = vmul.f32 %v260, 0.0
        %v2309 = vmul.f32 %v261, 0.0
        %v2310 = vmul.f32 %v262, 0.0
        %v2311 = vmul.f32 %v263, 0.0
        %v2312 = vmul.f32 %v264, 0.0
        %v2313 = vmul.f32 %v265, 0.0
        %v2314 = vmul.f32 %v266, 0.0
        %v2315 = vmul.f32 %v267, 0.0
        %v2316 = vmul.f32 %v268, 0.0
        %v2317 = vmul.f32 %v269, 0.0
        %v2318 = vmul.f32 %v270, 0.0
        %v2319 = vmul.f32 %v271, 0.0
        %v2320 = vmul.f32 %v272, 0.0
        %v2321 = vmul.f32 %v273, 0.0
        %v2322 = vmul.f32 %v274, 0.0
        %v2323 = vmul.f32 %v275, 0.0
        %v2324 = vmul.f32 %v276, 0.0
        %v2325 = vmul.f32 %v277, 0.0
        %v2326 = vmul.f32 %v278, 0.0
        %v2327 = vmul.f32 %v279, 0.0
        %v2328 = vmul.f32 %v280, 0.0
        %v2329 = vmul.f32 %v281, 0.0
        %v2330 = vmul.f32 %v282, 0.0
        %v2331 = vmul.f32 %v283, 0.0
        %v2332 = vmul.f32 %v284, 0.0
        %v2333 = vmul.f32 %v285, 0.0
        %v2334 = vmul.f32 %v286, 0.0
        %v2335 = vmul.f32 %v287, 0.0
        %v2336 = vmul.f32 %v288, 0.0
        %v2337 = vmul.f32 %v289, 0.0
        %v2338 = vmul.f32 %v290, 0.0
        %v2339 = vmul.f32 %v291, 0.0
        %v2340 = vmul.f32 %v292, 0.0
        %v2341 = vmul.f32 %v293, 0.0
        %v2342 = vmul.f32 %v294, 0.0
        %v2343 = vmul.f32 %v295, 0.0
        %v2344 = vmul.f32 %v296, 0.0
        %v2345 = vmul.f32 %v297, 0.0
        %v2346 = vmul.f32 %v298, 0.0
        %v2347 = vmul.f32 %v299, 0.0
        %v2348 = vmul.f32 %v300, 0.0
        %v2349 = vmul.f32 %v301, 0.0
        %v2350 = vmul.f32 %v302, 0.0
        %v2351 = vmul.f32 %v303, 0.0
        %v2352 = vmul.f32 %v304, 0.0
        %v2353 = vmul.f32 %v305, 0.0
        %v2354 = vmul.f32 %v306, 0.0
        %v2355 = vmul.f32 %v307, 0.0
        %v2356 = vmul.f32 %v308, 0.0
        %v2357 = vmul.f32 %v309, 0.0
        %v2358 = vmul.f32 %v310, 0.0
        %v2359 = vmul.f32 %v311, 0.0
        %v2360 = vmul.f32 %v312, 0.0
        %v2361 = vmul.f32 %v313, 0.0
        %v2362 = vmul.f32 %v314, 0.0
        %v2363 = vmul.f32 %v315, 0.0
        %v2364 = vmul.f32 %v316, 0.0
        %v2365 = vmul.f32 %v317, 0.0
        %v2366 = vmul.f32 %v318, 0.0
        %v2367 = vmul.f32 %v319, 0.0
        %v2368 = vmul.f32 %v320, 0.0
        %v2369 = vmul.f32 %v321, 0.0
        %v2370 = vmul.f32 %v322, 0.0
        %v2371 = vmul.f32 %v323, 0.0
        %v2372 = vmul.f32 %v324, 0.0
        %v2373 = vmul.f32 %v325, 0.0
        %v2374 = vmul.f32 %v326, 0.0
        %v2375 = vmul.f32 %v327, 0.0
        %v2376 = vmul.f32 %v328, 0.0
        %v2377 = vmul.f32 %v329, 0.0
        %v2378 = vmul.f32 %v330, 0.0
        %v2379 = vmul.f32 %v331, 0.0
        %v2380 = vmul.f32 %v332, 0.0
        %v2381 = vmul.f32 %v333, 0.0
        %v2382 = vmul.f32 %v334, 0.0
        %v2383 = vmul.f32 %v335, 0.0
        %v2384 = vmul.f32 %v336, 0.0
        %v2385 = vmul.f32 %v337, 0.0
        %v2386 = vmul.f32 %v338, 0.0
        %v2387 = vmul.f32 %v339, 0.0
        %v2388 = vmul.f32 %v340, 0.0
        %v2389 = vmul.f32 %v341, 0.0
        %v2390 = vmul.f32 %v342, 0.0
        %v2391 = vmul.f32 %v343, 0.0
        %v2392 = vmul.f32 %v344, 0.0
        %v2393 = vmul.f32 %v345, 0.0
        %v2394 = vmul.f32 %v346, 0.0
        %v2395 = vmul.f32 %v347, 0.0
        %v2396 = vmul.f32 %v348, 0.0
        %v2397 = vmul.f32 %v349, 0.0
        %v2398 = vmul.f32 %v350, 0.0
        %v2399 = vmul.f32 %v351, 0.0
        %v2400 = vmul.f32 %v352, 0.0
        %v2401 = vmul.f32 %v353, 0.0
        %v2402 = vmul.f32 %v354, 0.0
        %v2403 = vmul.f32 %v355, 0.0
        %v2404 = vmul.f32 %v356, 0.0
        %v2405 = vmul.f32 %v357, 0.0
        %v2406 = vmul.f32 %v358, 0.0
        %v2407 = vmul.f32 %v359, 0.0
        %v2408 = vmul.f32 %v360, 0.0
        %v2409 = vmul.f32 %v361, 0.0
        %v2410 = vmul.f32 %v362, 0.0
        %v2411 = vmul.f32 %v363, 0.0
        %v2412 = vmul.f32 %v364, 0.0
        %v2413 = vmul.f32 %v365, 0.0
        %v2414 = vmul.f32 %v366, 0.0
        %v2415 = vmul.f32 %v367, 0.0
        %v2416 = vmul.f32 %v368, 0.0
        %v2417 = vmul.f32 %v369, 0.0
        %v2418 = vmul.f32 %v370, 0.0
        %v2419 = vmul.f32 %v371, 0.0
        %v2420 = vmul.f32 %v372, 0.0
        %v2421 = vmul.f32 %v373, 0.0
        %v2422 = vmul.f32 %v374, 0.0
        %v2423 = vmul.f32 %v375, 0.0
        %v2424 = vmul.f32 %v376, 0.0
        %v2425 = vmul.f32 %v377, 0.0
        %v2426 = vmul.f32 %v378, 0.0
        %v2427 = vmul.f32 %v379, 0.0
        %v2428 = vmul.f32 %v380, 0.0
        %v2429 = vmul.f32 %v381, 0.0
        %v2430 = vmul.f32 %v382, 0.0
        %v2431 = vmul.f32 %v383, 0.0
        %v2432 = vmul.f32 %v384, 0.0
        %v2433 = vmul.f32 %v385, 0.0
        %v2434 = vmul.f32 %v386, 0.0
        %v2435 = vmul.f32 %v387, 0.0
        %v2436 = vmul.f32 %v388, 0.0
        %v2437 = vmul.f32 %v389, 0.0
        %v2438 = vmul.f32 %v390, 0.0
        %v2439 = vmul.f32 %v391, 0.0
        %v2440 = vmul.f32 %v392, 0.0
        %v2441 = vmul.f32 %v393, 0.0
        %v2442 = vmul.f32 %v394, 0.0
        %v2443 = vmul.f32 %v395, 0.0
        %v2444 = vmul.f32 %v396, 0.0
        %v2445 = vmul.f32 %v397, 0.0
        %v2446 = vmul.f32 %v398, 0.0
        %v2447 = vmul.f32 %v399, 0.0
        %v2448 = vmul.f32 %v400, 0.0
        %v2449 = vmul.f32 %v401, 0.0
        %v2450 = vmul.f32 %v402, 0.0
        %v2451 = vmul.f32 %v403, 0.0
        %v2452 = vmul.f32 %v404, 0.0
        %v2453 = vmul.f32 %v405, 0.0
        %v2454 = vmul.f32 %v406, 0.0
        %v2455 = vmul.f32 %v407, 0.0
        %v2456 = vmul.f32 %v408, 0.0
        %v2457 = vmul.f32 %v409, 0.0
        %v2458 = vmul.f32 %v410, 0.0
        %v2459 = vmul.f32 %v411, 0.0
        %v2460 = vmul.f32 %v412, 0.0
        %v2461 = vmul.f32 %v413, 0.0
        %v2462 = vmul.f32 %v414, 0.0
        %v2463 = vmul.f32 %v415, 0.0
        %v2464 = vmul.f32 %v416, 0.0
        %v2465 = vmul.f32 %v417, 0.0
        %v2466 = vmul.f32 %v418, 0.0
        %v2467 = vmul.f32 %v419, 0.0
        %v2468 = vmul.f32 %v420, 0.0
        %v2469 = vmul.f32 %v421, 0.0
        %v2470 = vmul.f32 %v422, 0.0
        %v2471 = vmul.f32 %v423, 0.0
        %v2472 = vmul.f32 %v424, 0.0
        %v2473 = vmul.f32 %v425, 0.0
        %v2474 = vmul.f32 %v426, 0.0
        %v2475 = vmul.f32 %v427, 0.0
        %v2476 = vmul.f32 %v428, 0.0
        %v2477 = vmul.f32 %v429, 0.0
        %v2478 = vmul.f32 %v430, 0.0
        %v2479 = vmul.f32 %v431, 0.0
        %v2480 = vmul.f32 %v432, 0.0
        %v2481 = vmul.f32 %v433, 0.0
        %v2482 = vmul.f32 %v434, 0.0
        %v2483 = vmul.f32 %v435, 0.0
        %v2484 = vmul.f32 %v436, 0.0
        %v2485 = vmul.f32 %v437, 0.0
        %v2486 = vmul.f32 %v438, 0.0
        %v2487 = vmul.f32 %v439, 0.0
        %v2488 = vmul.f32 %v440, 0.0
        %v2489 = vmul.f32 %v441, 0.0
        %v2490 = vmul.f32 %v442, 0.0
        %v2491 = vmul.f32 %v443, 0.0
        %v2492 = vmul.f32 %v444, 0.0
        %v2493 = vmul.f32 %v445, 0.0
        %v2494 = vmul.f32 %v446, 0.0
        %v2495 = vmul.f32 %v447, 0.0
        %v2496 = vmul.f32 %v448, 0.0
        %v2497 = vmul.f32 %v449, 0.0
        %v2498 = vmul.f32 %v450, 0.0
        %v2499 = vmul.f32 %v451, 0.0
        %v2500 = vmul.f32 %v452, 0.0
        %v2501 = vmul.f32 %v453, 0.0
        %v2502 = vmul.f32 %v454, 0.0
        %v2503 = vmul.f32 %v455, 0.0
        %v2504 = vmul.f32 %v456, 0.0
        %v2505 = vmul.f32 %v457, 0.0
        %v2506 = vmul.f32 %v458, 0.0
        %v2507 = vmul.f32 %v459, 0.0
        %v2508 = vmul.f32 %v460, 0.0
        %v2509 = vmul.f32 %v461, 0.0
        %v2510 = vmul.f32 %v462, 0.0
        %v2511 = vmul.f32 %v463, 0.0
        %v2512 = vmul.f32 %v464, 0.0
        %v2513 = vmul.f32 %v465, 0.0
        %v2514 = vmul.f32 %v466, 0.0
        %v2515 = vmul.f32 %v467, 0.0
        %v2516 = vmul.f32 %v468, 0.0
        %v2517 = vmul.f32 %v469, 0.0
        %v2518 = vmul.f32 %v470, 0.0
        %v2519 = vmul.f32 %v471, 0.0
        %v2520 = vmul.f32 %v472, 0.0
        %v2521 = vmul.f32 %v473, 0.0
        %v2522 = vmul.f32 %v474, 0.0
        %v2523 = vmul.f32 %v475, 0.0
        %v2524 = vmul.f32 %v476, 0.0
        %v2525 = vmul.f32 %v477, 0.0
        %v2526 = vmul.f32 %v478, 0.0
        %v2527 = vmul.f32 %v479, 0.0
        %v2528 = vmul.f32 %v480, 0.0
        %v2529 = vmul.f32 %v481, 0.0
        %v2530 = vmul.f32 %v482, 0.0
        %v2531 = vmul.f32 %v483, 0.0
        %v2532 = vmul.f32 %v484, 0.0
        %v2533 = vmul.f32 %v485, 0.0
        %v2534 = vmul.f32 %v486, 0.0
        %v2535 = vmul.f32 %v487, 0.0
        %v2536 = vmul.f32 %v488, 0.0
        %v2537 = vmul.f32 %v489, 0.0
        %v2538 = vmul.f32 %v490, 0.0
        %v2539 = vmul.f32 %v491, 0.0
        %v2540 = vmul.f32 %v492, 0.0
        %v2541 = vmul.f32 %v493, 0.0
        %v2542 = vmul.f32 %v494, 0.0
        %v2543 = vmul.f32 %v495, 0.0
        %v2544 = vmul.f32 %v496, 0.0
        %v2545 = vmul.f32 %v497, 0.0
        %v2546 = vmul.f32 %v498, 0.0
        %v2547 = vmul.f32 %v499, 0.0
        %v2548 = vmul.f32 %v500, 0.0
        %v2549 = vmul.f32 %v501, 0.0
        %v2550 = vmul.f32 %v502, 0.0
        %v2551 = vmul.f32 %v503, 0.0
        %v2552 = vmul.f32 %v504, 0.0
        %v2553 = vmul.f32 %v505, 0.0
        %v2554 = vmul.f32 %v506, 0.0
        %v2555 = vmul.f32 %v507, 0.0
        %v2556 = vmul.f32 %v508, 0.0
        %v2557 = vmul.f32 %v509, 0.0
        %v2558 = vmul.f32 %v510, 0.0
        %v2559 = vmul.f32 %v511, 0.0
        %v2560 = vmul.f32 %v512, 0.0
        %v2561 = vmul.f32 %v513, 0.0
        %v2562 = vmul.f32 %v514, 0.0
        %v2563 = vmul.f32 %v515, 0.0
        %v2564 = vmul.f32 %v516, 0.0
        %v2565 = vmul.f32 %v517, 0.0
        %v2566 = vmul.f32 %v518, 0.0
        %v2567 = vmul.f32 %v519, 0.0
        %v2568 = vmul.f32 %v520, 0.0
        %v2569 = vmul.f32 %v521, 0.0
        %v2570 = vmul.f32 %v522, 0.0
        %v2571 = vmul.f32 %v523, 0.0
        %v2572 = vmul.f32 %v524, 0.0
        %v2573 = vmul.f32 %v525, 0.0
        %v2574 = vmul.f32 %v526, 0.0
        %v2575 = vmul.f32 %v527, 0.0
        %v2576 = vmul.f32 %v528, 0.0
        %v2577 = vmul.f32 %v529, 0.0
        %v2578 = vmul.f32 %v530, 0.0
        %v2579 = vmul.f32 %v531, 0.0
        %v2580 = vmul.f32 %v532, 0.0
        %v2581 = vmul.f32 %v533, 0.0
        %v2582 = vmul.f32 %v534, 0.0
        %v2583 = vmul.f32 %v535, 0.0
        %v2584 = vmul.f32 %v536, 0.0
        %v2585 = vmul.f32 %v537, 0.0
        %v2586 = vmul.f32 %v538, 0.0
        %v2587 = vmul.f32 %v539, 0.0
        %v2588 = vmul.f32 %v540, 0.0
        %v2589 = vmul.f32 %v541, 0.0
        %v2590 = vmul.f32 %v542, 0.0
        %v2591 = vmul.f32 %v543, 0.0
        %v2592 = vmul.f32 %v544, 0.0
        %v2593 = vmul.f32 %v545, 0.0
        %v2594 = vmul.f32 %v546, 0.0
        %v2595 = vmul.f32 %v547, 0.0
        %v2596 = vmul.f32 %v548, 0.0
        %v2597 = vmul.f32 %v549, 0.0
        %v2598 = vmul.f32 %v550, 0.0
        %v2599 = vmul.f32 %v551, 0.0
        %v2600 = vmul.f32 %v552, 0.0
        %v2601 = vmul.f32 %v553, 0.0
        %v2602 = vmul.f32 %v554, 0.0
        %v2603 = vmul.f32 %v555, 0.0
        %v2604 = vmul.f32 %v556, 0.0
        %v2605 = vmul.f32 %v557, 0.0
        %v2606 = vmul.f32 %v558, 0.0
        %v2607 = vmul.f32 %v559, 0.0
        %v2608 = vmul.f32 %v560, 0.0
        %v2609 = vmul.f32 %v561, 0.0
        %v2610 = vmul.f32 %v562, 0.0
        %v2611 = vmul.f32 %v563, 0.0
        %v2612 = vmul.f32 %v564, 0.0
        %v2613 = vmul.f32 %v565, 0.0
        %v2614 = vmul.f32 %v566, 0.0
        %v2615 = vmul.f32 %v567, 0.0
        %v2616 = vmul.f32 %v568, 0.0
        %v2617 = vmul.f32 %v569, 0.0
        %v2618 = vmul.f32 %v570, 0.0
        %v2619 = vmul.f32 %v571, 0.0
        %v2620 = vmul.f32 %v572, 0.0
        %v2621 = vmul.f32 %v573, 0.0
        %v2622 = vmul.f32 %v574, 0.0
        %v2623 = vmul.f32 %v575, 0.0
        %v2624 = vmul.f32 %v576, 0.0
        %v2625 = vmul.f32 %v577, 0.0
        %v2626 = vmul.f32 %v578, 0.0
        %v2627 = vmul.f32 %v579, 0.0
        %v2628 = vmul.f32 %v580, 0.0
        %v2629 = vmul.f32 %v581, 0.0
        %v2630 = vmul.f32 %v582, 0.0
        %v2631 = vmul.f32 %v583, 0.0
        %v2632 = vmul.f32 %v584, 0.0
        %v2633 = vmul.f32 %v585, 0.0
        %v2634 = vmul.f32 %v586, 0.0
        %v2635 = vmul.f32 %v587, 0.0
        %v2636 = vmul.f32 %v588, 0.0
        %v2637 = vmul.f32 %v589, 0.0
        %v2638 = vmul.f32 %v590, 0.0
        %v2639 = vmul.f32 %v591, 0.0
        %v2640 = vmul.f32 %v592, 0.0
        %v2641 = vmul.f32 %v593, 0.0
        %v2642 = vmul.f32 %v594, 0.0
        %v2643 = vmul.f32 %v595, 0.0
        %v2644 = vmul.f32 %v596, 0.0
        %v2645 = vmul.f32 %v597, 0.0
        %v2646 = vmul.f32 %v598, 0.0
        %v2647 = vmul.f32 %v599, 0.0
        %v2648 = vmul.f32 %v600, 0.0
        %v2649 = vmul.f32 %v601, 0.0
        %v2650 = vmul.f32 %v602, 0.0
        %v2651 = vmul.f32 %v603, 0.0
        %v2652 = vmul.f32 %v604, 0.0
        %v2653 = vmul.f32 %v605, 0.0
        %v2654 = vmul.f32 %v606, 0.0
        %v2655 = vmul.f32 %v607, 0.0
        %v2656 = vmul.f32 %v608, 0.0
        %v2657 = vmul.f32 %v609, 0.0
        %v2658 = vmul.f32 %v610, 0.0
        %v2659 = vmul.f32 %v611, 0.0
        %v2660 = vmul.f32 %v612, 0.0
        %v2661 = vmul.f32 %v613, 0.0
        %v2662 = vmul.f32 %v614, 0.0
        %v2663 = vmul.f32 %v615, 0.0
        %v2664 = vmul.f32 %v616, 0.0
        %v2665 = vmul.f32 %v617, 0.0
        %v2666 = vmul.f32 %v618, 0.0
        %v2667 = vmul.f32 %v619, 0.0
        %v2668 = vmul.f32 %v620, 0.0
        %v2669 = vmul.f32 %v621, 0.0
        %v2670 = vmul.f32 %v622, 0.0
        %v2671 = vmul.f32 %v623, 0.0
        %v2672 = vmul.f32 %v624, 0.0
        %v2673 = vmul.f32 %v625, 0.0
        %v2674 = vmul.f32 %v626, 0.0
        %v2675 = vmul.f32 %v627, 0.0
        %v2676 = vmul.f32 %v628, 0.0
        %v2677 = vmul.f32 %v629, 0.0
        %v2678 = vmul.f32 %v630, 0.0
        %v2679 = vmul.f32 %v631, 0.0
        %v2680 = vmul.f32 %v632, 0.0
        %v2681 = vmul.f32 %v633, 0.0
        %v2682 = vmul.f32 %v634, 0.0
        %v2683 = vmul.f32 %v635, 0.0
        %v2684 = vmul.f32 %v636, 0.0
        %v2685 = vmul.f32 %v637, 0.0
        %v2686 = vmul.f32 %v638, 0.0
        %v2687 = vmul.f32 %v639, 0.0
        %v2688 = vmul.f32 %v640, 0.0
        %v2689 = vmul.f32 %v641, 0.0
        %v2690 = vmul.f32 %v642, 0.0
        %v2691 = vmul.f32 %v643, 0.0
        %v2692 = vmul.f32 %v644, 0.0
        %v2693 = vmul.f32 %v645, 0.0
        %v2694 = vmul.f32 %v646, 0.0
        %v2695 = vmul.f32 %v647, 0.0
        %v2696 = vmul.f32 %v648, 0.0
        %v2697 = vmul.f32 %v649, 0.0
        %v2698 = vmul.f32 %v650, 0.0
        %v2699 = vmul.f32 %v651, 0.0
        %v2700 = vmul.f32 %v652, 0.0
        %v2701 = vmul.f32 %v653, 0.0
        %v2702 = vmul.f32 %v654, 0.0
        %v2703 = vmul.f32 %v655, 0.0
        %v2704 = vmul.f32 %v656, 0.0
        %v2705 = vmul.f32 %v657, 0.0
        %v2706 = vmul.f32 %v658, 0.0
        %v2707 = vmul.f32 %v659, 0.0
        %v2708 = vmul.f32 %v660, 0.0
        %v2709 = vmul.f32 %v661, 0.0
        %v2710 = vmul.f32 %v662, 0.0
        %v2711 = vmul.f32 %v663, 0.0
        %v2712 = vmul.f32 %v664, 0.0
        %v2713 = vmul.f32 %v665, 0.0
        %v2714 = vmul.f32 %v666, 0.0
        %v2715 = vmul.f32 %v667, 0.0
        %v2716 = vmul.f32 %v668, 0.0
        %v2717 = vmul.f32 %v669, 0.0
        %v2718 = vmul.f32 %v670, 0.0
        %v2719 = vmul.f32 %v671, 0.0
        %v2720 = vmul.f32 %v672, 0.0
        %v2721 = vmul.f32 %v673, 0.0
        %v2722 = vmul.f32 %v674, 0.0
        %v2723 = vmul.f32 %v675, 0.0
        %v2724 = vmul.f32 %v676, 0.0
        %v2725 = vmul.f32 %v677, 0.0
        %v2726 = vmul.f32 %v678, 0.0
        %v2727 = vmul.f32 %v679, 0.0
        %v2728 = vmul.f32 %v680, 0.0
        %v2729 = vmul.f32 %v681, 0.0
        %v2730 = vmul.f32 %v682, 0.0
        %v2731 = vmul.f32 %v683, 0.0
        %v2732 = vmul.f32 %v684, 0.0
        %v2733 = vmul.f32 %v685, 0.0
        %v2734 = vmul.f32 %v686, 0.0
        %v2735 = vmul.f32 %v687, 0.0
        %v2736 = vmul.f32 %v688, 0.0
        %v2737 = vmul.f32 %v689, 0.0
        %v2738 = vmul.f32 %v690, 0.0
        %v2739 = vmul.f32 %v691, 0.0
        %v2740 = vmul.f32 %v692, 0.0
        %v2741 = vmul.f32 %v693, 0.0
        %v2742 = vmul.f32 %v694, 0.0
        %v2743 = vmul.f32 %v695, 0.0
        %v2744 = vmul.f32 %v696, 0.0
        %v2745 = vmul.f32 %v697, 0.0
        %v2746 = vmul.f32 %v698, 0.0
        %v2747 = vmul.f32 %v699, 0.0
        %v2748 = vmul.f32 %v700, 0.0
        %v2749 = vmul.f32 %v701, 0.0
        %v2750 = vmul.f32 %v702, 0.0
        %v2751 = vmul.f32 %v703, 0.0
        %v2752 = vmul.f32 %v704, 0.0
        %v2753 = vmul.f32 %v705, 0.0
        %v2754 = vmul.f32 %v706, 0.0
        %v2755 = vmul.f32 %v707, 0.0
        %v2756 = vmul.f32 %v708, 0.0
        %v2757 = vmul.f32 %v709, 0.0
        %v2758 = vmul.f32 %v710, 0.0
        %v2759 = vmul.f32 %v711, 0.0
        %v2760 = vmul.f32 %v712, 0.0
        %v2761 = vmul.f32 %v713, 0.0
        %v2762 = vmul.f32 %v714, 0.0
        %v2763 = vmul.f32 %v715, 0.0
        %v2764 = vmul.f32 %v716, 0.0
        %v2765 = vmul.f32 %v717, 0.0
        %v2766 = vmul.f32 %v718, 0.0
        %v2767 = vmul.f32 %v719, 0.0
        %v2768 = vmul.f32 %v720, 0.0
        %v2769 = vmul.f32 %v721, 0.0
        %v2770 = vmul.f32 %v722, 0.0
        %v2771 = vmul.f32 %v723, 0.0
        %v2772 = vmul.f32 %v724, 0.0
        %v2773 = vmul.f32 %v725, 0.0
        %v2774 = vmul.f32 %v726, 0.0
        %v2775 = vmul.f32 %v727, 0.0
        %v2776 = vmul.f32 %v728, 0.0
        %v2777 = vmul.f32 %v729, 0.0
        %v2778 = vmul.f32 %v730, 0.0
        %v2779 = vmul.f32 %v731, 0.0
        %v2780 = vmul.f32 %v732, 0.0
        %v2781 = vmul.f32 %v733, 0.0
        %v2782 = vmul.f32 %v734, 0.0
        %v2783 = vmul.f32 %v735, 0.0
        %v2784 = vmul.f32 %v736, 0.0
        %v2785 = vmul.f32 %v737, 0.0
        %v2786 = vmul.f32 %v738, 0.0
        %v2787 = vmul.f32 %v739, 0.0
        %v2788 = vmul.f32 %v740, 0.0
        %v2789 = vmul.f32 %v741, 0.0
        %v2790 = vmul.f32 %v742, 0.0
        %v2791 = vmul.f32 %v743, 0.0
        %v2792 = vmul.f32 %v744, 0.0
        %v2793 = vmul.f32 %v745, 0.0
        %v2794 = vmul.f32 %v746, 0.0
        %v2795 = vmul.f32 %v747, 0.0
        %v2796 = vmul.f32 %v748, 0.0
        %v2797 = vmul.f32 %v749, 0.0
        %v2798 = vmul.f32 %v750, 0.0
        %v2799 = vmul.f32 %v751, 0.0
        %v2800 = vmul.f32 %v752, 0.0
        %v2801 = vmul.f32 %v753, 0.0
        %v2802 = vmul.f32 %v754, 0.0
        %v2803 = vmul.f32 %v755, 0.0
        %v2804 = vmul.f32 %v756, 0.0
        %v2805 = vmul.f32 %v757, 0.0
        %v2806 = vmul.f32 %v758, 0.0
        %v2807 = vmul.f32 %v759, 0.0
        %v2808 = vmul.f32 %v760, 0.0
        %v2809 = vmul.f32 %v761, 0.0
        %v2810 = vmul.f32 %v762, 0.0
        %v2811 = vmul.f32 %v763, 0.0
        %v2812 = vmul.f32 %v764, 0.0
        %v2813 = vmul.f32 %v765, 0.0
        %v2814 = vmul.f32 %v766, 0.0
        %v2815 = vmul.f32 %v767, 0.0
        %v2816 = vmul.f32 %v768, 0.0
        %v2817 = vmul.f32 %v769, 0.0
        %v2818 = vmul.f32 %v770, 0.0
        %v2819 = vmul.f32 %v771, 0.0
        %v2820 = vmul.f32 %v772, 0.0
        %v2821 = vmul.f32 %v773, 0.0
        %v2822 = vmul.f32 %v774, 0.0
        %v2823 = vmul.f32 %v775, 0.0
        %v2824 = vmul.f32 %v776, 0.0
        %v2825 = vmul.f32 %v777, 0.0
        %v2826 = vmul.f32 %v778, 0.0
        %v2827 = vmul.f32 %v779, 0.0
        %v2828 = vmul.f32 %v780, 0.0
        %v2829 = vmul.f32 %v781, 0.0
        %v2830 = vmul.f32 %v782, 0.0
        %v2831 = vmul.f32 %v783, 0.0
        %v2832 = vmul.f32 %v784, 0.0
        %v2833 = vmul.f32 %v785, 0.0
        %v2834 = vmul.f32 %v786, 0.0
        %v2835 = vmul.f32 %v787, 0.0
        %v2836 = vmul.f32 %v788, 0.0
        %v2837 = vmul.f32 %v789, 0.0
        %v2838 = vmul.f32 %v790, 0.0
        %v2839 = vmul.f32 %v791, 0.0
        %v2840 = vmul.f32 %v792, 0.0
        %v2841 = vmul.f32 %v793, 0.0
        %v2842 = vmul.f32 %v794, 0.0
        %v2843 = vmul.f32 %v795, 0.0
        %v2844 = vmul.f32 %v796, 0.0
        %v2845 = vmul.f32 %v797, 0.0
        %v2846 = vmul.f32 %v798, 0.0
        %v2847 = vmul.f32 %v799, 0.0
        %v2848 = vmul.f32 %v800, 0.0
        %v2849 = vmul.f32 %v801, 0.0
        %v2850 = vmul.f32 %v802, 0.0
        %v2851 = vmul.f32 %v803, 0.0
        %v2852 = vmul.f32 %v804, 0.0
        %v2853 = vmul.f32 %v805, 0.0
        %v2854 = vmul.f32 %v806, 0.0
        %v2855 = vmul.f32 %v807, 0.0
        %v2856 = vmul.f32 %v808, 0.0
        %v2857 = vmul.f32 %v809, 0.0
        %v2858 = vmul.f32 %v810, 0.0
        %v2859 = vmul.f32 %v811, 0.0
        %v2860 = vmul.f32 %v812, 0.0
        %v2861 = vmul.f32 %v813, 0.0
        %v2862 = vmul.f32 %v814, 0.0
        %v2863 = vmul.f32 %v815, 0.0
        %v2864 = vmul.f32 %v816, 0.0
        %v2865 = vmul.f32 %v817, 0.0
        %v2866 = vmul.f32 %v818, 0.0
        %v2867 = vmul.f32 %v819, 0.0
        %v2868 = vmul.f32 %v820, 0.0
        %v2869 = vmul.f32 %v821, 0.0
        %v2870 = vmul.f32 %v822, 0.0
        %v2871 = vmul.f32 %v823, 0.0
        %v2872 = vmul.f32 %v824, 0.0
        %v2873 = vmul.f32 %v825, 0.0
        %v2874 = vmul.f32 %v826, 0.0
        %v2875 = vmul.f32 %v827, 0.0
        %v2876 = vmul.f32 %v828, 0.0
        %v2877 = vmul.f32 %v829, 0.0
        %v2878 = vmul.f32 %v830, 0.0
        %v2879 = vmul.f32 %v831, 0.0
        %v2880 = vmul.f32 %v832, 0.0
        %v2881 = vmul.f32 %v833, 0.0
        %v2882 = vmul.f32 %v834, 0.0
        %v2883 = vmul.f32 %v835, 0.0
        %v2884 = vmul.f32 %v836, 0.0
        %v2885 = vmul.f32 %v837, 0.0
        %v2886 = vmul.f32 %v838, 0.0
        %v2887 = vmul.f32 %v839, 0.0
        %v2888 = vmul.f32 %v840, 0.0
        %v2889 = vmul.f32 %v841, 0.0
        %v2890 = vmul.f32 %v842, 0.0
        %v2891 = vmul.f32 %v843, 0.0
        %v2892 = vmul.f32 %v844, 0.0
        %v2893 = vmul.f32 %v845, 0.0
        %v2894 = vmul.f32 %v846, 0.0
        %v2895 = vmul.f32 %v847, 0.0
        %v2896 = vmul.f32 %v848, 0.0
        %v2897 = vmul.f32 %v849, 0.0
        %v2898 = vmul.f32 %v850, 0.0
        %v2899 = vmul.f32 %v851, 0.0
        %v2900 = vmul.f32 %v852, 0.0
        %v2901 = vmul.f32 %v853, 0.0
        %v2902 = vmul.f32 %v854, 0.0
        %v2903 = vmul.f32 %v855, 0.0
        %v2904 = vmul.f32 %v856, 0.0
        %v2905 = vmul.f32 %v857, 0.0
        %v2906 = vmul.f32 %v858, 0.0
        %v2907 = vmul.f32 %v859, 0.0
        %v2908 = vmul.f32 %v860, 0.0
        %v2909 = vmul.f32 %v861, 0.0
        %v2910 = vmul.f32 %v862, 0.0
        %v2911 = vmul.f32 %v863, 0.0
        %v2912 = vmul.f32 %v864, 0.0
        %v2913 = vmul.f32 %v865, 0.0
        %v2914 = vmul.f32 %v866, 0.0
        %v2915 = vmul.f32 %v867, 0.0
        %v2916 = vmul.f32 %v868, 0.0
        %v2917 = vmul.f32 %v869, 0.0
        %v2918 = vmul.f32 %v870, 0.0
        %v2919 = vmul.f32 %v871, 0.0
        %v2920 = vmul.f32 %v872, 0.0
        %v2921 = vmul.f32 %v873, 0.0
        %v2922 = vmul.f32 %v874, 0.0
        %v2923 = vmul.f32 %v875, 0.0
        %v2924 = vmul.f32 %v876, 0.0
        %v2925 = vmul.f32 %v877, 0.0
        %v2926 = vmul.f32 %v878, 0.0
        %v2927 = vmul.f32 %v879, 0.0
        %v2928 = vmul.f32 %v880, 0.0
        %v2929 = vmul.f32 %v881, 0.0
        %v2930 = vmul.f32 %v882, 0.0
        %v2931 = vmul.f32 %v883, 0.0
        %v2932 = vmul.f32 %v884, 0.0
        %v2933 = vmul.f32 %v885, 0.0
        %v2934 = vmul.f32 %v886, 0.0
        %v2935 = vmul.f32 %v887, 0.0
        %v2936 = vmul.f32 %v888, 0.0
        %v2937 = vmul.f32 %v889, 0.0
        %v2938 = vmul.f32 %v890, 0.0
        %v2939 = vmul.f32 %v891, 0.0
        %v2940 = vmul.f32 %v892, 0.0
        %v2941 = vmul.f32 %v893, 0.0
        %v2942 = vmul.f32 %v894, 0.0
        %v2943 = vmul.f32 %v895, 0.0
        %v2944 = vmul.f32 %v896, 0.0
        %v2945 = vmul.f32 %v897, 0.0
        %v2946 = vmul.f32 %v898, 0.0
        %v2947 = vmul.f32 %v899, 0.0
        %v2948 = vmul.f32 %v900, 0.0
        %v2949 = vmul.f32 %v901, 0.0
        %v2950 = vmul.f32 %v902, 0.0
        %v2951 = vmul.f32 %v903, 0.0
        %v2952 = vmul.f32 %v904, 0.0
        %v2953 = vmul.f32 %v905, 0.0
        %v2954 = vmul.f32 %v906, 0.0
        %v2955 = vmul.f32 %v907, 0.0
        %v2956 = vmul.f32 %v908, 0.0
        %v2957 = vmul.f32 %v909, 0.0
        %v2958 = vmul.f32 %v910, 0.0
        %v2959 = vmul.f32 %v911, 0.0
        %v2960 = vmul.f32 %v912, 0.0
        %v2961 = vmul.f32 %v913, 0.0
        %v2962 = vmul.f32 %v914, 0.0
        %v2963 = vmul.f32 %v915, 0.0
        %v2964 = vmul.f32 %v916, 0.0
        %v2965 = vmul.f32 %v917, 0.0
        %v2966 = vmul.f32 %v918, 0.0
        %v2967 = vmul.f32 %v919, 0.0
        %v2968 = vmul.f32 %v920, 0.0
        %v2969 = vmul.f32 %v921, 0.0
        %v2970 = vmul.f32 %v922, 0.0
        %v2971 = vmul.f32 %v923, 0.0
        %v2972 = vmul.f32 %v924, 0.0
        %v2973 = vmul.f32 %v925, 0.0
        %v2974 = vmul.f32 %v926, 0.0
        %v2975 = vmul.f32 %v927, 0.0
        %v2976 = vmul.f32 %v928, 0.0
        %v2977 = vmul.f32 %v929, 0.0
        %v2978 = vmul.f32 %v930, 0.0
        %v2979 = vmul.f32 %v931, 0.0
        %v2980 = vmul.f32 %v932, 0.0
        %v2981 = vmul.f32 %v933, 0.0
        %v2982 = vmul.f32 %v934, 0.0
        %v2983 = vmul.f32 %v935, 0.0
        %v2984 = vmul.f32 %v936, 0.0
        %v2985 = vmul.f32 %v937, 0.0
        %v2986 = vmul.f32 %v938, 0.0
        %v2987 = vmul.f32 %v939, 0.0
        %v2988 = vmul.f32 %v940, 0.0
        %v2989 = vmul.f32 %v941, 0.0
        %v2990 = vmul.f32 %v942, 0.0
        %v2991 = vmul.f32 %v943, 0.0
        %v2992 = vmul.f32 %v944, 0.0
        %v2993 = vmul.f32 %v945, 0.0
        %v2994 = vmul.f32 %v946, 0.0
        %v2995 = vmul.f32 %v947, 0.0
        %v2996 = vmul.f32 %v948, 0.0
        %v2997 = vmul.f32 %v949, 0.0
        %v2998 = vmul.f32 %v950, 0.0
        %v2999 = vmul.f32 %v951, 0.0
        %v3000 = vmul.f32 %v952, 0.0
        %v3001 = vmul.f32 %v953, 0.0
        %v3002 = vmul.f32 %v954, 0.0
        %v3003 = vmul.f32 %v955, 0.0
        %v3004 = vmul.f32 %v956, 0.0
        %v3005 = vmul.f32 %v957, 0.0
        %v3006 = vmul.f32 %v958, 0.0
        %v3007 = vmul.f32 %v959, 0.0
        %v3008 = vmul.f32 %v960, 0.0
        %v3009 = vmul.f32 %v961, 0.0
        %v3010 = vmul.f32 %v962, 0.0
        %v3011 = vmul.f32 %v963, 0.0
        %v3012 = vmul.f32 %v964, 0.0
        %v3013 = vmul.f32 %v965, 0.0
        %v3014 = vmul.f32 %v966, 0.0
        %v3015 = vmul.f32 %v967, 0.0
        %v3016 = vmul.f32 %v968, 0.0
        %v3017 = vmul.f32 %v969, 0.0
        %v3018 = vmul.f32 %v970, 0.0
        %v3019 = vmul.f32 %v971, 0.0
        %v3020 = vmul.f32 %v972, 0.0
        %v3021 = vmul.f32 %v973, 0.0
        %v3022 = vmul.f32 %v974, 0.0
        %v3023 = vmul.f32 %v975, 0.0
        %v3024 = vmul.f32 %v976, 0.0
        %v3025 = vmul.f32 %v977, 0.0
        %v3026 = vmul.f32 %v978, 0.0
        %v3027 = vmul.f32 %v979, 0.0
        %v3028 = vmul.f32 %v980, 0.0
        %v3029 = vmul.f32 %v981, 0.0
        %v3030 = vmul.f32 %v982, 0.0
        %v3031 = vmul.f32 %v983, 0.0
        %v3032 = vmul.f32 %v984, 0.0
        %v3033 = vmul.f32 %v985, 0.0
        %v3034 = vmul.f32 %v986, 0.0
        %v3035 = vmul.f32 %v987, 0.0
        %v3036 = vmul.f32 %v988, 0.0
        %v3037 = vmul.f32 %v989, 0.0
        %v3038 = vmul.f32 %v990, 0.0
        %v3039 = vmul.f32 %v991, 0.0
        %v3040 = vmul.f32 %v992, 0.0
        %v3041 = vmul.f32 %v993, 0.0
        %v3042 = vmul.f32 %v994, 0.0
        %v3043 = vmul.f32 %v995, 0.0
        %v3044 = vmul.f32 %v996, 0.0
        %v3045 = vmul.f32 %v997, 0.0
        %v3046 = vmul.f32 %v998, 0.0
        %v3047 = vmul.f32 %v999, 0.0
        %v3048 = vmul.f32 %v1000, 0.0
        %v3049 = vmul.f32 %v1001, 0.0
        %v3050 = vmul.f32 %v1002, 0.0
        %v3051 = vmul.f32 %v1003, 0.0
        %v3052 = vmul.f32 %v1004, 0.0
        %v3053 = vmul.f32 %v1005, 0.0
        %v3054 = vmul.f32 %v1006, 0.0
        %v3055 = vmul.f32 %v1007, 0.0
        %v3056 = vmul.f32 %v1008, 0.0
        %v3057 = vmul.f32 %v1009, 0.0
        %v3058 = vmul.f32 %v1010, 0.0
        %v3059 = vmul.f32 %v1011, 0.0
        %v3060 = vmul.f32 %v1012, 0.0
        %v3061 = vmul.f32 %v1013, 0.0
        %v3062 = vmul.f32 %v1014, 0.0
        %v3063 = vmul.f32 %v1015, 0.0
        %v3064 = vmul.f32 %v1016, 0.0
        %v3065 = vmul.f32 %v1017, 0.0
        %v3066 = vmul.f32 %v1018, 0.0
        %v3067 = vmul.f32 %v1019, 0.0
        %v3068 = vmul.f32 %v1020, 0.0
        %v3069 = vmul.f32 %v1021, 0.0
        %v3070 = vmul.f32 %v1022, 0.0
        %v3071 = vmul.f32 %v1023, 0.0
        %v3072 = vmul.f32 %v1024, 0.0
        %v3073 = vmul.f32 %v1025, 0.0
        %v3074 = vmul.f32 %v1026, 0.0
        %v3075 = vmul.f32 %v1027, 0.0
        %v3076 = vmul.f32 %v1028, 0.0
        %v3077 = vmul.f32 %v1029, 0.0
        %v3078 = vmul.f32 %v1030, 0.0
        %v3079 = vmul.f32 %v1031, 0.0
        %v3080 = vmul.f32 %v1032, 0.0
        %v3081 = vmul.f32 %v1033, 0.0
        %v3082 = vmul.f32 %v1034, 0.0
        %v3083 = vmul.f32 %v1035, 0.0
        %v3084 = vmul.f32 %v1036, 0.0
        %v3085 = vmul.f32 %v1037, 0.0
        %v3086 = vmul.f32 %v1038, 0.0
        %v3087 = vmul.f32 %v1039, 0.0
        %v3088 = vmul.f32 %v1040, 0.0
        %v3089 = vmul.f32 %v1041, 0.0
        %v3090 = vmul.f32 %v1042, 0.0
        %v3091 = vmul.f32 %v1043, 0.0
        %v3092 = vmul.f32 %v1044, 0.0
        %v3093 = vmul.f32 %v1045, 0.0
        %v3094 = vmul.f32 %v1046, 0.0
        %v3095 = vmul.f32 %v1047, 0.0
        %v3096 = vmul.f32 %v1048, 0.0
        %v3097 = vmul.f32 %v1049, 0.0
        %v3098 = vmul.f32 %v1050, 0.0
        %v3099 = vmul.f32 %v1051, 0.0
        %v3100 = vmul.f32 %v1052, 0.0
        %v3101 = vmul.f32 %v1053, 0.0
        %v3102 = vmul.f32 %v1054, 0.0
        %v3103 = vmul.f32 %v1055, 0.0
        %v3104 = vmul.f32 %v1056, 0.0
        %v3105 = vmul.f32 %v1057, 0.0
        %v3106 = vmul.f32 %v1058, 0.0
        %v3107 = vmul.f32 %v1059, 0.0
        %v3108 = vmul.f32 %v1060, 0.0
        %v3109 = vmul.f32 %v1061, 0.0
        %v3110 = vmul.f32 %v1062, 0.0
        %v3111 = vmul.f32 %v1063, 0.0
        %v3112 = vmul.f32 %v1064, 0.0
        %v3113 = vmul.f32 %v1065, 0.0
        %v3114 = vmul.f32 %v1066, 0.0
        %v3115 = vmul.f32 %v1067, 0.0
        %v3116 = vmul.f32 %v1068, 0.0
        %v3117 = vmul.f32 %v1069, 0.0
        %v3118 = vmul.f32 %v1070, 0.0
        %v3119 = vmul.f32 %v1071, 0.0
        %v3120 = vmul.f32 %v1072, 0.0
        %v3121 = vmul.f32 %v1073, 0.0
        %v3122 = vmul.f32 %v1074, 0.0
        %v3123 = vmul.f32 %v1075, 0.0
        %v3124 = vmul.f32 %v1076, 0.0
        %v3125 = vmul.f32 %v1077, 0.0
        %v3126 = vmul.f32 %v1078, 0.0
        %v3127 = vmul.f32 %v1079, 0.0
        %v3128 = vmul.f32 %v1080, 0.0
        %v3129 = vmul.f32 %v1081, 0.0
        %v3130 = vmul.f32 %v1082, 0.0
        %v3131 = vmul.f32 %v1083, 0.0
        %v3132 = vmul.f32 %v1084, 0.0
        %v3133 = vmul.f32 %v1085, 0.0
        %v3134 = vmul.f32 %v1086, 0.0
        %v3135 = vmul.f32 %v1087, 0.0
        %v3136 = vmul.f32 %v1088, 0.0
        %v3137 = vmul.f32 %v1089, 0.0
        %v3138 = vmul.f32 %v1090, 0.0
        %v3139 = vmul.f32 %v1091, 0.0
        %v3140 = vmul.f32 %v1092, 0.0
        %v3141 = vmul.f32 %v1093, 0.0
        %v3142 = vmul.f32 %v1094, 0.0
        %v3143 = vmul.f32 %v1095, 0.0
        %v3144 = vmul.f32 %v1096, 0.0
        %v3145 = vmul.f32 %v1097, 0.0
        %v3146 = vmul.f32 %v1098, 0.0
        %v3147 = vmul.f32 %v1099, 0.0
        %v3148 = vmul.f32 %v1100, 0.0
        %v3149 = vmul.f32 %v1101, 0.0
        %v3150 = vmul.f32 %v1102, 0.0
        %v3151 = vmul.f32 %v1103, 0.0
        %v3152 = vmul.f32 %v1104, 0.0
        %v3153 = vmul.f32 %v1105, 0.0
        %v3154 = vmul.f32 %v1106, 0.0
        %v3155 = vmul.f32 %v1107, 0.0
        %v3156 = vmul.f32 %v1108, 0.0
        %v3157 = vmul.f32 %v1109, 0.0
        %v3158 = vmul.f32 %v1110, 0.0
        %v3159 = vmul.f32 %v1111, 0.0
        %v3160 = vmul.f32 %v1112, 0.0
        %v3161 = vmul.f32 %v1113, 0.0
        %v3162 = vmul.f32 %v1114, 0.0
        %v3163 = vmul.f32 %v1115, 0.0
        %v3164 = vmul.f32 %v1116, 0.0
        %v3165 = vmul.f32 %v1117, 0.0
        %v3166 = vmul.f32 %v1118, 0.0
        %v3167 = vmul.f32 %v1119, 0.0
        %v3168 = vmul.f32 %v1120, 0.0
        %v3169 = vmul.f32 %v1121, 0.0
        %v3170 = vmul.f32 %v1122, 0.0
        %v3171 = vmul.f32 %v1123, 0.0
        %v3172 = vmul.f32 %v1124, 0.0
        %v3173 = vmul.f32 %v1125, 0.0
        %v3174 = vmul.f32 %v1126, 0.0
        %v3175 = vmul.f32 %v1127, 0.0
        %v3176 = vmul.f32 %v1128, 0.0
        %v3177 = vmul.f32 %v1129, 0.0
        %v3178 = vmul.f32 %v1130, 0.0
        %v3179 = vmul.f32 %v1131, 0.0
        %v3180 = vmul.f32 %v1132, 0.0
        %v3181 = vmul.f32 %v1133, 0.0
        %v3182 = vmul.f32 %v1134, 0.0
        %v3183 = vmul.f32 %v1135, 0.0
        %v3184 = vmul.f32 %v1136, 0.0
        %v3185 = vmul.f32 %v1137, 0.0
        %v3186 = vmul.f32 %v1138, 0.0
        %v3187 = vmul.f32 %v1139, 0.0
        %v3188 = vmul.f32 %v1140, 0.0
        %v3189 = vmul.f32 %v1141, 0.0
        %v3190 = vmul.f32 %v1142, 0.0
        %v3191 = vmul.f32 %v1143, 0.0
        %v3192 = vmul.f32 %v1144, 0.0
        %v3193 = vmul.f32 %v1145, 0.0
        %v3194 = vmul.f32 %v1146, 0.0
        %v3195 = vmul.f32 %v1147, 0.0
        %v3196 = vmul.f32 %v1148, 0.0
        %v3197 = vmul.f32 %v1149, 0.0
        %v3198 = vmul.f32 %v1150, 0.0
        %v3199 = vmul.f32 %v1151, 0.0
        %v3200 = vmul.f32 %v1152, 0.0
        %v3201 = vmul.f32 %v1153, 0.0
        %v3202 = vmul.f32 %v1154, 0.0
        %v3203 = vmul.f32 %v1155, 0.0
        %v3204 = vmul.f32 %v1156, 0.0
        %v3205 = vmul.f32 %v1157, 0.0
        %v3206 = vmul.f32 %v1158, 0.0
        %v3207 = vmul.f32 %v1159, 0.0
        %v3208 = vmul.f32 %v1160, 0.0
        %v3209 = vmul.f32 %v1161, 0.0
        %v3210 = vmul.f32 %v1162, 0.0
        %v3211 = vmul.f32 %v1163, 0.0
        %v3212 = vmul.f32 %v1164, 0.0
        %v3213 = vmul.f32 %v1165, 0.0
        %v3214 = vmul.f32 %v1166, 0.0
        %v3215 = vmul.f32 %v1167, 0.0
        %v3216 = vmul.f32 %v1168, 0.0
        %v3217 = vmul.f32 %v1169, 0.0
        %v3218 = vmul.f32 %v1170, 0.0
        %v3219 = vmul.f32 %v1171, 0.0
        %v3220 = vmul.f32 %v1172, 0.0
        %v3221 = vmul.f32 %v1173, 0.0
        %v3222 = vmul.f32 %v1174, 0.0
        %v3223 = vmul.f32 %v1175, 0.0
        %v3224 = vmul.f32 %v1176, 0.0
        %v3225 = vmul.f32 %v1177, 0.0
        %v3226 = vmul.f32 %v1178, 0.0
        %v3227 = vmul.f32 %v1179, 0.0
        %v3228 = vmul.f32 %v1180, 0.0
        %v3229 = vmul.f32 %v1181, 0.0
        %v3230 = vmul.f32 %v1182, 0.0
        %v3231 = vmul.f32 %v1183, 0.0
        %v3232 = vmul.f32 %v1184, 0.0
        %v3233 = vmul.f32 %v1185, 0.0
        %v3234 = vmul.f32 %v1186, 0.0
        %v3235 = vmul.f32 %v1187, 0.0
        %v3236 = vmul.f32 %v1188, 0.0
        %v3237 = vmul.f32 %v1189, 0.0
        %v3238 = vmul.f32 %v1190, 0.0
        %v3239 = vmul.f32 %v1191, 0.0
        %v3240 = vmul.f32 %v1192, 0.0
        %v3241 = vmul.f32 %v1193, 0.0
        %v3242 = vmul.f32 %v1194, 0.0
        %v3243 = vmul.f32 %v1195, 0.0
        %v3244 = vmul.f32 %v1196, 0.0
        %v3245 = vmul.f32 %v1197, 0.0
        %v3246 = vmul.f32 %v1198, 0.0
        %v3247 = vmul.f32 %v1199, 0.0
        %v3248 = vmul.f32 %v1200, 0.0
        %v3249 = vmul.f32 %v1201, 0.0
        %v3250 = vmul.f32 %v1202, 0.0
        %v3251 = vmul.f32 %v1203, 0.0
        %v3252 = vmul.f32 %v1204, 0.0
        %v3253 = vmul.f32 %v1205, 0.0
        %v3254 = vmul.f32 %v1206, 0.0
        %v3255 = vmul.f32 %v1207, 0.0
        %v3256 = vmul.f32 %v1208, 0.0
        %v3257 = vmul.f32 %v1209, 0.0
        %v3258 = vmul.f32 %v1210, 0.0
        %v3259 = vmul.f32 %v1211, 0.0
        %v3260 = vmul.f32 %v1212, 0.0
        %v3261 = vmul.f32 %v1213, 0.0
        %v3262 = vmul.f32 %v1214, 0.0
        %v3263 = vmul.f32 %v1215, 0.0
        %v3264 = vmul.f32 %v1216, 0.0
        %v3265 = vmul.f32 %v1217, 0.0
        %v3266 = vmul.f32 %v1218, 0.0
        %v3267 = vmul.f32 %v1219, 0.0
        %v3268 = vmul.f32 %v1220, 0.0
        %v3269 = vmul.f32 %v1221, 0.0
        %v3270 = vmul.f32 %v1222, 0.0
        %v3271 = vmul.f32 %v1223, 0.0
        %v3272 = vmul.f32 %v1224, 0.0
        %v3273 = vmul.f32 %v1225, 0.0
        %v3274 = vmul.f32 %v1226, 0.0
        %v3275 = vmul.f32 %v1227, 0.0
        %v3276 = vmul.f32 %v1228, 0.0
        %v3277 = vmul.f32 %v1229, 0.0
        %v3278 = vmul.f32 %v1230, 0.0
        %v3279 = vmul.f32 %v1231, 0.0
        %v3280 = vmul.f32 %v1232, 0.0
        %v3281 = vmul.f32 %v1233, 0.0
        %v3282 = vmul.f32 %v1234, 0.0
        %v3283 = vmul.f32 %v1235, 0.0
        %v3284 = vmul.f32 %v1236, 0.0
        %v3285 = vmul.f32 %v1237, 0.0
        %v3286 = vmul.f32 %v1238, 0.0
        %v3287 = vmul.f32 %v1239, 0.0
        %v3288 = vmul.f32 %v1240, 0.0
        %v3289 = vmul.f32 %v1241, 0.0
        %v3290 = vmul.f32 %v1242, 0.0
        %v3291 = vmul.f32 %v1243, 0.0
        %v3292 = vmul.f32 %v1244, 0.0
        %v3293 = vmul.f32 %v1245, 0.0
        %v3294 = vmul.f32 %v1246, 0.0
        %v3295 = vmul.f32 %v1247, 0.0
        %v3296 = vmul.f32 %v1248, 0.0
        %v3297 = vmul.f32 %v1249, 0.0
        %v3298 = vmul.f32 %v1250, 0.0
        %v3299 = vmul.f32 %v1251, 0.0
        %v3300 = vmul.f32 %v1252, 0.0
        %v3301 = vmul.f32 %v1253, 0.0
        %v3302 = vmul.f32 %v1254, 0.0
        %v3303 = vmul.f32 %v1255, 0.0
        %v3304 = vmul.f32 %v1256, 0.0
        %v3305 = vmul.f32 %v1257, 0.0
        %v3306 = vmul.f32 %v1258, 0.0
        %v3307 = vmul.f32 %v1259, 0.0
        %v3308 = vmul.f32 %v1260, 0.0
        %v3309 = vmul.f32 %v1261, 0.0
        %v3310 = vmul.f32 %v1262, 0.0
        %v3311 = vmul.f32 %v1263, 0.0
        %v3312 = vmul.f32 %v1264, 0.0
        %v3313 = vmul.f32 %v1265, 0.0
        %v3314 = vmul.f32 %v1266, 0.0
        %v3315 = vmul.f32 %v1267, 0.0
        %v3316 = vmul.f32 %v1268, 0.0
        %v3317 = vmul.f32 %v1269, 0.0
        %v3318 = vmul.f32 %v1270, 0.0
        %v3319 = vmul.f32 %v1271, 0.0
        %v3320 = vmul.f32 %v1272, 0.0
        %v3321 = vmul.f32 %v1273, 0.0
        %v3322 = vmul.f32 %v1274, 0.0
        %v3323 = vmul.f32 %v1275, 0.0
        %v3324 = vmul.f32 %v1276, 0.0
        %v3325 = vmul.f32 %v1277, 0.0
        %v3326 = vmul.f32 %v1278, 0.0
        %v3327 = vmul.f32 %v1279, 0.0
        %v3328 = vmul.f32 %v1280, 0.0
        %v3329 = vmul.f32 %v1281, 0.0
        %v3330 = vmul.f32 %v1282, 0.0
        %v3331 = vmul.f32 %v1283, 0.0
        %v3332 = vmul.f32 %v1284, 0.0
        %v3333 = vmul.f32 %v1285, 0.0
        %v3334 = vmul.f32 %v1286, 0.0
        %v3335 = vmul.f32 %v1287, 0.0
        %v3336 = vmul.f32 %v1288, 0.0
        %v3337 = vmul.f32 %v1289, 0.0
        %v3338 = vmul.f32 %v1290, 0.0
        %v3339 = vmul.f32 %v1291, 0.0
        %v3340 = vmul.f32 %v1292, 0.0
        %v3341 = vmul.f32 %v1293, 0.0
        %v3342 = vmul.f32 %v1294, 0.0
        %v3343 = vmul.f32 %v1295, 0.0
        %v3344 = vmul.f32 %v1296, 0.0
        %v3345 = vmul.f32 %v1297, 0.0
        %v3346 = vmul.f32 %v1298, 0.0
        %v3347 = vmul.f32 %v1299, 0.0
        %v3348 = vmul.f32 %v1300, 0.0
        %v3349 = vmul.f32 %v1301, 0.0
        %v3350 = vmul.f32 %v1302, 0.0
        %v3351 = vmul.f32 %v1303, 0.0
        %v3352 = vmul.f32 %v1304, 0.0
        %v3353 = vmul.f32 %v1305, 0.0
        %v3354 = vmul.f32 %v1306, 0.0
        %v3355 = vmul.f32 %v1307, 0.0
        %v3356 = vmul.f32 %v1308, 0.0
        %v3357 = vmul.f32 %v1309, 0.0
        %v3358 = vmul.f32 %v1310, 0.0
        %v3359 = vmul.f32 %v1311, 0.0
        %v3360 = vmul.f32 %v1312, 0.0
        %v3361 = vmul.f32 %v1313, 0.0
        %v3362 = vmul.f32 %v1314, 0.0
        %v3363 = vmul.f32 %v1315, 0.0
        %v3364 = vmul.f32 %v1316, 0.0
        %v3365 = vmul.f32 %v1317, 0.0
        %v3366 = vmul.f32 %v1318, 0.0
        %v3367 = vmul.f32 %v1319, 0.0
        %v3368 = vmul.f32 %v1320, 0.0
        %v3369 = vmul.f32 %v1321, 0.0
        %v3370 = vmul.f32 %v1322, 0.0
        %v3371 = vmul.f32 %v1323, 0.0
        %v3372 = vmul.f32 %v1324, 0.0
        %v3373 = vmul.f32 %v1325, 0.0
        %v3374 = vmul.f32 %v1326, 0.0
        %v3375 = vmul.f32 %v1327, 0.0
        %v3376 = vmul.f32 %v1328, 0.0
        %v3377 = vmul.f32 %v1329, 0.0
        %v3378 = vmul.f32 %v1330, 0.0
        %v3379 = vmul.f32 %v1331, 0.0
        %v3380 = vmul.f32 %v1332, 0.0
        %v3381 = vmul.f32 %v1333, 0.0
        %v3382 = vmul.f32 %v1334, 0.0
        %v3383 = vmul.f32 %v1335, 0.0
        %v3384 = vmul.f32 %v1336, 0.0
        %v3385 = vmul.f32 %v1337, 0.0
        %v3386 = vmul.f32 %v1338, 0.0
        %v3387 = vmul.f32 %v1339, 0.0
        %v3388 = vmul.f32 %v1340, 0.0
        %v3389 = vmul.f32 %v1341, 0.0
        %v3390 = vmul.f32 %v1342, 0.0
        %v3391 = vmul.f32 %v1343, 0.0
        %v3392 = vmul.f32 %v1344, 0.0
        %v3393 = vmul.f32 %v1345, 0.0
        %v3394 = vmul.f32 %v1346, 0.0
        %v3395 = vmul.f32 %v1347, 0.0
        %v3396 = vmul.f32 %v1348, 0.0
        %v3397 = vmul.f32 %v1349, 0.0
        %v3398 = vmul.f32 %v1350, 0.0
        %v3399 = vmul.f32 %v1351, 0.0
        %v3400 = vmul.f32 %v1352, 0.0
        %v3401 = vmul.f32 %v1353, 0.0
        %v3402 = vmul.f32 %v1354, 0.0
        %v3403 = vmul.f32 %v1355, 0.0
        %v3404 = vmul.f32 %v1356, 0.0
        %v3405 = vmul.f32 %v1357, 0.0
        %v3406 = vmul.f32 %v1358, 0.0
        %v3407 = vmul.f32 %v1359, 0.0
        %v3408 = vmul.f32 %v1360, 0.0
        %v3409 = vmul.f32 %v1361, 0.0
        %v3410 = vmul.f32 %v1362, 0.0
        %v3411 = vmul.f32 %v1363, 0.0
        %v3412 = vmul.f32 %v1364, 0.0
        %v3413 = vmul.f32 %v1365, 0.0
        %v3414 = vmul.f32 %v1366, 0.0
        %v3415 = vmul.f32 %v1367, 0.0
        %v3416 = vmul.f32 %v1368, 0.0
        %v3417 = vmul.f32 %v1369, 0.0
        %v3418 = vmul.f32 %v1370, 0.0
        %v3419 = vmul.f32 %v1371, 0.0
        %v3420 = vmul.f32 %v1372, 0.0
        %v3421 = vmul.f32 %v1373, 0.0
        %v3422 = vmul.f32 %v1374, 0.0
        %v3423 = vmul.f32 %v1375, 0.0
        %v3424 = vmul.f32 %v1376, 0.0
        %v3425 = vmul.f32 %v1377, 0.0
        %v3426 = vmul.f32 %v1378, 0.0
        %v3427 = vmul.f32 %v1379, 0.0
        %v3428 = vmul.f32 %v1380, 0.0
        %v3429 = vmul.f32 %v1381, 0.0
        %v3430 = vmul.f32 %v1382, 0.0
        %v3431 = vmul.f32 %v1383, 0.0
        %v3432 = vmul.f32 %v1384, 0.0
        %v3433 = vmul.f32 %v1385, 0.0
        %v3434 = vmul.f32 %v1386, 0.0
        %v3435 = vmul.f32 %v1387, 0.0
        %v3436 = vmul.f32 %v1388, 0.0
        %v3437 = vmul.f32 %v1389, 0.0
        %v3438 = vmul.f32 %v1390, 0.0
        %v3439 = vmul.f32 %v1391, 0.0
        %v3440 = vmul.f32 %v1392, 0.0
        %v3441 = vmul.f32 %v1393, 0.0
        %v3442 = vmul.f32 %v1394, 0.0
        %v3443 = vmul.f32 %v1395, 0.0
        %v3444 = vmul.f32 %v1396, 0.0
        %v3445 = vmul.f32 %v1397, 0.0
        %v3446 = vmul.f32 %v1398, 0.0
        %v3447 = vmul.f32 %v1399, 0.0
        %v3448 = vmul.f32 %v1400, 0.0
        %v3449 = vmul.f32 %v1401, 0.0
        %v3450 = vmul.f32 %v1402, 0.0
        %v3451 = vmul.f32 %v1403, 0.0
        %v3452 = vmul.f32 %v1404, 0.0
        %v3453 = vmul.f32 %v1405, 0.0
        %v3454 = vmul.f32 %v1406, 0.0
        %v3455 = vmul.f32 %v1407, 0.0
        %v3456 = vmul.f32 %v1408, 0.0
        %v3457 = vmul.f32 %v1409, 0.0
        %v3458 = vmul.f32 %v1410, 0.0
        %v3459 = vmul.f32 %v1411, 0.0
        %v3460 = vmul.f32 %v1412, 0.0
        %v3461 = vmul.f32 %v1413, 0.0
        %v3462 = vmul.f32 %v1414, 0.0
        %v3463 = vmul.f32 %v1415, 0.0
        %v3464 = vmul.f32 %v1416, 0.0
        %v3465 = vmul.f32 %v1417, 0.0
        %v3466 = vmul.f32 %v1418, 0.0
        %v3467 = vmul.f32 %v1419, 0.0
        %v3468 = vmul.f32 %v1420, 0.0
        %v3469 = vmul.f32 %v1421, 0.0
        %v3470 = vmul.f32 %v1422, 0.0
        %v3471 = vmul.f32 %v1423, 0.0
        %v3472 = vmul.f32 %v1424, 0.0
        %v3473 = vmul.f32 %v1425, 0.0
        %v3474 = vmul.f32 %v1426, 0.0
        %v3475 = vmul.f32 %v1427, 0.0
        %v3476 = vmul.f32 %v1428, 0.0
        %v3477 = vmul.f32 %v1429, 0.0
        %v3478 = vmul.f32 %v1430, 0.0
        %v3479 = vmul.f32 %v1431, 0.0
        %v3480 = vmul.f32 %v1432, 0.0
        %v3481 = vmul.f32 %v1433, 0.0
        %v3482 = vmul.f32 %v1434, 0.0
        %v3483 = vmul.f32 %v1435, 0.0
        %v3484 = vmul.f32 %v1436, 0.0
        %v3485 = vmul.f32 %v1437, 0.0
        %v3486 = vmul.f32 %v1438, 0.0
        %v3487 = vmul.f32 %v1439, 0.0
        %v3488 = vmul.f32 %v1440, 0.0
        %v3489 = vmul.f32 %v1441, 0.0
        %v3490 = vmul.f32 %v1442, 0.0
        %v3491 = vmul.f32 %v1443, 0.0
        %v3492 = vmul.f32 %v1444, 0.0
        %v3493 = vmul.f32 %v1445, 0.0
        %v3494 = vmul.f32 %v1446, 0.0
        %v3495 = vmul.f32 %v1447, 0.0
        %v3496 = vmul.f32 %v1448, 0.0
        %v3497 = vmul.f32 %v1449, 0.0
        %v3498 = vmul.f32 %v1450, 0.0
        %v3499 = vmul.f32 %v1451, 0.0
        %v3500 = vmul.f32 %v1452, 0.0
        %v3501 = vmul.f32 %v1453, 0.0
        %v3502 = vmul.f32 %v1454, 0.0
        %v3503 = vmul.f32 %v1455, 0.0
        %v3504 = vmul.f32 %v1456, 0.0
        %v3505 = vmul.f32 %v1457, 0.0
        %v3506 = vmul.f32 %v1458, 0.0
        %v3507 = vmul.f32 %v1459, 0.0
        %v3508 = vmul.f32 %v1460, 0.0
        %v3509 = vmul.f32 %v1461, 0.0
        %v3510 = vmul.f32 %v1462, 0.0
        %v3511 = vmul.f32 %v1463, 0.0
        %v3512 = vmul.f32 %v1464, 0.0
        %v3513 = vmul.f32 %v1465, 0.0
        %v3514 = vmul.f32 %v1466, 0.0
        %v3515 = vmul.f32 %v1467, 0.0
        %v3516 = vmul.f32 %v1468, 0.0
        %v3517 = vmul.f32 %v1469, 0.0
        %v3518 = vmul.f32 %v1470, 0.0
        %v3519 = vmul.f32 %v1471, 0.0
        %v3520 = vmul.f32 %v1472, 0.0
        %v3521 = vmul.f32 %v1473, 0.0
        %v3522 = vmul.f32 %v1474, 0.0
        %v3523 = vmul.f32 %v1475, 0.0
        %v3524 = vmul.f32 %v1476, 0.0
        %v3525 = vmul.f32 %v1477, 0.0
        %v3526 = vmul.f32 %v1478, 0.0
        %v3527 = vmul.f32 %v1479, 0.0
        %v3528 = vmul.f32 %v1480, 0.0
        %v3529 = vmul.f32 %v1481, 0.0
        %v3530 = vmul.f32 %v1482, 0.0
        %v3531 = vmul.f32 %v1483, 0.0
        %v3532 = vmul.f32 %v1484, 0.0
        %v3533 = vmul.f32 %v1485, 0.0
        %v3534 = vmul.f32 %v1486, 0.0
        %v3535 = vmul.f32 %v1487, 0.0
        %v3536 = vmul.f32 %v1488, 0.0
        %v3537 = vmul.f32 %v1489, 0.0
        %v3538 = vmul.f32 %v1490, 0.0
        %v3539 = vmul.f32 %v1491, 0.0
        %v3540 = vmul.f32 %v1492, 0.0
        %v3541 = vmul.f32 %v1493, 0.0
        %v3542 = vmul.f32 %v1494, 0.0
        %v3543 = vmul.f32 %v1495, 0.0
        %v3544 = vmul.f32 %v1496, 0.0
        %v3545 = vmul.f32 %v1497, 0.0
        %v3546 = vmul.f32 %v1498, 0.0
        %v3547 = vmul.f32 %v1499, 0.0
        %v3548 = vmul.f32 %v1500, 0.0
        %v3549 = vmul.f32 %v1501, 0.0
        %v3550 = vmul.f32 %v1502, 0.0
        %v3551 = vmul.f32 %v1503, 0.0
        %v3552 = vmul.f32 %v1504, 0.0
        %v3553 = vmul.f32 %v1505, 0.0
        %v3554 = vmul.f32 %v1506, 0.0
        %v3555 = vmul.f32 %v1507, 0.0
        %v3556 = vmul.f32 %v1508, 0.0
        %v3557 = vmul.f32 %v1509, 0.0
        %v3558 = vmul.f32 %v1510, 0.0
        %v3559 = vmul.f32 %v1511, 0.0
        %v3560 = vmul.f32 %v1512, 0.0
        %v3561 = vmul.f32 %v1513, 0.0
        %v3562 = vmul.f32 %v1514, 0.0
        %v3563 = vmul.f32 %v1515, 0.0
        %v3564 = vmul.f32 %v1516, 0.0
        %v3565 = vmul.f32 %v1517, 0.0
        %v3566 = vmul.f32 %v1518, 0.0
        %v3567 = vmul.f32 %v1519, 0.0
        %v3568 = vmul.f32 %v1520, 0.0
        %v3569 = vmul.f32 %v1521, 0.0
        %v3570 = vmul.f32 %v1522, 0.0
        %v3571 = vmul.f32 %v1523, 0.0
        %v3572 = vmul.f32 %v1524, 0.0
        %v3573 = vmul.f32 %v1525, 0.0
        %v3574 = vmul.f32 %v1526, 0.0
        %v3575 = vmul.f32 %v1527, 0.0
        %v3576 = vmul.f32 %v1528, 0.0
        %v3577 = vmul.f32 %v1529, 0.0
        %v3578 = vmul.f32 %v1530, 0.0
        %v3579 = vmul.f32 %v1531, 0.0
        %v3580 = vmul.f32 %v1532, 0.0
        %v3581 = vmul.f32 %v1533, 0.0
        %v3582 = vmul.f32 %v1534, 0.0
        %v3583 = vmul.f32 %v1535, 0.0
        %v3584 = vmul.f32 %v1536, 0.0
        %v3585 = vmul.f32 %v1537, 0.0
        %v3586 = vmul.f32 %v1538, 0.0
        %v3587 = vmul.f32 %v1539, 0.0
        %v3588 = vmul.f32 %v1540, 0.0
        %v3589 = vmul.f32 %v1541, 0.0
        %v3590 = vmul.f32 %v1542, 0.0
        %v3591 = vmul.f32 %v1543, 0.0
        %v3592 = vmul.f32 %v1544, 0.0
        %v3593 = vmul.f32 %v1545, 0.0
        %v3594 = vmul.f32 %v1546, 0.0
        %v3595 = vmul.f32 %v1547, 0.0
        %v3596 = vmul.f32 %v1548, 0.0
        %v3597 = vmul.f32 %v1549, 0.0
        %v3598 = vmul.f32 %v1550, 0.0
        %v3599 = vmul.f32 %v1551, 0.0
        %v3600 = vmul.f32 %v1552, 0.0
        %v3601 = vmul.f32 %v1553, 0.0
        %v3602 = vmul.f32 %v1554, 0.0
        %v3603 = vmul.f32 %v1555, 0.0
        %v3604 = vmul.f32 %v1556, 0.0
        %v3605 = vmul.f32 %v1557, 0.0
        %v3606 = vmul.f32 %v1558, 0.0
        %v3607 = vmul.f32 %v1559, 0.0
        %v3608 = vmul.f32 %v1560, 0.0
        %v3609 = vmul.f32 %v1561, 0.0
        %v3610 = vmul.f32 %v1562, 0.0
        %v3611 = vmul.f32 %v1563, 0.0
        %v3612 = vmul.f32 %v1564, 0.0
        %v3613 = vmul.f32 %v1565, 0.0
        %v3614 = vmul.f32 %v1566, 0.0
        %v3615 = vmul.f32 %v1567, 0.0
        %v3616 = vmul.f32 %v1568, 0.0
        %v3617 = vmul.f32 %v1569, 0.0
        %v3618 = vmul.f32 %v1570, 0.0
        %v3619 = vmul.f32 %v1571, 0.0
        %v3620 = vmul.f32 %v1572, 0.0
        %v3621 = vmul.f32 %v1573, 0.0
        %v3622 = vmul.f32 %v1574, 0.0
        %v3623 = vmul.f32 %v1575, 0.0
        %v3624 = vmul.f32 %v1576, 0.0
        %v3625 = vmul.f32 %v1577, 0.0
        %v3626 = vmul.f32 %v1578, 0.0
        %v3627 = vmul.f32 %v1579, 0.0
        %v3628 = vmul.f32 %v1580, 0.0
        %v3629 = vmul.f32 %v1581, 0.0
        %v3630 = vmul.f32 %v1582, 0.0
        %v3631 = vmul.f32 %v1583, 0.0
        %v3632 = vmul.f32 %v1584, 0.0
        %v3633 = vmul.f32 %v1585, 0.0
        %v3634 = vmul.f32 %v1586, 0.0
        %v3635 = vmul.f32 %v1587, 0.0
        %v3636 = vmul.f32 %v1588, 0.0
        %v3637 = vmul.f32 %v1589, 0.0
        %v3638 = vmul.f32 %v1590, 0.0
        %v3639 = vmul.f32 %v1591, 0.0
        %v3640 = vmul.f32 %v1592, 0.0
        %v3641 = vmul.f32 %v1593, 0.0
        %v3642 = vmul.f32 %v1594, 0.0
        %v3643 = vmul.f32 %v1595, 0.0
        %v3644 = vmul.f32 %v1596, 0.0
        %v3645 = vmul.f32 %v1597, 0.0
        %v3646 = vmul.f32 %v1598, 0.0
        %v3647 = vmul.f32 %v1599, 0.0
        %v3648 = vmul.f32 %v1600, 0.0
        %v3649 = vmul.f32 %v1601, 0.0
        %v3650 = vmul.f32 %v1602, 0.0
        %v3651 = vmul.f32 %v1603, 0.0
        %v3652 = vmul.f32 %v1604, 0.0
        %v3653 = vmul.f32 %v1605, 0.0
        %v3654 = vmul.f32 %v1606, 0.0
        %v3655 = vmul.f32 %v1607, 0.0
        %v3656 = vmul.f32 %v1608, 0.0
        %v3657 = vmul.f32 %v1609, 0.0
        %v3658 = vmul.f32 %v1610, 0.0
        %v3659 = vmul.f32 %v1611, 0.0
        %v3660 = vmul.f32 %v1612, 0.0
        %v3661 = vmul.f32 %v1613, 0.0
        %v3662 = vmul.f32 %v1614, 0.0
        %v3663 = vmul.f32 %v1615, 0.0
        %v3664 = vmul.f32 %v1616, 0.0
        %v3665 = vmul.f32 %v1617, 0.0
        %v3666 = vmul.f32 %v1618, 0.0
        %v3667 = vmul.f32 %v1619, 0.0
        %v3668 = vmul.f32 %v1620, 0.0
        %v3669 = vmul.f32 %v1621, 0.0
        %v3670 = vmul.f32 %v1622, 0.0
        %v3671 = vmul.f32 %v1623, 0.0
        %v3672 = vmul.f32 %v1624, 0.0
        %v3673 = vmul.f32 %v1625, 0.0
        %v3674 = vmul.f32 %v1626, 0.0
        %v3675 = vmul.f32 %v1627, 0.0
        %v3676 = vmul.f32 %v1628, 0.0
        %v3677 = vmul.f32 %v1629, 0.0
        %v3678 = vmul.f32 %v1630, 0.0
        %v3679 = vmul.f32 %v1631, 0.0
        %v3680 = vmul.f32 %v1632, 0.0
        %v3681 = vmul.f32 %v1633, 0.0
        %v3682 = vmul.f32 %v1634, 0.0
        %v3683 = vmul.f32 %v1635, 0.0
        %v3684 = vmul.f32 %v1636, 0.0
        %v3685 = vmul.f32 %v1637, 0.0
        %v3686 = vmul.f32 %v1638, 0.0
        %v3687 = vmul.f32 %v1639, 0.0
        %v3688 = vmul.f32 %v1640, 0.0
        %v3689 = vmul.f32 %v1641, 0.0
        %v3690 = vmul.f32 %v1642, 0.0
        %v3691 = vmul.f32 %v1643, 0.0
        %v3692 = vmul.f32 %v1644, 0.0
        %v3693 = vmul.f32 %v1645, 0.0
        %v3694 = vmul.f32 %v1646, 0.0
        %v3695 = vmul.f32 %v1647, 0.0
        %v3696 = vmul.f32 %v1648, 0.0
        %v3697 = vmul.f32 %v1649, 0.0
        %v3698 = vmul.f32 %v1650, 0.0
        %v3699 = vmul.f32 %v1651, 0.0
        %v3700 = vmul.f32 %v1652, 0.0
        %v3701 = vmul.f32 %v1653, 0.0
        %v3702 = vmul.f32 %v1654, 0.0
        %v3703 = vmul.f32 %v1655, 0.0
        %v3704 = vmul.f32 %v1656, 0.0
        %v3705 = vmul.f32 %v1657, 0.0
        %v3706 = vmul.f32 %v1658, 0.0
        %v3707 = vmul.f32 %v1659, 0.0
        %v3708 = vmul.f32 %v1660, 0.0
        %v3709 = vmul.f32 %v1661, 0.0
        %v3710 = vmul.f32 %v1662, 0.0
        %v3711 = vmul.f32 %v1663, 0.0
        %v3712 = vmul.f32 %v1664, 0.0
        %v3713 = vmul.f32 %v1665, 0.0
        %v3714 = vmul.f32 %v1666, 0.0
        %v3715 = vmul.f32 %v1667, 0.0
        %v3716 = vmul.f32 %v1668, 0.0
        %v3717 = vmul.f32 %v1669, 0.0
        %v3718 = vmul.f32 %v1670, 0.0
        %v3719 = vmul.f32 %v1671, 0.0
        %v3720 = vmul.f32 %v1672, 0.0
        %v3721 = vmul.f32 %v1673, 0.0
        %v3722 = vmul.f32 %v1674, 0.0
        %v3723 = vmul.f32 %v1675, 0.0
        %v3724 = vmul.f32 %v1676, 0.0
        %v3725 = vmul.f32 %v1677, 0.0
        %v3726 = vmul.f32 %v1678, 0.0
        %v3727 = vmul.f32 %v1679, 0.0
        %v3728 = vmul.f32 %v1680, 0.0
        %v3729 = vmul.f32 %v1681, 0.0
        %v3730 = vmul.f32 %v1682, 0.0
        %v3731 = vmul.f32 %v1683, 0.0
        %v3732 = vmul.f32 %v1684, 0.0
        %v3733 = vmul.f32 %v1685, 0.0
        %v3734 = vmul.f32 %v1686, 0.0
        %v3735 = vmul.f32 %v1687, 0.0
        %v3736 = vmul.f32 %v1688, 0.0
        %v3737 = vmul.f32 %v1689, 0.0
        %v3738 = vmul.f32 %v1690, 0.0
        %v3739 = vmul.f32 %v1691, 0.0
        %v3740 = vmul.f32 %v1692, 0.0
        %v3741 = vmul.f32 %v1693, 0.0
        %v3742 = vmul.f32 %v1694, 0.0
        %v3743 = vmul.f32 %v1695, 0.0
        %v3744 = vmul.f32 %v1696, 0.0
        %v3745 = vmul.f32 %v1697, 0.0
        %v3746 = vmul.f32 %v1698, 0.0
        %v3747 = vmul.f32 %v1699, 0.0
        %v3748 = vmul.f32 %v1700, 0.0
        %v3749 = vmul.f32 %v1701, 0.0
        %v3750 = vmul.f32 %v1702, 0.0
        %v3751 = vmul.f32 %v1703, 0.0
        %v3752 = vmul.f32 %v1704, 0.0
        %v3753 = vmul.f32 %v1705, 0.0
        %v3754 = vmul.f32 %v1706, 0.0
        %v3755 = vmul.f32 %v1707, 0.0
        %v3756 = vmul.f32 %v1708, 0.0
        %v3757 = vmul.f32 %v1709, 0.0
        %v3758 = vmul.f32 %v1710, 0.0
        %v3759 = vmul.f32 %v1711, 0.0
        %v3760 = vmul.f32 %v1712, 0.0
        %v3761 = vmul.f32 %v1713, 0.0
        %v3762 = vmul.f32 %v1714, 0.0
        %v3763 = vmul.f32 %v1715, 0.0
        %v3764 = vmul.f32 %v1716, 0.0
        %v3765 = vmul.f32 %v1717, 0.0
        %v3766 = vmul.f32 %v1718, 0.0
        %v3767 = vmul.f32 %v1719, 0.0
        %v3768 = vmul.f32 %v1720, 0.0
        %v3769 = vmul.f32 %v1721, 0.0
        %v3770 = vmul.f32 %v1722, 0.0
        %v3771 = vmul.f32 %v1723, 0.0
        %v3772 = vmul.f32 %v1724, 0.0
        %v3773 = vmul.f32 %v1725, 0.0
        %v3774 = vmul.f32 %v1726, 0.0
        %v3775 = vmul.f32 %v1727, 0.0
        %v3776 = vmul.f32 %v1728, 0.0
        %v3777 = vmul.f32 %v1729, 0.0
        %v3778 = vmul.f32 %v1730, 0.0
        %v3779 = vmul.f32 %v1731, 0.0
        %v3780 = vmul.f32 %v1732, 0.0
        %v3781 = vmul.f32 %v1733, 0.0
        %v3782 = vmul.f32 %v1734, 0.0
        %v3783 = vmul.f32 %v1735, 0.0
        %v3784 = vmul.f32 %v1736, 0.0
        %v3785 = vmul.f32 %v1737, 0.0
        %v3786 = vmul.f32 %v1738, 0.0
        %v3787 = vmul.f32 %v1739, 0.0
        %v3788 = vmul.f32 %v1740, 0.0
        %v3789 = vmul.f32 %v1741, 0.0
        %v3790 = vmul.f32 %v1742, 0.0
        %v3791 = vmul.f32 %v1743, 0.0
        %v3792 = vmul.f32 %v1744, 0.0
        %v3793 = vmul.f32 %v1745, 0.0
        %v3794 = vmul.f32 %v1746, 0.0
        %v3795 = vmul.f32 %v1747, 0.0
        %v3796 = vmul.f32 %v1748, 0.0
        %v3797 = vmul.f32 %v1749, 0.0
        %v3798 = vmul.f32 %v1750, 0.0
        %v3799 = vmul.f32 %v1751, 0.0
        %v3800 = vmul.f32 %v1752, 0.0
        %v3801 = vmul.f32 %v1753, 0.0
        %v3802 = vmul.f32 %v1754, 0.0
        %v3803 = vmul.f32 %v1755, 0.0
        %v3804 = vmul.f32 %v1756, 0.0
        %v3805 = vmul.f32 %v1757, 0.0
        %v3806 = vmul.f32 %v1758, 0.0
        %v3807 = vmul.f32 %v1759, 0.0
        %v3808 = vmul.f32 %v1760, 0.0
        %v3809 = vmul.f32 %v1761, 0.0
        %v3810 = vmul.f32 %v1762, 0.0
        %v3811 = vmul.f32 %v1763, 0.0
        %v3812 = vmul.f32 %v1764, 0.0
        %v3813 = vmul.f32 %v1765, 0.0
        %v3814 = vmul.f32 %v1766, 0.0
        %v3815 = vmul.f32 %v1767, 0.0
        %v3816 = vmul.f32 %v1768, 0.0
        %v3817 = vmul.f32 %v1769, 0.0
        %v3818 = vmul.f32 %v1770, 0.0
        %v3819 = vmul.f32 %v1771, 0.0
        %v3820 = vmul.f32 %v1772, 0.0
        %v3821 = vmul.f32 %v1773, 0.0
        %v3822 = vmul.f32 %v1774, 0.0
        %v3823 = vmul.f32 %v1775, 0.0
        %v3824 = vmul.f32 %v1776, 0.0
        %v3825 = vmul.f32 %v1777, 0.0
        %v3826 = vmul.f32 %v1778, 0.0
        %v3827 = vmul.f32 %v1779, 0.0
        %v3828 = vmul.f32 %v1780, 0.0
        %v3829 = vmul.f32 %v1781, 0.0
        %v3830 = vmul.f32 %v1782, 0.0
        %v3831 = vmul.f32 %v1783, 0.0
        %v3832 = vmul.f32 %v1784, 0.0
        %v3833 = vmul.f32 %v1785, 0.0
        %v3834 = vmul.f32 %v1786, 0.0
        %v3835 = vmul.f32 %v1787, 0.0
        %v3836 = vmul.f32 %v1788, 0.0
        %v3837 = vmul.f32 %v1789, 0.0
        %v3838 = vmul.f32 %v1790, 0.0
        %v3839 = vmul.f32 %v1791, 0.0
        %v3840 = vmul.f32 %v1792, 0.0
        %v3841 = vmul.f32 %v1793, 0.0
        %v3842 = vmul.f32 %v1794, 0.0
        %v3843 = vmul.f32 %v1795, 0.0
        %v3844 = vmul.f32 %v1796, 0.0
        %v3845 = vmul.f32 %v1797, 0.0
        %v3846 = vmul.f32 %v1798, 0.0
        %v3847 = vmul.f32 %v1799, 0.0
        %v3848 = vmul.f32 %v1800, 0.0
        %v3849 = vmul.f32 %v1801, 0.0
        %v3850 = vmul.f32 %v1802, 0.0
        %v3851 = vmul.f32 %v1803, 0.0
        %v3852 = vmul.f32 %v1804, 0.0
        %v3853 = vmul.f32 %v1805, 0.0
        %v3854 = vmul.f32 %v1806, 0.0
        %v3855 = vmul.f32 %v1807, 0.0
        %v3856 = vmul.f32 %v1808, 0.0
        %v3857 = vmul.f32 %v1809, 0.0
        %v3858 = vmul.f32 %v1810, 0.0
        %v3859 = vmul.f32 %v1811, 0.0
        %v3860 = vmul.f32 %v1812, 0.0
        %v3861 = vmul.f32 %v1813, 0.0
        %v3862 = vmul.f32 %v1814, 0.0
        %v3863 = vmul.f32 %v1815, 0.0
        %v3864 = vmul.f32 %v1816, 0.0
        %v3865 = vmul.f32 %v1817, 0.0
        %v3866 = vmul.f32 %v1818, 0.0
        %v3867 = vmul.f32 %v1819, 0.0
        %v3868 = vmul.f32 %v1820, 0.0
        %v3869 = vmul.f32 %v1821, 0.0
        %v3870 = vmul.f32 %v1822, 0.0
        %v3871 = vmul.f32 %v1823, 0.0
        %v3872 = vmul.f32 %v1824, 0.0
        %v3873 = vmul.f32 %v1825, 0.0
        %v3874 = vmul.f32 %v1826, 0.0
        %v3875 = vmul.f32 %v1827, 0.0
        %v3876 = vmul.f32 %v1828, 0.0
        %v3877 = vmul.f32 %v1829, 0.0
        %v3878 = vmul.f32 %v1830, 0.0
        %v3879 = vmul.f32 %v1831, 0.0
        %v3880 = vmul.f32 %v1832, 0.0
        %v3881 = vmul.f32 %v1833, 0.0
        %v3882 = vmul.f32 %v1834, 0.0
        %v3883 = vmul.f32 %v1835, 0.0
        %v3884 = vmul.f32 %v1836, 0.0
        %v3885 = vmul.f32 %v1837, 0.0
        %v3886 = vmul.f32 %v1838, 0.0
        %v3887 = vmul.f32 %v1839, 0.0
        %v3888 = vmul.f32 %v1840, 0.0
        %v3889 = vmul.f32 %v1841, 0.0
        %v3890 = vmul.f32 %v1842, 0.0
        %v3891 = vmul.f32 %v1843, 0.0
        %v3892 = vmul.f32 %v1844, 0.0
        %v3893 = vmul.f32 %v1845, 0.0
        %v3894 = vmul.f32 %v1846, 0.0
        %v3895 = vmul.f32 %v1847, 0.0
        %v3896 = vmul.f32 %v1848, 0.0
        %v3897 = vmul.f32 %v1849, 0.0
        %v3898 = vmul.f32 %v1850, 0.0
        %v3899 = vmul.f32 %v1851, 0.0
        %v3900 = vmul.f32 %v1852, 0.0
        %v3901 = vmul.f32 %v1853, 0.0
        %v3902 = vmul.f32 %v1854, 0.0
        %v3903 = vmul.f32 %v1855, 0.0
        %v3904 = vmul.f32 %v1856, 0.0
        %v3905 = vmul.f32 %v1857, 0.0
        %v3906 = vmul.f32 %v1858, 0.0
        %v3907 = vmul.f32 %v1859, 0.0
        %v3908 = vmul.f32 %v1860, 0.0
        %v3909 = vmul.f32 %v1861, 0.0
        %v3910 = vmul.f32 %v1862, 0.0
        %v3911 = vmul.f32 %v1863, 0.0
        %v3912 = vmul.f32 %v1864, 0.0
        %v3913 = vmul.f32 %v1865, 0.0
        %v3914 = vmul.f32 %v1866, 0.0
        %v3915 = vmul.f32 %v1867, 0.0
        %v3916 = vmul.f32 %v1868, 0.0
        %v3917 = vmul.f32 %v1869, 0.0
        %v3918 = vmul.f32 %v1870, 0.0
        %v3919 = vmul.f32 %v1871, 0.0
        %v3920 = vmul.f32 %v1872, 0.0
        %v3921 = vmul.f32 %v1873, 0.0
        %v3922 = vmul.f32 %v1874, 0.0
        %v3923 = vmul.f32 %v1875, 0.0
        %v3924 = vmul.f32 %v1876, 0.0
        %v3925 = vmul.f32 %v1877, 0.0
        %v3926 = vmul.f32 %v1878, 0.0
        %v3927 = vmul.f32 %v1879, 0.0
        %v3928 = vmul.f32 %v1880, 0.0
        %v3929 = vmul.f32 %v1881, 0.0
        %v3930 = vmul.f32 %v1882, 0.0
        %v3931 = vmul.f32 %v1883, 0.0
        %v3932 = vmul.f32 %v1884, 0.0
        %v3933 = vmul.f32 %v1885, 0.0
        %v3934 = vmul.f32 %v1886, 0.0
        %v3935 = vmul.f32 %v1887, 0.0
        %v3936 = vmul.f32 %v1888, 0.0
        %v3937 = vmul.f32 %v1889, 0.0
        %v3938 = vmul.f32 %v1890, 0.0
        %v3939 = vmul.f32 %v1891, 0.0
        %v3940 = vmul.f32 %v1892, 0.0
        %v3941 = vmul.f32 %v1893, 0.0
        %v3942 = vmul.f32 %v1894, 0.0
        %v3943 = vmul.f32 %v1895, 0.0
        %v3944 = vmul.f32 %v1896, 0.0
        %v3945 = vmul.f32 %v1897, 0.0
        %v3946 = vmul.f32 %v1898, 0.0
        %v3947 = vmul.f32 %v1899, 0.0
        %v3948 = vmul.f32 %v1900, 0.0
        %v3949 = vmul.f32 %v1901, 0.0
        %v3950 = vmul.f32 %v1902, 0.0
        %v3951 = vmul.f32 %v1903, 0.0
        %v3952 = vmul.f32 %v1904, 0.0
        %v3953 = vmul.f32 %v1905, 0.0
        %v3954 = vmul.f32 %v1906, 0.0
        %v3955 = vmul.f32 %v1907, 0.0
        %v3956 = vmul.f32 %v1908, 0.0
        %v3957 = vmul.f32 %v1909, 0.0
        %v3958 = vmul.f32 %v1910, 0.0
        %v3959 = vmul.f32 %v1911, 0.0
        %v3960 = vmul.f32 %v1912, 0.0
        %v3961 = vmul.f32 %v1913, 0.0
        %v3962 = vmul.f32 %v1914, 0.0
        %v3963 = vmul.f32 %v1915, 0.0
        %v3964 = vmul.f32 %v1916, 0.0
        %v3965 = vmul.f32 %v1917, 0.0
        %v3966 = vmul.f32 %v1918, 0.0
        %v3967 = vmul.f32 %v1919, 0.0
        %v3968 = vmul.f32 %v1920, 0.0
        %v3969 = vmul.f32 %v1921, 0.0
        %v3970 = vmul.f32 %v1922, 0.0
        %v3971 = vmul.f32 %v1923, 0.0
        %v3972 = vmul.f32 %v1924, 0.0
        %v3973 = vmul.f32 %v1925, 0.0
        %v3974 = vmul.f32 %v1926, 0.0
        %v3975 = vmul.f32 %v1927, 0.0
        %v3976 = vmul.f32 %v1928, 0.0
        %v3977 = vmul.f32 %v1929, 0.0
        %v3978 = vmul.f32 %v1930, 0.0
        %v3979 = vmul.f32 %v1931, 0.0
        %v3980 = vmul.f32 %v1932, 0.0
        %v3981 = vmul.f32 %v1933, 0.0
        %v3982 = vmul.f32 %v1934, 0.0
        %v3983 = vmul.f32 %v1935, 0.0
        %v3984 = vmul.f32 %v1936, 0.0
        %v3985 = vmul.f32 %v1937, 0.0
        %v3986 = vmul.f32 %v1938, 0.0
        %v3987 = vmul.f32 %v1939, 0.0
        %v3988 = vmul.f32 %v1940, 0.0
        %v3989 = vmul.f32 %v1941, 0.0
        %v3990 = vmul.f32 %v1942, 0.0
        %v3991 = vmul.f32 %v1943, 0.0
        %v3992 = vmul.f32 %v1944, 0.0
        %v3993 = vmul.f32 %v1945, 0.0
        %v3994 = vmul.f32 %v1946, 0.0
        %v3995 = vmul.f32 %v1947, 0.0
        %v3996 = vmul.f32 %v1948, 0.0
        %v3997 = vmul.f32 %v1949, 0.0
        %v3998 = vmul.f32 %v1950, 0.0
        %v3999 = vmul.f32 %v1951, 0.0
        %v4000 = vmul.f32 %v1952, 0.0
        %v4001 = vmul.f32 %v1953, 0.0
        %v4002 = vmul.f32 %v1954, 0.0
        %v4003 = vmul.f32 %v1955, 0.0
        %v4004 = vmul.f32 %v1956, 0.0
        %v4005 = vmul.f32 %v1957, 0.0
        %v4006 = vmul.f32 %v1958, 0.0
        %v4007 = vmul.f32 %v1959, 0.0
        %v4008 = vmul.f32 %v1960, 0.0
        %v4009 = vmul.f32 %v1961, 0.0
        %v4010 = vmul.f32 %v1962, 0.0
        %v4011 = vmul.f32 %v1963, 0.0
        %v4012 = vmul.f32 %v1964, 0.0
        %v4013 = vmul.f32 %v1965, 0.0
        %v4014 = vmul.f32 %v1966, 0.0
        %v4015 = vmul.f32 %v1967, 0.0
        %v4016 = vmul.f32 %v1968, 0.0
        %v4017 = vmul.f32 %v1969, 0.0
        %v4018 = vmul.f32 %v1970, 0.0
        %v4019 = vmul.f32 %v1971, 0.0
        %v4020 = vmul.f32 %v1972, 0.0
        %v4021 = vmul.f32 %v1973, 0.0
        %v4022 = vmul.f32 %v1974, 0.0
        %v4023 = vmul.f32 %v1975, 0.0
        %v4024 = vmul.f32 %v1976, 0.0
        %v4025 = vmul.f32 %v1977, 0.0
        %v4026 = vmul.f32 %v1978, 0.0
        %v4027 = vmul.f32 %v1979, 0.0
        %v4028 = vmul.f32 %v1980, 0.0
        %v4029 = vmul.f32 %v1981, 0.0
        %v4030 = vmul.f32 %v1982, 0.0
        %v4031 = vmul.f32 %v1983, 0.0
        %v4032 = vmul.f32 %v1984, 0.0
        %v4033 = vmul.f32 %v1985, 0.0
        %v4034 = vmul.f32 %v1986, 0.0
        %v4035 = vmul.f32 %v1987, 0.0
        %v4036 = vmul.f32 %v1988, 0.0
        %v4037 = vmul.f32 %v1989, 0.0
        %v4038 = vmul.f32 %v1990, 0.0
        %v4039 = vmul.f32 %v1991, 0.0
        %v4040 = vmul.f32 %v1992, 0.0
        %v4041 = vmul.f32 %v1993, 0.0
        %v4042 = vmul.f32 %v1994, 0.0
        %v4043 = vmul.f32 %v1995, 0.0
        %v4044 = vmul.f32 %v1996, 0.0
        %v4045 = vmul.f32 %v1997, 0.0
        %v4046 = vmul.f32 %v1998, 0.0
        %v4047 = vmul.f32 %v1999, 0.0
        %v4048 = vmul.f32 %v2000, 0.0
        %v4049 = vmul.f32 %v2001, 0.0
        %v4050 = vmul.f32 %v2002, 0.0
        %v4051 = vmul.f32 %v2003, 0.0
        %v4052 = vmul.f32 %v2004, 0.0
        %v4053 = vmul.f32 %v2005, 0.0
        %v4054 = vmul.f32 %v2006, 0.0
        %v4055 = vmul.f32 %v2007, 0.0
        %v4056 = vmul.f32 %v2008, 0.0
        %v4057 = vmul.f32 %v2009, 0.0
        %v4058 = vmul.f32 %v2010, 0.0
        %v4059 = vmul.f32 %v2011, 0.0
        %v4060 = vmul.f32 %v2012, 0.0
        %v4061 = vmul.f32 %v2013, 0.0
        %v4062 = vmul.f32 %v2014, 0.0
        %v4063 = vmul.f32 %v2015, 0.0
        %v4064 = vmul.f32 %v2016, 0.0
        %v4065 = vmul.f32 %v2017, 0.0
        %v4066 = vmul.f32 %v2018, 0.0
        %v4067 = vmul.f32 %v2019, 0.0
        %v4068 = vmul.f32 %v2020, 0.0
        %v4069 = vmul.f32 %v2021, 0.0
        %v4070 = vmul.f32 %v2022, 0.0
        %v4071 = vmul.f32 %v2023, 0.0
        %v4072 = vmul.f32 %v2024, 0.0
        %v4073 = vmul.f32 %v2025, 0.0
        %v4074 = vmul.f32 %v2026, 0.0
        %v4075 = vmul.f32 %v2027, 0.0
        %v4076 = vmul.f32 %v2028, 0.0
        %v4077 = vmul.f32 %v2029, 0.0
        %v4078 = vmul.f32 %v2030, 0.0
        %v4079 = vmul.f32 %v2031, 0.0
        %v4080 = vmul.f32 %v2032, 0.0
        %v4081 = vmul.f32 %v2033, 0.0
        %v4082 = vmul.f32 %v2034, 0.0
        %v4083 = vmul.f32 %v2035, 0.0
        %v4084 = vmul.f32 %v2036, 0.0
        %v4085 = vmul.f32 %v2037, 0.0
        %v4086 = vmul.f32 %v2038, 0.0
        %v4087 = vmul.f32 %v2039, 0.0
        %v4088 = vmul.f32 %v2040, 0.0
        %v4089 = vmul.f32 %v2041, 0.0
        %v4090 = vmul.f32 %v2042, 0.0
        %v4091 = vmul.f32 %v2043, 0.0
        %v4092 = vmul.f32 %v2044, 0.0
        %v4093 = vmul.f32 %v2045, 0.0
        %v4094 = vmul.f32 %v2046, 0.0
        %v4095 = vmul.f32 %v2047, 0.0
        %v4096 = vmul.f32 %v2048, 0.0
        %v4097 = vmul.f32 %v2049, 0.0
        %v4098 = vmul.f32 %v2050, 0.0
        %v4099 = vmul.f32 %v2051, 0.0
        %v4100 = vmul.f32 %v2052, 0.0
        %v4101 = vmul.f32 %v2053, 0.0
        %v4102 = vmul.f32 %v2054, 0.0
        %v4103 = vmul.f32 %v2055, 0.0
        %v4104 = vmul.f32 %v2056, 0.0
        %v4105 = vmul.f32 %v2057, 0.0
        %v4106 = vmul.f32 %v2058, 0.0
        %v4107 = vmul.f32 %v2059, 0.0
        %v4108 = vmul.f32 %v2060, 0.0
        %v4109 = vmul.f32 %v2061, 0.0
        %v4110 = vmul.f32 %v2062, 0.0
        %v4111 = vmul.f32 %v2063, 0.0
        %v4112 = vmul.f32 %v2064, 0.0
        %v4113 = vmul.f32 %v2065, 0.0
        %v4114 = vmul.f32 %v2066, 0.0
        %v4115 = vmul.f32 %v2067, 0.0
        %v4116 = vmul.f32 %v2068, 0.0
        %v4117 = vmul.f32 %v2069, 0.0
        %v4118 = vmul.f32 %v2070, 0.0
        %v4119 = vmul.f32 %v2071, 0.0
        %v4120 = vmul.f32 %v2072, 0.0
        %v4121 = vmul.f32 %v2073, 0.0
        %v4122 = vmul.f32 %v2074, 0.0
        %v4123 = vmul.f32 %v2075, 0.0
        %v4124 = vmul.f32 %v2076, 0.0
        %v4125 = vmul.f32 %v2077, 0.0
        %v4126 = vmul.f32 %v2078, 0.0
        %v4127 = vmul.f32 %v2079, 0.0
        %v4128 = vmul.f32 %v2080, 0.0
        %v4129 = vmul.f32 %v2081, 0.0
        %v4130 = vmul.f32 %v2082, 0.0
        %v4131 = vmul.f32 %v2083, 0.0
        %v4132 = vmul.f32 %v2084, 0.0
        %v4133 = vmul.f32 %v2085, 0.0
        %v4134 = vmul.f32 %v2086, 0.0
        %v4135 = vmul.f32 %v2087, 0.0
        %v4136 = vmul.f32 %v2088, 0.0
        %v4137 = vmul.f32 %v2089, 0.0
        %v4138 = vmul.f32 %v2090, 0.0
        %v4139 = vmul.f32 %v2091, 0.0
        %v4140 = vmul.f32 %v2092, 0.0
        %v4141 = vmul.f32 %v2093, 0.0
        %v4142 = vmul.f32 %v2094, 0.0
        %v4143 = vmul.f32 %v2095, 0.0
        %v4144 = vmul.f32 %v2096, 0.0
        %v4145 = vmul.f32 %v2097, 0.0
        %v4146 = vmul.f32 %v2098, 0.0
        %v4147 = vmul.f32 %v2099, 0.0
        %v4148 = vmul.f32 %v2100, 0.0
        %v4149 = vmul.f32 %v2101, 0.0
        %v4150 = vmul.f32 %v2102, 0.0
        %v4151 = vmul.f32 %v2103, 0.0
        %v4152 = vmul.f32 %v2104, 0.0
        %v4153 = vmul.f32 %v2105, 0.0
        %v4154 = vmul.f32 %v2106, 0.0
        %v4155 = vmul.f32 %v2107, 0.0
        %v4156 = vmul.f32 %v2108, 0.0
        %v4157 = vmul.f32 %v2109, 0.0
        %v4158 = vmul.f32 %v2110, 0.0
        %v4159 = vmul.f32 %v2111, 0.0
        %v4160 = vmul.f32 %v2112, 0.0
        %v4161 = vmul.f32 %v2113, 0.0
        %v4162 = vmul.f32 %v2114, 0.0
        %v4163 = vmul.f32 %v2115, 0.0
        %v4164 = vmul.f32 %v2116, 0.0
        %v4165 = vmul.f32 %v2117, 0.0
        %v4166 = vmul.f32 %v2118, 0.0
        %v4167 = vmul.f32 %v2119, 0.0
        %v4168 = vmul.f32 %v2120, 0.0
        %v4169 = vmul.f32 %v2121, 0.0
        %v4170 = vmul.f32 %v2122, 0.0
        %v4171 = vmul.f32 %v2123, 0.0
        %v4172 = vmul.f32 %v2124, 0.0
        %v4173 = vmul.f32 %v2125, 0.0
        %v4174 = vmul.f32 %v2126, 0.0
        %v4175 = vmul.f32 %v2127, 0.0
        %v4176 = vmul.f32 %v2128, 0.0
        %v4177 = vmul.f32 %v2129, 0.0
        %v4178 = vmul.f32 %v2130, 0.0
        %v4179 = vmul.f32 %v2131, 0.0
        %v4180 = vmul.f32 %v2132, 0.0
        %v4181 = vmul.f32 %v2133, 0.0
        %v4182 = vmul.f32 %v2134, 0.0
        %v4183 = vmul.f32 %v2135, 0.0
        %v4184 = vmul.f32 %v2136, 0.0
        %v4185 = vmul.f32 %v2137, 0.0
        %v4186 = vmul.f32 %v2138, 0.0
        %v4187 = vmul.f32 %v2139, 0.0
        %v4188 = vmul.f32 %v2140, 0.0
        %v4189 = vmul.f32 %v2141, 0.0
        %v4190 = vmul.f32 %v2142, 0.0
        %v4191 = vmul.f32 %v2143, 0.0
        %v4192 = vmul.f32 %v2144, 0.0
        %v4193 = vmul.f32 %v2145, 0.0
        %v4194 = vmul.f32 %v2146, 0.0
        %v4195 = vmul.f32 %v2147, 0.0
        %v4196 = vmul.f32 %v2148, 0.0
        %v4197 = vmul.f32 %v2149, 0.0
        %v4198 = vmul.f32 %v2150, 0.0
        %v4199 = vmul.f32 %v2151, 0.0
        %v4200 = vmul.f32 %v2152, 0.0
        %v4201 = vmul.f32 %v2153, 0.0
        %v4202 = vmul.f32 %v2154, 0.0
        %v4203 = vmul.f32 %v2155, 0.0
        %v4204 = vmul.f32 %v2156, 0.0
        %v4205 = vmul.f32 %v2157, 0.0
        %v4206 = vmul.f32 %v2158, 0.0
        %v4207 = vmul.f32 %v2159, 0.0
        %v4208 = vmul.f32 %v2160, 0.0
        %v4209 = vmul.f32 %v2161, 0.0
        %v4210 = vmul.f32 %v2162, 0.0
        %v4211 = vmul.f32 %v2163, 0.0
        %v4212 = vmul.f32 %v2164, 0.0
        %v4213 = vmul.f32 %v2165, 0.0
        %v4214 = vmul.f32 %v2166, 0.0
        %v4215 = vmul.f32 %v2167, 0.0
        %v4216 = vmul.f32 %v2168, 0.0
        %v4217 = vmul.f32 %v2169, 0.0
        %v4218 = vmul.f32 %v2170, 0.0
        %v4219 = vmul.f32 %v2171, 0.0
        %v4220 = vmul.f32 %v2172, 0.0
        %v4221 = vmul.f32 %v2173, 0.0
        %v4222 = vmul.f32 %v2174, 0.0
        %v4223 = vmul.f32 %v2175, 0.0
        %v4224 = vmul.f32 %v2176, 0.0
        %v4225 = vmul.f32 %v2177, 0.0
        %v4226 = vmul.f32 %v2178, 0.0
        %v4227 = vmul.f32 %v2179, 0.0
        %v4228 = vmul.f32 %v2180, 0.0
        %v4229 = vmul.f32 %v2181, 0.0
        %v4230 = vmul.f32 %v2182, 0.0
        %v4231 = vmul.f32 %v2183, 0.0
        %v4232 = vmul.f32 %v2184, 0.0
        %v4233 = vmul.f32 %v2185, 0.0
        %4234 = vst [vmem:[%s135] sm:$0xff] %v2186
        %4235 = vst [vmem:[%s135 + $0x8] sm:$0xff] %v2187
        %4236 = vst [vmem:[%s135 + $0x10] sm:$0xff] %v2188
        %4237 = vst [vmem:[%s135 + $0x18] sm:$0xff] %v2189
        %4238 = vst [vmem:[%s135 + $0x20] sm:$0xff] %v2190
        %4239 = vst [vmem:[%s135 + $0x28] sm:$0xff] %v2191
        %4240 = vst [vmem:[%s135 + $0x30] sm:$0xff] %v2192
        %4241 = vst [vmem:[%s135 + $0x38] sm:$0xff] %v2193
        %4242 = vst [vmem:[%s135 + $0x40] sm:$0xff] %v2194
        %4243 = vst [vmem:[%s135 + $0x48] sm:$0xff] %v2195
        %4244 = vst [vmem:[%s135 + $0x50] sm:$0xff] %v2196
        %4245 = vst [vmem:[%s135 + $0x58] sm:$0xff] %v2197
        %4246 = vst [vmem:[%s135 + $0x60] sm:$0xff] %v2198
        %4247 = vst [vmem:[%s135 + $0x68] sm:$0xff] %v2199
        %4248 = vst [vmem:[%s135 + $0x70] sm:$0xff] %v2200
        %4249 = vst [vmem:[%s135 + $0x78] sm:$0xff] %v2201
        %4250 = vst [vmem:[%s135 + $0x80] sm:$0xff] %v2202
        %4251 = vst [vmem:[%s135 + $0x88] sm:$0xff] %v2203
        %4252 = vst [vmem:[%s135 + $0x90] sm:$0xff] %v2204
        %4253 = vst [vmem:[%s135 + $0x98] sm:$0xff] %v2205
        %4254 = vst [vmem:[%s135 + $0xa0] sm:$0xff] %v2206
        %4255 = vst [vmem:[%s135 + $0xa8] sm:$0xff] %v2207
        %4256 = vst [vmem:[%s135 + $0xb0] sm:$0xff] %v2208
        %4257 = vst [vmem:[%s135 + $0xb8] sm:$0xff] %v2209
        %4258 = vst [vmem:[%s135 + $0xc0] sm:$0xff] %v2210
        %4259 = vst [vmem:[%s135 + $0xc8] sm:$0xff] %v2211
        %4260 = vst [vmem:[%s135 + $0xd0] sm:$0xff] %v2212
        %4261 = vst [vmem:[%s135 + $0xd8] sm:$0xff] %v2213
        %4262 = vst [vmem:[%s135 + $0xe0] sm:$0xff] %v2214
        %4263 = vst [vmem:[%s135 + $0xe8] sm:$0xff] %v2215
        %4264 = vst [vmem:[%s135 + $0xf0] sm:$0xff] %v2216
        %4265 = vst [vmem:[%s135 + $0xf8] sm:$0xff] %v2217
        %4266 = vst [vmem:[%s135 + $0x100] sm:$0xff] %v2218
        %4267 = vst [vmem:[%s135 + $0x108] sm:$0xff] %v2219
        %4268 = vst [vmem:[%s135 + $0x110] sm:$0xff] %v2220
        %4269 = vst [vmem:[%s135 + $0x118] sm:$0xff] %v2221
        %4270 = vst [vmem:[%s135 + $0x120] sm:$0xff] %v2222
        %4271 = vst [vmem:[%s135 + $0x128] sm:$0xff] %v2223
        %4272 = vst [vmem:[%s135 + $0x130] sm:$0xff] %v2224
        %4273 = vst [vmem:[%s135 + $0x138] sm:$0xff] %v2225
        %4274 = vst [vmem:[%s135 + $0x140] sm:$0xff] %v2226
        %4275 = vst [vmem:[%s135 + $0x148] sm:$0xff] %v2227
        %4276 = vst [vmem:[%s135 + $0x150] sm:$0xff] %v2228
        %4277 = vst [vmem:[%s135 + $0x158] sm:$0xff] %v2229
        %4278 = vst [vmem:[%s135 + $0x160] sm:$0xff] %v2230
        %4279 = vst [vmem:[%s135 + $0x168] sm:$0xff] %v2231
        %4280 = vst [vmem:[%s135 + $0x170] sm:$0xff] %v2232
        %4281 = vst [vmem:[%s135 + $0x178] sm:$0xff] %v2233
        %4282 = vst [vmem:[%s135 + $0x180] sm:$0xff] %v2234
        %4283 = vst [vmem:[%s135 + $0x188] sm:$0xff] %v2235
        %4284 = vst [vmem:[%s135 + $0x190] sm:$0xff] %v2236
        %4285 = vst [vmem:[%s135 + $0x198] sm:$0xff] %v2237
        %4286 = vst [vmem:[%s135 + $0x1a0] sm:$0xff] %v2238
        %4287 = vst [vmem:[%s135 + $0x1a8] sm:$0xff] %v2239
        %4288 = vst [vmem:[%s135 + $0x1b0] sm:$0xff] %v2240
        %4289 = vst [vmem:[%s135 + $0x1b8] sm:$0xff] %v2241
        %4290 = vst [vmem:[%s135 + $0x1c0] sm:$0xff] %v2242
        %4291 = vst [vmem:[%s135 + $0x1c8] sm:$0xff] %v2243
        %4292 = vst [vmem:[%s135 + $0x1d0] sm:$0xff] %v2244
        %4293 = vst [vmem:[%s135 + $0x1d8] sm:$0xff] %v2245
        %4294 = vst [vmem:[%s135 + $0x1e0] sm:$0xff] %v2246
        %4295 = vst [vmem:[%s135 + $0x1e8] sm:$0xff] %v2247
        %4296 = vst [vmem:[%s135 + $0x1f0] sm:$0xff] %v2248
        %4297 = vst [vmem:[%s135 + $0x1f8] sm:$0xff] %v2249
        %4298 = vst [vmem:[%s135 + $0x200] sm:$0xff] %v2250
        %4299 = vst [vmem:[%s135 + $0x208] sm:$0xff] %v2251
        %4300 = vst [vmem:[%s135 + $0x210] sm:$0xff] %v2252
        %4301 = vst [vmem:[%s135 + $0x218] sm:$0xff] %v2253
        %4302 = vst [vmem:[%s135 + $0x220] sm:$0xff] %v2254
        %4303 = vst [vmem:[%s135 + $0x228] sm:$0xff] %v2255
        %4304 = vst [vmem:[%s135 + $0x230] sm:$0xff] %v2256
        %4305 = vst [vmem:[%s135 + $0x238] sm:$0xff] %v2257
        %4306 = vst [vmem:[%s135 + $0x240] sm:$0xff] %v2258
        %4307 = vst [vmem:[%s135 + $0x248] sm:$0xff] %v2259
        %4308 = vst [vmem:[%s135 + $0x250] sm:$0xff] %v2260
        %4309 = vst [vmem:[%s135 + $0x258] sm:$0xff] %v2261
        %4310 = vst [vmem:[%s135 + $0x260] sm:$0xff] %v2262
        %4311 = vst [vmem:[%s135 + $0x268] sm:$0xff] %v2263
        %4312 = vst [vmem:[%s135 + $0x270] sm:$0xff] %v2264
        %4313 = vst [vmem:[%s135 + $0x278] sm:$0xff] %v2265
        %4314 = vst [vmem:[%s135 + $0x280] sm:$0xff] %v2266
        %4315 = vst [vmem:[%s135 + $0x288] sm:$0xff] %v2267
        %4316 = vst [vmem:[%s135 + $0x290] sm:$0xff] %v2268
        %4317 = vst [vmem:[%s135 + $0x298] sm:$0xff] %v2269
        %4318 = vst [vmem:[%s135 + $0x2a0] sm:$0xff] %v2270
        %4319 = vst [vmem:[%s135 + $0x2a8] sm:$0xff] %v2271
        %4320 = vst [vmem:[%s135 + $0x2b0] sm:$0xff] %v2272
        %4321 = vst [vmem:[%s135 + $0x2b8] sm:$0xff] %v2273
        %4322 = vst [vmem:[%s135 + $0x2c0] sm:$0xff] %v2274
        %4323 = vst [vmem:[%s135 + $0x2c8] sm:$0xff] %v2275
        %4324 = vst [vmem:[%s135 + $0x2d0] sm:$0xff] %v2276
        %4325 = vst [vmem:[%s135 + $0x2d8] sm:$0xff] %v2277
        %4326 = vst [vmem:[%s135 + $0x2e0] sm:$0xff] %v2278
        %4327 = vst [vmem:[%s135 + $0x2e8] sm:$0xff] %v2279
        %4328 = vst [vmem:[%s135 + $0x2f0] sm:$0xff] %v2280
        %4329 = vst [vmem:[%s135 + $0x2f8] sm:$0xff] %v2281
        %4330 = vst [vmem:[%s135 + $0x300] sm:$0xff] %v2282
        %4331 = vst [vmem:[%s135 + $0x308] sm:$0xff] %v2283
        %4332 = vst [vmem:[%s135 + $0x310] sm:$0xff] %v2284
        %4333 = vst [vmem:[%s135 + $0x318] sm:$0xff] %v2285
        %4334 = vst [vmem:[%s135 + $0x320] sm:$0xff] %v2286
        %4335 = vst [vmem:[%s135 + $0x328] sm:$0xff] %v2287
        %4336 = vst [vmem:[%s135 + $0x330] sm:$0xff] %v2288
        %4337 = vst [vmem:[%s135 + $0x338] sm:$0xff] %v2289
        %4338 = vst [vmem:[%s135 + $0x340] sm:$0xff] %v2290
        %4339 = vst [vmem:[%s135 + $0x348] sm:$0xff] %v2291
        %4340 = vst [vmem:[%s135 + $0x350] sm:$0xff] %v2292
        %4341 = vst [vmem:[%s135 + $0x358] sm:$0xff] %v2293
        %4342 = vst [vmem:[%s135 + $0x360] sm:$0xff] %v2294
        %4343 = vst [vmem:[%s135 + $0x368] sm:$0xff] %v2295
        %4344 = vst [vmem:[%s135 + $0x370] sm:$0xff] %v2296
        %4345 = vst [vmem:[%s135 + $0x378] sm:$0xff] %v2297
        %4346 = vst [vmem:[%s135 + $0x380] sm:$0xff] %v2298
        %4347 = vst [vmem:[%s135 + $0x388] sm:$0xff] %v2299
        %4348 = vst [vmem:[%s135 + $0x390] sm:$0xff] %v2300
        %4349 = vst [vmem:[%s135 + $0x398] sm:$0xff] %v2301
        %4350 = vst [vmem:[%s135 + $0x3a0] sm:$0xff] %v2302
        %4351 = vst [vmem:[%s135 + $0x3a8] sm:$0xff] %v2303
        %4352 = vst [vmem:[%s135 + $0x3b0] sm:$0xff] %v2304
        %4353 = vst [vmem:[%s135 + $0x3b8] sm:$0xff] %v2305
        %4354 = vst [vmem:[%s135 + $0x3c0] sm:$0xff] %v2306
        %4355 = vst [vmem:[%s135 + $0x3c8] sm:$0xff] %v2307
        %4356 = vst [vmem:[%s135 + $0x3d0] sm:$0xff] %v2308
        %4357 = vst [vmem:[%s135 + $0x3d8] sm:$0xff] %v2309
        %4358 = vst [vmem:[%s135 + $0x3e0] sm:$0xff] %v2310
        %4359 = vst [vmem:[%s135 + $0x3e8] sm:$0xff] %v2311
        %4360 = vst [vmem:[%s135 + $0x3f0] sm:$0xff] %v2312
        %4361 = vst [vmem:[%s135 + $0x3f8] sm:$0xff] %v2313
        %4362 = vst [vmem:[%s135 + $0x400] sm:$0xff] %v2314
        %4363 = vst [vmem:[%s135 + $0x408] sm:$0xff] %v2315
        %4364 = vst [vmem:[%s135 + $0x410] sm:$0xff] %v2316
        %4365 = vst [vmem:[%s135 + $0x418] sm:$0xff] %v2317
        %4366 = vst [vmem:[%s135 + $0x420] sm:$0xff] %v2318
        %4367 = vst [vmem:[%s135 + $0x428] sm:$0xff] %v2319
        %4368 = vst [vmem:[%s135 + $0x430] sm:$0xff] %v2320
        %4369 = vst [vmem:[%s135 + $0x438] sm:$0xff] %v2321
        %4370 = vst [vmem:[%s135 + $0x440] sm:$0xff] %v2322
        %4371 = vst [vmem:[%s135 + $0x448] sm:$0xff] %v2323
        %4372 = vst [vmem:[%s135 + $0x450] sm:$0xff] %v2324
        %4373 = vst [vmem:[%s135 + $0x458] sm:$0xff] %v2325
        %4374 = vst [vmem:[%s135 + $0x460] sm:$0xff] %v2326
        %4375 = vst [vmem:[%s135 + $0x468] sm:$0xff] %v2327
        %4376 = vst [vmem:[%s135 + $0x470] sm:$0xff] %v2328
        %4377 = vst [vmem:[%s135 + $0x478] sm:$0xff] %v2329
        %4378 = vst [vmem:[%s135 + $0x480] sm:$0xff] %v2330
        %4379 = vst [vmem:[%s135 + $0x488] sm:$0xff] %v2331
        %4380 = vst [vmem:[%s135 + $0x490] sm:$0xff] %v2332
        %4381 = vst [vmem:[%s135 + $0x498] sm:$0xff] %v2333
        %4382 = vst [vmem:[%s135 + $0x4a0] sm:$0xff] %v2334
        %4383 = vst [vmem:[%s135 + $0x4a8] sm:$0xff] %v2335
        %4384 = vst [vmem:[%s135 + $0x4b0] sm:$0xff] %v2336
        %4385 = vst [vmem:[%s135 + $0x4b8] sm:$0xff] %v2337
        %4386 = vst [vmem:[%s135 + $0x4c0] sm:$0xff] %v2338
        %4387 = vst [vmem:[%s135 + $0x4c8] sm:$0xff] %v2339
        %4388 = vst [vmem:[%s135 + $0x4d0] sm:$0xff] %v2340
        %4389 = vst [vmem:[%s135 + $0x4d8] sm:$0xff] %v2341
        %4390 = vst [vmem:[%s135 + $0x4e0] sm:$0xff] %v2342
        %4391 = vst [vmem:[%s135 + $0x4e8] sm:$0xff] %v2343
        %4392 = vst [vmem:[%s135 + $0x4f0] sm:$0xff] %v2344
        %4393 = vst [vmem:[%s135 + $0x4f8] sm:$0xff] %v2345
        %4394 = vst [vmem:[%s135 + $0x500] sm:$0xff] %v2346
        %4395 = vst [vmem:[%s135 + $0x508] sm:$0xff] %v2347
        %4396 = vst [vmem:[%s135 + $0x510] sm:$0xff] %v2348
        %4397 = vst [vmem:[%s135 + $0x518] sm:$0xff] %v2349
        %4398 = vst [vmem:[%s135 + $0x520] sm:$0xff] %v2350
        %4399 = vst [vmem:[%s135 + $0x528] sm:$0xff] %v2351
        %4400 = vst [vmem:[%s135 + $0x530] sm:$0xff] %v2352
        %4401 = vst [vmem:[%s135 + $0x538] sm:$0xff] %v2353
        %4402 = vst [vmem:[%s135 + $0x540] sm:$0xff] %v2354
        %4403 = vst [vmem:[%s135 + $0x548] sm:$0xff] %v2355
        %4404 = vst [vmem:[%s135 + $0x550] sm:$0xff] %v2356
        %4405 = vst [vmem:[%s135 + $0x558] sm:$0xff] %v2357
        %4406 = vst [vmem:[%s135 + $0x560] sm:$0xff] %v2358
        %4407 = vst [vmem:[%s135 + $0x568] sm:$0xff] %v2359
        %4408 = vst [vmem:[%s135 + $0x570] sm:$0xff] %v2360
        %4409 = vst [vmem:[%s135 + $0x578] sm:$0xff] %v2361
        %4410 = vst [vmem:[%s135 + $0x580] sm:$0xff] %v2362
        %4411 = vst [vmem:[%s135 + $0x588] sm:$0xff] %v2363
        %4412 = vst [vmem:[%s135 + $0x590] sm:$0xff] %v2364
        %4413 = vst [vmem:[%s135 + $0x598] sm:$0xff] %v2365
        %4414 = vst [vmem:[%s135 + $0x5a0] sm:$0xff] %v2366
        %4415 = vst [vmem:[%s135 + $0x5a8] sm:$0xff] %v2367
        %4416 = vst [vmem:[%s135 + $0x5b0] sm:$0xff] %v2368
        %4417 = vst [vmem:[%s135 + $0x5b8] sm:$0xff] %v2369
        %4418 = vst [vmem:[%s135 + $0x5c0] sm:$0xff] %v2370
        %4419 = vst [vmem:[%s135 + $0x5c8] sm:$0xff] %v2371
        %4420 = vst [vmem:[%s135 + $0x5d0] sm:$0xff] %v2372
        %4421 = vst [vmem:[%s135 + $0x5d8] sm:$0xff] %v2373
        %4422 = vst [vmem:[%s135 + $0x5e0] sm:$0xff] %v2374
        %4423 = vst [vmem:[%s135 + $0x5e8] sm:$0xff] %v2375
        %4424 = vst [vmem:[%s135 + $0x5f0] sm:$0xff] %v2376
        %4425 = vst [vmem:[%s135 + $0x5f8] sm:$0xff] %v2377
        %4426 = vst [vmem:[%s135 + $0x600] sm:$0xff] %v2378
        %4427 = vst [vmem:[%s135 + $0x608] sm:$0xff] %v2379
        %4428 = vst [vmem:[%s135 + $0x610] sm:$0xff] %v2380
        %4429 = vst [vmem:[%s135 + $0x618] sm:$0xff] %v2381
        %4430 = vst [vmem:[%s135 + $0x620] sm:$0xff] %v2382
        %4431 = vst [vmem:[%s135 + $0x628] sm:$0xff] %v2383
        %4432 = vst [vmem:[%s135 + $0x630] sm:$0xff] %v2384
        %4433 = vst [vmem:[%s135 + $0x638] sm:$0xff] %v2385
        %4434 = vst [vmem:[%s135 + $0x640] sm:$0xff] %v2386
        %4435 = vst [vmem:[%s135 + $0x648] sm:$0xff] %v2387
        %4436 = vst [vmem:[%s135 + $0x650] sm:$0xff] %v2388
        %4437 = vst [vmem:[%s135 + $0x658] sm:$0xff] %v2389
        %4438 = vst [vmem:[%s135 + $0x660] sm:$0xff] %v2390
        %4439 = vst [vmem:[%s135 + $0x668] sm:$0xff] %v2391
        %4440 = vst [vmem:[%s135 + $0x670] sm:$0xff] %v2392
        %4441 = vst [vmem:[%s135 + $0x678] sm:$0xff] %v2393
        %4442 = vst [vmem:[%s135 + $0x680] sm:$0xff] %v2394
        %4443 = vst [vmem:[%s135 + $0x688] sm:$0xff] %v2395
        %4444 = vst [vmem:[%s135 + $0x690] sm:$0xff] %v2396
        %4445 = vst [vmem:[%s135 + $0x698] sm:$0xff] %v2397
        %4446 = vst [vmem:[%s135 + $0x6a0] sm:$0xff] %v2398
        %4447 = vst [vmem:[%s135 + $0x6a8] sm:$0xff] %v2399
        %4448 = vst [vmem:[%s135 + $0x6b0] sm:$0xff] %v2400
        %4449 = vst [vmem:[%s135 + $0x6b8] sm:$0xff] %v2401
        %4450 = vst [vmem:[%s135 + $0x6c0] sm:$0xff] %v2402
        %4451 = vst [vmem:[%s135 + $0x6c8] sm:$0xff] %v2403
        %4452 = vst [vmem:[%s135 + $0x6d0] sm:$0xff] %v2404
        %4453 = vst [vmem:[%s135 + $0x6d8] sm:$0xff] %v2405
        %4454 = vst [vmem:[%s135 + $0x6e0] sm:$0xff] %v2406
        %4455 = vst [vmem:[%s135 + $0x6e8] sm:$0xff] %v2407
        %4456 = vst [vmem:[%s135 + $0x6f0] sm:$0xff] %v2408
        %4457 = vst [vmem:[%s135 + $0x6f8] sm:$0xff] %v2409
        %4458 = vst [vmem:[%s135 + $0x700] sm:$0xff] %v2410
        %4459 = vst [vmem:[%s135 + $0x708] sm:$0xff] %v2411
        %4460 = vst [vmem:[%s135 + $0x710] sm:$0xff] %v2412
        %4461 = vst [vmem:[%s135 + $0x718] sm:$0xff] %v2413
        %4462 = vst [vmem:[%s135 + $0x720] sm:$0xff] %v2414
        %4463 = vst [vmem:[%s135 + $0x728] sm:$0xff] %v2415
        %4464 = vst [vmem:[%s135 + $0x730] sm:$0xff] %v2416
        %4465 = vst [vmem:[%s135 + $0x738] sm:$0xff] %v2417
        %4466 = vst [vmem:[%s135 + $0x740] sm:$0xff] %v2418
        %4467 = vst [vmem:[%s135 + $0x748] sm:$0xff] %v2419
        %4468 = vst [vmem:[%s135 + $0x750] sm:$0xff] %v2420
        %4469 = vst [vmem:[%s135 + $0x758] sm:$0xff] %v2421
        %4470 = vst [vmem:[%s135 + $0x760] sm:$0xff] %v2422
        %4471 = vst [vmem:[%s135 + $0x768] sm:$0xff] %v2423
        %4472 = vst [vmem:[%s135 + $0x770] sm:$0xff] %v2424
        %4473 = vst [vmem:[%s135 + $0x778] sm:$0xff] %v2425
        %4474 = vst [vmem:[%s135 + $0x780] sm:$0xff] %v2426
        %4475 = vst [vmem:[%s135 + $0x788] sm:$0xff] %v2427
        %4476 = vst [vmem:[%s135 + $0x790] sm:$0xff] %v2428
        %4477 = vst [vmem:[%s135 + $0x798] sm:$0xff] %v2429
        %4478 = vst [vmem:[%s135 + $0x7a0] sm:$0xff] %v2430
        %4479 = vst [vmem:[%s135 + $0x7a8] sm:$0xff] %v2431
        %4480 = vst [vmem:[%s135 + $0x7b0] sm:$0xff] %v2432
        %4481 = vst [vmem:[%s135 + $0x7b8] sm:$0xff] %v2433
        %4482 = vst [vmem:[%s135 + $0x7c0] sm:$0xff] %v2434
        %4483 = vst [vmem:[%s135 + $0x7c8] sm:$0xff] %v2435
        %4484 = vst [vmem:[%s135 + $0x7d0] sm:$0xff] %v2436
        %4485 = vst [vmem:[%s135 + $0x7d8] sm:$0xff] %v2437
        %4486 = vst [vmem:[%s135 + $0x7e0] sm:$0xff] %v2438
        %4487 = vst [vmem:[%s135 + $0x7e8] sm:$0xff] %v2439
        %4488 = vst [vmem:[%s135 + $0x7f0] sm:$0xff] %v2440
        %4489 = vst [vmem:[%s135 + $0x7f8] sm:$0xff] %v2441
        %4490 = vst [vmem:[%s135 + $0x800] sm:$0xff] %v2442
        %4491 = vst [vmem:[%s135 + $0x808] sm:$0xff] %v2443
        %4492 = vst [vmem:[%s135 + $0x810] sm:$0xff] %v2444
        %4493 = vst [vmem:[%s135 + $0x818] sm:$0xff] %v2445
        %4494 = vst [vmem:[%s135 + $0x820] sm:$0xff] %v2446
        %4495 = vst [vmem:[%s135 + $0x828] sm:$0xff] %v2447
        %4496 = vst [vmem:[%s135 + $0x830] sm:$0xff] %v2448
        %4497 = vst [vmem:[%s135 + $0x838] sm:$0xff] %v2449
        %4498 = vst [vmem:[%s135 + $0x840] sm:$0xff] %v2450
        %4499 = vst [vmem:[%s135 + $0x848] sm:$0xff] %v2451
        %4500 = vst [vmem:[%s135 + $0x850] sm:$0xff] %v2452
        %4501 = vst [vmem:[%s135 + $0x858] sm:$0xff] %v2453
        %4502 = vst [vmem:[%s135 + $0x860] sm:$0xff] %v2454
        %4503 = vst [vmem:[%s135 + $0x868] sm:$0xff] %v2455
        %4504 = vst [vmem:[%s135 + $0x870] sm:$0xff] %v2456
        %4505 = vst [vmem:[%s135 + $0x878] sm:$0xff] %v2457
        %4506 = vst [vmem:[%s135 + $0x880] sm:$0xff] %v2458
        %4507 = vst [vmem:[%s135 + $0x888] sm:$0xff] %v2459
        %4508 = vst [vmem:[%s135 + $0x890] sm:$0xff] %v2460
        %4509 = vst [vmem:[%s135 + $0x898] sm:$0xff] %v2461
        %4510 = vst [vmem:[%s135 + $0x8a0] sm:$0xff] %v2462
        %4511 = vst [vmem:[%s135 + $0x8a8] sm:$0xff] %v2463
        %4512 = vst [vmem:[%s135 + $0x8b0] sm:$0xff] %v2464
        %4513 = vst [vmem:[%s135 + $0x8b8] sm:$0xff] %v2465
        %4514 = vst [vmem:[%s135 + $0x8c0] sm:$0xff] %v2466
        %4515 = vst [vmem:[%s135 + $0x8c8] sm:$0xff] %v2467
        %4516 = vst [vmem:[%s135 + $0x8d0] sm:$0xff] %v2468
        %4517 = vst [vmem:[%s135 + $0x8d8] sm:$0xff] %v2469
        %4518 = vst [vmem:[%s135 + $0x8e0] sm:$0xff] %v2470
        %4519 = vst [vmem:[%s135 + $0x8e8] sm:$0xff] %v2471
        %4520 = vst [vmem:[%s135 + $0x8f0] sm:$0xff] %v2472
        %4521 = vst [vmem:[%s135 + $0x8f8] sm:$0xff] %v2473
        %4522 = vst [vmem:[%s135 + $0x900] sm:$0xff] %v2474
        %4523 = vst [vmem:[%s135 + $0x908] sm:$0xff] %v2475
        %4524 = vst [vmem:[%s135 + $0x910] sm:$0xff] %v2476
        %4525 = vst [vmem:[%s135 + $0x918] sm:$0xff] %v2477
        %4526 = vst [vmem:[%s135 + $0x920] sm:$0xff] %v2478
        %4527 = vst [vmem:[%s135 + $0x928] sm:$0xff] %v2479
        %4528 = vst [vmem:[%s135 + $0x930] sm:$0xff] %v2480
        %4529 = vst [vmem:[%s135 + $0x938] sm:$0xff] %v2481
        %4530 = vst [vmem:[%s135 + $0x940] sm:$0xff] %v2482
        %4531 = vst [vmem:[%s135 + $0x948] sm:$0xff] %v2483
        %4532 = vst [vmem:[%s135 + $0x950] sm:$0xff] %v2484
        %4533 = vst [vmem:[%s135 + $0x958] sm:$0xff] %v2485
        %4534 = vst [vmem:[%s135 + $0x960] sm:$0xff] %v2486
        %4535 = vst [vmem:[%s135 + $0x968] sm:$0xff] %v2487
        %4536 = vst [vmem:[%s135 + $0x970] sm:$0xff] %v2488
        %4537 = vst [vmem:[%s135 + $0x978] sm:$0xff] %v2489
        %4538 = vst [vmem:[%s135 + $0x980] sm:$0xff] %v2490
        %4539 = vst [vmem:[%s135 + $0x988] sm:$0xff] %v2491
        %4540 = vst [vmem:[%s135 + $0x990] sm:$0xff] %v2492
        %4541 = vst [vmem:[%s135 + $0x998] sm:$0xff] %v2493
        %4542 = vst [vmem:[%s135 + $0x9a0] sm:$0xff] %v2494
        %4543 = vst [vmem:[%s135 + $0x9a8] sm:$0xff] %v2495
        %4544 = vst [vmem:[%s135 + $0x9b0] sm:$0xff] %v2496
        %4545 = vst [vmem:[%s135 + $0x9b8] sm:$0xff] %v2497
        %4546 = vst [vmem:[%s135 + $0x9c0] sm:$0xff] %v2498
        %4547 = vst [vmem:[%s135 + $0x9c8] sm:$0xff] %v2499
        %4548 = vst [vmem:[%s135 + $0x9d0] sm:$0xff] %v2500
        %4549 = vst [vmem:[%s135 + $0x9d8] sm:$0xff] %v2501
        %4550 = vst [vmem:[%s135 + $0x9e0] sm:$0xff] %v2502
        %4551 = vst [vmem:[%s135 + $0x9e8] sm:$0xff] %v2503
        %4552 = vst [vmem:[%s135 + $0x9f0] sm:$0xff] %v2504
        %4553 = vst [vmem:[%s135 + $0x9f8] sm:$0xff] %v2505
        %4554 = vst [vmem:[%s135 + $0xa00] sm:$0xff] %v2506
        %4555 = vst [vmem:[%s135 + $0xa08] sm:$0xff] %v2507
        %4556 = vst [vmem:[%s135 + $0xa10] sm:$0xff] %v2508
        %4557 = vst [vmem:[%s135 + $0xa18] sm:$0xff] %v2509
        %4558 = vst [vmem:[%s135 + $0xa20] sm:$0xff] %v2510
        %4559 = vst [vmem:[%s135 + $0xa28] sm:$0xff] %v2511
        %4560 = vst [vmem:[%s135 + $0xa30] sm:$0xff] %v2512
        %4561 = vst [vmem:[%s135 + $0xa38] sm:$0xff] %v2513
        %4562 = vst [vmem:[%s135 + $0xa40] sm:$0xff] %v2514
        %4563 = vst [vmem:[%s135 + $0xa48] sm:$0xff] %v2515
        %4564 = vst [vmem:[%s135 + $0xa50] sm:$0xff] %v2516
        %4565 = vst [vmem:[%s135 + $0xa58] sm:$0xff] %v2517
        %4566 = vst [vmem:[%s135 + $0xa60] sm:$0xff] %v2518
        %4567 = vst [vmem:[%s135 + $0xa68] sm:$0xff] %v2519
        %4568 = vst [vmem:[%s135 + $0xa70] sm:$0xff] %v2520
        %4569 = vst [vmem:[%s135 + $0xa78] sm:$0xff] %v2521
        %4570 = vst [vmem:[%s135 + $0xa80] sm:$0xff] %v2522
        %4571 = vst [vmem:[%s135 + $0xa88] sm:$0xff] %v2523
        %4572 = vst [vmem:[%s135 + $0xa90] sm:$0xff] %v2524
        %4573 = vst [vmem:[%s135 + $0xa98] sm:$0xff] %v2525
        %4574 = vst [vmem:[%s135 + $0xaa0] sm:$0xff] %v2526
        %4575 = vst [vmem:[%s135 + $0xaa8] sm:$0xff] %v2527
        %4576 = vst [vmem:[%s135 + $0xab0] sm:$0xff] %v2528
        %4577 = vst [vmem:[%s135 + $0xab8] sm:$0xff] %v2529
        %4578 = vst [vmem:[%s135 + $0xac0] sm:$0xff] %v2530
        %4579 = vst [vmem:[%s135 + $0xac8] sm:$0xff] %v2531
        %4580 = vst [vmem:[%s135 + $0xad0] sm:$0xff] %v2532
        %4581 = vst [vmem:[%s135 + $0xad8] sm:$0xff] %v2533
        %4582 = vst [vmem:[%s135 + $0xae0] sm:$0xff] %v2534
        %4583 = vst [vmem:[%s135 + $0xae8] sm:$0xff] %v2535
        %4584 = vst [vmem:[%s135 + $0xaf0] sm:$0xff] %v2536
        %4585 = vst [vmem:[%s135 + $0xaf8] sm:$0xff] %v2537
        %4586 = vst [vmem:[%s135 + $0xb00] sm:$0xff] %v2538
        %4587 = vst [vmem:[%s135 + $0xb08] sm:$0xff] %v2539
        %4588 = vst [vmem:[%s135 + $0xb10] sm:$0xff] %v2540
        %4589 = vst [vmem:[%s135 + $0xb18] sm:$0xff] %v2541
        %4590 = vst [vmem:[%s135 + $0xb20] sm:$0xff] %v2542
        %4591 = vst [vmem:[%s135 + $0xb28] sm:$0xff] %v2543
        %4592 = vst [vmem:[%s135 + $0xb30] sm:$0xff] %v2544
        %4593 = vst [vmem:[%s135 + $0xb38] sm:$0xff] %v2545
        %4594 = vst [vmem:[%s135 + $0xb40] sm:$0xff] %v2546
        %4595 = vst [vmem:[%s135 + $0xb48] sm:$0xff] %v2547
        %4596 = vst [vmem:[%s135 + $0xb50] sm:$0xff] %v2548
        %4597 = vst [vmem:[%s135 + $0xb58] sm:$0xff] %v2549
        %4598 = vst [vmem:[%s135 + $0xb60] sm:$0xff] %v2550
        %4599 = vst [vmem:[%s135 + $0xb68] sm:$0xff] %v2551
        %4600 = vst [vmem:[%s135 + $0xb70] sm:$0xff] %v2552
        %4601 = vst [vmem:[%s135 + $0xb78] sm:$0xff] %v2553
        %4602 = vst [vmem:[%s135 + $0xb80] sm:$0xff] %v2554
        %4603 = vst [vmem:[%s135 + $0xb88] sm:$0xff] %v2555
        %4604 = vst [vmem:[%s135 + $0xb90] sm:$0xff] %v2556
        %4605 = vst [vmem:[%s135 + $0xb98] sm:$0xff] %v2557
        %4606 = vst [vmem:[%s135 + $0xba0] sm:$0xff] %v2558
        %4607 = vst [vmem:[%s135 + $0xba8] sm:$0xff] %v2559
        %4608 = vst [vmem:[%s135 + $0xbb0] sm:$0xff] %v2560
        %4609 = vst [vmem:[%s135 + $0xbb8] sm:$0xff] %v2561
        %4610 = vst [vmem:[%s135 + $0xbc0] sm:$0xff] %v2562
        %4611 = vst [vmem:[%s135 + $0xbc8] sm:$0xff] %v2563
        %4612 = vst [vmem:[%s135 + $0xbd0] sm:$0xff] %v2564
        %4613 = vst [vmem:[%s135 + $0xbd8] sm:$0xff] %v2565
        %4614 = vst [vmem:[%s135 + $0xbe0] sm:$0xff] %v2566
        %4615 = vst [vmem:[%s135 + $0xbe8] sm:$0xff] %v2567
        %4616 = vst [vmem:[%s135 + $0xbf0] sm:$0xff] %v2568
        %4617 = vst [vmem:[%s135 + $0xbf8] sm:$0xff] %v2569
        %4618 = vst [vmem:[%s135 + $0xc00] sm:$0xff] %v2570
        %4619 = vst [vmem:[%s135 + $0xc08] sm:$0xff] %v2571
        %4620 = vst [vmem:[%s135 + $0xc10] sm:$0xff] %v2572
        %4621 = vst [vmem:[%s135 + $0xc18] sm:$0xff] %v2573
        %4622 = vst [vmem:[%s135 + $0xc20] sm:$0xff] %v2574
        %4623 = vst [vmem:[%s135 + $0xc28] sm:$0xff] %v2575
        %4624 = vst [vmem:[%s135 + $0xc30] sm:$0xff] %v2576
        %4625 = vst [vmem:[%s135 + $0xc38] sm:$0xff] %v2577
        %4626 = vst [vmem:[%s135 + $0xc40] sm:$0xff] %v2578
        %4627 = vst [vmem:[%s135 + $0xc48] sm:$0xff] %v2579
        %4628 = vst [vmem:[%s135 + $0xc50] sm:$0xff] %v2580
        %4629 = vst [vmem:[%s135 + $0xc58] sm:$0xff] %v2581
        %4630 = vst [vmem:[%s135 + $0xc60] sm:$0xff] %v2582
        %4631 = vst [vmem:[%s135 + $0xc68] sm:$0xff] %v2583
        %4632 = vst [vmem:[%s135 + $0xc70] sm:$0xff] %v2584
        %4633 = vst [vmem:[%s135 + $0xc78] sm:$0xff] %v2585
        %4634 = vst [vmem:[%s135 + $0xc80] sm:$0xff] %v2586
        %4635 = vst [vmem:[%s135 + $0xc88] sm:$0xff] %v2587
        %4636 = vst [vmem:[%s135 + $0xc90] sm:$0xff] %v2588
        %4637 = vst [vmem:[%s135 + $0xc98] sm:$0xff] %v2589
        %4638 = vst [vmem:[%s135 + $0xca0] sm:$0xff] %v2590
        %4639 = vst [vmem:[%s135 + $0xca8] sm:$0xff] %v2591
        %4640 = vst [vmem:[%s135 + $0xcb0] sm:$0xff] %v2592
        %4641 = vst [vmem:[%s135 + $0xcb8] sm:$0xff] %v2593
        %4642 = vst [vmem:[%s135 + $0xcc0] sm:$0xff] %v2594
        %4643 = vst [vmem:[%s135 + $0xcc8] sm:$0xff] %v2595
        %4644 = vst [vmem:[%s135 + $0xcd0] sm:$0xff] %v2596
        %4645 = vst [vmem:[%s135 + $0xcd8] sm:$0xff] %v2597
        %4646 = vst [vmem:[%s135 + $0xce0] sm:$0xff] %v2598
        %4647 = vst [vmem:[%s135 + $0xce8] sm:$0xff] %v2599
        %4648 = vst [vmem:[%s135 + $0xcf0] sm:$0xff] %v2600
        %4649 = vst [vmem:[%s135 + $0xcf8] sm:$0xff] %v2601
        %4650 = vst [vmem:[%s135 + $0xd00] sm:$0xff] %v2602
        %4651 = vst [vmem:[%s135 + $0xd08] sm:$0xff] %v2603
        %4652 = vst [vmem:[%s135 + $0xd10] sm:$0xff] %v2604
        %4653 = vst [vmem:[%s135 + $0xd18] sm:$0xff] %v2605
        %4654 = vst [vmem:[%s135 + $0xd20] sm:$0xff] %v2606
        %4655 = vst [vmem:[%s135 + $0xd28] sm:$0xff] %v2607
        %4656 = vst [vmem:[%s135 + $0xd30] sm:$0xff] %v2608
        %4657 = vst [vmem:[%s135 + $0xd38] sm:$0xff] %v2609
        %4658 = vst [vmem:[%s135 + $0xd40] sm:$0xff] %v2610
        %4659 = vst [vmem:[%s135 + $0xd48] sm:$0xff] %v2611
        %4660 = vst [vmem:[%s135 + $0xd50] sm:$0xff] %v2612
        %4661 = vst [vmem:[%s135 + $0xd58] sm:$0xff] %v2613
        %4662 = vst [vmem:[%s135 + $0xd60] sm:$0xff] %v2614
        %4663 = vst [vmem:[%s135 + $0xd68] sm:$0xff] %v2615
        %4664 = vst [vmem:[%s135 + $0xd70] sm:$0xff] %v2616
        %4665 = vst [vmem:[%s135 + $0xd78] sm:$0xff] %v2617
        %4666 = vst [vmem:[%s135 + $0xd80] sm:$0xff] %v2618
        %4667 = vst [vmem:[%s135 + $0xd88] sm:$0xff] %v2619
        %4668 = vst [vmem:[%s135 + $0xd90] sm:$0xff] %v2620
        %4669 = vst [vmem:[%s135 + $0xd98] sm:$0xff] %v2621
        %4670 = vst [vmem:[%s135 + $0xda0] sm:$0xff] %v2622
        %4671 = vst [vmem:[%s135 + $0xda8] sm:$0xff] %v2623
        %4672 = vst [vmem:[%s135 + $0xdb0] sm:$0xff] %v2624
        %4673 = vst [vmem:[%s135 + $0xdb8] sm:$0xff] %v2625
        %4674 = vst [vmem:[%s135 + $0xdc0] sm:$0xff] %v2626
        %4675 = vst [vmem:[%s135 + $0xdc8] sm:$0xff] %v2627
        %4676 = vst [vmem:[%s135 + $0xdd0] sm:$0xff] %v2628
        %4677 = vst [vmem:[%s135 + $0xdd8] sm:$0xff] %v2629
        %4678 = vst [vmem:[%s135 + $0xde0] sm:$0xff] %v2630
        %4679 = vst [vmem:[%s135 + $0xde8] sm:$0xff] %v2631
        %4680 = vst [vmem:[%s135 + $0xdf0] sm:$0xff] %v2632
        %4681 = vst [vmem:[%s135 + $0xdf8] sm:$0xff] %v2633
        %4682 = vst [vmem:[%s135 + $0xe00] sm:$0xff] %v2634
        %4683 = vst [vmem:[%s135 + $0xe08] sm:$0xff] %v2635
        %4684 = vst [vmem:[%s135 + $0xe10] sm:$0xff] %v2636
        %4685 = vst [vmem:[%s135 + $0xe18] sm:$0xff] %v2637
        %4686 = vst [vmem:[%s135 + $0xe20] sm:$0xff] %v2638
        %4687 = vst [vmem:[%s135 + $0xe28] sm:$0xff] %v2639
        %4688 = vst [vmem:[%s135 + $0xe30] sm:$0xff] %v2640
        %4689 = vst [vmem:[%s135 + $0xe38] sm:$0xff] %v2641
        %4690 = vst [vmem:[%s135 + $0xe40] sm:$0xff] %v2642
        %4691 = vst [vmem:[%s135 + $0xe48] sm:$0xff] %v2643
        %4692 = vst [vmem:[%s135 + $0xe50] sm:$0xff] %v2644
        %4693 = vst [vmem:[%s135 + $0xe58] sm:$0xff] %v2645
        %4694 = vst [vmem:[%s135 + $0xe60] sm:$0xff] %v2646
        %4695 = vst [vmem:[%s135 + $0xe68] sm:$0xff] %v2647
        %4696 = vst [vmem:[%s135 + $0xe70] sm:$0xff] %v2648
        %4697 = vst [vmem:[%s135 + $0xe78] sm:$0xff] %v2649
        %4698 = vst [vmem:[%s135 + $0xe80] sm:$0xff] %v2650
        %4699 = vst [vmem:[%s135 + $0xe88] sm:$0xff] %v2651
        %4700 = vst [vmem:[%s135 + $0xe90] sm:$0xff] %v2652
        %4701 = vst [vmem:[%s135 + $0xe98] sm:$0xff] %v2653
        %4702 = vst [vmem:[%s135 + $0xea0] sm:$0xff] %v2654
        %4703 = vst [vmem:[%s135 + $0xea8] sm:$0xff] %v2655
        %4704 = vst [vmem:[%s135 + $0xeb0] sm:$0xff] %v2656
        %4705 = vst [vmem:[%s135 + $0xeb8] sm:$0xff] %v2657
        %4706 = vst [vmem:[%s135 + $0xec0] sm:$0xff] %v2658
        %4707 = vst [vmem:[%s135 + $0xec8] sm:$0xff] %v2659
        %4708 = vst [vmem:[%s135 + $0xed0] sm:$0xff] %v2660
        %4709 = vst [vmem:[%s135 + $0xed8] sm:$0xff] %v2661
        %4710 = vst [vmem:[%s135 + $0xee0] sm:$0xff] %v2662
        %4711 = vst [vmem:[%s135 + $0xee8] sm:$0xff] %v2663
        %4712 = vst [vmem:[%s135 + $0xef0] sm:$0xff] %v2664
        %4713 = vst [vmem:[%s135 + $0xef8] sm:$0xff] %v2665
        %4714 = vst [vmem:[%s135 + $0xf00] sm:$0xff] %v2666
        %4715 = vst [vmem:[%s135 + $0xf08] sm:$0xff] %v2667
        %4716 = vst [vmem:[%s135 + $0xf10] sm:$0xff] %v2668
        %4717 = vst [vmem:[%s135 + $0xf18] sm:$0xff] %v2669
        %4718 = vst [vmem:[%s135 + $0xf20] sm:$0xff] %v2670
        %4719 = vst [vmem:[%s135 + $0xf28] sm:$0xff] %v2671
        %4720 = vst [vmem:[%s135 + $0xf30] sm:$0xff] %v2672
        %4721 = vst [vmem:[%s135 + $0xf38] sm:$0xff] %v2673
        %4722 = vst [vmem:[%s135 + $0xf40] sm:$0xff] %v2674
        %4723 = vst [vmem:[%s135 + $0xf48] sm:$0xff] %v2675
        %4724 = vst [vmem:[%s135 + $0xf50] sm:$0xff] %v2676
        %4725 = vst [vmem:[%s135 + $0xf58] sm:$0xff] %v2677
        %4726 = vst [vmem:[%s135 + $0xf60] sm:$0xff] %v2678
        %4727 = vst [vmem:[%s135 + $0xf68] sm:$0xff] %v2679
        %4728 = vst [vmem:[%s135 + $0xf70] sm:$0xff] %v2680
        %4729 = vst [vmem:[%s135 + $0xf78] sm:$0xff] %v2681
        %4730 = vst [vmem:[%s135 + $0xf80] sm:$0xff] %v2682
        %4731 = vst [vmem:[%s135 + $0xf88] sm:$0xff] %v2683
        %4732 = vst [vmem:[%s135 + $0xf90] sm:$0xff] %v2684
        %4733 = vst [vmem:[%s135 + $0xf98] sm:$0xff] %v2685
        %4734 = vst [vmem:[%s135 + $0xfa0] sm:$0xff] %v2686
        %4735 = vst [vmem:[%s135 + $0xfa8] sm:$0xff] %v2687
        %4736 = vst [vmem:[%s135 + $0xfb0] sm:$0xff] %v2688
        %4737 = vst [vmem:[%s135 + $0xfb8] sm:$0xff] %v2689
        %4738 = vst [vmem:[%s135 + $0xfc0] sm:$0xff] %v2690
        %4739 = vst [vmem:[%s135 + $0xfc8] sm:$0xff] %v2691
        %4740 = vst [vmem:[%s135 + $0xfd0] sm:$0xff] %v2692
        %4741 = vst [vmem:[%s135 + $0xfd8] sm:$0xff] %v2693
        %4742 = vst [vmem:[%s135 + $0xfe0] sm:$0xff] %v2694
        %4743 = vst [vmem:[%s135 + $0xfe8] sm:$0xff] %v2695
        %4744 = vst [vmem:[%s135 + $0xff0] sm:$0xff] %v2696
        %4745 = vst [vmem:[%s135 + $0xff8] sm:$0xff] %v2697
        %4746 = vst [vmem:[%s135 + $0x1000] sm:$0xff] %v2698
        %4747 = vst [vmem:[%s135 + $0x1008] sm:$0xff] %v2699
        %4748 = vst [vmem:[%s135 + $0x1010] sm:$0xff] %v2700
        %4749 = vst [vmem:[%s135 + $0x1018] sm:$0xff] %v2701
        %4750 = vst [vmem:[%s135 + $0x1020] sm:$0xff] %v2702
        %4751 = vst [vmem:[%s135 + $0x1028] sm:$0xff] %v2703
        %4752 = vst [vmem:[%s135 + $0x1030] sm:$0xff] %v2704
        %4753 = vst [vmem:[%s135 + $0x1038] sm:$0xff] %v2705
        %4754 = vst [vmem:[%s135 + $0x1040] sm:$0xff] %v2706
        %4755 = vst [vmem:[%s135 + $0x1048] sm:$0xff] %v2707
        %4756 = vst [vmem:[%s135 + $0x1050] sm:$0xff] %v2708
        %4757 = vst [vmem:[%s135 + $0x1058] sm:$0xff] %v2709
        %4758 = vst [vmem:[%s135 + $0x1060] sm:$0xff] %v2710
        %4759 = vst [vmem:[%s135 + $0x1068] sm:$0xff] %v2711
        %4760 = vst [vmem:[%s135 + $0x1070] sm:$0xff] %v2712
        %4761 = vst [vmem:[%s135 + $0x1078] sm:$0xff] %v2713
        %4762 = vst [vmem:[%s135 + $0x1080] sm:$0xff] %v2714
        %4763 = vst [vmem:[%s135 + $0x1088] sm:$0xff] %v2715
        %4764 = vst [vmem:[%s135 + $0x1090] sm:$0xff] %v2716
        %4765 = vst [vmem:[%s135 + $0x1098] sm:$0xff] %v2717
        %4766 = vst [vmem:[%s135 + $0x10a0] sm:$0xff] %v2718
        %4767 = vst [vmem:[%s135 + $0x10a8] sm:$0xff] %v2719
        %4768 = vst [vmem:[%s135 + $0x10b0] sm:$0xff] %v2720
        %4769 = vst [vmem:[%s135 + $0x10b8] sm:$0xff] %v2721
        %4770 = vst [vmem:[%s135 + $0x10c0] sm:$0xff] %v2722
        %4771 = vst [vmem:[%s135 + $0x10c8] sm:$0xff] %v2723
        %4772 = vst [vmem:[%s135 + $0x10d0] sm:$0xff] %v2724
        %4773 = vst [vmem:[%s135 + $0x10d8] sm:$0xff] %v2725
        %4774 = vst [vmem:[%s135 + $0x10e0] sm:$0xff] %v2726
        %4775 = vst [vmem:[%s135 + $0x10e8] sm:$0xff] %v2727
        %4776 = vst [vmem:[%s135 + $0x10f0] sm:$0xff] %v2728
        %4777 = vst [vmem:[%s135 + $0x10f8] sm:$0xff] %v2729
        %4778 = vst [vmem:[%s135 + $0x1100] sm:$0xff] %v2730
        %4779 = vst [vmem:[%s135 + $0x1108] sm:$0xff] %v2731
        %4780 = vst [vmem:[%s135 + $0x1110] sm:$0xff] %v2732
        %4781 = vst [vmem:[%s135 + $0x1118] sm:$0xff] %v2733
        %4782 = vst [vmem:[%s135 + $0x1120] sm:$0xff] %v2734
        %4783 = vst [vmem:[%s135 + $0x1128] sm:$0xff] %v2735
        %4784 = vst [vmem:[%s135 + $0x1130] sm:$0xff] %v2736
        %4785 = vst [vmem:[%s135 + $0x1138] sm:$0xff] %v2737
        %4786 = vst [vmem:[%s135 + $0x1140] sm:$0xff] %v2738
        %4787 = vst [vmem:[%s135 + $0x1148] sm:$0xff] %v2739
        %4788 = vst [vmem:[%s135 + $0x1150] sm:$0xff] %v2740
        %4789 = vst [vmem:[%s135 + $0x1158] sm:$0xff] %v2741
        %4790 = vst [vmem:[%s135 + $0x1160] sm:$0xff] %v2742
        %4791 = vst [vmem:[%s135 + $0x1168] sm:$0xff] %v2743
        %4792 = vst [vmem:[%s135 + $0x1170] sm:$0xff] %v2744
        %4793 = vst [vmem:[%s135 + $0x1178] sm:$0xff] %v2745
        %4794 = vst [vmem:[%s135 + $0x1180] sm:$0xff] %v2746
        %4795 = vst [vmem:[%s135 + $0x1188] sm:$0xff] %v2747
        %4796 = vst [vmem:[%s135 + $0x1190] sm:$0xff] %v2748
        %4797 = vst [vmem:[%s135 + $0x1198] sm:$0xff] %v2749
        %4798 = vst [vmem:[%s135 + $0x11a0] sm:$0xff] %v2750
        %4799 = vst [vmem:[%s135 + $0x11a8] sm:$0xff] %v2751
        %4800 = vst [vmem:[%s135 + $0x11b0] sm:$0xff] %v2752
        %4801 = vst [vmem:[%s135 + $0x11b8] sm:$0xff] %v2753
        %4802 = vst [vmem:[%s135 + $0x11c0] sm:$0xff] %v2754
        %4803 = vst [vmem:[%s135 + $0x11c8] sm:$0xff] %v2755
        %4804 = vst [vmem:[%s135 + $0x11d0] sm:$0xff] %v2756
        %4805 = vst [vmem:[%s135 + $0x11d8] sm:$0xff] %v2757
        %4806 = vst [vmem:[%s135 + $0x11e0] sm:$0xff] %v2758
        %4807 = vst [vmem:[%s135 + $0x11e8] sm:$0xff] %v2759
        %4808 = vst [vmem:[%s135 + $0x11f0] sm:$0xff] %v2760
        %4809 = vst [vmem:[%s135 + $0x11f8] sm:$0xff] %v2761
        %4810 = vst [vmem:[%s135 + $0x1200] sm:$0xff] %v2762
        %4811 = vst [vmem:[%s135 + $0x1208] sm:$0xff] %v2763
        %4812 = vst [vmem:[%s135 + $0x1210] sm:$0xff] %v2764
        %4813 = vst [vmem:[%s135 + $0x1218] sm:$0xff] %v2765
        %4814 = vst [vmem:[%s135 + $0x1220] sm:$0xff] %v2766
        %4815 = vst [vmem:[%s135 + $0x1228] sm:$0xff] %v2767
        %4816 = vst [vmem:[%s135 + $0x1230] sm:$0xff] %v2768
        %4817 = vst [vmem:[%s135 + $0x1238] sm:$0xff] %v2769
        %4818 = vst [vmem:[%s135 + $0x1240] sm:$0xff] %v2770
        %4819 = vst [vmem:[%s135 + $0x1248] sm:$0xff] %v2771
        %4820 = vst [vmem:[%s135 + $0x1250] sm:$0xff] %v2772
        %4821 = vst [vmem:[%s135 + $0x1258] sm:$0xff] %v2773
        %4822 = vst [vmem:[%s135 + $0x1260] sm:$0xff] %v2774
        %4823 = vst [vmem:[%s135 + $0x1268] sm:$0xff] %v2775
        %4824 = vst [vmem:[%s135 + $0x1270] sm:$0xff] %v2776
        %4825 = vst [vmem:[%s135 + $0x1278] sm:$0xff] %v2777
        %4826 = vst [vmem:[%s135 + $0x1280] sm:$0xff] %v2778
        %4827 = vst [vmem:[%s135 + $0x1288] sm:$0xff] %v2779
        %4828 = vst [vmem:[%s135 + $0x1290] sm:$0xff] %v2780
        %4829 = vst [vmem:[%s135 + $0x1298] sm:$0xff] %v2781
        %4830 = vst [vmem:[%s135 + $0x12a0] sm:$0xff] %v2782
        %4831 = vst [vmem:[%s135 + $0x12a8] sm:$0xff] %v2783
        %4832 = vst [vmem:[%s135 + $0x12b0] sm:$0xff] %v2784
        %4833 = vst [vmem:[%s135 + $0x12b8] sm:$0xff] %v2785
        %4834 = vst [vmem:[%s135 + $0x12c0] sm:$0xff] %v2786
        %4835 = vst [vmem:[%s135 + $0x12c8] sm:$0xff] %v2787
        %4836 = vst [vmem:[%s135 + $0x12d0] sm:$0xff] %v2788
        %4837 = vst [vmem:[%s135 + $0x12d8] sm:$0xff] %v2789
        %4838 = vst [vmem:[%s135 + $0x12e0] sm:$0xff] %v2790
        %4839 = vst [vmem:[%s135 + $0x12e8] sm:$0xff] %v2791
        %4840 = vst [vmem:[%s135 + $0x12f0] sm:$0xff] %v2792
        %4841 = vst [vmem:[%s135 + $0x12f8] sm:$0xff] %v2793
        %4842 = vst [vmem:[%s135 + $0x1300] sm:$0xff] %v2794
        %4843 = vst [vmem:[%s135 + $0x1308] sm:$0xff] %v2795
        %4844 = vst [vmem:[%s135 + $0x1310] sm:$0xff] %v2796
        %4845 = vst [vmem:[%s135 + $0x1318] sm:$0xff] %v2797
        %4846 = vst [vmem:[%s135 + $0x1320] sm:$0xff] %v2798
        %4847 = vst [vmem:[%s135 + $0x1328] sm:$0xff] %v2799
        %4848 = vst [vmem:[%s135 + $0x1330] sm:$0xff] %v2800
        %4849 = vst [vmem:[%s135 + $0x1338] sm:$0xff] %v2801
        %4850 = vst [vmem:[%s135 + $0x1340] sm:$0xff] %v2802
        %4851 = vst [vmem:[%s135 + $0x1348] sm:$0xff] %v2803
        %4852 = vst [vmem:[%s135 + $0x1350] sm:$0xff] %v2804
        %4853 = vst [vmem:[%s135 + $0x1358] sm:$0xff] %v2805
        %4854 = vst [vmem:[%s135 + $0x1360] sm:$0xff] %v2806
        %4855 = vst [vmem:[%s135 + $0x1368] sm:$0xff] %v2807
        %4856 = vst [vmem:[%s135 + $0x1370] sm:$0xff] %v2808
        %4857 = vst [vmem:[%s135 + $0x1378] sm:$0xff] %v2809
        %4858 = vst [vmem:[%s135 + $0x1380] sm:$0xff] %v2810
        %4859 = vst [vmem:[%s135 + $0x1388] sm:$0xff] %v2811
        %4860 = vst [vmem:[%s135 + $0x1390] sm:$0xff] %v2812
        %4861 = vst [vmem:[%s135 + $0x1398] sm:$0xff] %v2813
        %4862 = vst [vmem:[%s135 + $0x13a0] sm:$0xff] %v2814
        %4863 = vst [vmem:[%s135 + $0x13a8] sm:$0xff] %v2815
        %4864 = vst [vmem:[%s135 + $0x13b0] sm:$0xff] %v2816
        %4865 = vst [vmem:[%s135 + $0x13b8] sm:$0xff] %v2817
        %4866 = vst [vmem:[%s135 + $0x13c0] sm:$0xff] %v2818
        %4867 = vst [vmem:[%s135 + $0x13c8] sm:$0xff] %v2819
        %4868 = vst [vmem:[%s135 + $0x13d0] sm:$0xff] %v2820
        %4869 = vst [vmem:[%s135 + $0x13d8] sm:$0xff] %v2821
        %4870 = vst [vmem:[%s135 + $0x13e0] sm:$0xff] %v2822
        %4871 = vst [vmem:[%s135 + $0x13e8] sm:$0xff] %v2823
        %4872 = vst [vmem:[%s135 + $0x13f0] sm:$0xff] %v2824
        %4873 = vst [vmem:[%s135 + $0x13f8] sm:$0xff] %v2825
        %4874 = vst [vmem:[%s135 + $0x1400] sm:$0xff] %v2826
        %4875 = vst [vmem:[%s135 + $0x1408] sm:$0xff] %v2827
        %4876 = vst [vmem:[%s135 + $0x1410] sm:$0xff] %v2828
        %4877 = vst [vmem:[%s135 + $0x1418] sm:$0xff] %v2829
        %4878 = vst [vmem:[%s135 + $0x1420] sm:$0xff] %v2830
        %4879 = vst [vmem:[%s135 + $0x1428] sm:$0xff] %v2831
        %4880 = vst [vmem:[%s135 + $0x1430] sm:$0xff] %v2832
        %4881 = vst [vmem:[%s135 + $0x1438] sm:$0xff] %v2833
        %4882 = vst [vmem:[%s135 + $0x1440] sm:$0xff] %v2834
        %4883 = vst [vmem:[%s135 + $0x1448] sm:$0xff] %v2835
        %4884 = vst [vmem:[%s135 + $0x1450] sm:$0xff] %v2836
        %4885 = vst [vmem:[%s135 + $0x1458] sm:$0xff] %v2837
        %4886 = vst [vmem:[%s135 + $0x1460] sm:$0xff] %v2838
        %4887 = vst [vmem:[%s135 + $0x1468] sm:$0xff] %v2839
        %4888 = vst [vmem:[%s135 + $0x1470] sm:$0xff] %v2840
        %4889 = vst [vmem:[%s135 + $0x1478] sm:$0xff] %v2841
        %4890 = vst [vmem:[%s135 + $0x1480] sm:$0xff] %v2842
        %4891 = vst [vmem:[%s135 + $0x1488] sm:$0xff] %v2843
        %4892 = vst [vmem:[%s135 + $0x1490] sm:$0xff] %v2844
        %4893 = vst [vmem:[%s135 + $0x1498] sm:$0xff] %v2845
        %4894 = vst [vmem:[%s135 + $0x14a0] sm:$0xff] %v2846
        %4895 = vst [vmem:[%s135 + $0x14a8] sm:$0xff] %v2847
        %4896 = vst [vmem:[%s135 + $0x14b0] sm:$0xff] %v2848
        %4897 = vst [vmem:[%s135 + $0x14b8] sm:$0xff] %v2849
        %4898 = vst [vmem:[%s135 + $0x14c0] sm:$0xff] %v2850
        %4899 = vst [vmem:[%s135 + $0x14c8] sm:$0xff] %v2851
        %4900 = vst [vmem:[%s135 + $0x14d0] sm:$0xff] %v2852
        %4901 = vst [vmem:[%s135 + $0x14d8] sm:$0xff] %v2853
        %4902 = vst [vmem:[%s135 + $0x14e0] sm:$0xff] %v2854
        %4903 = vst [vmem:[%s135 + $0x14e8] sm:$0xff] %v2855
        %4904 = vst [vmem:[%s135 + $0x14f0] sm:$0xff] %v2856
        %4905 = vst [vmem:[%s135 + $0x14f8] sm:$0xff] %v2857
        %4906 = vst [vmem:[%s135 + $0x1500] sm:$0xff] %v2858
        %4907 = vst [vmem:[%s135 + $0x1508] sm:$0xff] %v2859
        %4908 = vst [vmem:[%s135 + $0x1510] sm:$0xff] %v2860
        %4909 = vst [vmem:[%s135 + $0x1518] sm:$0xff] %v2861
        %4910 = vst [vmem:[%s135 + $0x1520] sm:$0xff] %v2862
        %4911 = vst [vmem:[%s135 + $0x1528] sm:$0xff] %v2863
        %4912 = vst [vmem:[%s135 + $0x1530] sm:$0xff] %v2864
        %4913 = vst [vmem:[%s135 + $0x1538] sm:$0xff] %v2865
        %4914 = vst [vmem:[%s135 + $0x1540] sm:$0xff] %v2866
        %4915 = vst [vmem:[%s135 + $0x1548] sm:$0xff] %v2867
        %4916 = vst [vmem:[%s135 + $0x1550] sm:$0xff] %v2868
        %4917 = vst [vmem:[%s135 + $0x1558] sm:$0xff] %v2869
        %4918 = vst [vmem:[%s135 + $0x1560] sm:$0xff] %v2870
        %4919 = vst [vmem:[%s135 + $0x1568] sm:$0xff] %v2871
        %4920 = vst [vmem:[%s135 + $0x1570] sm:$0xff] %v2872
        %4921 = vst [vmem:[%s135 + $0x1578] sm:$0xff] %v2873
        %4922 = vst [vmem:[%s135 + $0x1580] sm:$0xff] %v2874
        %4923 = vst [vmem:[%s135 + $0x1588] sm:$0xff] %v2875
        %4924 = vst [vmem:[%s135 + $0x1590] sm:$0xff] %v2876
        %4925 = vst [vmem:[%s135 + $0x1598] sm:$0xff] %v2877
        %4926 = vst [vmem:[%s135 + $0x15a0] sm:$0xff] %v2878
        %4927 = vst [vmem:[%s135 + $0x15a8] sm:$0xff] %v2879
        %4928 = vst [vmem:[%s135 + $0x15b0] sm:$0xff] %v2880
        %4929 = vst [vmem:[%s135 + $0x15b8] sm:$0xff] %v2881
        %4930 = vst [vmem:[%s135 + $0x15c0] sm:$0xff] %v2882
        %4931 = vst [vmem:[%s135 + $0x15c8] sm:$0xff] %v2883
        %4932 = vst [vmem:[%s135 + $0x15d0] sm:$0xff] %v2884
        %4933 = vst [vmem:[%s135 + $0x15d8] sm:$0xff] %v2885
        %4934 = vst [vmem:[%s135 + $0x15e0] sm:$0xff] %v2886
        %4935 = vst [vmem:[%s135 + $0x15e8] sm:$0xff] %v2887
        %4936 = vst [vmem:[%s135 + $0x15f0] sm:$0xff] %v2888
        %4937 = vst [vmem:[%s135 + $0x15f8] sm:$0xff] %v2889
        %4938 = vst [vmem:[%s135 + $0x1600] sm:$0xff] %v2890
        %4939 = vst [vmem:[%s135 + $0x1608] sm:$0xff] %v2891
        %4940 = vst [vmem:[%s135 + $0x1610] sm:$0xff] %v2892
        %4941 = vst [vmem:[%s135 + $0x1618] sm:$0xff] %v2893
        %4942 = vst [vmem:[%s135 + $0x1620] sm:$0xff] %v2894
        %4943 = vst [vmem:[%s135 + $0x1628] sm:$0xff] %v2895
        %4944 = vst [vmem:[%s135 + $0x1630] sm:$0xff] %v2896
        %4945 = vst [vmem:[%s135 + $0x1638] sm:$0xff] %v2897
        %4946 = vst [vmem:[%s135 + $0x1640] sm:$0xff] %v2898
        %4947 = vst [vmem:[%s135 + $0x1648] sm:$0xff] %v2899
        %4948 = vst [vmem:[%s135 + $0x1650] sm:$0xff] %v2900
        %4949 = vst [vmem:[%s135 + $0x1658] sm:$0xff] %v2901
        %4950 = vst [vmem:[%s135 + $0x1660] sm:$0xff] %v2902
        %4951 = vst [vmem:[%s135 + $0x1668] sm:$0xff] %v2903
        %4952 = vst [vmem:[%s135 + $0x1670] sm:$0xff] %v2904
        %4953 = vst [vmem:[%s135 + $0x1678] sm:$0xff] %v2905
        %4954 = vst [vmem:[%s135 + $0x1680] sm:$0xff] %v2906
        %4955 = vst [vmem:[%s135 + $0x1688] sm:$0xff] %v2907
        %4956 = vst [vmem:[%s135 + $0x1690] sm:$0xff] %v2908
        %4957 = vst [vmem:[%s135 + $0x1698] sm:$0xff] %v2909
        %4958 = vst [vmem:[%s135 + $0x16a0] sm:$0xff] %v2910
        %4959 = vst [vmem:[%s135 + $0x16a8] sm:$0xff] %v2911
        %4960 = vst [vmem:[%s135 + $0x16b0] sm:$0xff] %v2912
        %4961 = vst [vmem:[%s135 + $0x16b8] sm:$0xff] %v2913
        %4962 = vst [vmem:[%s135 + $0x16c0] sm:$0xff] %v2914
        %4963 = vst [vmem:[%s135 + $0x16c8] sm:$0xff] %v2915
        %4964 = vst [vmem:[%s135 + $0x16d0] sm:$0xff] %v2916
        %4965 = vst [vmem:[%s135 + $0x16d8] sm:$0xff] %v2917
        %4966 = vst [vmem:[%s135 + $0x16e0] sm:$0xff] %v2918
        %4967 = vst [vmem:[%s135 + $0x16e8] sm:$0xff] %v2919
        %4968 = vst [vmem:[%s135 + $0x16f0] sm:$0xff] %v2920
        %4969 = vst [vmem:[%s135 + $0x16f8] sm:$0xff] %v2921
        %4970 = vst [vmem:[%s135 + $0x1700] sm:$0xff] %v2922
        %4971 = vst [vmem:[%s135 + $0x1708] sm:$0xff] %v2923
        %4972 = vst [vmem:[%s135 + $0x1710] sm:$0xff] %v2924
        %4973 = vst [vmem:[%s135 + $0x1718] sm:$0xff] %v2925
        %4974 = vst [vmem:[%s135 + $0x1720] sm:$0xff] %v2926
        %4975 = vst [vmem:[%s135 + $0x1728] sm:$0xff] %v2927
        %4976 = vst [vmem:[%s135 + $0x1730] sm:$0xff] %v2928
        %4977 = vst [vmem:[%s135 + $0x1738] sm:$0xff] %v2929
        %4978 = vst [vmem:[%s135 + $0x1740] sm:$0xff] %v2930
        %4979 = vst [vmem:[%s135 + $0x1748] sm:$0xff] %v2931
        %4980 = vst [vmem:[%s135 + $0x1750] sm:$0xff] %v2932
        %4981 = vst [vmem:[%s135 + $0x1758] sm:$0xff] %v2933
        %4982 = vst [vmem:[%s135 + $0x1760] sm:$0xff] %v2934
        %4983 = vst [vmem:[%s135 + $0x1768] sm:$0xff] %v2935
        %4984 = vst [vmem:[%s135 + $0x1770] sm:$0xff] %v2936
        %4985 = vst [vmem:[%s135 + $0x1778] sm:$0xff] %v2937
        %4986 = vst [vmem:[%s135 + $0x1780] sm:$0xff] %v2938
        %4987 = vst [vmem:[%s135 + $0x1788] sm:$0xff] %v2939
        %4988 = vst [vmem:[%s135 + $0x1790] sm:$0xff] %v2940
        %4989 = vst [vmem:[%s135 + $0x1798] sm:$0xff] %v2941
        %4990 = vst [vmem:[%s135 + $0x17a0] sm:$0xff] %v2942
        %4991 = vst [vmem:[%s135 + $0x17a8] sm:$0xff] %v2943
        %4992 = vst [vmem:[%s135 + $0x17b0] sm:$0xff] %v2944
        %4993 = vst [vmem:[%s135 + $0x17b8] sm:$0xff] %v2945
        %4994 = vst [vmem:[%s135 + $0x17c0] sm:$0xff] %v2946
        %4995 = vst [vmem:[%s135 + $0x17c8] sm:$0xff] %v2947
        %4996 = vst [vmem:[%s135 + $0x17d0] sm:$0xff] %v2948
        %4997 = vst [vmem:[%s135 + $0x17d8] sm:$0xff] %v2949
        %4998 = vst [vmem:[%s135 + $0x17e0] sm:$0xff] %v2950
        %4999 = vst [vmem:[%s135 + $0x17e8] sm:$0xff] %v2951
        %5000 = vst [vmem:[%s135 + $0x17f0] sm:$0xff] %v2952
        %5001 = vst [vmem:[%s135 + $0x17f8] sm:$0xff] %v2953
        %5002 = vst [vmem:[%s135 + $0x1800] sm:$0xff] %v2954
        %5003 = vst [vmem:[%s135 + $0x1808] sm:$0xff] %v2955
        %5004 = vst [vmem:[%s135 + $0x1810] sm:$0xff] %v2956
        %5005 = vst [vmem:[%s135 + $0x1818] sm:$0xff] %v2957
        %5006 = vst [vmem:[%s135 + $0x1820] sm:$0xff] %v2958
        %5007 = vst [vmem:[%s135 + $0x1828] sm:$0xff] %v2959
        %5008 = vst [vmem:[%s135 + $0x1830] sm:$0xff] %v2960
        %5009 = vst [vmem:[%s135 + $0x1838] sm:$0xff] %v2961
        %5010 = vst [vmem:[%s135 + $0x1840] sm:$0xff] %v2962
        %5011 = vst [vmem:[%s135 + $0x1848] sm:$0xff] %v2963
        %5012 = vst [vmem:[%s135 + $0x1850] sm:$0xff] %v2964
        %5013 = vst [vmem:[%s135 + $0x1858] sm:$0xff] %v2965
        %5014 = vst [vmem:[%s135 + $0x1860] sm:$0xff] %v2966
        %5015 = vst [vmem:[%s135 + $0x1868] sm:$0xff] %v2967
        %5016 = vst [vmem:[%s135 + $0x1870] sm:$0xff] %v2968
        %5017 = vst [vmem:[%s135 + $0x1878] sm:$0xff] %v2969
        %5018 = vst [vmem:[%s135 + $0x1880] sm:$0xff] %v2970
        %5019 = vst [vmem:[%s135 + $0x1888] sm:$0xff] %v2971
        %5020 = vst [vmem:[%s135 + $0x1890] sm:$0xff] %v2972
        %5021 = vst [vmem:[%s135 + $0x1898] sm:$0xff] %v2973
        %5022 = vst [vmem:[%s135 + $0x18a0] sm:$0xff] %v2974
        %5023 = vst [vmem:[%s135 + $0x18a8] sm:$0xff] %v2975
        %5024 = vst [vmem:[%s135 + $0x18b0] sm:$0xff] %v2976
        %5025 = vst [vmem:[%s135 + $0x18b8] sm:$0xff] %v2977
        %5026 = vst [vmem:[%s135 + $0x18c0] sm:$0xff] %v2978
        %5027 = vst [vmem:[%s135 + $0x18c8] sm:$0xff] %v2979
        %5028 = vst [vmem:[%s135 + $0x18d0] sm:$0xff] %v2980
        %5029 = vst [vmem:[%s135 + $0x18d8] sm:$0xff] %v2981
        %5030 = vst [vmem:[%s135 + $0x18e0] sm:$0xff] %v2982
        %5031 = vst [vmem:[%s135 + $0x18e8] sm:$0xff] %v2983
        %5032 = vst [vmem:[%s135 + $0x18f0] sm:$0xff] %v2984
        %5033 = vst [vmem:[%s135 + $0x18f8] sm:$0xff] %v2985
        %5034 = vst [vmem:[%s135 + $0x1900] sm:$0xff] %v2986
        %5035 = vst [vmem:[%s135 + $0x1908] sm:$0xff] %v2987
        %5036 = vst [vmem:[%s135 + $0x1910] sm:$0xff] %v2988
        %5037 = vst [vmem:[%s135 + $0x1918] sm:$0xff] %v2989
        %5038 = vst [vmem:[%s135 + $0x1920] sm:$0xff] %v2990
        %5039 = vst [vmem:[%s135 + $0x1928] sm:$0xff] %v2991
        %5040 = vst [vmem:[%s135 + $0x1930] sm:$0xff] %v2992
        %5041 = vst [vmem:[%s135 + $0x1938] sm:$0xff] %v2993
        %5042 = vst [vmem:[%s135 + $0x1940] sm:$0xff] %v2994
        %5043 = vst [vmem:[%s135 + $0x1948] sm:$0xff] %v2995
        %5044 = vst [vmem:[%s135 + $0x1950] sm:$0xff] %v2996
        %5045 = vst [vmem:[%s135 + $0x1958] sm:$0xff] %v2997
        %5046 = vst [vmem:[%s135 + $0x1960] sm:$0xff] %v2998
        %5047 = vst [vmem:[%s135 + $0x1968] sm:$0xff] %v2999
        %5048 = vst [vmem:[%s135 + $0x1970] sm:$0xff] %v3000
        %5049 = vst [vmem:[%s135 + $0x1978] sm:$0xff] %v3001
        %5050 = vst [vmem:[%s135 + $0x1980] sm:$0xff] %v3002
        %5051 = vst [vmem:[%s135 + $0x1988] sm:$0xff] %v3003
        %5052 = vst [vmem:[%s135 + $0x1990] sm:$0xff] %v3004
        %5053 = vst [vmem:[%s135 + $0x1998] sm:$0xff] %v3005
        %5054 = vst [vmem:[%s135 + $0x19a0] sm:$0xff] %v3006
        %5055 = vst [vmem:[%s135 + $0x19a8] sm:$0xff] %v3007
        %5056 = vst [vmem:[%s135 + $0x19b0] sm:$0xff] %v3008
        %5057 = vst [vmem:[%s135 + $0x19b8] sm:$0xff] %v3009
        %5058 = vst [vmem:[%s135 + $0x19c0] sm:$0xff] %v3010
        %5059 = vst [vmem:[%s135 + $0x19c8] sm:$0xff] %v3011
        %5060 = vst [vmem:[%s135 + $0x19d0] sm:$0xff] %v3012
        %5061 = vst [vmem:[%s135 + $0x19d8] sm:$0xff] %v3013
        %5062 = vst [vmem:[%s135 + $0x19e0] sm:$0xff] %v3014
        %5063 = vst [vmem:[%s135 + $0x19e8] sm:$0xff] %v3015
        %5064 = vst [vmem:[%s135 + $0x19f0] sm:$0xff] %v3016
        %5065 = vst [vmem:[%s135 + $0x19f8] sm:$0xff] %v3017
        %5066 = vst [vmem:[%s135 + $0x1a00] sm:$0xff] %v3018
        %5067 = vst [vmem:[%s135 + $0x1a08] sm:$0xff] %v3019
        %5068 = vst [vmem:[%s135 + $0x1a10] sm:$0xff] %v3020
        %5069 = vst [vmem:[%s135 + $0x1a18] sm:$0xff] %v3021
        %5070 = vst [vmem:[%s135 + $0x1a20] sm:$0xff] %v3022
        %5071 = vst [vmem:[%s135 + $0x1a28] sm:$0xff] %v3023
        %5072 = vst [vmem:[%s135 + $0x1a30] sm:$0xff] %v3024
        %5073 = vst [vmem:[%s135 + $0x1a38] sm:$0xff] %v3025
        %5074 = vst [vmem:[%s135 + $0x1a40] sm:$0xff] %v3026
        %5075 = vst [vmem:[%s135 + $0x1a48] sm:$0xff] %v3027
        %5076 = vst [vmem:[%s135 + $0x1a50] sm:$0xff] %v3028
        %5077 = vst [vmem:[%s135 + $0x1a58] sm:$0xff] %v3029
        %5078 = vst [vmem:[%s135 + $0x1a60] sm:$0xff] %v3030
        %5079 = vst [vmem:[%s135 + $0x1a68] sm:$0xff] %v3031
        %5080 = vst [vmem:[%s135 + $0x1a70] sm:$0xff] %v3032
        %5081 = vst [vmem:[%s135 + $0x1a78] sm:$0xff] %v3033
        %5082 = vst [vmem:[%s135 + $0x1a80] sm:$0xff] %v3034
        %5083 = vst [vmem:[%s135 + $0x1a88] sm:$0xff] %v3035
        %5084 = vst [vmem:[%s135 + $0x1a90] sm:$0xff] %v3036
        %5085 = vst [vmem:[%s135 + $0x1a98] sm:$0xff] %v3037
        %5086 = vst [vmem:[%s135 + $0x1aa0] sm:$0xff] %v3038
        %5087 = vst [vmem:[%s135 + $0x1aa8] sm:$0xff] %v3039
        %5088 = vst [vmem:[%s135 + $0x1ab0] sm:$0xff] %v3040
        %5089 = vst [vmem:[%s135 + $0x1ab8] sm:$0xff] %v3041
        %5090 = vst [vmem:[%s135 + $0x1ac0] sm:$0xff] %v3042
        %5091 = vst [vmem:[%s135 + $0x1ac8] sm:$0xff] %v3043
        %5092 = vst [vmem:[%s135 + $0x1ad0] sm:$0xff] %v3044
        %5093 = vst [vmem:[%s135 + $0x1ad8] sm:$0xff] %v3045
        %5094 = vst [vmem:[%s135 + $0x1ae0] sm:$0xff] %v3046
        %5095 = vst [vmem:[%s135 + $0x1ae8] sm:$0xff] %v3047
        %5096 = vst [vmem:[%s135 + $0x1af0] sm:$0xff] %v3048
        %5097 = vst [vmem:[%s135 + $0x1af8] sm:$0xff] %v3049
        %5098 = vst [vmem:[%s135 + $0x1b00] sm:$0xff] %v3050
        %5099 = vst [vmem:[%s135 + $0x1b08] sm:$0xff] %v3051
        %5100 = vst [vmem:[%s135 + $0x1b10] sm:$0xff] %v3052
        %5101 = vst [vmem:[%s135 + $0x1b18] sm:$0xff] %v3053
        %5102 = vst [vmem:[%s135 + $0x1b20] sm:$0xff] %v3054
        %5103 = vst [vmem:[%s135 + $0x1b28] sm:$0xff] %v3055
        %5104 = vst [vmem:[%s135 + $0x1b30] sm:$0xff] %v3056
        %5105 = vst [vmem:[%s135 + $0x1b38] sm:$0xff] %v3057
        %5106 = vst [vmem:[%s135 + $0x1b40] sm:$0xff] %v3058
        %5107 = vst [vmem:[%s135 + $0x1b48] sm:$0xff] %v3059
        %5108 = vst [vmem:[%s135 + $0x1b50] sm:$0xff] %v3060
        %5109 = vst [vmem:[%s135 + $0x1b58] sm:$0xff] %v3061
        %5110 = vst [vmem:[%s135 + $0x1b60] sm:$0xff] %v3062
        %5111 = vst [vmem:[%s135 + $0x1b68] sm:$0xff] %v3063
        %5112 = vst [vmem:[%s135 + $0x1b70] sm:$0xff] %v3064
        %5113 = vst [vmem:[%s135 + $0x1b78] sm:$0xff] %v3065
        %5114 = vst [vmem:[%s135 + $0x1b80] sm:$0xff] %v3066
        %5115 = vst [vmem:[%s135 + $0x1b88] sm:$0xff] %v3067
        %5116 = vst [vmem:[%s135 + $0x1b90] sm:$0xff] %v3068
        %5117 = vst [vmem:[%s135 + $0x1b98] sm:$0xff] %v3069
        %5118 = vst [vmem:[%s135 + $0x1ba0] sm:$0xff] %v3070
        %5119 = vst [vmem:[%s135 + $0x1ba8] sm:$0xff] %v3071
        %5120 = vst [vmem:[%s135 + $0x1bb0] sm:$0xff] %v3072
        %5121 = vst [vmem:[%s135 + $0x1bb8] sm:$0xff] %v3073
        %5122 = vst [vmem:[%s135 + $0x1bc0] sm:$0xff] %v3074
        %5123 = vst [vmem:[%s135 + $0x1bc8] sm:$0xff] %v3075
        %5124 = vst [vmem:[%s135 + $0x1bd0] sm:$0xff] %v3076
        %5125 = vst [vmem:[%s135 + $0x1bd8] sm:$0xff] %v3077
        %5126 = vst [vmem:[%s135 + $0x1be0] sm:$0xff] %v3078
        %5127 = vst [vmem:[%s135 + $0x1be8] sm:$0xff] %v3079
        %5128 = vst [vmem:[%s135 + $0x1bf0] sm:$0xff] %v3080
        %5129 = vst [vmem:[%s135 + $0x1bf8] sm:$0xff] %v3081
        %5130 = vst [vmem:[%s135 + $0x1c00] sm:$0xff] %v3082
        %5131 = vst [vmem:[%s135 + $0x1c08] sm:$0xff] %v3083
        %5132 = vst [vmem:[%s135 + $0x1c10] sm:$0xff] %v3084
        %5133 = vst [vmem:[%s135 + $0x1c18] sm:$0xff] %v3085
        %5134 = vst [vmem:[%s135 + $0x1c20] sm:$0xff] %v3086
        %5135 = vst [vmem:[%s135 + $0x1c28] sm:$0xff] %v3087
        %5136 = vst [vmem:[%s135 + $0x1c30] sm:$0xff] %v3088
        %5137 = vst [vmem:[%s135 + $0x1c38] sm:$0xff] %v3089
        %5138 = vst [vmem:[%s135 + $0x1c40] sm:$0xff] %v3090
        %5139 = vst [vmem:[%s135 + $0x1c48] sm:$0xff] %v3091
        %5140 = vst [vmem:[%s135 + $0x1c50] sm:$0xff] %v3092
        %5141 = vst [vmem:[%s135 + $0x1c58] sm:$0xff] %v3093
        %5142 = vst [vmem:[%s135 + $0x1c60] sm:$0xff] %v3094
        %5143 = vst [vmem:[%s135 + $0x1c68] sm:$0xff] %v3095
        %5144 = vst [vmem:[%s135 + $0x1c70] sm:$0xff] %v3096
        %5145 = vst [vmem:[%s135 + $0x1c78] sm:$0xff] %v3097
        %5146 = vst [vmem:[%s135 + $0x1c80] sm:$0xff] %v3098
        %5147 = vst [vmem:[%s135 + $0x1c88] sm:$0xff] %v3099
        %5148 = vst [vmem:[%s135 + $0x1c90] sm:$0xff] %v3100
        %5149 = vst [vmem:[%s135 + $0x1c98] sm:$0xff] %v3101
        %5150 = vst [vmem:[%s135 + $0x1ca0] sm:$0xff] %v3102
        %5151 = vst [vmem:[%s135 + $0x1ca8] sm:$0xff] %v3103
        %5152 = vst [vmem:[%s135 + $0x1cb0] sm:$0xff] %v3104
        %5153 = vst [vmem:[%s135 + $0x1cb8] sm:$0xff] %v3105
        %5154 = vst [vmem:[%s135 + $0x1cc0] sm:$0xff] %v3106
        %5155 = vst [vmem:[%s135 + $0x1cc8] sm:$0xff] %v3107
        %5156 = vst [vmem:[%s135 + $0x1cd0] sm:$0xff] %v3108
        %5157 = vst [vmem:[%s135 + $0x1cd8] sm:$0xff] %v3109
        %5158 = vst [vmem:[%s135 + $0x1ce0] sm:$0xff] %v3110
        %5159 = vst [vmem:[%s135 + $0x1ce8] sm:$0xff] %v3111
        %5160 = vst [vmem:[%s135 + $0x1cf0] sm:$0xff] %v3112
        %5161 = vst [vmem:[%s135 + $0x1cf8] sm:$0xff] %v3113
        %5162 = vst [vmem:[%s135 + $0x1d00] sm:$0xff] %v3114
        %5163 = vst [vmem:[%s135 + $0x1d08] sm:$0xff] %v3115
        %5164 = vst [vmem:[%s135 + $0x1d10] sm:$0xff] %v3116
        %5165 = vst [vmem:[%s135 + $0x1d18] sm:$0xff] %v3117
        %5166 = vst [vmem:[%s135 + $0x1d20] sm:$0xff] %v3118
        %5167 = vst [vmem:[%s135 + $0x1d28] sm:$0xff] %v3119
        %5168 = vst [vmem:[%s135 + $0x1d30] sm:$0xff] %v3120
        %5169 = vst [vmem:[%s135 + $0x1d38] sm:$0xff] %v3121
        %5170 = vst [vmem:[%s135 + $0x1d40] sm:$0xff] %v3122
        %5171 = vst [vmem:[%s135 + $0x1d48] sm:$0xff] %v3123
        %5172 = vst [vmem:[%s135 + $0x1d50] sm:$0xff] %v3124
        %5173 = vst [vmem:[%s135 + $0x1d58] sm:$0xff] %v3125
        %5174 = vst [vmem:[%s135 + $0x1d60] sm:$0xff] %v3126
        %5175 = vst [vmem:[%s135 + $0x1d68] sm:$0xff] %v3127
        %5176 = vst [vmem:[%s135 + $0x1d70] sm:$0xff] %v3128
        %5177 = vst [vmem:[%s135 + $0x1d78] sm:$0xff] %v3129
        %5178 = vst [vmem:[%s135 + $0x1d80] sm:$0xff] %v3130
        %5179 = vst [vmem:[%s135 + $0x1d88] sm:$0xff] %v3131
        %5180 = vst [vmem:[%s135 + $0x1d90] sm:$0xff] %v3132
        %5181 = vst [vmem:[%s135 + $0x1d98] sm:$0xff] %v3133
        %5182 = vst [vmem:[%s135 + $0x1da0] sm:$0xff] %v3134
        %5183 = vst [vmem:[%s135 + $0x1da8] sm:$0xff] %v3135
        %5184 = vst [vmem:[%s135 + $0x1db0] sm:$0xff] %v3136
        %5185 = vst [vmem:[%s135 + $0x1db8] sm:$0xff] %v3137
        %5186 = vst [vmem:[%s135 + $0x1dc0] sm:$0xff] %v3138
        %5187 = vst [vmem:[%s135 + $0x1dc8] sm:$0xff] %v3139
        %5188 = vst [vmem:[%s135 + $0x1dd0] sm:$0xff] %v3140
        %5189 = vst [vmem:[%s135 + $0x1dd8] sm:$0xff] %v3141
        %5190 = vst [vmem:[%s135 + $0x1de0] sm:$0xff] %v3142
        %5191 = vst [vmem:[%s135 + $0x1de8] sm:$0xff] %v3143
        %5192 = vst [vmem:[%s135 + $0x1df0] sm:$0xff] %v3144
        %5193 = vst [vmem:[%s135 + $0x1df8] sm:$0xff] %v3145
        %5194 = vst [vmem:[%s135 + $0x1e00] sm:$0xff] %v3146
        %5195 = vst [vmem:[%s135 + $0x1e08] sm:$0xff] %v3147
        %5196 = vst [vmem:[%s135 + $0x1e10] sm:$0xff] %v3148
        %5197 = vst [vmem:[%s135 + $0x1e18] sm:$0xff] %v3149
        %5198 = vst [vmem:[%s135 + $0x1e20] sm:$0xff] %v3150
        %5199 = vst [vmem:[%s135 + $0x1e28] sm:$0xff] %v3151
        %5200 = vst [vmem:[%s135 + $0x1e30] sm:$0xff] %v3152
        %5201 = vst [vmem:[%s135 + $0x1e38] sm:$0xff] %v3153
        %5202 = vst [vmem:[%s135 + $0x1e40] sm:$0xff] %v3154
        %5203 = vst [vmem:[%s135 + $0x1e48] sm:$0xff] %v3155
        %5204 = vst [vmem:[%s135 + $0x1e50] sm:$0xff] %v3156
        %5205 = vst [vmem:[%s135 + $0x1e58] sm:$0xff] %v3157
        %5206 = vst [vmem:[%s135 + $0x1e60] sm:$0xff] %v3158
        %5207 = vst [vmem:[%s135 + $0x1e68] sm:$0xff] %v3159
        %5208 = vst [vmem:[%s135 + $0x1e70] sm:$0xff] %v3160
        %5209 = vst [vmem:[%s135 + $0x1e78] sm:$0xff] %v3161
        %5210 = vst [vmem:[%s135 + $0x1e80] sm:$0xff] %v3162
        %5211 = vst [vmem:[%s135 + $0x1e88] sm:$0xff] %v3163
        %5212 = vst [vmem:[%s135 + $0x1e90] sm:$0xff] %v3164
        %5213 = vst [vmem:[%s135 + $0x1e98] sm:$0xff] %v3165
        %5214 = vst [vmem:[%s135 + $0x1ea0] sm:$0xff] %v3166
        %5215 = vst [vmem:[%s135 + $0x1ea8] sm:$0xff] %v3167
        %5216 = vst [vmem:[%s135 + $0x1eb0] sm:$0xff] %v3168
        %5217 = vst [vmem:[%s135 + $0x1eb8] sm:$0xff] %v3169
        %5218 = vst [vmem:[%s135 + $0x1ec0] sm:$0xff] %v3170
        %5219 = vst [vmem:[%s135 + $0x1ec8] sm:$0xff] %v3171
        %5220 = vst [vmem:[%s135 + $0x1ed0] sm:$0xff] %v3172
        %5221 = vst [vmem:[%s135 + $0x1ed8] sm:$0xff] %v3173
        %5222 = vst [vmem:[%s135 + $0x1ee0] sm:$0xff] %v3174
        %5223 = vst [vmem:[%s135 + $0x1ee8] sm:$0xff] %v3175
        %5224 = vst [vmem:[%s135 + $0x1ef0] sm:$0xff] %v3176
        %5225 = vst [vmem:[%s135 + $0x1ef8] sm:$0xff] %v3177
        %5226 = vst [vmem:[%s135 + $0x1f00] sm:$0xff] %v3178
        %5227 = vst [vmem:[%s135 + $0x1f08] sm:$0xff] %v3179
        %5228 = vst [vmem:[%s135 + $0x1f10] sm:$0xff] %v3180
        %5229 = vst [vmem:[%s135 + $0x1f18] sm:$0xff] %v3181
        %5230 = vst [vmem:[%s135 + $0x1f20] sm:$0xff] %v3182
        %5231 = vst [vmem:[%s135 + $0x1f28] sm:$0xff] %v3183
        %5232 = vst [vmem:[%s135 + $0x1f30] sm:$0xff] %v3184
        %5233 = vst [vmem:[%s135 + $0x1f38] sm:$0xff] %v3185
        %5234 = vst [vmem:[%s135 + $0x1f40] sm:$0xff] %v3186
        %5235 = vst [vmem:[%s135 + $0x1f48] sm:$0xff] %v3187
        %5236 = vst [vmem:[%s135 + $0x1f50] sm:$0xff] %v3188
        %5237 = vst [vmem:[%s135 + $0x1f58] sm:$0xff] %v3189
        %5238 = vst [vmem:[%s135 + $0x1f60] sm:$0xff] %v3190
        %5239 = vst [vmem:[%s135 + $0x1f68] sm:$0xff] %v3191
        %5240 = vst [vmem:[%s135 + $0x1f70] sm:$0xff] %v3192
        %5241 = vst [vmem:[%s135 + $0x1f78] sm:$0xff] %v3193
        %5242 = vst [vmem:[%s135 + $0x1f80] sm:$0xff] %v3194
        %5243 = vst [vmem:[%s135 + $0x1f88] sm:$0xff] %v3195
        %5244 = vst [vmem:[%s135 + $0x1f90] sm:$0xff] %v3196
        %5245 = vst [vmem:[%s135 + $0x1f98] sm:$0xff] %v3197
        %5246 = vst [vmem:[%s135 + $0x1fa0] sm:$0xff] %v3198
        %5247 = vst [vmem:[%s135 + $0x1fa8] sm:$0xff] %v3199
        %5248 = vst [vmem:[%s135 + $0x1fb0] sm:$0xff] %v3200
        %5249 = vst [vmem:[%s135 + $0x1fb8] sm:$0xff] %v3201
        %5250 = vst [vmem:[%s135 + $0x1fc0] sm:$0xff] %v3202
        %5251 = vst [vmem:[%s135 + $0x1fc8] sm:$0xff] %v3203
        %5252 = vst [vmem:[%s135 + $0x1fd0] sm:$0xff] %v3204
        %5253 = vst [vmem:[%s135 + $0x1fd8] sm:$0xff] %v3205
        %5254 = vst [vmem:[%s135 + $0x1fe0] sm:$0xff] %v3206
        %5255 = vst [vmem:[%s135 + $0x1fe8] sm:$0xff] %v3207
        %5256 = vst [vmem:[%s135 + $0x1ff0] sm:$0xff] %v3208
        %5257 = vst [vmem:[%s135 + $0x1ff8] sm:$0xff] %v3209
        %5258 = vst [vmem:[%s135 + $0x2000] sm:$0xff] %v3210
        %5259 = vst [vmem:[%s135 + $0x2008] sm:$0xff] %v3211
        %5260 = vst [vmem:[%s135 + $0x2010] sm:$0xff] %v3212
        %5261 = vst [vmem:[%s135 + $0x2018] sm:$0xff] %v3213
        %5262 = vst [vmem:[%s135 + $0x2020] sm:$0xff] %v3214
        %5263 = vst [vmem:[%s135 + $0x2028] sm:$0xff] %v3215
        %5264 = vst [vmem:[%s135 + $0x2030] sm:$0xff] %v3216
        %5265 = vst [vmem:[%s135 + $0x2038] sm:$0xff] %v3217
        %5266 = vst [vmem:[%s135 + $0x2040] sm:$0xff] %v3218
        %5267 = vst [vmem:[%s135 + $0x2048] sm:$0xff] %v3219
        %5268 = vst [vmem:[%s135 + $0x2050] sm:$0xff] %v3220
        %5269 = vst [vmem:[%s135 + $0x2058] sm:$0xff] %v3221
        %5270 = vst [vmem:[%s135 + $0x2060] sm:$0xff] %v3222
        %5271 = vst [vmem:[%s135 + $0x2068] sm:$0xff] %v3223
        %5272 = vst [vmem:[%s135 + $0x2070] sm:$0xff] %v3224
        %5273 = vst [vmem:[%s135 + $0x2078] sm:$0xff] %v3225
        %5274 = vst [vmem:[%s135 + $0x2080] sm:$0xff] %v3226
        %5275 = vst [vmem:[%s135 + $0x2088] sm:$0xff] %v3227
        %5276 = vst [vmem:[%s135 + $0x2090] sm:$0xff] %v3228
        %5277 = vst [vmem:[%s135 + $0x2098] sm:$0xff] %v3229
        %5278 = vst [vmem:[%s135 + $0x20a0] sm:$0xff] %v3230
        %5279 = vst [vmem:[%s135 + $0x20a8] sm:$0xff] %v3231
        %5280 = vst [vmem:[%s135 + $0x20b0] sm:$0xff] %v3232
        %5281 = vst [vmem:[%s135 + $0x20b8] sm:$0xff] %v3233
        %5282 = vst [vmem:[%s135 + $0x20c0] sm:$0xff] %v3234
        %5283 = vst [vmem:[%s135 + $0x20c8] sm:$0xff] %v3235
        %5284 = vst [vmem:[%s135 + $0x20d0] sm:$0xff] %v3236
        %5285 = vst [vmem:[%s135 + $0x20d8] sm:$0xff] %v3237
        %5286 = vst [vmem:[%s135 + $0x20e0] sm:$0xff] %v3238
        %5287 = vst [vmem:[%s135 + $0x20e8] sm:$0xff] %v3239
        %5288 = vst [vmem:[%s135 + $0x20f0] sm:$0xff] %v3240
        %5289 = vst [vmem:[%s135 + $0x20f8] sm:$0xff] %v3241
        %5290 = vst [vmem:[%s135 + $0x2100] sm:$0xff] %v3242
        %5291 = vst [vmem:[%s135 + $0x2108] sm:$0xff] %v3243
        %5292 = vst [vmem:[%s135 + $0x2110] sm:$0xff] %v3244
        %5293 = vst [vmem:[%s135 + $0x2118] sm:$0xff] %v3245
        %5294 = vst [vmem:[%s135 + $0x2120] sm:$0xff] %v3246
        %5295 = vst [vmem:[%s135 + $0x2128] sm:$0xff] %v3247
        %5296 = vst [vmem:[%s135 + $0x2130] sm:$0xff] %v3248
        %5297 = vst [vmem:[%s135 + $0x2138] sm:$0xff] %v3249
        %5298 = vst [vmem:[%s135 + $0x2140] sm:$0xff] %v3250
        %5299 = vst [vmem:[%s135 + $0x2148] sm:$0xff] %v3251
        %5300 = vst [vmem:[%s135 + $0x2150] sm:$0xff] %v3252
        %5301 = vst [vmem:[%s135 + $0x2158] sm:$0xff] %v3253
        %5302 = vst [vmem:[%s135 + $0x2160] sm:$0xff] %v3254
        %5303 = vst [vmem:[%s135 + $0x2168] sm:$0xff] %v3255
        %5304 = vst [vmem:[%s135 + $0x2170] sm:$0xff] %v3256
        %5305 = vst [vmem:[%s135 + $0x2178] sm:$0xff] %v3257
        %5306 = vst [vmem:[%s135 + $0x2180] sm:$0xff] %v3258
        %5307 = vst [vmem:[%s135 + $0x2188] sm:$0xff] %v3259
        %5308 = vst [vmem:[%s135 + $0x2190] sm:$0xff] %v3260
        %5309 = vst [vmem:[%s135 + $0x2198] sm:$0xff] %v3261
        %5310 = vst [vmem:[%s135 + $0x21a0] sm:$0xff] %v3262
        %5311 = vst [vmem:[%s135 + $0x21a8] sm:$0xff] %v3263
        %5312 = vst [vmem:[%s135 + $0x21b0] sm:$0xff] %v3264
        %5313 = vst [vmem:[%s135 + $0x21b8] sm:$0xff] %v3265
        %5314 = vst [vmem:[%s135 + $0x21c0] sm:$0xff] %v3266
        %5315 = vst [vmem:[%s135 + $0x21c8] sm:$0xff] %v3267
        %5316 = vst [vmem:[%s135 + $0x21d0] sm:$0xff] %v3268
        %5317 = vst [vmem:[%s135 + $0x21d8] sm:$0xff] %v3269
        %5318 = vst [vmem:[%s135 + $0x21e0] sm:$0xff] %v3270
        %5319 = vst [vmem:[%s135 + $0x21e8] sm:$0xff] %v3271
        %5320 = vst [vmem:[%s135 + $0x21f0] sm:$0xff] %v3272
        %5321 = vst [vmem:[%s135 + $0x21f8] sm:$0xff] %v3273
        %5322 = vst [vmem:[%s135 + $0x2200] sm:$0xff] %v3274
        %5323 = vst [vmem:[%s135 + $0x2208] sm:$0xff] %v3275
        %5324 = vst [vmem:[%s135 + $0x2210] sm:$0xff] %v3276
        %5325 = vst [vmem:[%s135 + $0x2218] sm:$0xff] %v3277
        %5326 = vst [vmem:[%s135 + $0x2220] sm:$0xff] %v3278
        %5327 = vst [vmem:[%s135 + $0x2228] sm:$0xff] %v3279
        %5328 = vst [vmem:[%s135 + $0x2230] sm:$0xff] %v3280
        %5329 = vst [vmem:[%s135 + $0x2238] sm:$0xff] %v3281
        %5330 = vst [vmem:[%s135 + $0x2240] sm:$0xff] %v3282
        %5331 = vst [vmem:[%s135 + $0x2248] sm:$0xff] %v3283
        %5332 = vst [vmem:[%s135 + $0x2250] sm:$0xff] %v3284
        %5333 = vst [vmem:[%s135 + $0x2258] sm:$0xff] %v3285
        %5334 = vst [vmem:[%s135 + $0x2260] sm:$0xff] %v3286
        %5335 = vst [vmem:[%s135 + $0x2268] sm:$0xff] %v3287
        %5336 = vst [vmem:[%s135 + $0x2270] sm:$0xff] %v3288
        %5337 = vst [vmem:[%s135 + $0x2278] sm:$0xff] %v3289
        %5338 = vst [vmem:[%s135 + $0x2280] sm:$0xff] %v3290
        %5339 = vst [vmem:[%s135 + $0x2288] sm:$0xff] %v3291
        %5340 = vst [vmem:[%s135 + $0x2290] sm:$0xff] %v3292
        %5341 = vst [vmem:[%s135 + $0x2298] sm:$0xff] %v3293
        %5342 = vst [vmem:[%s135 + $0x22a0] sm:$0xff] %v3294
        %5343 = vst [vmem:[%s135 + $0x22a8] sm:$0xff] %v3295
        %5344 = vst [vmem:[%s135 + $0x22b0] sm:$0xff] %v3296
        %5345 = vst [vmem:[%s135 + $0x22b8] sm:$0xff] %v3297
        %5346 = vst [vmem:[%s135 + $0x22c0] sm:$0xff] %v3298
        %5347 = vst [vmem:[%s135 + $0x22c8] sm:$0xff] %v3299
        %5348 = vst [vmem:[%s135 + $0x22d0] sm:$0xff] %v3300
        %5349 = vst [vmem:[%s135 + $0x22d8] sm:$0xff] %v3301
        %5350 = vst [vmem:[%s135 + $0x22e0] sm:$0xff] %v3302
        %5351 = vst [vmem:[%s135 + $0x22e8] sm:$0xff] %v3303
        %5352 = vst [vmem:[%s135 + $0x22f0] sm:$0xff] %v3304
        %5353 = vst [vmem:[%s135 + $0x22f8] sm:$0xff] %v3305
        %5354 = vst [vmem:[%s135 + $0x2300] sm:$0xff] %v3306
        %5355 = vst [vmem:[%s135 + $0x2308] sm:$0xff] %v3307
        %5356 = vst [vmem:[%s135 + $0x2310] sm:$0xff] %v3308
        %5357 = vst [vmem:[%s135 + $0x2318] sm:$0xff] %v3309
        %5358 = vst [vmem:[%s135 + $0x2320] sm:$0xff] %v3310
        %5359 = vst [vmem:[%s135 + $0x2328] sm:$0xff] %v3311
        %5360 = vst [vmem:[%s135 + $0x2330] sm:$0xff] %v3312
        %5361 = vst [vmem:[%s135 + $0x2338] sm:$0xff] %v3313
        %5362 = vst [vmem:[%s135 + $0x2340] sm:$0xff] %v3314
        %5363 = vst [vmem:[%s135 + $0x2348] sm:$0xff] %v3315
        %5364 = vst [vmem:[%s135 + $0x2350] sm:$0xff] %v3316
        %5365 = vst [vmem:[%s135 + $0x2358] sm:$0xff] %v3317
        %5366 = vst [vmem:[%s135 + $0x2360] sm:$0xff] %v3318
        %5367 = vst [vmem:[%s135 + $0x2368] sm:$0xff] %v3319
        %5368 = vst [vmem:[%s135 + $0x2370] sm:$0xff] %v3320
        %5369 = vst [vmem:[%s135 + $0x2378] sm:$0xff] %v3321
        %5370 = vst [vmem:[%s135 + $0x2380] sm:$0xff] %v3322
        %5371 = vst [vmem:[%s135 + $0x2388] sm:$0xff] %v3323
        %5372 = vst [vmem:[%s135 + $0x2390] sm:$0xff] %v3324
        %5373 = vst [vmem:[%s135 + $0x2398] sm:$0xff] %v3325
        %5374 = vst [vmem:[%s135 + $0x23a0] sm:$0xff] %v3326
        %5375 = vst [vmem:[%s135 + $0x23a8] sm:$0xff] %v3327
        %5376 = vst [vmem:[%s135 + $0x23b0] sm:$0xff] %v3328
        %5377 = vst [vmem:[%s135 + $0x23b8] sm:$0xff] %v3329
        %5378 = vst [vmem:[%s135 + $0x23c0] sm:$0xff] %v3330
        %5379 = vst [vmem:[%s135 + $0x23c8] sm:$0xff] %v3331
        %5380 = vst [vmem:[%s135 + $0x23d0] sm:$0xff] %v3332
        %5381 = vst [vmem:[%s135 + $0x23d8] sm:$0xff] %v3333
        %5382 = vst [vmem:[%s135 + $0x23e0] sm:$0xff] %v3334
        %5383 = vst [vmem:[%s135 + $0x23e8] sm:$0xff] %v3335
        %5384 = vst [vmem:[%s135 + $0x23f0] sm:$0xff] %v3336
        %5385 = vst [vmem:[%s135 + $0x23f8] sm:$0xff] %v3337
        %5386 = vst [vmem:[%s135 + $0x2400] sm:$0xff] %v3338
        %5387 = vst [vmem:[%s135 + $0x2408] sm:$0xff] %v3339
        %5388 = vst [vmem:[%s135 + $0x2410] sm:$0xff] %v3340
        %5389 = vst [vmem:[%s135 + $0x2418] sm:$0xff] %v3341
        %5390 = vst [vmem:[%s135 + $0x2420] sm:$0xff] %v3342
        %5391 = vst [vmem:[%s135 + $0x2428] sm:$0xff] %v3343
        %5392 = vst [vmem:[%s135 + $0x2430] sm:$0xff] %v3344
        %5393 = vst [vmem:[%s135 + $0x2438] sm:$0xff] %v3345
        %5394 = vst [vmem:[%s135 + $0x2440] sm:$0xff] %v3346
        %5395 = vst [vmem:[%s135 + $0x2448] sm:$0xff] %v3347
        %5396 = vst [vmem:[%s135 + $0x2450] sm:$0xff] %v3348
        %5397 = vst [vmem:[%s135 + $0x2458] sm:$0xff] %v3349
        %5398 = vst [vmem:[%s135 + $0x2460] sm:$0xff] %v3350
        %5399 = vst [vmem:[%s135 + $0x2468] sm:$0xff] %v3351
        %5400 = vst [vmem:[%s135 + $0x2470] sm:$0xff] %v3352
        %5401 = vst [vmem:[%s135 + $0x2478] sm:$0xff] %v3353
        %5402 = vst [vmem:[%s135 + $0x2480] sm:$0xff] %v3354
        %5403 = vst [vmem:[%s135 + $0x2488] sm:$0xff] %v3355
        %5404 = vst [vmem:[%s135 + $0x2490] sm:$0xff] %v3356
        %5405 = vst [vmem:[%s135 + $0x2498] sm:$0xff] %v3357
        %5406 = vst [vmem:[%s135 + $0x24a0] sm:$0xff] %v3358
        %5407 = vst [vmem:[%s135 + $0x24a8] sm:$0xff] %v3359
        %5408 = vst [vmem:[%s135 + $0x24b0] sm:$0xff] %v3360
        %5409 = vst [vmem:[%s135 + $0x24b8] sm:$0xff] %v3361
        %5410 = vst [vmem:[%s135 + $0x24c0] sm:$0xff] %v3362
        %5411 = vst [vmem:[%s135 + $0x24c8] sm:$0xff] %v3363
        %5412 = vst [vmem:[%s135 + $0x24d0] sm:$0xff] %v3364
        %5413 = vst [vmem:[%s135 + $0x24d8] sm:$0xff] %v3365
        %5414 = vst [vmem:[%s135 + $0x24e0] sm:$0xff] %v3366
        %5415 = vst [vmem:[%s135 + $0x24e8] sm:$0xff] %v3367
        %5416 = vst [vmem:[%s135 + $0x24f0] sm:$0xff] %v3368
        %5417 = vst [vmem:[%s135 + $0x24f8] sm:$0xff] %v3369
        %5418 = vst [vmem:[%s135 + $0x2500] sm:$0xff] %v3370
        %5419 = vst [vmem:[%s135 + $0x2508] sm:$0xff] %v3371
        %5420 = vst [vmem:[%s135 + $0x2510] sm:$0xff] %v3372
        %5421 = vst [vmem:[%s135 + $0x2518] sm:$0xff] %v3373
        %5422 = vst [vmem:[%s135 + $0x2520] sm:$0xff] %v3374
        %5423 = vst [vmem:[%s135 + $0x2528] sm:$0xff] %v3375
        %5424 = vst [vmem:[%s135 + $0x2530] sm:$0xff] %v3376
        %5425 = vst [vmem:[%s135 + $0x2538] sm:$0xff] %v3377
        %5426 = vst [vmem:[%s135 + $0x2540] sm:$0xff] %v3378
        %5427 = vst [vmem:[%s135 + $0x2548] sm:$0xff] %v3379
        %5428 = vst [vmem:[%s135 + $0x2550] sm:$0xff] %v3380
        %5429 = vst [vmem:[%s135 + $0x2558] sm:$0xff] %v3381
        %5430 = vst [vmem:[%s135 + $0x2560] sm:$0xff] %v3382
        %5431 = vst [vmem:[%s135 + $0x2568] sm:$0xff] %v3383
        %5432 = vst [vmem:[%s135 + $0x2570] sm:$0xff] %v3384
        %5433 = vst [vmem:[%s135 + $0x2578] sm:$0xff] %v3385
        %5434 = vst [vmem:[%s135 + $0x2580] sm:$0xff] %v3386
        %5435 = vst [vmem:[%s135 + $0x2588] sm:$0xff] %v3387
        %5436 = vst [vmem:[%s135 + $0x2590] sm:$0xff] %v3388
        %5437 = vst [vmem:[%s135 + $0x2598] sm:$0xff] %v3389
        %5438 = vst [vmem:[%s135 + $0x25a0] sm:$0xff] %v3390
        %5439 = vst [vmem:[%s135 + $0x25a8] sm:$0xff] %v3391
        %5440 = vst [vmem:[%s135 + $0x25b0] sm:$0xff] %v3392
        %5441 = vst [vmem:[%s135 + $0x25b8] sm:$0xff] %v3393
        %5442 = vst [vmem:[%s135 + $0x25c0] sm:$0xff] %v3394
        %5443 = vst [vmem:[%s135 + $0x25c8] sm:$0xff] %v3395
        %5444 = vst [vmem:[%s135 + $0x25d0] sm:$0xff] %v3396
        %5445 = vst [vmem:[%s135 + $0x25d8] sm:$0xff] %v3397
        %5446 = vst [vmem:[%s135 + $0x25e0] sm:$0xff] %v3398
        %5447 = vst [vmem:[%s135 + $0x25e8] sm:$0xff] %v3399
        %5448 = vst [vmem:[%s135 + $0x25f0] sm:$0xff] %v3400
        %5449 = vst [vmem:[%s135 + $0x25f8] sm:$0xff] %v3401
        %5450 = vst [vmem:[%s135 + $0x2600] sm:$0xff] %v3402
        %5451 = vst [vmem:[%s135 + $0x2608] sm:$0xff] %v3403
        %5452 = vst [vmem:[%s135 + $0x2610] sm:$0xff] %v3404
        %5453 = vst [vmem:[%s135 + $0x2618] sm:$0xff] %v3405
        %5454 = vst [vmem:[%s135 + $0x2620] sm:$0xff] %v3406
        %5455 = vst [vmem:[%s135 + $0x2628] sm:$0xff] %v3407
        %5456 = vst [vmem:[%s135 + $0x2630] sm:$0xff] %v3408
        %5457 = vst [vmem:[%s135 + $0x2638] sm:$0xff] %v3409
        %5458 = vst [vmem:[%s135 + $0x2640] sm:$0xff] %v3410
        %5459 = vst [vmem:[%s135 + $0x2648] sm:$0xff] %v3411
        %5460 = vst [vmem:[%s135 + $0x2650] sm:$0xff] %v3412
        %5461 = vst [vmem:[%s135 + $0x2658] sm:$0xff] %v3413
        %5462 = vst [vmem:[%s135 + $0x2660] sm:$0xff] %v3414
        %5463 = vst [vmem:[%s135 + $0x2668] sm:$0xff] %v3415
        %5464 = vst [vmem:[%s135 + $0x2670] sm:$0xff] %v3416
        %5465 = vst [vmem:[%s135 + $0x2678] sm:$0xff] %v3417
        %5466 = vst [vmem:[%s135 + $0x2680] sm:$0xff] %v3418
        %5467 = vst [vmem:[%s135 + $0x2688] sm:$0xff] %v3419
        %5468 = vst [vmem:[%s135 + $0x2690] sm:$0xff] %v3420
        %5469 = vst [vmem:[%s135 + $0x2698] sm:$0xff] %v3421
        %5470 = vst [vmem:[%s135 + $0x26a0] sm:$0xff] %v3422
        %5471 = vst [vmem:[%s135 + $0x26a8] sm:$0xff] %v3423
        %5472 = vst [vmem:[%s135 + $0x26b0] sm:$0xff] %v3424
        %5473 = vst [vmem:[%s135 + $0x26b8] sm:$0xff] %v3425
        %5474 = vst [vmem:[%s135 + $0x26c0] sm:$0xff] %v3426
        %5475 = vst [vmem:[%s135 + $0x26c8] sm:$0xff] %v3427
        %5476 = vst [vmem:[%s135 + $0x26d0] sm:$0xff] %v3428
        %5477 = vst [vmem:[%s135 + $0x26d8] sm:$0xff] %v3429
        %5478 = vst [vmem:[%s135 + $0x26e0] sm:$0xff] %v3430
        %5479 = vst [vmem:[%s135 + $0x26e8] sm:$0xff] %v3431
        %5480 = vst [vmem:[%s135 + $0x26f0] sm:$0xff] %v3432
        %5481 = vst [vmem:[%s135 + $0x26f8] sm:$0xff] %v3433
        %5482 = vst [vmem:[%s135 + $0x2700] sm:$0xff] %v3434
        %5483 = vst [vmem:[%s135 + $0x2708] sm:$0xff] %v3435
        %5484 = vst [vmem:[%s135 + $0x2710] sm:$0xff] %v3436
        %5485 = vst [vmem:[%s135 + $0x2718] sm:$0xff] %v3437
        %5486 = vst [vmem:[%s135 + $0x2720] sm:$0xff] %v3438
        %5487 = vst [vmem:[%s135 + $0x2728] sm:$0xff] %v3439
        %5488 = vst [vmem:[%s135 + $0x2730] sm:$0xff] %v3440
        %5489 = vst [vmem:[%s135 + $0x2738] sm:$0xff] %v3441
        %5490 = vst [vmem:[%s135 + $0x2740] sm:$0xff] %v3442
        %5491 = vst [vmem:[%s135 + $0x2748] sm:$0xff] %v3443
        %5492 = vst [vmem:[%s135 + $0x2750] sm:$0xff] %v3444
        %5493 = vst [vmem:[%s135 + $0x2758] sm:$0xff] %v3445
        %5494 = vst [vmem:[%s135 + $0x2760] sm:$0xff] %v3446
        %5495 = vst [vmem:[%s135 + $0x2768] sm:$0xff] %v3447
        %5496 = vst [vmem:[%s135 + $0x2770] sm:$0xff] %v3448
        %5497 = vst [vmem:[%s135 + $0x2778] sm:$0xff] %v3449
        %5498 = vst [vmem:[%s135 + $0x2780] sm:$0xff] %v3450
        %5499 = vst [vmem:[%s135 + $0x2788] sm:$0xff] %v3451
        %5500 = vst [vmem:[%s135 + $0x2790] sm:$0xff] %v3452
        %5501 = vst [vmem:[%s135 + $0x2798] sm:$0xff] %v3453
        %5502 = vst [vmem:[%s135 + $0x27a0] sm:$0xff] %v3454
        %5503 = vst [vmem:[%s135 + $0x27a8] sm:$0xff] %v3455
        %5504 = vst [vmem:[%s135 + $0x27b0] sm:$0xff] %v3456
        %5505 = vst [vmem:[%s135 + $0x27b8] sm:$0xff] %v3457
        %5506 = vst [vmem:[%s135 + $0x27c0] sm:$0xff] %v3458
        %5507 = vst [vmem:[%s135 + $0x27c8] sm:$0xff] %v3459
        %5508 = vst [vmem:[%s135 + $0x27d0] sm:$0xff] %v3460
        %5509 = vst [vmem:[%s135 + $0x27d8] sm:$0xff] %v3461
        %5510 = vst [vmem:[%s135 + $0x27e0] sm:$0xff] %v3462
        %5511 = vst [vmem:[%s135 + $0x27e8] sm:$0xff] %v3463
        %5512 = vst [vmem:[%s135 + $0x27f0] sm:$0xff] %v3464
        %5513 = vst [vmem:[%s135 + $0x27f8] sm:$0xff] %v3465
        %5514 = vst [vmem:[%s135 + $0x2800] sm:$0xff] %v3466
        %5515 = vst [vmem:[%s135 + $0x2808] sm:$0xff] %v3467
        %5516 = vst [vmem:[%s135 + $0x2810] sm:$0xff] %v3468
        %5517 = vst [vmem:[%s135 + $0x2818] sm:$0xff] %v3469
        %5518 = vst [vmem:[%s135 + $0x2820] sm:$0xff] %v3470
        %5519 = vst [vmem:[%s135 + $0x2828] sm:$0xff] %v3471
        %5520 = vst [vmem:[%s135 + $0x2830] sm:$0xff] %v3472
        %5521 = vst [vmem:[%s135 + $0x2838] sm:$0xff] %v3473
        %5522 = vst [vmem:[%s135 + $0x2840] sm:$0xff] %v3474
        %5523 = vst [vmem:[%s135 + $0x2848] sm:$0xff] %v3475
        %5524 = vst [vmem:[%s135 + $0x2850] sm:$0xff] %v3476
        %5525 = vst [vmem:[%s135 + $0x2858] sm:$0xff] %v3477
        %5526 = vst [vmem:[%s135 + $0x2860] sm:$0xff] %v3478
        %5527 = vst [vmem:[%s135 + $0x2868] sm:$0xff] %v3479
        %5528 = vst [vmem:[%s135 + $0x2870] sm:$0xff] %v3480
        %5529 = vst [vmem:[%s135 + $0x2878] sm:$0xff] %v3481
        %5530 = vst [vmem:[%s135 + $0x2880] sm:$0xff] %v3482
        %5531 = vst [vmem:[%s135 + $0x2888] sm:$0xff] %v3483
        %5532 = vst [vmem:[%s135 + $0x2890] sm:$0xff] %v3484
        %5533 = vst [vmem:[%s135 + $0x2898] sm:$0xff] %v3485
        %5534 = vst [vmem:[%s135 + $0x28a0] sm:$0xff] %v3486
        %5535 = vst [vmem:[%s135 + $0x28a8] sm:$0xff] %v3487
        %5536 = vst [vmem:[%s135 + $0x28b0] sm:$0xff] %v3488
        %5537 = vst [vmem:[%s135 + $0x28b8] sm:$0xff] %v3489
        %5538 = vst [vmem:[%s135 + $0x28c0] sm:$0xff] %v3490
        %5539 = vst [vmem:[%s135 + $0x28c8] sm:$0xff] %v3491
        %5540 = vst [vmem:[%s135 + $0x28d0] sm:$0xff] %v3492
        %5541 = vst [vmem:[%s135 + $0x28d8] sm:$0xff] %v3493
        %5542 = vst [vmem:[%s135 + $0x28e0] sm:$0xff] %v3494
        %5543 = vst [vmem:[%s135 + $0x28e8] sm:$0xff] %v3495
        %5544 = vst [vmem:[%s135 + $0x28f0] sm:$0xff] %v3496
        %5545 = vst [vmem:[%s135 + $0x28f8] sm:$0xff] %v3497
        %5546 = vst [vmem:[%s135 + $0x2900] sm:$0xff] %v3498
        %5547 = vst [vmem:[%s135 + $0x2908] sm:$0xff] %v3499
        %5548 = vst [vmem:[%s135 + $0x2910] sm:$0xff] %v3500
        %5549 = vst [vmem:[%s135 + $0x2918] sm:$0xff] %v3501
        %5550 = vst [vmem:[%s135 + $0x2920] sm:$0xff] %v3502
        %5551 = vst [vmem:[%s135 + $0x2928] sm:$0xff] %v3503
        %5552 = vst [vmem:[%s135 + $0x2930] sm:$0xff] %v3504
        %5553 = vst [vmem:[%s135 + $0x2938] sm:$0xff] %v3505
        %5554 = vst [vmem:[%s135 + $0x2940] sm:$0xff] %v3506
        %5555 = vst [vmem:[%s135 + $0x2948] sm:$0xff] %v3507
        %5556 = vst [vmem:[%s135 + $0x2950] sm:$0xff] %v3508
        %5557 = vst [vmem:[%s135 + $0x2958] sm:$0xff] %v3509
        %5558 = vst [vmem:[%s135 + $0x2960] sm:$0xff] %v3510
        %5559 = vst [vmem:[%s135 + $0x2968] sm:$0xff] %v3511
        %5560 = vst [vmem:[%s135 + $0x2970] sm:$0xff] %v3512
        %5561 = vst [vmem:[%s135 + $0x2978] sm:$0xff] %v3513
        %5562 = vst [vmem:[%s135 + $0x2980] sm:$0xff] %v3514
        %5563 = vst [vmem:[%s135 + $0x2988] sm:$0xff] %v3515
        %5564 = vst [vmem:[%s135 + $0x2990] sm:$0xff] %v3516
        %5565 = vst [vmem:[%s135 + $0x2998] sm:$0xff] %v3517
        %5566 = vst [vmem:[%s135 + $0x29a0] sm:$0xff] %v3518
        %5567 = vst [vmem:[%s135 + $0x29a8] sm:$0xff] %v3519
        %5568 = vst [vmem:[%s135 + $0x29b0] sm:$0xff] %v3520
        %5569 = vst [vmem:[%s135 + $0x29b8] sm:$0xff] %v3521
        %5570 = vst [vmem:[%s135 + $0x29c0] sm:$0xff] %v3522
        %5571 = vst [vmem:[%s135 + $0x29c8] sm:$0xff] %v3523
        %5572 = vst [vmem:[%s135 + $0x29d0] sm:$0xff] %v3524
        %5573 = vst [vmem:[%s135 + $0x29d8] sm:$0xff] %v3525
        %5574 = vst [vmem:[%s135 + $0x29e0] sm:$0xff] %v3526
        %5575 = vst [vmem:[%s135 + $0x29e8] sm:$0xff] %v3527
        %5576 = vst [vmem:[%s135 + $0x29f0] sm:$0xff] %v3528
        %5577 = vst [vmem:[%s135 + $0x29f8] sm:$0xff] %v3529
        %5578 = vst [vmem:[%s135 + $0x2a00] sm:$0xff] %v3530
        %5579 = vst [vmem:[%s135 + $0x2a08] sm:$0xff] %v3531
        %5580 = vst [vmem:[%s135 + $0x2a10] sm:$0xff] %v3532
        %5581 = vst [vmem:[%s135 + $0x2a18] sm:$0xff] %v3533
        %5582 = vst [vmem:[%s135 + $0x2a20] sm:$0xff] %v3534
        %5583 = vst [vmem:[%s135 + $0x2a28] sm:$0xff] %v3535
        %5584 = vst [vmem:[%s135 + $0x2a30] sm:$0xff] %v3536
        %5585 = vst [vmem:[%s135 + $0x2a38] sm:$0xff] %v3537
        %5586 = vst [vmem:[%s135 + $0x2a40] sm:$0xff] %v3538
        %5587 = vst [vmem:[%s135 + $0x2a48] sm:$0xff] %v3539
        %5588 = vst [vmem:[%s135 + $0x2a50] sm:$0xff] %v3540
        %5589 = vst [vmem:[%s135 + $0x2a58] sm:$0xff] %v3541
        %5590 = vst [vmem:[%s135 + $0x2a60] sm:$0xff] %v3542
        %5591 = vst [vmem:[%s135 + $0x2a68] sm:$0xff] %v3543
        %5592 = vst [vmem:[%s135 + $0x2a70] sm:$0xff] %v3544
        %5593 = vst [vmem:[%s135 + $0x2a78] sm:$0xff] %v3545
        %5594 = vst [vmem:[%s135 + $0x2a80] sm:$0xff] %v3546
        %5595 = vst [vmem:[%s135 + $0x2a88] sm:$0xff] %v3547
        %5596 = vst [vmem:[%s135 + $0x2a90] sm:$0xff] %v3548
        %5597 = vst [vmem:[%s135 + $0x2a98] sm:$0xff] %v3549
        %5598 = vst [vmem:[%s135 + $0x2aa0] sm:$0xff] %v3550
        %5599 = vst [vmem:[%s135 + $0x2aa8] sm:$0xff] %v3551
        %5600 = vst [vmem:[%s135 + $0x2ab0] sm:$0xff] %v3552
        %5601 = vst [vmem:[%s135 + $0x2ab8] sm:$0xff] %v3553
        %5602 = vst [vmem:[%s135 + $0x2ac0] sm:$0xff] %v3554
        %5603 = vst [vmem:[%s135 + $0x2ac8] sm:$0xff] %v3555
        %5604 = vst [vmem:[%s135 + $0x2ad0] sm:$0xff] %v3556
        %5605 = vst [vmem:[%s135 + $0x2ad8] sm:$0xff] %v3557
        %5606 = vst [vmem:[%s135 + $0x2ae0] sm:$0xff] %v3558
        %5607 = vst [vmem:[%s135 + $0x2ae8] sm:$0xff] %v3559
        %5608 = vst [vmem:[%s135 + $0x2af0] sm:$0xff] %v3560
        %5609 = vst [vmem:[%s135 + $0x2af8] sm:$0xff] %v3561
        %5610 = vst [vmem:[%s135 + $0x2b00] sm:$0xff] %v3562
        %5611 = vst [vmem:[%s135 + $0x2b08] sm:$0xff] %v3563
        %5612 = vst [vmem:[%s135 + $0x2b10] sm:$0xff] %v3564
        %5613 = vst [vmem:[%s135 + $0x2b18] sm:$0xff] %v3565
        %5614 = vst [vmem:[%s135 + $0x2b20] sm:$0xff] %v3566
        %5615 = vst [vmem:[%s135 + $0x2b28] sm:$0xff] %v3567
        %5616 = vst [vmem:[%s135 + $0x2b30] sm:$0xff] %v3568
        %5617 = vst [vmem:[%s135 + $0x2b38] sm:$0xff] %v3569
        %5618 = vst [vmem:[%s135 + $0x2b40] sm:$0xff] %v3570
        %5619 = vst [vmem:[%s135 + $0x2b48] sm:$0xff] %v3571
        %5620 = vst [vmem:[%s135 + $0x2b50] sm:$0xff] %v3572
        %5621 = vst [vmem:[%s135 + $0x2b58] sm:$0xff] %v3573
        %5622 = vst [vmem:[%s135 + $0x2b60] sm:$0xff] %v3574
        %5623 = vst [vmem:[%s135 + $0x2b68] sm:$0xff] %v3575
        %5624 = vst [vmem:[%s135 + $0x2b70] sm:$0xff] %v3576
        %5625 = vst [vmem:[%s135 + $0x2b78] sm:$0xff] %v3577
        %5626 = vst [vmem:[%s135 + $0x2b80] sm:$0xff] %v3578
        %5627 = vst [vmem:[%s135 + $0x2b88] sm:$0xff] %v3579
        %5628 = vst [vmem:[%s135 + $0x2b90] sm:$0xff] %v3580
        %5629 = vst [vmem:[%s135 + $0x2b98] sm:$0xff] %v3581
        %5630 = vst [vmem:[%s135 + $0x2ba0] sm:$0xff] %v3582
        %5631 = vst [vmem:[%s135 + $0x2ba8] sm:$0xff] %v3583
        %5632 = vst [vmem:[%s135 + $0x2bb0] sm:$0xff] %v3584
        %5633 = vst [vmem:[%s135 + $0x2bb8] sm:$0xff] %v3585
        %5634 = vst [vmem:[%s135 + $0x2bc0] sm:$0xff] %v3586
        %5635 = vst [vmem:[%s135 + $0x2bc8] sm:$0xff] %v3587
        %5636 = vst [vmem:[%s135 + $0x2bd0] sm:$0xff] %v3588
        %5637 = vst [vmem:[%s135 + $0x2bd8] sm:$0xff] %v3589
        %5638 = vst [vmem:[%s135 + $0x2be0] sm:$0xff] %v3590
        %5639 = vst [vmem:[%s135 + $0x2be8] sm:$0xff] %v3591
        %5640 = vst [vmem:[%s135 + $0x2bf0] sm:$0xff] %v3592
        %5641 = vst [vmem:[%s135 + $0x2bf8] sm:$0xff] %v3593
        %5642 = vst [vmem:[%s135 + $0x2c00] sm:$0xff] %v3594
        %5643 = vst [vmem:[%s135 + $0x2c08] sm:$0xff] %v3595
        %5644 = vst [vmem:[%s135 + $0x2c10] sm:$0xff] %v3596
        %5645 = vst [vmem:[%s135 + $0x2c18] sm:$0xff] %v3597
        %5646 = vst [vmem:[%s135 + $0x2c20] sm:$0xff] %v3598
        %5647 = vst [vmem:[%s135 + $0x2c28] sm:$0xff] %v3599
        %5648 = vst [vmem:[%s135 + $0x2c30] sm:$0xff] %v3600
        %5649 = vst [vmem:[%s135 + $0x2c38] sm:$0xff] %v3601
        %5650 = vst [vmem:[%s135 + $0x2c40] sm:$0xff] %v3602
        %5651 = vst [vmem:[%s135 + $0x2c48] sm:$0xff] %v3603
        %5652 = vst [vmem:[%s135 + $0x2c50] sm:$0xff] %v3604
        %5653 = vst [vmem:[%s135 + $0x2c58] sm:$0xff] %v3605
        %5654 = vst [vmem:[%s135 + $0x2c60] sm:$0xff] %v3606
        %5655 = vst [vmem:[%s135 + $0x2c68] sm:$0xff] %v3607
        %5656 = vst [vmem:[%s135 + $0x2c70] sm:$0xff] %v3608
        %5657 = vst [vmem:[%s135 + $0x2c78] sm:$0xff] %v3609
        %5658 = vst [vmem:[%s135 + $0x2c80] sm:$0xff] %v3610
        %5659 = vst [vmem:[%s135 + $0x2c88] sm:$0xff] %v3611
        %5660 = vst [vmem:[%s135 + $0x2c90] sm:$0xff] %v3612
        %5661 = vst [vmem:[%s135 + $0x2c98] sm:$0xff] %v3613
        %5662 = vst [vmem:[%s135 + $0x2ca0] sm:$0xff] %v3614
        %5663 = vst [vmem:[%s135 + $0x2ca8] sm:$0xff] %v3615
        %5664 = vst [vmem:[%s135 + $0x2cb0] sm:$0xff] %v3616
        %5665 = vst [vmem:[%s135 + $0x2cb8] sm:$0xff] %v3617
        %5666 = vst [vmem:[%s135 + $0x2cc0] sm:$0xff] %v3618
        %5667 = vst [vmem:[%s135 + $0x2cc8] sm:$0xff] %v3619
        %5668 = vst [vmem:[%s135 + $0x2cd0] sm:$0xff] %v3620
        %5669 = vst [vmem:[%s135 + $0x2cd8] sm:$0xff] %v3621
        %5670 = vst [vmem:[%s135 + $0x2ce0] sm:$0xff] %v3622
        %5671 = vst [vmem:[%s135 + $0x2ce8] sm:$0xff] %v3623
        %5672 = vst [vmem:[%s135 + $0x2cf0] sm:$0xff] %v3624
        %5673 = vst [vmem:[%s135 + $0x2cf8] sm:$0xff] %v3625
        %5674 = vst [vmem:[%s135 + $0x2d00] sm:$0xff] %v3626
        %5675 = vst [vmem:[%s135 + $0x2d08] sm:$0xff] %v3627
        %5676 = vst [vmem:[%s135 + $0x2d10] sm:$0xff] %v3628
        %5677 = vst [vmem:[%s135 + $0x2d18] sm:$0xff] %v3629
        %5678 = vst [vmem:[%s135 + $0x2d20] sm:$0xff] %v3630
        %5679 = vst [vmem:[%s135 + $0x2d28] sm:$0xff] %v3631
        %5680 = vst [vmem:[%s135 + $0x2d30] sm:$0xff] %v3632
        %5681 = vst [vmem:[%s135 + $0x2d38] sm:$0xff] %v3633
        %5682 = vst [vmem:[%s135 + $0x2d40] sm:$0xff] %v3634
        %5683 = vst [vmem:[%s135 + $0x2d48] sm:$0xff] %v3635
        %5684 = vst [vmem:[%s135 + $0x2d50] sm:$0xff] %v3636
        %5685 = vst [vmem:[%s135 + $0x2d58] sm:$0xff] %v3637
        %5686 = vst [vmem:[%s135 + $0x2d60] sm:$0xff] %v3638
        %5687 = vst [vmem:[%s135 + $0x2d68] sm:$0xff] %v3639
        %5688 = vst [vmem:[%s135 + $0x2d70] sm:$0xff] %v3640
        %5689 = vst [vmem:[%s135 + $0x2d78] sm:$0xff] %v3641
        %5690 = vst [vmem:[%s135 + $0x2d80] sm:$0xff] %v3642
        %5691 = vst [vmem:[%s135 + $0x2d88] sm:$0xff] %v3643
        %5692 = vst [vmem:[%s135 + $0x2d90] sm:$0xff] %v3644
        %5693 = vst [vmem:[%s135 + $0x2d98] sm:$0xff] %v3645
        %5694 = vst [vmem:[%s135 + $0x2da0] sm:$0xff] %v3646
        %5695 = vst [vmem:[%s135 + $0x2da8] sm:$0xff] %v3647
        %5696 = vst [vmem:[%s135 + $0x2db0] sm:$0xff] %v3648
        %5697 = vst [vmem:[%s135 + $0x2db8] sm:$0xff] %v3649
        %5698 = vst [vmem:[%s135 + $0x2dc0] sm:$0xff] %v3650
        %5699 = vst [vmem:[%s135 + $0x2dc8] sm:$0xff] %v3651
        %5700 = vst [vmem:[%s135 + $0x2dd0] sm:$0xff] %v3652
        %5701 = vst [vmem:[%s135 + $0x2dd8] sm:$0xff] %v3653
        %5702 = vst [vmem:[%s135 + $0x2de0] sm:$0xff] %v3654
        %5703 = vst [vmem:[%s135 + $0x2de8] sm:$0xff] %v3655
        %5704 = vst [vmem:[%s135 + $0x2df0] sm:$0xff] %v3656
        %5705 = vst [vmem:[%s135 + $0x2df8] sm:$0xff] %v3657
        %5706 = vst [vmem:[%s135 + $0x2e00] sm:$0xff] %v3658
        %5707 = vst [vmem:[%s135 + $0x2e08] sm:$0xff] %v3659
        %5708 = vst [vmem:[%s135 + $0x2e10] sm:$0xff] %v3660
        %5709 = vst [vmem:[%s135 + $0x2e18] sm:$0xff] %v3661
        %5710 = vst [vmem:[%s135 + $0x2e20] sm:$0xff] %v3662
        %5711 = vst [vmem:[%s135 + $0x2e28] sm:$0xff] %v3663
        %5712 = vst [vmem:[%s135 + $0x2e30] sm:$0xff] %v3664
        %5713 = vst [vmem:[%s135 + $0x2e38] sm:$0xff] %v3665
        %5714 = vst [vmem:[%s135 + $0x2e40] sm:$0xff] %v3666
        %5715 = vst [vmem:[%s135 + $0x2e48] sm:$0xff] %v3667
        %5716 = vst [vmem:[%s135 + $0x2e50] sm:$0xff] %v3668
        %5717 = vst [vmem:[%s135 + $0x2e58] sm:$0xff] %v3669
        %5718 = vst [vmem:[%s135 + $0x2e60] sm:$0xff] %v3670
        %5719 = vst [vmem:[%s135 + $0x2e68] sm:$0xff] %v3671
        %5720 = vst [vmem:[%s135 + $0x2e70] sm:$0xff] %v3672
        %5721 = vst [vmem:[%s135 + $0x2e78] sm:$0xff] %v3673
        %5722 = vst [vmem:[%s135 + $0x2e80] sm:$0xff] %v3674
        %5723 = vst [vmem:[%s135 + $0x2e88] sm:$0xff] %v3675
        %5724 = vst [vmem:[%s135 + $0x2e90] sm:$0xff] %v3676
        %5725 = vst [vmem:[%s135 + $0x2e98] sm:$0xff] %v3677
        %5726 = vst [vmem:[%s135 + $0x2ea0] sm:$0xff] %v3678
        %5727 = vst [vmem:[%s135 + $0x2ea8] sm:$0xff] %v3679
        %5728 = vst [vmem:[%s135 + $0x2eb0] sm:$0xff] %v3680
        %5729 = vst [vmem:[%s135 + $0x2eb8] sm:$0xff] %v3681
        %5730 = vst [vmem:[%s135 + $0x2ec0] sm:$0xff] %v3682
        %5731 = vst [vmem:[%s135 + $0x2ec8] sm:$0xff] %v3683
        %5732 = vst [vmem:[%s135 + $0x2ed0] sm:$0xff] %v3684
        %5733 = vst [vmem:[%s135 + $0x2ed8] sm:$0xff] %v3685
        %5734 = vst [vmem:[%s135 + $0x2ee0] sm:$0xff] %v3686
        %5735 = vst [vmem:[%s135 + $0x2ee8] sm:$0xff] %v3687
        %5736 = vst [vmem:[%s135 + $0x2ef0] sm:$0xff] %v3688
        %5737 = vst [vmem:[%s135 + $0x2ef8] sm:$0xff] %v3689
        %5738 = vst [vmem:[%s135 + $0x2f00] sm:$0xff] %v3690
        %5739 = vst [vmem:[%s135 + $0x2f08] sm:$0xff] %v3691
        %5740 = vst [vmem:[%s135 + $0x2f10] sm:$0xff] %v3692
        %5741 = vst [vmem:[%s135 + $0x2f18] sm:$0xff] %v3693
        %5742 = vst [vmem:[%s135 + $0x2f20] sm:$0xff] %v3694
        %5743 = vst [vmem:[%s135 + $0x2f28] sm:$0xff] %v3695
        %5744 = vst [vmem:[%s135 + $0x2f30] sm:$0xff] %v3696
        %5745 = vst [vmem:[%s135 + $0x2f38] sm:$0xff] %v3697
        %5746 = vst [vmem:[%s135 + $0x2f40] sm:$0xff] %v3698
        %5747 = vst [vmem:[%s135 + $0x2f48] sm:$0xff] %v3699
        %5748 = vst [vmem:[%s135 + $0x2f50] sm:$0xff] %v3700
        %5749 = vst [vmem:[%s135 + $0x2f58] sm:$0xff] %v3701
        %5750 = vst [vmem:[%s135 + $0x2f60] sm:$0xff] %v3702
        %5751 = vst [vmem:[%s135 + $0x2f68] sm:$0xff] %v3703
        %5752 = vst [vmem:[%s135 + $0x2f70] sm:$0xff] %v3704
        %5753 = vst [vmem:[%s135 + $0x2f78] sm:$0xff] %v3705
        %5754 = vst [vmem:[%s135 + $0x2f80] sm:$0xff] %v3706
        %5755 = vst [vmem:[%s135 + $0x2f88] sm:$0xff] %v3707
        %5756 = vst [vmem:[%s135 + $0x2f90] sm:$0xff] %v3708
        %5757 = vst [vmem:[%s135 + $0x2f98] sm:$0xff] %v3709
        %5758 = vst [vmem:[%s135 + $0x2fa0] sm:$0xff] %v3710
        %5759 = vst [vmem:[%s135 + $0x2fa8] sm:$0xff] %v3711
        %5760 = vst [vmem:[%s135 + $0x2fb0] sm:$0xff] %v3712
        %5761 = vst [vmem:[%s135 + $0x2fb8] sm:$0xff] %v3713
        %5762 = vst [vmem:[%s135 + $0x2fc0] sm:$0xff] %v3714
        %5763 = vst [vmem:[%s135 + $0x2fc8] sm:$0xff] %v3715
        %5764 = vst [vmem:[%s135 + $0x2fd0] sm:$0xff] %v3716
        %5765 = vst [vmem:[%s135 + $0x2fd8] sm:$0xff] %v3717
        %5766 = vst [vmem:[%s135 + $0x2fe0] sm:$0xff] %v3718
        %5767 = vst [vmem:[%s135 + $0x2fe8] sm:$0xff] %v3719
        %5768 = vst [vmem:[%s135 + $0x2ff0] sm:$0xff] %v3720
        %5769 = vst [vmem:[%s135 + $0x2ff8] sm:$0xff] %v3721
        %5770 = vst [vmem:[%s135 + $0x3000] sm:$0xff] %v3722
        %5771 = vst [vmem:[%s135 + $0x3008] sm:$0xff] %v3723
        %5772 = vst [vmem:[%s135 + $0x3010] sm:$0xff] %v3724
        %5773 = vst [vmem:[%s135 + $0x3018] sm:$0xff] %v3725
        %5774 = vst [vmem:[%s135 + $0x3020] sm:$0xff] %v3726
        %5775 = vst [vmem:[%s135 + $0x3028] sm:$0xff] %v3727
        %5776 = vst [vmem:[%s135 + $0x3030] sm:$0xff] %v3728
        %5777 = vst [vmem:[%s135 + $0x3038] sm:$0xff] %v3729
        %5778 = vst [vmem:[%s135 + $0x3040] sm:$0xff] %v3730
        %5779 = vst [vmem:[%s135 + $0x3048] sm:$0xff] %v3731
        %5780 = vst [vmem:[%s135 + $0x3050] sm:$0xff] %v3732
        %5781 = vst [vmem:[%s135 + $0x3058] sm:$0xff] %v3733
        %5782 = vst [vmem:[%s135 + $0x3060] sm:$0xff] %v3734
        %5783 = vst [vmem:[%s135 + $0x3068] sm:$0xff] %v3735
        %5784 = vst [vmem:[%s135 + $0x3070] sm:$0xff] %v3736
        %5785 = vst [vmem:[%s135 + $0x3078] sm:$0xff] %v3737
        %5786 = vst [vmem:[%s135 + $0x3080] sm:$0xff] %v3738
        %5787 = vst [vmem:[%s135 + $0x3088] sm:$0xff] %v3739
        %5788 = vst [vmem:[%s135 + $0x3090] sm:$0xff] %v3740
        %5789 = vst [vmem:[%s135 + $0x3098] sm:$0xff] %v3741
        %5790 = vst [vmem:[%s135 + $0x30a0] sm:$0xff] %v3742
        %5791 = vst [vmem:[%s135 + $0x30a8] sm:$0xff] %v3743
        %5792 = vst [vmem:[%s135 + $0x30b0] sm:$0xff] %v3744
        %5793 = vst [vmem:[%s135 + $0x30b8] sm:$0xff] %v3745
        %5794 = vst [vmem:[%s135 + $0x30c0] sm:$0xff] %v3746
        %5795 = vst [vmem:[%s135 + $0x30c8] sm:$0xff] %v3747
        %5796 = vst [vmem:[%s135 + $0x30d0] sm:$0xff] %v3748
        %5797 = vst [vmem:[%s135 + $0x30d8] sm:$0xff] %v3749
        %5798 = vst [vmem:[%s135 + $0x30e0] sm:$0xff] %v3750
        %5799 = vst [vmem:[%s135 + $0x30e8] sm:$0xff] %v3751
        %5800 = vst [vmem:[%s135 + $0x30f0] sm:$0xff] %v3752
        %5801 = vst [vmem:[%s135 + $0x30f8] sm:$0xff] %v3753
        %5802 = vst [vmem:[%s135 + $0x3100] sm:$0xff] %v3754
        %5803 = vst [vmem:[%s135 + $0x3108] sm:$0xff] %v3755
        %5804 = vst [vmem:[%s135 + $0x3110] sm:$0xff] %v3756
        %5805 = vst [vmem:[%s135 + $0x3118] sm:$0xff] %v3757
        %5806 = vst [vmem:[%s135 + $0x3120] sm:$0xff] %v3758
        %5807 = vst [vmem:[%s135 + $0x3128] sm:$0xff] %v3759
        %5808 = vst [vmem:[%s135 + $0x3130] sm:$0xff] %v3760
        %5809 = vst [vmem:[%s135 + $0x3138] sm:$0xff] %v3761
        %5810 = vst [vmem:[%s135 + $0x3140] sm:$0xff] %v3762
        %5811 = vst [vmem:[%s135 + $0x3148] sm:$0xff] %v3763
        %5812 = vst [vmem:[%s135 + $0x3150] sm:$0xff] %v3764
        %5813 = vst [vmem:[%s135 + $0x3158] sm:$0xff] %v3765
        %5814 = vst [vmem:[%s135 + $0x3160] sm:$0xff] %v3766
        %5815 = vst [vmem:[%s135 + $0x3168] sm:$0xff] %v3767
        %5816 = vst [vmem:[%s135 + $0x3170] sm:$0xff] %v3768
        %5817 = vst [vmem:[%s135 + $0x3178] sm:$0xff] %v3769
        %5818 = vst [vmem:[%s135 + $0x3180] sm:$0xff] %v3770
        %5819 = vst [vmem:[%s135 + $0x3188] sm:$0xff] %v3771
        %5820 = vst [vmem:[%s135 + $0x3190] sm:$0xff] %v3772
        %5821 = vst [vmem:[%s135 + $0x3198] sm:$0xff] %v3773
        %5822 = vst [vmem:[%s135 + $0x31a0] sm:$0xff] %v3774
        %5823 = vst [vmem:[%s135 + $0x31a8] sm:$0xff] %v3775
        %5824 = vst [vmem:[%s135 + $0x31b0] sm:$0xff] %v3776
        %5825 = vst [vmem:[%s135 + $0x31b8] sm:$0xff] %v3777
        %5826 = vst [vmem:[%s135 + $0x31c0] sm:$0xff] %v3778
        %5827 = vst [vmem:[%s135 + $0x31c8] sm:$0xff] %v3779
        %5828 = vst [vmem:[%s135 + $0x31d0] sm:$0xff] %v3780
        %5829 = vst [vmem:[%s135 + $0x31d8] sm:$0xff] %v3781
        %5830 = vst [vmem:[%s135 + $0x31e0] sm:$0xff] %v3782
        %5831 = vst [vmem:[%s135 + $0x31e8] sm:$0xff] %v3783
        %5832 = vst [vmem:[%s135 + $0x31f0] sm:$0xff] %v3784
        %5833 = vst [vmem:[%s135 + $0x31f8] sm:$0xff] %v3785
        %5834 = vst [vmem:[%s135 + $0x3200] sm:$0xff] %v3786
        %5835 = vst [vmem:[%s135 + $0x3208] sm:$0xff] %v3787
        %5836 = vst [vmem:[%s135 + $0x3210] sm:$0xff] %v3788
        %5837 = vst [vmem:[%s135 + $0x3218] sm:$0xff] %v3789
        %5838 = vst [vmem:[%s135 + $0x3220] sm:$0xff] %v3790
        %5839 = vst [vmem:[%s135 + $0x3228] sm:$0xff] %v3791
        %5840 = vst [vmem:[%s135 + $0x3230] sm:$0xff] %v3792
        %5841 = vst [vmem:[%s135 + $0x3238] sm:$0xff] %v3793
        %5842 = vst [vmem:[%s135 + $0x3240] sm:$0xff] %v3794
        %5843 = vst [vmem:[%s135 + $0x3248] sm:$0xff] %v3795
        %5844 = vst [vmem:[%s135 + $0x3250] sm:$0xff] %v3796
        %5845 = vst [vmem:[%s135 + $0x3258] sm:$0xff] %v3797
        %5846 = vst [vmem:[%s135 + $0x3260] sm:$0xff] %v3798
        %5847 = vst [vmem:[%s135 + $0x3268] sm:$0xff] %v3799
        %5848 = vst [vmem:[%s135 + $0x3270] sm:$0xff] %v3800
        %5849 = vst [vmem:[%s135 + $0x3278] sm:$0xff] %v3801
        %5850 = vst [vmem:[%s135 + $0x3280] sm:$0xff] %v3802
        %5851 = vst [vmem:[%s135 + $0x3288] sm:$0xff] %v3803
        %5852 = vst [vmem:[%s135 + $0x3290] sm:$0xff] %v3804
        %5853 = vst [vmem:[%s135 + $0x3298] sm:$0xff] %v3805
        %5854 = vst [vmem:[%s135 + $0x32a0] sm:$0xff] %v3806
        %5855 = vst [vmem:[%s135 + $0x32a8] sm:$0xff] %v3807
        %5856 = vst [vmem:[%s135 + $0x32b0] sm:$0xff] %v3808
        %5857 = vst [vmem:[%s135 + $0x32b8] sm:$0xff] %v3809
        %5858 = vst [vmem:[%s135 + $0x32c0] sm:$0xff] %v3810
        %5859 = vst [vmem:[%s135 + $0x32c8] sm:$0xff] %v3811
        %5860 = vst [vmem:[%s135 + $0x32d0] sm:$0xff] %v3812
        %5861 = vst [vmem:[%s135 + $0x32d8] sm:$0xff] %v3813
        %5862 = vst [vmem:[%s135 + $0x32e0] sm:$0xff] %v3814
        %5863 = vst [vmem:[%s135 + $0x32e8] sm:$0xff] %v3815
        %5864 = vst [vmem:[%s135 + $0x32f0] sm:$0xff] %v3816
        %5865 = vst [vmem:[%s135 + $0x32f8] sm:$0xff] %v3817
        %5866 = vst [vmem:[%s135 + $0x3300] sm:$0xff] %v3818
        %5867 = vst [vmem:[%s135 + $0x3308] sm:$0xff] %v3819
        %5868 = vst [vmem:[%s135 + $0x3310] sm:$0xff] %v3820
        %5869 = vst [vmem:[%s135 + $0x3318] sm:$0xff] %v3821
        %5870 = vst [vmem:[%s135 + $0x3320] sm:$0xff] %v3822
        %5871 = vst [vmem:[%s135 + $0x3328] sm:$0xff] %v3823
        %5872 = vst [vmem:[%s135 + $0x3330] sm:$0xff] %v3824
        %5873 = vst [vmem:[%s135 + $0x3338] sm:$0xff] %v3825
        %5874 = vst [vmem:[%s135 + $0x3340] sm:$0xff] %v3826
        %5875 = vst [vmem:[%s135 + $0x3348] sm:$0xff] %v3827
        %5876 = vst [vmem:[%s135 + $0x3350] sm:$0xff] %v3828
        %5877 = vst [vmem:[%s135 + $0x3358] sm:$0xff] %v3829
        %5878 = vst [vmem:[%s135 + $0x3360] sm:$0xff] %v3830
        %5879 = vst [vmem:[%s135 + $0x3368] sm:$0xff] %v3831
        %5880 = vst [vmem:[%s135 + $0x3370] sm:$0xff] %v3832
        %5881 = vst [vmem:[%s135 + $0x3378] sm:$0xff] %v3833
        %5882 = vst [vmem:[%s135 + $0x3380] sm:$0xff] %v3834
        %5883 = vst [vmem:[%s135 + $0x3388] sm:$0xff] %v3835
        %5884 = vst [vmem:[%s135 + $0x3390] sm:$0xff] %v3836
        %5885 = vst [vmem:[%s135 + $0x3398] sm:$0xff] %v3837
        %5886 = vst [vmem:[%s135 + $0x33a0] sm:$0xff] %v3838
        %5887 = vst [vmem:[%s135 + $0x33a8] sm:$0xff] %v3839
        %5888 = vst [vmem:[%s135 + $0x33b0] sm:$0xff] %v3840
        %5889 = vst [vmem:[%s135 + $0x33b8] sm:$0xff] %v3841
        %5890 = vst [vmem:[%s135 + $0x33c0] sm:$0xff] %v3842
        %5891 = vst [vmem:[%s135 + $0x33c8] sm:$0xff] %v3843
        %5892 = vst [vmem:[%s135 + $0x33d0] sm:$0xff] %v3844
        %5893 = vst [vmem:[%s135 + $0x33d8] sm:$0xff] %v3845
        %5894 = vst [vmem:[%s135 + $0x33e0] sm:$0xff] %v3846
        %5895 = vst [vmem:[%s135 + $0x33e8] sm:$0xff] %v3847
        %5896 = vst [vmem:[%s135 + $0x33f0] sm:$0xff] %v3848
        %5897 = vst [vmem:[%s135 + $0x33f8] sm:$0xff] %v3849
        %5898 = vst [vmem:[%s135 + $0x3400] sm:$0xff] %v3850
        %5899 = vst [vmem:[%s135 + $0x3408] sm:$0xff] %v3851
        %5900 = vst [vmem:[%s135 + $0x3410] sm:$0xff] %v3852
        %5901 = vst [vmem:[%s135 + $0x3418] sm:$0xff] %v3853
        %5902 = vst [vmem:[%s135 + $0x3420] sm:$0xff] %v3854
        %5903 = vst [vmem:[%s135 + $0x3428] sm:$0xff] %v3855
        %5904 = vst [vmem:[%s135 + $0x3430] sm:$0xff] %v3856
        %5905 = vst [vmem:[%s135 + $0x3438] sm:$0xff] %v3857
        %5906 = vst [vmem:[%s135 + $0x3440] sm:$0xff] %v3858
        %5907 = vst [vmem:[%s135 + $0x3448] sm:$0xff] %v3859
        %5908 = vst [vmem:[%s135 + $0x3450] sm:$0xff] %v3860
        %5909 = vst [vmem:[%s135 + $0x3458] sm:$0xff] %v3861
        %5910 = vst [vmem:[%s135 + $0x3460] sm:$0xff] %v3862
        %5911 = vst [vmem:[%s135 + $0x3468] sm:$0xff] %v3863
        %5912 = vst [vmem:[%s135 + $0x3470] sm:$0xff] %v3864
        %5913 = vst [vmem:[%s135 + $0x3478] sm:$0xff] %v3865
        %5914 = vst [vmem:[%s135 + $0x3480] sm:$0xff] %v3866
        %5915 = vst [vmem:[%s135 + $0x3488] sm:$0xff] %v3867
        %5916 = vst [vmem:[%s135 + $0x3490] sm:$0xff] %v3868
        %5917 = vst [vmem:[%s135 + $0x3498] sm:$0xff] %v3869
        %5918 = vst [vmem:[%s135 + $0x34a0] sm:$0xff] %v3870
        %5919 = vst [vmem:[%s135 + $0x34a8] sm:$0xff] %v3871
        %5920 = vst [vmem:[%s135 + $0x34b0] sm:$0xff] %v3872
        %5921 = vst [vmem:[%s135 + $0x34b8] sm:$0xff] %v3873
        %5922 = vst [vmem:[%s135 + $0x34c0] sm:$0xff] %v3874
        %5923 = vst [vmem:[%s135 + $0x34c8] sm:$0xff] %v3875
        %5924 = vst [vmem:[%s135 + $0x34d0] sm:$0xff] %v3876
        %5925 = vst [vmem:[%s135 + $0x34d8] sm:$0xff] %v3877
        %5926 = vst [vmem:[%s135 + $0x34e0] sm:$0xff] %v3878
        %5927 = vst [vmem:[%s135 + $0x34e8] sm:$0xff] %v3879
        %5928 = vst [vmem:[%s135 + $0x34f0] sm:$0xff] %v3880
        %5929 = vst [vmem:[%s135 + $0x34f8] sm:$0xff] %v3881
        %5930 = vst [vmem:[%s135 + $0x3500] sm:$0xff] %v3882
        %5931 = vst [vmem:[%s135 + $0x3508] sm:$0xff] %v3883
        %5932 = vst [vmem:[%s135 + $0x3510] sm:$0xff] %v3884
        %5933 = vst [vmem:[%s135 + $0x3518] sm:$0xff] %v3885
        %5934 = vst [vmem:[%s135 + $0x3520] sm:$0xff] %v3886
        %5935 = vst [vmem:[%s135 + $0x3528] sm:$0xff] %v3887
        %5936 = vst [vmem:[%s135 + $0x3530] sm:$0xff] %v3888
        %5937 = vst [vmem:[%s135 + $0x3538] sm:$0xff] %v3889
        %5938 = vst [vmem:[%s135 + $0x3540] sm:$0xff] %v3890
        %5939 = vst [vmem:[%s135 + $0x3548] sm:$0xff] %v3891
        %5940 = vst [vmem:[%s135 + $0x3550] sm:$0xff] %v3892
        %5941 = vst [vmem:[%s135 + $0x3558] sm:$0xff] %v3893
        %5942 = vst [vmem:[%s135 + $0x3560] sm:$0xff] %v3894
        %5943 = vst [vmem:[%s135 + $0x3568] sm:$0xff] %v3895
        %5944 = vst [vmem:[%s135 + $0x3570] sm:$0xff] %v3896
        %5945 = vst [vmem:[%s135 + $0x3578] sm:$0xff] %v3897
        %5946 = vst [vmem:[%s135 + $0x3580] sm:$0xff] %v3898
        %5947 = vst [vmem:[%s135 + $0x3588] sm:$0xff] %v3899
        %5948 = vst [vmem:[%s135 + $0x3590] sm:$0xff] %v3900
        %5949 = vst [vmem:[%s135 + $0x3598] sm:$0xff] %v3901
        %5950 = vst [vmem:[%s135 + $0x35a0] sm:$0xff] %v3902
        %5951 = vst [vmem:[%s135 + $0x35a8] sm:$0xff] %v3903
        %5952 = vst [vmem:[%s135 + $0x35b0] sm:$0xff] %v3904
        %5953 = vst [vmem:[%s135 + $0x35b8] sm:$0xff] %v3905
        %5954 = vst [vmem:[%s135 + $0x35c0] sm:$0xff] %v3906
        %5955 = vst [vmem:[%s135 + $0x35c8] sm:$0xff] %v3907
        %5956 = vst [vmem:[%s135 + $0x35d0] sm:$0xff] %v3908
        %5957 = vst [vmem:[%s135 + $0x35d8] sm:$0xff] %v3909
        %5958 = vst [vmem:[%s135 + $0x35e0] sm:$0xff] %v3910
        %5959 = vst [vmem:[%s135 + $0x35e8] sm:$0xff] %v3911
        %5960 = vst [vmem:[%s135 + $0x35f0] sm:$0xff] %v3912
        %5961 = vst [vmem:[%s135 + $0x35f8] sm:$0xff] %v3913
        %5962 = vst [vmem:[%s135 + $0x3600] sm:$0xff] %v3914
        %5963 = vst [vmem:[%s135 + $0x3608] sm:$0xff] %v3915
        %5964 = vst [vmem:[%s135 + $0x3610] sm:$0xff] %v3916
        %5965 = vst [vmem:[%s135 + $0x3618] sm:$0xff] %v3917
        %5966 = vst [vmem:[%s135 + $0x3620] sm:$0xff] %v3918
        %5967 = vst [vmem:[%s135 + $0x3628] sm:$0xff] %v3919
        %5968 = vst [vmem:[%s135 + $0x3630] sm:$0xff] %v3920
        %5969 = vst [vmem:[%s135 + $0x3638] sm:$0xff] %v3921
        %5970 = vst [vmem:[%s135 + $0x3640] sm:$0xff] %v3922
        %5971 = vst [vmem:[%s135 + $0x3648] sm:$0xff] %v3923
        %5972 = vst [vmem:[%s135 + $0x3650] sm:$0xff] %v3924
        %5973 = vst [vmem:[%s135 + $0x3658] sm:$0xff] %v3925
        %5974 = vst [vmem:[%s135 + $0x3660] sm:$0xff] %v3926
        %5975 = vst [vmem:[%s135 + $0x3668] sm:$0xff] %v3927
        %5976 = vst [vmem:[%s135 + $0x3670] sm:$0xff] %v3928
        %5977 = vst [vmem:[%s135 + $0x3678] sm:$0xff] %v3929
        %5978 = vst [vmem:[%s135 + $0x3680] sm:$0xff] %v3930
        %5979 = vst [vmem:[%s135 + $0x3688] sm:$0xff] %v3931
        %5980 = vst [vmem:[%s135 + $0x3690] sm:$0xff] %v3932
        %5981 = vst [vmem:[%s135 + $0x3698] sm:$0xff] %v3933
        %5982 = vst [vmem:[%s135 + $0x36a0] sm:$0xff] %v3934
        %5983 = vst [vmem:[%s135 + $0x36a8] sm:$0xff] %v3935
        %5984 = vst [vmem:[%s135 + $0x36b0] sm:$0xff] %v3936
        %5985 = vst [vmem:[%s135 + $0x36b8] sm:$0xff] %v3937
        %5986 = vst [vmem:[%s135 + $0x36c0] sm:$0xff] %v3938
        %5987 = vst [vmem:[%s135 + $0x36c8] sm:$0xff] %v3939
        %5988 = vst [vmem:[%s135 + $0x36d0] sm:$0xff] %v3940
        %5989 = vst [vmem:[%s135 + $0x36d8] sm:$0xff] %v3941
        %5990 = vst [vmem:[%s135 + $0x36e0] sm:$0xff] %v3942
        %5991 = vst [vmem:[%s135 + $0x36e8] sm:$0xff] %v3943
        %5992 = vst [vmem:[%s135 + $0x36f0] sm:$0xff] %v3944
        %5993 = vst [vmem:[%s135 + $0x36f8] sm:$0xff] %v3945
        %5994 = vst [vmem:[%s135 + $0x3700] sm:$0xff] %v3946
        %5995 = vst [vmem:[%s135 + $0x3708] sm:$0xff] %v3947
        %5996 = vst [vmem:[%s135 + $0x3710] sm:$0xff] %v3948
        %5997 = vst [vmem:[%s135 + $0x3718] sm:$0xff] %v3949
        %5998 = vst [vmem:[%s135 + $0x3720] sm:$0xff] %v3950
        %5999 = vst [vmem:[%s135 + $0x3728] sm:$0xff] %v3951
        %6000 = vst [vmem:[%s135 + $0x3730] sm:$0xff] %v3952
        %6001 = vst [vmem:[%s135 + $0x3738] sm:$0xff] %v3953
        %6002 = vst [vmem:[%s135 + $0x3740] sm:$0xff] %v3954
        %6003 = vst [vmem:[%s135 + $0x3748] sm:$0xff] %v3955
        %6004 = vst [vmem:[%s135 + $0x3750] sm:$0xff] %v3956
        %6005 = vst [vmem:[%s135 + $0x3758] sm:$0xff] %v3957
        %6006 = vst [vmem:[%s135 + $0x3760] sm:$0xff] %v3958
        %6007 = vst [vmem:[%s135 + $0x3768] sm:$0xff] %v3959
        %6008 = vst [vmem:[%s135 + $0x3770] sm:$0xff] %v3960
        %6009 = vst [vmem:[%s135 + $0x3778] sm:$0xff] %v3961
        %6010 = vst [vmem:[%s135 + $0x3780] sm:$0xff] %v3962
        %6011 = vst [vmem:[%s135 + $0x3788] sm:$0xff] %v3963
        %6012 = vst [vmem:[%s135 + $0x3790] sm:$0xff] %v3964
        %6013 = vst [vmem:[%s135 + $0x3798] sm:$0xff] %v3965
        %6014 = vst [vmem:[%s135 + $0x37a0] sm:$0xff] %v3966
        %6015 = vst [vmem:[%s135 + $0x37a8] sm:$0xff] %v3967
        %6016 = vst [vmem:[%s135 + $0x37b0] sm:$0xff] %v3968
        %6017 = vst [vmem:[%s135 + $0x37b8] sm:$0xff] %v3969
        %6018 = vst [vmem:[%s135 + $0x37c0] sm:$0xff] %v3970
        %6019 = vst [vmem:[%s135 + $0x37c8] sm:$0xff] %v3971
        %6020 = vst [vmem:[%s135 + $0x37d0] sm:$0xff] %v3972
        %6021 = vst [vmem:[%s135 + $0x37d8] sm:$0xff] %v3973
        %6022 = vst [vmem:[%s135 + $0x37e0] sm:$0xff] %v3974
        %6023 = vst [vmem:[%s135 + $0x37e8] sm:$0xff] %v3975
        %6024 = vst [vmem:[%s135 + $0x37f0] sm:$0xff] %v3976
        %6025 = vst [vmem:[%s135 + $0x37f8] sm:$0xff] %v3977
        %6026 = vst [vmem:[%s135 + $0x3800] sm:$0xff] %v3978
        %6027 = vst [vmem:[%s135 + $0x3808] sm:$0xff] %v3979
        %6028 = vst [vmem:[%s135 + $0x3810] sm:$0xff] %v3980
        %6029 = vst [vmem:[%s135 + $0x3818] sm:$0xff] %v3981
        %6030 = vst [vmem:[%s135 + $0x3820] sm:$0xff] %v3982
        %6031 = vst [vmem:[%s135 + $0x3828] sm:$0xff] %v3983
        %6032 = vst [vmem:[%s135 + $0x3830] sm:$0xff] %v3984
        %6033 = vst [vmem:[%s135 + $0x3838] sm:$0xff] %v3985
        %6034 = vst [vmem:[%s135 + $0x3840] sm:$0xff] %v3986
        %6035 = vst [vmem:[%s135 + $0x3848] sm:$0xff] %v3987
        %6036 = vst [vmem:[%s135 + $0x3850] sm:$0xff] %v3988
        %6037 = vst [vmem:[%s135 + $0x3858] sm:$0xff] %v3989
        %6038 = vst [vmem:[%s135 + $0x3860] sm:$0xff] %v3990
        %6039 = vst [vmem:[%s135 + $0x3868] sm:$0xff] %v3991
        %6040 = vst [vmem:[%s135 + $0x3870] sm:$0xff] %v3992
        %6041 = vst [vmem:[%s135 + $0x3878] sm:$0xff] %v3993
        %6042 = vst [vmem:[%s135 + $0x3880] sm:$0xff] %v3994
        %6043 = vst [vmem:[%s135 + $0x3888] sm:$0xff] %v3995
        %6044 = vst [vmem:[%s135 + $0x3890] sm:$0xff] %v3996
        %6045 = vst [vmem:[%s135 + $0x3898] sm:$0xff] %v3997
        %6046 = vst [vmem:[%s135 + $0x38a0] sm:$0xff] %v3998
        %6047 = vst [vmem:[%s135 + $0x38a8] sm:$0xff] %v3999
        %6048 = vst [vmem:[%s135 + $0x38b0] sm:$0xff] %v4000
        %6049 = vst [vmem:[%s135 + $0x38b8] sm:$0xff] %v4001
        %6050 = vst [vmem:[%s135 + $0x38c0] sm:$0xff] %v4002
        %6051 = vst [vmem:[%s135 + $0x38c8] sm:$0xff] %v4003
        %6052 = vst [vmem:[%s135 + $0x38d0] sm:$0xff] %v4004
        %6053 = vst [vmem:[%s135 + $0x38d8] sm:$0xff] %v4005
        %6054 = vst [vmem:[%s135 + $0x38e0] sm:$0xff] %v4006
        %6055 = vst [vmem:[%s135 + $0x38e8] sm:$0xff] %v4007
        %6056 = vst [vmem:[%s135 + $0x38f0] sm:$0xff] %v4008
        %6057 = vst [vmem:[%s135 + $0x38f8] sm:$0xff] %v4009
        %6058 = vst [vmem:[%s135 + $0x3900] sm:$0xff] %v4010
        %6059 = vst [vmem:[%s135 + $0x3908] sm:$0xff] %v4011
        %6060 = vst [vmem:[%s135 + $0x3910] sm:$0xff] %v4012
        %6061 = vst [vmem:[%s135 + $0x3918] sm:$0xff] %v4013
        %6062 = vst [vmem:[%s135 + $0x3920] sm:$0xff] %v4014
        %6063 = vst [vmem:[%s135 + $0x3928] sm:$0xff] %v4015
        %6064 = vst [vmem:[%s135 + $0x3930] sm:$0xff] %v4016
        %6065 = vst [vmem:[%s135 + $0x3938] sm:$0xff] %v4017
        %6066 = vst [vmem:[%s135 + $0x3940] sm:$0xff] %v4018
        %6067 = vst [vmem:[%s135 + $0x3948] sm:$0xff] %v4019
        %6068 = vst [vmem:[%s135 + $0x3950] sm:$0xff] %v4020
        %6069 = vst [vmem:[%s135 + $0x3958] sm:$0xff] %v4021
        %6070 = vst [vmem:[%s135 + $0x3960] sm:$0xff] %v4022
        %6071 = vst [vmem:[%s135 + $0x3968] sm:$0xff] %v4023
        %6072 = vst [vmem:[%s135 + $0x3970] sm:$0xff] %v4024
        %6073 = vst [vmem:[%s135 + $0x3978] sm:$0xff] %v4025
        %6074 = vst [vmem:[%s135 + $0x3980] sm:$0xff] %v4026
        %6075 = vst [vmem:[%s135 + $0x3988] sm:$0xff] %v4027
        %6076 = vst [vmem:[%s135 + $0x3990] sm:$0xff] %v4028
        %6077 = vst [vmem:[%s135 + $0x3998] sm:$0xff] %v4029
        %6078 = vst [vmem:[%s135 + $0x39a0] sm:$0xff] %v4030
        %6079 = vst [vmem:[%s135 + $0x39a8] sm:$0xff] %v4031
        %6080 = vst [vmem:[%s135 + $0x39b0] sm:$0xff] %v4032
        %6081 = vst [vmem:[%s135 + $0x39b8] sm:$0xff] %v4033
        %6082 = vst [vmem:[%s135 + $0x39c0] sm:$0xff] %v4034
        %6083 = vst [vmem:[%s135 + $0x39c8] sm:$0xff] %v4035
        %6084 = vst [vmem:[%s135 + $0x39d0] sm:$0xff] %v4036
        %6085 = vst [vmem:[%s135 + $0x39d8] sm:$0xff] %v4037
        %6086 = vst [vmem:[%s135 + $0x39e0] sm:$0xff] %v4038
        %6087 = vst [vmem:[%s135 + $0x39e8] sm:$0xff] %v4039
        %6088 = vst [vmem:[%s135 + $0x39f0] sm:$0xff] %v4040
        %6089 = vst [vmem:[%s135 + $0x39f8] sm:$0xff] %v4041
        %6090 = vst [vmem:[%s135 + $0x3a00] sm:$0xff] %v4042
        %6091 = vst [vmem:[%s135 + $0x3a08] sm:$0xff] %v4043
        %6092 = vst [vmem:[%s135 + $0x3a10] sm:$0xff] %v4044
        %6093 = vst [vmem:[%s135 + $0x3a18] sm:$0xff] %v4045
        %6094 = vst [vmem:[%s135 + $0x3a20] sm:$0xff] %v4046
        %6095 = vst [vmem:[%s135 + $0x3a28] sm:$0xff] %v4047
        %6096 = vst [vmem:[%s135 + $0x3a30] sm:$0xff] %v4048
        %6097 = vst [vmem:[%s135 + $0x3a38] sm:$0xff] %v4049
        %6098 = vst [vmem:[%s135 + $0x3a40] sm:$0xff] %v4050
        %6099 = vst [vmem:[%s135 + $0x3a48] sm:$0xff] %v4051
        %6100 = vst [vmem:[%s135 + $0x3a50] sm:$0xff] %v4052
        %6101 = vst [vmem:[%s135 + $0x3a58] sm:$0xff] %v4053
        %6102 = vst [vmem:[%s135 + $0x3a60] sm:$0xff] %v4054
        %6103 = vst [vmem:[%s135 + $0x3a68] sm:$0xff] %v4055
        %6104 = vst [vmem:[%s135 + $0x3a70] sm:$0xff] %v4056
        %6105 = vst [vmem:[%s135 + $0x3a78] sm:$0xff] %v4057
        %6106 = vst [vmem:[%s135 + $0x3a80] sm:$0xff] %v4058
        %6107 = vst [vmem:[%s135 + $0x3a88] sm:$0xff] %v4059
        %6108 = vst [vmem:[%s135 + $0x3a90] sm:$0xff] %v4060
        %6109 = vst [vmem:[%s135 + $0x3a98] sm:$0xff] %v4061
        %6110 = vst [vmem:[%s135 + $0x3aa0] sm:$0xff] %v4062
        %6111 = vst [vmem:[%s135 + $0x3aa8] sm:$0xff] %v4063
        %6112 = vst [vmem:[%s135 + $0x3ab0] sm:$0xff] %v4064
        %6113 = vst [vmem:[%s135 + $0x3ab8] sm:$0xff] %v4065
        %6114 = vst [vmem:[%s135 + $0x3ac0] sm:$0xff] %v4066
        %6115 = vst [vmem:[%s135 + $0x3ac8] sm:$0xff] %v4067
        %6116 = vst [vmem:[%s135 + $0x3ad0] sm:$0xff] %v4068
        %6117 = vst [vmem:[%s135 + $0x3ad8] sm:$0xff] %v4069
        %6118 = vst [vmem:[%s135 + $0x3ae0] sm:$0xff] %v4070
        %6119 = vst [vmem:[%s135 + $0x3ae8] sm:$0xff] %v4071
        %6120 = vst [vmem:[%s135 + $0x3af0] sm:$0xff] %v4072
        %6121 = vst [vmem:[%s135 + $0x3af8] sm:$0xff] %v4073
        %6122 = vst [vmem:[%s135 + $0x3b00] sm:$0xff] %v4074
        %6123 = vst [vmem:[%s135 + $0x3b08] sm:$0xff] %v4075
        %6124 = vst [vmem:[%s135 + $0x3b10] sm:$0xff] %v4076
        %6125 = vst [vmem:[%s135 + $0x3b18] sm:$0xff] %v4077
        %6126 = vst [vmem:[%s135 + $0x3b20] sm:$0xff] %v4078
        %6127 = vst [vmem:[%s135 + $0x3b28] sm:$0xff] %v4079
        %6128 = vst [vmem:[%s135 + $0x3b30] sm:$0xff] %v4080
        %6129 = vst [vmem:[%s135 + $0x3b38] sm:$0xff] %v4081
        %6130 = vst [vmem:[%s135 + $0x3b40] sm:$0xff] %v4082
        %6131 = vst [vmem:[%s135 + $0x3b48] sm:$0xff] %v4083
        %6132 = vst [vmem:[%s135 + $0x3b50] sm:$0xff] %v4084
        %6133 = vst [vmem:[%s135 + $0x3b58] sm:$0xff] %v4085
        %6134 = vst [vmem:[%s135 + $0x3b60] sm:$0xff] %v4086
        %6135 = vst [vmem:[%s135 + $0x3b68] sm:$0xff] %v4087
        %6136 = vst [vmem:[%s135 + $0x3b70] sm:$0xff] %v4088
        %6137 = vst [vmem:[%s135 + $0x3b78] sm:$0xff] %v4089
        %6138 = vst [vmem:[%s135 + $0x3b80] sm:$0xff] %v4090
        %6139 = vst [vmem:[%s135 + $0x3b88] sm:$0xff] %v4091
        %6140 = vst [vmem:[%s135 + $0x3b90] sm:$0xff] %v4092
        %6141 = vst [vmem:[%s135 + $0x3b98] sm:$0xff] %v4093
        %6142 = vst [vmem:[%s135 + $0x3ba0] sm:$0xff] %v4094
        %6143 = vst [vmem:[%s135 + $0x3ba8] sm:$0xff] %v4095
        %6144 = vst [vmem:[%s135 + $0x3bb0] sm:$0xff] %v4096
        %6145 = vst [vmem:[%s135 + $0x3bb8] sm:$0xff] %v4097
        %6146 = vst [vmem:[%s135 + $0x3bc0] sm:$0xff] %v4098
        %6147 = vst [vmem:[%s135 + $0x3bc8] sm:$0xff] %v4099
        %6148 = vst [vmem:[%s135 + $0x3bd0] sm:$0xff] %v4100
        %6149 = vst [vmem:[%s135 + $0x3bd8] sm:$0xff] %v4101
        %6150 = vst [vmem:[%s135 + $0x3be0] sm:$0xff] %v4102
        %6151 = vst [vmem:[%s135 + $0x3be8] sm:$0xff] %v4103
        %6152 = vst [vmem:[%s135 + $0x3bf0] sm:$0xff] %v4104
        %6153 = vst [vmem:[%s135 + $0x3bf8] sm:$0xff] %v4105
        %6154 = vst [vmem:[%s135 + $0x3c00] sm:$0xff] %v4106
        %6155 = vst [vmem:[%s135 + $0x3c08] sm:$0xff] %v4107
        %6156 = vst [vmem:[%s135 + $0x3c10] sm:$0xff] %v4108
        %6157 = vst [vmem:[%s135 + $0x3c18] sm:$0xff] %v4109
        %6158 = vst [vmem:[%s135 + $0x3c20] sm:$0xff] %v4110
        %6159 = vst [vmem:[%s135 + $0x3c28] sm:$0xff] %v4111
        %6160 = vst [vmem:[%s135 + $0x3c30] sm:$0xff] %v4112
        %6161 = vst [vmem:[%s135 + $0x3c38] sm:$0xff] %v4113
        %6162 = vst [vmem:[%s135 + $0x3c40] sm:$0xff] %v4114
        %6163 = vst [vmem:[%s135 + $0x3c48] sm:$0xff] %v4115
        %6164 = vst [vmem:[%s135 + $0x3c50] sm:$0xff] %v4116
        %6165 = vst [vmem:[%s135 + $0x3c58] sm:$0xff] %v4117
        %6166 = vst [vmem:[%s135 + $0x3c60] sm:$0xff] %v4118
        %6167 = vst [vmem:[%s135 + $0x3c68] sm:$0xff] %v4119
        %6168 = vst [vmem:[%s135 + $0x3c70] sm:$0xff] %v4120
        %6169 = vst [vmem:[%s135 + $0x3c78] sm:$0xff] %v4121
        %6170 = vst [vmem:[%s135 + $0x3c80] sm:$0xff] %v4122
        %6171 = vst [vmem:[%s135 + $0x3c88] sm:$0xff] %v4123
        %6172 = vst [vmem:[%s135 + $0x3c90] sm:$0xff] %v4124
        %6173 = vst [vmem:[%s135 + $0x3c98] sm:$0xff] %v4125
        %6174 = vst [vmem:[%s135 + $0x3ca0] sm:$0xff] %v4126
        %6175 = vst [vmem:[%s135 + $0x3ca8] sm:$0xff] %v4127
        %6176 = vst [vmem:[%s135 + $0x3cb0] sm:$0xff] %v4128
        %6177 = vst [vmem:[%s135 + $0x3cb8] sm:$0xff] %v4129
        %6178 = vst [vmem:[%s135 + $0x3cc0] sm:$0xff] %v4130
        %6179 = vst [vmem:[%s135 + $0x3cc8] sm:$0xff] %v4131
        %6180 = vst [vmem:[%s135 + $0x3cd0] sm:$0xff] %v4132
        %6181 = vst [vmem:[%s135 + $0x3cd8] sm:$0xff] %v4133
        %6182 = vst [vmem:[%s135 + $0x3ce0] sm:$0xff] %v4134
        %6183 = vst [vmem:[%s135 + $0x3ce8] sm:$0xff] %v4135
        %6184 = vst [vmem:[%s135 + $0x3cf0] sm:$0xff] %v4136
        %6185 = vst [vmem:[%s135 + $0x3cf8] sm:$0xff] %v4137
        %6186 = vst [vmem:[%s135 + $0x3d00] sm:$0xff] %v4138
        %6187 = vst [vmem:[%s135 + $0x3d08] sm:$0xff] %v4139
        %6188 = vst [vmem:[%s135 + $0x3d10] sm:$0xff] %v4140
        %6189 = vst [vmem:[%s135 + $0x3d18] sm:$0xff] %v4141
        %6190 = vst [vmem:[%s135 + $0x3d20] sm:$0xff] %v4142
        %6191 = vst [vmem:[%s135 + $0x3d28] sm:$0xff] %v4143
        %6192 = vst [vmem:[%s135 + $0x3d30] sm:$0xff] %v4144
        %6193 = vst [vmem:[%s135 + $0x3d38] sm:$0xff] %v4145
        %6194 = vst [vmem:[%s135 + $0x3d40] sm:$0xff] %v4146
        %6195 = vst [vmem:[%s135 + $0x3d48] sm:$0xff] %v4147
        %6196 = vst [vmem:[%s135 + $0x3d50] sm:$0xff] %v4148
        %6197 = vst [vmem:[%s135 + $0x3d58] sm:$0xff] %v4149
        %6198 = vst [vmem:[%s135 + $0x3d60] sm:$0xff] %v4150
        %6199 = vst [vmem:[%s135 + $0x3d68] sm:$0xff] %v4151
        %6200 = vst [vmem:[%s135 + $0x3d70] sm:$0xff] %v4152
        %6201 = vst [vmem:[%s135 + $0x3d78] sm:$0xff] %v4153
        %6202 = vst [vmem:[%s135 + $0x3d80] sm:$0xff] %v4154
        %6203 = vst [vmem:[%s135 + $0x3d88] sm:$0xff] %v4155
        %6204 = vst [vmem:[%s135 + $0x3d90] sm:$0xff] %v4156
        %6205 = vst [vmem:[%s135 + $0x3d98] sm:$0xff] %v4157
        %6206 = vst [vmem:[%s135 + $0x3da0] sm:$0xff] %v4158
        %6207 = vst [vmem:[%s135 + $0x3da8] sm:$0xff] %v4159
        %6208 = vst [vmem:[%s135 + $0x3db0] sm:$0xff] %v4160
        %6209 = vst [vmem:[%s135 + $0x3db8] sm:$0xff] %v4161
        %6210 = vst [vmem:[%s135 + $0x3dc0] sm:$0xff] %v4162
        %6211 = vst [vmem:[%s135 + $0x3dc8] sm:$0xff] %v4163
        %6212 = vst [vmem:[%s135 + $0x3dd0] sm:$0xff] %v4164
        %6213 = vst [vmem:[%s135 + $0x3dd8] sm:$0xff] %v4165
        %6214 = vst [vmem:[%s135 + $0x3de0] sm:$0xff] %v4166
        %6215 = vst [vmem:[%s135 + $0x3de8] sm:$0xff] %v4167
        %6216 = vst [vmem:[%s135 + $0x3df0] sm:$0xff] %v4168
        %6217 = vst [vmem:[%s135 + $0x3df8] sm:$0xff] %v4169
        %6218 = vst [vmem:[%s135 + $0x3e00] sm:$0xff] %v4170
        %6219 = vst [vmem:[%s135 + $0x3e08] sm:$0xff] %v4171
        %6220 = vst [vmem:[%s135 + $0x3e10] sm:$0xff] %v4172
        %6221 = vst [vmem:[%s135 + $0x3e18] sm:$0xff] %v4173
        %6222 = vst [vmem:[%s135 + $0x3e20] sm:$0xff] %v4174
        %6223 = vst [vmem:[%s135 + $0x3e28] sm:$0xff] %v4175
        %6224 = vst [vmem:[%s135 + $0x3e30] sm:$0xff] %v4176
        %6225 = vst [vmem:[%s135 + $0x3e38] sm:$0xff] %v4177
        %6226 = vst [vmem:[%s135 + $0x3e40] sm:$0xff] %v4178
        %6227 = vst [vmem:[%s135 + $0x3e48] sm:$0xff] %v4179
        %6228 = vst [vmem:[%s135 + $0x3e50] sm:$0xff] %v4180
        %6229 = vst [vmem:[%s135 + $0x3e58] sm:$0xff] %v4181
        %6230 = vst [vmem:[%s135 + $0x3e60] sm:$0xff] %v4182
        %6231 = vst [vmem:[%s135 + $0x3e68] sm:$0xff] %v4183
        %6232 = vst [vmem:[%s135 + $0x3e70] sm:$0xff] %v4184
        %6233 = vst [vmem:[%s135 + $0x3e78] sm:$0xff] %v4185
        %6234 = vst [vmem:[%s135 + $0x3e80] sm:$0xff] %v4186
        %6235 = vst [vmem:[%s135 + $0x3e88] sm:$0xff] %v4187
        %6236 = vst [vmem:[%s135 + $0x3e90] sm:$0xff] %v4188
        %6237 = vst [vmem:[%s135 + $0x3e98] sm:$0xff] %v4189
        %6238 = vst [vmem:[%s135 + $0x3ea0] sm:$0xff] %v4190
        %6239 = vst [vmem:[%s135 + $0x3ea8] sm:$0xff] %v4191
        %6240 = vst [vmem:[%s135 + $0x3eb0] sm:$0xff] %v4192
        %6241 = vst [vmem:[%s135 + $0x3eb8] sm:$0xff] %v4193
        %6242 = vst [vmem:[%s135 + $0x3ec0] sm:$0xff] %v4194
        %6243 = vst [vmem:[%s135 + $0x3ec8] sm:$0xff] %v4195
        %6244 = vst [vmem:[%s135 + $0x3ed0] sm:$0xff] %v4196
        %6245 = vst [vmem:[%s135 + $0x3ed8] sm:$0xff] %v4197
        %6246 = vst [vmem:[%s135 + $0x3ee0] sm:$0xff] %v4198
        %6247 = vst [vmem:[%s135 + $0x3ee8] sm:$0xff] %v4199
        %6248 = vst [vmem:[%s135 + $0x3ef0] sm:$0xff] %v4200
        %6249 = vst [vmem:[%s135 + $0x3ef8] sm:$0xff] %v4201
        %6250 = vst [vmem:[%s135 + $0x3f00] sm:$0xff] %v4202
        %6251 = vst [vmem:[%s135 + $0x3f08] sm:$0xff] %v4203
        %6252 = vst [vmem:[%s135 + $0x3f10] sm:$0xff] %v4204
        %6253 = vst [vmem:[%s135 + $0x3f18] sm:$0xff] %v4205
        %6254 = vst [vmem:[%s135 + $0x3f20] sm:$0xff] %v4206
        %6255 = vst [vmem:[%s135 + $0x3f28] sm:$0xff] %v4207
        %6256 = vst [vmem:[%s135 + $0x3f30] sm:$0xff] %v4208
        %6257 = vst [vmem:[%s135 + $0x3f38] sm:$0xff] %v4209
        %6258 = vst [vmem:[%s135 + $0x3f40] sm:$0xff] %v4210
        %6259 = vst [vmem:[%s135 + $0x3f48] sm:$0xff] %v4211
        %6260 = vst [vmem:[%s135 + $0x3f50] sm:$0xff] %v4212
        %6261 = vst [vmem:[%s135 + $0x3f58] sm:$0xff] %v4213
        %6262 = vst [vmem:[%s135 + $0x3f60] sm:$0xff] %v4214
        %6263 = vst [vmem:[%s135 + $0x3f68] sm:$0xff] %v4215
        %6264 = vst [vmem:[%s135 + $0x3f70] sm:$0xff] %v4216
        %6265 = vst [vmem:[%s135 + $0x3f78] sm:$0xff] %v4217
        %6266 = vst [vmem:[%s135 + $0x3f80] sm:$0xff] %v4218
        %6267 = vst [vmem:[%s135 + $0x3f88] sm:$0xff] %v4219
        %6268 = vst [vmem:[%s135 + $0x3f90] sm:$0xff] %v4220
        %6269 = vst [vmem:[%s135 + $0x3f98] sm:$0xff] %v4221
        %6270 = vst [vmem:[%s135 + $0x3fa0] sm:$0xff] %v4222
        %6271 = vst [vmem:[%s135 + $0x3fa8] sm:$0xff] %v4223
        %6272 = vst [vmem:[%s135 + $0x3fb0] sm:$0xff] %v4224
        %6273 = vst [vmem:[%s135 + $0x3fb8] sm:$0xff] %v4225
        %6274 = vst [vmem:[%s135 + $0x3fc0] sm:$0xff] %v4226
        %6275 = vst [vmem:[%s135 + $0x3fc8] sm:$0xff] %v4227
        %6276 = vst [vmem:[%s135 + $0x3fd0] sm:$0xff] %v4228
        %6277 = vst [vmem:[%s135 + $0x3fd8] sm:$0xff] %v4229
        %6278 = vst [vmem:[%s135 + $0x3fe0] sm:$0xff] %v4230
        %6279 = vst [vmem:[%s135 + $0x3fe8] sm:$0xff] %v4231
        %6280 = vst [vmem:[%s135 + $0x3ff0] sm:$0xff] %v4232
        %6281 = vst [vmem:[%s135 + $0x3ff8] sm:$0xff] %v4233
        %s6282 = sand.u32 %s52, 1
        %s6283 = scalar_lea.sflag [#allocation4], %s6282
        %s6284 = sand.u32 %s52, 1
        %s6285 = smul.addr %s6284, 16384
        %s6286 = scalar_lea.vmem [#allocation5], %s6285
        // Predicated region
        $region29: #{tpu_custom_call.1} parent=23 // pred_check
          %p6287 = pneg %p62
        $region30: #{tpu_custom_call.1} parent=23 // pred_check_branch
          %6289 = sbr.rel (%p6287) target = $region32
        $region31: #{tpu_custom_call.1} parent=23 // pred_region
          %s6290 = smul.u32 128, %s18
          %s6292 = ssub.s32 262144, 262144
          %6293 = vsyncadd %s6283, %s6292
          %s6294 = smul.addr %s6290, 16
          %s6295 = smul.addr %s6294, 128
          %s6296 = scalar_lea.hbm %s1, %s6295
          %s6297 = sshll.u32 %s6286, 4
          %s6298 = int_to_ptr.vmem [resolvable:$true] %s6297
          %6303 = dma.vmem_to_hbm [thread:$0]  %s6298, 262144, %s6296, %s6283, 2048, 2048, 128
        $region32: #{tpu_custom_call.1} parent=23 // pred_fallthru
          _
      $region24: #{tpu_custom_call.1} parent=5 // pred_fallthru
        _
      %p6304 = scmp.le.s32.totalorder 2, %s13
      // Predicated region
      $region33: #{tpu_custom_call.1} parent=5 // pred_check
        %p6305 = pneg %p6304
      $region34: #{tpu_custom_call.1} parent=5 // pred_check_branch
        %6307 = sbr.rel (%p6305) target = $region36
      $region35: #{tpu_custom_call.1} parent=5 // pred_region
        %s6308 = ssub.s32 %s13, 2
        // Predicated region
        $region37: #{tpu_custom_call.1} parent=35 // pred_check
          %p6309 = pneg %p68
        $region38: #{tpu_custom_call.1} parent=35 // pred_check_branch
          %6311 = sbr.rel (%p6309) target = $region40
        $region39: #{tpu_custom_call.1} parent=35 // pred_region
          %s6312 = sand.u32 %s53, 1
          %s6313 = scalar_lea.sflag [#allocation4], %s6312
          %s6314 = sand.u32 %s53, 1
          %s6315 = smul.addr %s6314, 16384
          %s6316 = scalar_lea.vmem [#allocation5], %s6315
          %6317 = dma.done %s6313, 262144
        $region40: #{tpu_custom_call.1} parent=35 // pred_fallthru
          _
      $region36: #{tpu_custom_call.1} parent=5 // pred_fallthru
        _
    $region6: #{tpu_custom_call.1} parent=1 // loop_footer
      %s17 = sadd.s32 1, %s13
    $region7: #{tpu_custom_call.1} parent=1 // loop_footer_branch
      %12 = sbr.rel target = $region3
    $region8: #{tpu_custom_call.1} parent=1 // loop_exit
      _
    %6318 = vsyncpa [#allocation3], 1
    %s6319 = scalar_lea.sflag [#allocation3], 1
    %6320 = vsyncpa %s6319, 1
    %6321 = vsyncpa [#allocation4], 1
    %s6322 = scalar_lea.sflag [#allocation4], 1
    %6323 = vsyncpa %s6322, 1

</llo_original>
